<compile_context>
chip_gen: v7x
topology: tpu7x:2x2x1
jax: 0.10.0
libtpu: 0.0.40
codegen_flags: <defaults>
</compile_context>

<pallas_src>
import jax
import jax.numpy as jnp
import numpy as np
from jax import lax
from jax.experimental import pallas as pl
from jax.experimental.pallas import tpu as pltpu

BN_EPS = 1e-3


def _fused_kernel(scale_ref, x_ref, w_ref, gb_ref, out_ref):
    # SE gate (per-Cin), applied to x — the small operand — in f32, then cast
    # to bf16 for the MXU. The weight tile is already bf16 in VMEM.
    gate = jax.nn.sigmoid(scale_ref[...])                           # (Cin, 1) f32
    x_gated = (x_ref[...] * gate).astype(jnp.bfloat16)              # (Cin, M) bf16

    # 1x1 conv == matmul over channels (bf16 operands, f32 accumulation).
    y = jnp.dot(w_ref[...], x_gated,
                preferred_element_type=jnp.float32)                 # (T, M) f32

    # BatchNorm2d (training): per-channel batch stats over M = N*H*W positions.
    inv_m = 1.0 / y.shape[1]
    s1 = jnp.sum(y, axis=1, keepdims=True)                          # (T, 1)
    s2 = jnp.sum(y * y, axis=1, keepdims=True)                      # (T, 1)
    mean = s1 * inv_m
    var = jnp.maximum(s2 * inv_m - mean * mean, 0.0)

    gamma = gb_ref[:, 0:1]                                          # (T, 1)
    beta = gb_ref[:, 1:2]                                           # (T, 1)
    scale_out = lax.rsqrt(var + BN_EPS) * gamma
    out_ref[...] = ((y - mean) * scale_out + beta).astype(out_ref.dtype)


def _pick_tile(cout):
    # Two-way split of the Cout axis: one tile per TensorCore on v7x, two
    # short serial steps on v5e/v6e. Fall back to a single tile otherwise.
    half = cout // 2
    if cout % 2 == 0 and half % 8 == 0:
        return half
    return cout


def prepare_params(conv_w, gamma, beta):
    """One-time parameter prep: bf16 weight matrix + packed gamma|beta."""
    Cout, Cin = conv_w.shape[0], conv_w.shape[1]
    w_bf16 = conv_w.reshape(Cout, Cin).astype(jnp.bfloat16)   # (Cout, Cin) bf16
    gb = jnp.stack([gamma, beta], axis=1)                     # (Cout, 2) f32
    return w_bf16, gb


def fused_sigmoid_mul_conv1x1_bn(x805, x801, w_bf16, gb):
    """x805: (1,Cin,1,1), x801: (1,Cin,H,W), w_bf16: (Cout,Cin) bf16, gb: (Cout,2)."""
    N, Cin, H, W = x801.shape
    assert N == 1, "module is defined for batch size 1"
    Cout = w_bf16.shape[0]
    M = H * W

    # Free reshapes only (native NCHW memory order) — no transposes anywhere.
    x_cm = x801.reshape(Cin, M)                # (Cin, M)
    scale = x805.reshape(Cin, 1)               # (Cin, 1): gate along x's sublane axis

    tile = _pick_tile(Cout)
    grid = (Cout // tile,)

    cost = pl.CostEstimate(
        flops=2 * Cout * Cin * M,
        transcendentals=Cin,
        bytes_accessed=(Cout * Cin * 2           # bf16 weights (dominant)
                        + Cin * M * 4            # activations
                        + Cout * M * 4           # output
                        + Cin * 4 + Cout * 2 * 4),
    )

    out_cm = pl.pallas_call(
        _fused_kernel,
        out_shape=jax.ShapeDtypeStruct((Cout, M), jnp.float32),
        grid=grid,
        in_specs=[
            pl.BlockSpec((Cin, 1), lambda j: (0, 0)),      # SE pre-activation
            pl.BlockSpec((Cin, M), lambda j: (0, 0)),      # activations (resident)
            pl.BlockSpec((tile, Cin), lambda j: (j, 0)),   # bf16 weight tile (pipelined)
            pl.BlockSpec((tile, 2), lambda j: (j, 0)),     # packed gamma|beta tile
        ],
        out_specs=pl.BlockSpec((tile, M), lambda j: (j, 0)),
        compiler_params=pltpu.CompilerParams(
            dimension_semantics=("parallel",)),
        cost_estimate=cost,
    )(scale, x_cm, w_bf16, gb)

    # Free reshape straight back to NCHW.
    return out_cm.reshape(N, Cout, H, W)


def _reference(x805, x801, conv_w, gamma, beta):
    gate = jax.nn.sigmoid(x805)                                    # (1, Cin, 1, 1)
    x = gate * x801                                                # (1, Cin, H, W)
    y = lax.conv_general_dilated(
        x, conv_w, window_strides=(1, 1), padding="VALID",
        dimension_numbers=("NCHW", "OIHW", "NCHW"),
        precision=lax.Precision.HIGHEST)                           # (1, Cout, H, W)
    mean = jnp.mean(y, axis=(0, 2, 3), keepdims=True)
    var = jnp.mean((y - mean) ** 2, axis=(0, 2, 3), keepdims=True)
    inv = lax.rsqrt(var + BN_EPS)
    g = gamma.reshape(1, -1, 1, 1)
    b = beta.reshape(1, -1, 1, 1)
    return (y - mean) * inv * g + b


if __name__ == "__main__":
    # Shapes implied by the module: SE gate over 2304 ch -> 1x1 conv to 640 -> BN, 7x7 map.
    N, Cin, Cout, H, W = 1, 2304, 640, 7, 7

    key = jax.random.PRNGKey(0)
    k1, k2, k3, k4, k5 = jax.random.split(key, 5)

    x801 = jax.random.normal(k1, (N, Cin, H, W), dtype=jnp.float32)
    x805 = jax.random.normal(k2, (N, Cin, 1, 1), dtype=jnp.float32)

    # Deterministic parameter init (Conv2d kaiming-uniform-ish; BN affine non-trivial).
    bound = 1.0 / np.sqrt(Cin)  # 1x1 kernel -> fan_in = Cin
    conv_w = jax.random.uniform(k3, (Cout, Cin, 1, 1), minval=-bound, maxval=bound,
                                dtype=jnp.float32)
    gamma = jax.random.uniform(k4, (Cout,), minval=0.5, maxval=1.5, dtype=jnp.float32)
    beta = jax.random.uniform(k5, (Cout,), minval=-0.5, maxval=0.5, dtype=jnp.float32)

    # One-time parameter prep (bf16 weights, packed gamma|beta).
    w_bf16, gb = prepare_params(conv_w, gamma, beta)

    out = jax.block_until_ready(
        fused_sigmoid_mul_conv1x1_bn(x805, x801, w_bf16, gb))
    ref = jax.block_until_ready(_reference(x805, x801, conv_w, gamma, beta))

    assert out.shape == (N, Cout, H, W)
    # Tolerance absorbs bf16 MXU operands (K = 2304 contraction); the reference
    # conv runs at f32 HIGHEST precision.
    assert np.allclose(np.asarray(out), np.asarray(ref), rtol=2e-2, atol=2e-2), \
        "Pallas output mismatch vs reference"

    print("KERNEL_OK")
</pallas_src>

<mosaic_0001>
module attributes {stable_mosaic.version = 11 : i64} {
  func.func @_fused_kernel(%arg0: i32, %arg1: memref<2304x1xf32, #tpu.memory_space<vmem>>, %arg2: memref<2304x49xf32, #tpu.memory_space<vmem>>, %arg3: memref<320x2304xbf16, #tpu.memory_space<vmem>>, %arg4: memref<320x2xf32, #tpu.memory_space<vmem>>, %arg5: memref<320x49xf32, #tpu.memory_space<vmem>>) attributes {dimension_semantics = [#tpu.dimension_semantics<parallel>], iteration_bounds = array<i64: 2>, scalar_prefetch = 0 : i64, scratch_operands = 0 : i64, tpu.core_type = #tpu.core_type<tc>, window_params = [{pipeline_mode = #tpu.pipeline_mode<synchronous>, transform_indices = @transform_0, window_bounds = array<i64: 2304, 1>}, {pipeline_mode = #tpu.pipeline_mode<synchronous>, transform_indices = @transform_1, window_bounds = array<i64: 2304, 49>}, {transform_indices = @transform_2, window_bounds = array<i64: 320, 2304>}, {transform_indices = @transform_3, window_bounds = array<i64: 320, 2>}, {transform_indices = @transform_4, window_bounds = array<i64: 320, 49>}]} {
    %c0 = arith.constant 0 : index
    %c0_0 = arith.constant 0 : index
    %0 = vector.load %arg1[%c0, %c0_0] : memref<2304x1xf32, #tpu.memory_space<vmem>>, vector<2304x1xf32>
    %1 = arith.negf %0 : vector<2304x1xf32>
    %2 = math.exp %1 : vector<2304x1xf32>
    %cst = arith.constant 1.000000e+00 : f32
    %3 = vector.broadcast %cst : f32 to vector<2304x1xf32>
    %4 = arith.addf %3, %2 : vector<2304x1xf32>
    %5 = arith.divf %3, %4 : vector<2304x1xf32>
    %c0_1 = arith.constant 0 : index
    %c0_2 = arith.constant 0 : index
    %6 = vector.load %arg2[%c0_1, %c0_2] : memref<2304x49xf32, #tpu.memory_space<vmem>>, vector<2304x49xf32>
    %7 = vector.broadcast %5 : vector<2304x1xf32> to vector<2304x49xf32>
    %8 = arith.mulf %6, %7 : vector<2304x49xf32>
    %9 = arith.truncf %8 : vector<2304x49xf32> to vector<2304x49xbf16>
    %c0_3 = arith.constant 0 : index
    %c0_4 = arith.constant 0 : index
    %10 = vector.load %arg3[%c0_3, %c0_4] : memref<320x2304xbf16, #tpu.memory_space<vmem>>, vector<320x2304xbf16>
    %cst_5 = arith.constant dense<0.000000e+00> : vector<320x49xf32>
    %11 = tpu.matmul %10, %9, %cst_5 {dimension_numbers = #tpu.dot_dimension_numbers<[1], [0], [0], [1], [0, 0, 1, 1], [], []>} : vector<320x2304xbf16>, vector<2304x49xbf16>, vector<320x49xf32> -> vector<320x49xf32>
    %cst_6 = arith.constant dense<0.000000e+00> : vector<320xf32>
    %12 = vector.multi_reduction <add>, %11, %cst_6 [1] : vector<320x49xf32> to vector<320xf32>
    %13 = vector.shape_cast %12 : vector<320xf32> to vector<320x1xf32>
    %14 = arith.mulf %11, %11 : vector<320x49xf32>
    %cst_7 = arith.constant dense<0.000000e+00> : vector<320xf32>
    %15 = vector.multi_reduction <add>, %14, %cst_7 [1] : vector<320x49xf32> to vector<320xf32>
    %16 = vector.shape_cast %15 : vector<320xf32> to vector<320x1xf32>
    %cst_8 = arith.constant 0.0204081628 : f32
    %17 = vector.broadcast %cst_8 : f32 to vector<320x1xf32>
    %18 = arith.mulf %13, %17 : vector<320x1xf32>
    %cst_9 = arith.constant 0.0204081628 : f32
    %19 = vector.broadcast %cst_9 : f32 to vector<320x1xf32>
    %20 = arith.mulf %16, %19 : vector<320x1xf32>
    %21 = arith.mulf %18, %18 : vector<320x1xf32>
    %22 = arith.subf %20, %21 : vector<320x1xf32>
    %cst_10 = arith.constant 0.000000e+00 : f32
    %23 = vector.broadcast %cst_10 : f32 to vector<320x1xf32>
    %24 = arith.maximumf %22, %23 : vector<320x1xf32>
    %c0_11 = arith.constant 0 : index
    %c0_12 = arith.constant 0 : index
    %25 = vector.load %arg4[%c0_11, %c0_12] : memref<320x2xf32, #tpu.memory_space<vmem>>, vector<320x1xf32>
    %c0_13 = arith.constant 0 : index
    %c1 = arith.constant 1 : index
    %26 = vector.load %arg4[%c0_13, %c1] : memref<320x2xf32, #tpu.memory_space<vmem>>, vector<320x1xf32>
    %cst_14 = arith.constant 1.000000e-03 : f32
    %27 = vector.broadcast %cst_14 : f32 to vector<320x1xf32>
    %28 = arith.addf %24, %27 : vector<320x1xf32>
    %29 = math.rsqrt %28 : vector<320x1xf32>
    %30 = arith.mulf %29, %25 : vector<320x1xf32>
    %31 = vector.broadcast %18 : vector<320x1xf32> to vector<320x49xf32>
    %32 = arith.subf %11, %31 : vector<320x49xf32>
    %33 = vector.broadcast %30 : vector<320x1xf32> to vector<320x49xf32>
    %34 = arith.mulf %32, %33 : vector<320x49xf32>
    %35 = vector.broadcast %26 : vector<320x1xf32> to vector<320x49xf32>
    %36 = arith.addf %34, %35 : vector<320x49xf32>
    %c0_15 = arith.constant 0 : index
    %c0_16 = arith.constant 0 : index
    %37 = vector.load %arg5[%c0_15, %c0_16] : memref<320x49xf32, #tpu.memory_space<vmem>>, vector<320x49xf32>
    tpu.vector_store %arg5[%c0_15, %c0_16], %36 {strides = array<i32>} : memref<320x49xf32, #tpu.memory_space<vmem>>, vector<320x49xf32>,
    return
  }
  func.func @transform_0(%arg0: i32) -> (i32, i32) {
    %c0_i32 = arith.constant 0 : i32
    %c0_i32_0 = arith.constant 0 : i32
    %c0_i32_1 = arith.constant 0 : i32
    return %c0_i32, %c0_i32_0 : i32, i32
  }
  func.func @transform_1(%arg0: i32) -> (i32, i32) {
    %c0_i32 = arith.constant 0 : i32
    %c0_i32_0 = arith.constant 0 : i32
    %c0_i32_1 = arith.constant 0 : i32
    return %c0_i32, %c0_i32_0 : i32, i32
  }
  func.func @transform_2(%arg0: i32) -> (i32, i32) {
    %c0_i32 = arith.constant 0 : i32
    %c0_i32_0 = arith.constant 0 : i32
    return %arg0, %c0_i32 : i32, i32
  }
  func.func @transform_3(%arg0: i32) -> (i32, i32) {
    %c0_i32 = arith.constant 0 : i32
    %c0_i32_0 = arith.constant 0 : i32
    return %arg0, %c0_i32 : i32, i32
  }
  func.func @transform_4(%arg0: i32) -> (i32, i32) {
    %c0_i32 = arith.constant 0 : i32
    %c0_i32_0 = arith.constant 0 : i32
    return %arg0, %c0_i32 : i32, i32
  }
}

</mosaic_0001>

<llo_original>
// kernel: tpu_custom_call.1
$region0: #{tpu_custom_call.1}
  #allocation0 [shape = 'u32[]', space=smem, size = 0x4, offset = 0x4, fixed_abs, tag = 'smem constant byte address 0x4 - core index']
  #allocation1 [shape = 'u32[144,128]{1,0:T(1,128)}', space=vmem, size = 0x12000, scoped, tag = 'internal scratch']
  %s0 = inlined_call_operand.vmem [shape: f32[2304,1], index: 0, kind: input, shape index: {}]
  %s1 = inlined_call_operand.vmem [shape: f32[2304,49], index: 1, kind: input, shape index: {}]
  %s2 = inlined_call_operand.vmem [shape: bf16[640,2304], index: 2, kind: input, shape index: {}]
  %s3 = inlined_call_operand.vmem [shape: f32[640,2], index: 3, kind: input, shape index: {}]
  %s4 = inlined_call_operand.vmem [shape: f32[640,49], index: 4, kind: output, shape index: {}]
  %s5 = sld [smem:[#allocation0]]
  $region49: #{tpu_custom_call.1} parent=0
    _
  %s7 = ssub.s32 1, %s5
  %s8 = scalar_select 0, %s7, %s5
  loop: start=0, step=1, limit=4
  $region2: #{tpu_custom_call.1} parent=0 // loop_pre_header
    _
  $region3: #{tpu_custom_call.1} parent=0 // loop_header
    %s10 = sphi 0, %s14
    %p11 = scmp.ge.s32.totalorder %s10, 4
    %s18 = sphi 0, %s18
    %s20 = sphi 0, %s18
    %s21 = sphi 0, %s20
    %s35 = sphi 0, %s21
    %s39 = sphi 0, %s39
    %s41 = sphi 0, %s39
    %s42 = sphi 0, %s41
    %s56 = sphi 0, %s42
    %s62 = sphi 0, %s64
    %s65 = sphi 0, %s62
    %s66 = sphi 0, %s65
    %s82 = sphi 0, %s66
    %s88 = sphi 0, %s90
    %s91 = sphi 0, %s88
    %s92 = sphi 0, %s91
    %s108 = sphi 0, %s92
    %s114 = sphi 0, %s116
    %s117 = sphi 0, %s114
    %s118 = sphi 0, %s117
    %s134 = sphi 0, %s118
  $region4: #{tpu_custom_call.1} parent=0 // loop_header_branch
    %13 = sbr.rel (%p11) target = $region8
  $region5: #{tpu_custom_call.1} parent=0 // loop_body
    %s15 = ssub.s32 %s10, 1
    %s16 = ssub.s32 %s10, 2
    %s17 = sadd.s32 %s10, 1
    %s19 = sadd.s32 %s18, 1
    %p22 = scmp.eq.s32.totalorder %s10, 1
    %p23 = scmp.ne.s32.totalorder %s18, %s20
    %p24 = scmp.eq.s32.totalorder %s10, 0
    %p25 = por %p23, %p24
    %p26 = scmp.ne.s32.totalorder %s18, %s20
    %p27 = scmp.eq.s32.totalorder %s15, 1
    %p28 = por %p26, %p27
    %p29 = scmp.ne.s32.totalorder %s20, %s21
    %p30 = scmp.eq.s32.totalorder %s15, 0
    %p31 = por %p29, %p30
    %p32 = scmp.ne.s32.totalorder %s20, %s21
    %p33 = scmp.eq.s32.totalorder %s16, 1
    %p34 = por %p32, %p33
    %p36 = scmp.ne.s32.totalorder %s21, %s35
    %p37 = scmp.eq.s32.totalorder %s16, 0
    %p38 = por %p36, %p37
    %s40 = sadd.s32 %s39, 1
    %p43 = scmp.eq.s32.totalorder %s10, 1
    %p44 = scmp.ne.s32.totalorder %s39, %s41
    %p45 = scmp.eq.s32.totalorder %s10, 0
    %p46 = por %p44, %p45
    %p47 = scmp.ne.s32.totalorder %s39, %s41
    %p48 = scmp.eq.s32.totalorder %s15, 1
    %p49 = por %p47, %p48
    %p50 = scmp.ne.s32.totalorder %s41, %s42
    %p51 = scmp.eq.s32.totalorder %s15, 0
    %p52 = por %p50, %p51
    %p53 = scmp.ne.s32.totalorder %s41, %s42
    %p54 = scmp.eq.s32.totalorder %s16, 1
    %p55 = por %p53, %p54
    %p57 = scmp.ne.s32.totalorder %s42, %s56
    %p58 = scmp.eq.s32.totalorder %s16, 0
    %p59 = por %p57, %p58
    %s60 = ssub.s32 %s10, %s17
    %p61 = scmp.eq.s32.totalorder %s60, 0
    %s63 = sadd.s32 %s62, 1
    %s64 = scalar_select %p61, %s62, %s63
    %p67 = pneg %p61
    %p68 = scmp.eq.s32.totalorder %s10, 1
    %p69 = por %p67, %p68
    %p70 = scmp.ne.s32.totalorder %s62, %s65
    %p71 = scmp.eq.s32.totalorder %s10, 0
    %p72 = por %p70, %p71
    %p73 = scmp.ne.s32.totalorder %s62, %s65
    %p74 = scmp.eq.s32.totalorder %s15, 1
    %p75 = por %p73, %p74
    %p76 = scmp.ne.s32.totalorder %s65, %s66
    %p77 = scmp.eq.s32.totalorder %s15, 0
    %p78 = por %p76, %p77
    %p79 = scmp.ne.s32.totalorder %s65, %s66
    %p80 = scmp.eq.s32.totalorder %s16, 1
    %p81 = por %p79, %p80
    %p83 = scmp.ne.s32.totalorder %s66, %s82
    %p84 = scmp.eq.s32.totalorder %s16, 0
    %p85 = por %p83, %p84
    %s86 = ssub.s32 %s10, %s17
    %p87 = scmp.eq.s32.totalorder %s86, 0
    %s89 = sadd.s32 %s88, 1
    %s90 = scalar_select %p87, %s88, %s89
    %p93 = pneg %p87
    %p94 = scmp.eq.s32.totalorder %s10, 1
    %p95 = por %p93, %p94
    %p96 = scmp.ne.s32.totalorder %s88, %s91
    %p97 = scmp.eq.s32.totalorder %s10, 0
    %p98 = por %p96, %p97
    %p99 = scmp.ne.s32.totalorder %s88, %s91
    %p100 = scmp.eq.s32.totalorder %s15, 1
    %p101 = por %p99, %p100
    %p102 = scmp.ne.s32.totalorder %s91, %s92
    %p103 = scmp.eq.s32.totalorder %s15, 0
    %p104 = por %p102, %p103
    %p105 = scmp.ne.s32.totalorder %s91, %s92
    %p106 = scmp.eq.s32.totalorder %s16, 1
    %p107 = por %p105, %p106
    %p109 = scmp.ne.s32.totalorder %s92, %s108
    %p110 = scmp.eq.s32.totalorder %s16, 0
    %p111 = por %p109, %p110
    %s112 = ssub.s32 %s10, %s17
    %p113 = scmp.eq.s32.totalorder %s112, 0
    %s115 = sadd.s32 %s114, 1
    %s116 = scalar_select %p113, %s114, %s115
    %p119 = pneg %p113
    %p120 = scmp.eq.s32.totalorder %s10, 1
    %p121 = por %p119, %p120
    %p122 = scmp.ne.s32.totalorder %s114, %s117
    %p123 = scmp.eq.s32.totalorder %s10, 0
    %p124 = por %p122, %p123
    %p125 = scmp.ne.s32.totalorder %s114, %s117
    %p126 = scmp.eq.s32.totalorder %s15, 1
    %p127 = por %p125, %p126
    %p128 = scmp.ne.s32.totalorder %s117, %s118
    %p129 = scmp.eq.s32.totalorder %s15, 0
    %p130 = por %p128, %p129
    %p131 = scmp.ne.s32.totalorder %s117, %s118
    %p132 = scmp.eq.s32.totalorder %s16, 1
    %p133 = por %p131, %p132
    %p135 = scmp.ne.s32.totalorder %s118, %s134
    %p136 = scmp.eq.s32.totalorder %s16, 0
    %p137 = por %p135, %p136
    %p138 = scmp.le.s32.totalorder 1, %s10
    %p139 = scmp.lt.s32.totalorder %s10, 3
    %p140 = pnand %p138, %p139
    %p141 = pneg %p140
    // Predicated region
    $region9: #{tpu_custom_call.1} parent=5 // pred_check
      _
    $region10: #{tpu_custom_call.1} parent=5 // pred_check_branch
      %143 = sbr.rel (%p140) target = $region12
    $region11: #{tpu_custom_call.1} parent=5 // pred_region
      %s144 = ssub.s32 %s10, 1
      // Predicated region
      $region13: #{tpu_custom_call.1} parent=11 // pred_check
        %p145 = pneg %p31
      $region14: #{tpu_custom_call.1} parent=11 // pred_check_branch
        %147 = sbr.rel (%p145) target = $region16
      $region15: #{tpu_custom_call.1} parent=11 // pred_region
        _
      $region16: #{tpu_custom_call.1} parent=11 // pred_fallthru
        _
      // Predicated region
      $region17: #{tpu_custom_call.1} parent=11 // pred_check
        %p148 = pneg %p52
      $region18: #{tpu_custom_call.1} parent=11 // pred_check_branch
        %150 = sbr.rel (%p148) target = $region20
      $region19: #{tpu_custom_call.1} parent=11 // pred_region
        _
      $region20: #{tpu_custom_call.1} parent=11 // pred_fallthru
        _
    $region12: #{tpu_custom_call.1} parent=5 // pred_fallthru
      _
    %p151 = scmp.lt.s32.totalorder %s10, 2
    // Predicated region
    $region21: #{tpu_custom_call.1} parent=5 // pred_check
      %p152 = pneg %p151
    $region22: #{tpu_custom_call.1} parent=5 // pred_check_branch
      %154 = sbr.rel (%p152) target = $region24
    $region23: #{tpu_custom_call.1} parent=5 // pred_region
      // Predicated region
      $region25: #{tpu_custom_call.1} parent=23 // pred_check
        %p155 = pneg %p72
      $region26: #{tpu_custom_call.1} parent=23 // pred_check_branch
        %157 = sbr.rel (%p155) target = $region28
      $region27: #{tpu_custom_call.1} parent=23 // pred_region
        %s158 = smul.u32 40, %s10
        %p159 = scmp.lt.s32.totalorder %s158, 79
        %s160 = scalar_select %p159, %s158, 79
        %s161 = smul.addr %s160, 18
        %s162 = smul.addr %s161, 4
        %s163 = scalar_lea.vmem %s2, %s162
        %s164 = smul.u32 40, %s10
      $region28: #{tpu_custom_call.1} parent=23 // pred_fallthru
        _
      // Predicated region
      $region29: #{tpu_custom_call.1} parent=23 // pred_check
        %p165 = pneg %p98
      $region30: #{tpu_custom_call.1} parent=23 // pred_check_branch
        %167 = sbr.rel (%p165) target = $region32
      $region31: #{tpu_custom_call.1} parent=23 // pred_region
        %s168 = smul.u32 40, %s10
        %p169 = scmp.lt.s32.totalorder %s168, 79
        %s170 = scalar_select %p169, %s168, 79
        %s171 = smul.addr %s170, 8
        %s172 = scalar_lea.vmem %s3, %s171
        %s173 = smul.u32 40, %s10
      $region32: #{tpu_custom_call.1} parent=23 // pred_fallthru
        _
    $region24: #{tpu_custom_call.1} parent=5 // pred_fallthru
      _
    %p174 = scmp.le.s32.totalorder 1, %s10
    %p175 = scmp.lt.s32.totalorder %s10, 3
    %p176 = pnand %p174, %p175
    %p177 = pneg %p176
    // Predicated region
    $region33: #{tpu_custom_call.1} parent=5 // pred_check
      _
    $region34: #{tpu_custom_call.1} parent=5 // pred_check_branch
      %179 = sbr.rel (%p176) target = $region36
    $region35: #{tpu_custom_call.1} parent=5 // pred_region
      %s180 = ssub.s32 %s10, 1
      %p181 = pneg %p31
      %p182 = pneg %p28
      %p183 = pneg %p52
      %p184 = pneg %p49
      %s185 = smul.u32 40, %s15
      %p186 = scmp.lt.s32.totalorder %s185, 79
      %s187 = scalar_select %p186, %s185, 79
      %s188 = smul.addr %s187, 18
      %s189 = smul.addr %s188, 4
      %s190 = scalar_lea.vmem %s2, %s189
      %p191 = pneg %p78
      %p192 = pneg %p75
      %s193 = smul.u32 40, %s15
      %p194 = scmp.lt.s32.totalorder %s193, 79
      %s195 = scalar_select %p194, %s193, 79
      %s196 = smul.addr %s195, 8
      %s197 = scalar_lea.vmem %s3, %s196
      %p198 = pneg %p104
      %p199 = pneg %p101
      %p200 = pneg %p130
      %p201 = pneg %p127
      %s202 = smul.u32 40, %s15
      %p203 = scmp.lt.s32.totalorder %s202, 79
      %s204 = scalar_select %p203, %s202, 79
      %s205 = smul.addr %s204, 8
      %s206 = scalar_lea.vmem %s4, %s205
      %s207 = smul.u32 40, %s15
      %p208 = scmp.lt.s32.totalorder %s207, 79
      %s209 = scalar_select %p208, %s207, 79
      %s210 = smul.addr %s209, 18
      %s211 = smul.addr %s210, 4
      %s212 = scalar_lea.vmem %s2, %s211
      %s213 = smul.u32 40, %s15
      %s214 = smul.u32 40, %s15
      %p215 = scmp.lt.s32.totalorder %s214, 79
      %s216 = scalar_select %p215, %s214, 79
      %s217 = smul.addr %s216, 8
      %s218 = scalar_lea.vmem %s3, %s217
      %s219 = smul.u32 40, %s15
      %s220 = smul.u32 40, %s15
      %p221 = scmp.lt.s32.totalorder %s220, 79
      %s222 = scalar_select %p221, %s220, 79
      %s223 = smul.addr %s222, 8
      %s224 = scalar_lea.vmem %s4, %s223
      %s225 = smul.u32 40, %s15
      %v227 = vld [vmem:[%s0] sm:$0xff]
      %v228 = vld [vmem:[%s0 + $0x8] sm:$0xff]
      %v229 = vld [vmem:[%s0 + $0x10] sm:$0xff]
      %v230 = vld [vmem:[%s0 + $0x18] sm:$0xff]
      %v231 = vld [vmem:[%s0 + $0x20] sm:$0xff]
      %v232 = vld [vmem:[%s0 + $0x28] sm:$0xff]
      %v233 = vld [vmem:[%s0 + $0x30] sm:$0xff]
      %v234 = vld [vmem:[%s0 + $0x38] sm:$0xff]
      %v235 = vld [vmem:[%s0 + $0x40] sm:$0xff]
      %v236 = vld [vmem:[%s0 + $0x48] sm:$0xff]
      %v237 = vld [vmem:[%s0 + $0x50] sm:$0xff]
      %v238 = vld [vmem:[%s0 + $0x58] sm:$0xff]
      %v239 = vld [vmem:[%s0 + $0x60] sm:$0xff]
      %v240 = vld [vmem:[%s0 + $0x68] sm:$0xff]
      %v241 = vld [vmem:[%s0 + $0x70] sm:$0xff]
      %v242 = vld [vmem:[%s0 + $0x78] sm:$0xff]
      %v243 = vld [vmem:[%s0 + $0x80] sm:$0xff]
      %v244 = vld [vmem:[%s0 + $0x88] sm:$0xff]
      %v245 = vld [vmem:[%s0 + $0x90] sm:$0xff]
      %v246 = vld [vmem:[%s0 + $0x98] sm:$0xff]
      %v247 = vld [vmem:[%s0 + $0xa0] sm:$0xff]
      %v248 = vld [vmem:[%s0 + $0xa8] sm:$0xff]
      %v249 = vld [vmem:[%s0 + $0xb0] sm:$0xff]
      %v250 = vld [vmem:[%s0 + $0xb8] sm:$0xff]
      %v251 = vld [vmem:[%s0 + $0xc0] sm:$0xff]
      %v252 = vld [vmem:[%s0 + $0xc8] sm:$0xff]
      %v253 = vld [vmem:[%s0 + $0xd0] sm:$0xff]
      %v254 = vld [vmem:[%s0 + $0xd8] sm:$0xff]
      %v255 = vld [vmem:[%s0 + $0xe0] sm:$0xff]
      %v256 = vld [vmem:[%s0 + $0xe8] sm:$0xff]
      %v257 = vld [vmem:[%s0 + $0xf0] sm:$0xff]
      %v258 = vld [vmem:[%s0 + $0xf8] sm:$0xff]
      %v259 = vld [vmem:[%s0 + $0x100] sm:$0xff]
      %v260 = vld [vmem:[%s0 + $0x108] sm:$0xff]
      %v261 = vld [vmem:[%s0 + $0x110] sm:$0xff]
      %v262 = vld [vmem:[%s0 + $0x118] sm:$0xff]
      %v263 = vld [vmem:[%s0 + $0x120] sm:$0xff]
      %v264 = vld [vmem:[%s0 + $0x128] sm:$0xff]
      %v265 = vld [vmem:[%s0 + $0x130] sm:$0xff]
      %v266 = vld [vmem:[%s0 + $0x138] sm:$0xff]
      %v267 = vld [vmem:[%s0 + $0x140] sm:$0xff]
      %v268 = vld [vmem:[%s0 + $0x148] sm:$0xff]
      %v269 = vld [vmem:[%s0 + $0x150] sm:$0xff]
      %v270 = vld [vmem:[%s0 + $0x158] sm:$0xff]
      %v271 = vld [vmem:[%s0 + $0x160] sm:$0xff]
      %v272 = vld [vmem:[%s0 + $0x168] sm:$0xff]
      %v273 = vld [vmem:[%s0 + $0x170] sm:$0xff]
      %v274 = vld [vmem:[%s0 + $0x178] sm:$0xff]
      %v275 = vld [vmem:[%s0 + $0x180] sm:$0xff]
      %v276 = vld [vmem:[%s0 + $0x188] sm:$0xff]
      %v277 = vld [vmem:[%s0 + $0x190] sm:$0xff]
      %v278 = vld [vmem:[%s0 + $0x198] sm:$0xff]
      %v279 = vld [vmem:[%s0 + $0x1a0] sm:$0xff]
      %v280 = vld [vmem:[%s0 + $0x1a8] sm:$0xff]
      %v281 = vld [vmem:[%s0 + $0x1b0] sm:$0xff]
      %v282 = vld [vmem:[%s0 + $0x1b8] sm:$0xff]
      %v283 = vld [vmem:[%s0 + $0x1c0] sm:$0xff]
      %v284 = vld [vmem:[%s0 + $0x1c8] sm:$0xff]
      %v285 = vld [vmem:[%s0 + $0x1d0] sm:$0xff]
      %v286 = vld [vmem:[%s0 + $0x1d8] sm:$0xff]
      %v287 = vld [vmem:[%s0 + $0x1e0] sm:$0xff]
      %v288 = vld [vmem:[%s0 + $0x1e8] sm:$0xff]
      %v289 = vld [vmem:[%s0 + $0x1f0] sm:$0xff]
      %v290 = vld [vmem:[%s0 + $0x1f8] sm:$0xff]
      %v291 = vld [vmem:[%s0 + $0x200] sm:$0xff]
      %v292 = vld [vmem:[%s0 + $0x208] sm:$0xff]
      %v293 = vld [vmem:[%s0 + $0x210] sm:$0xff]
      %v294 = vld [vmem:[%s0 + $0x218] sm:$0xff]
      %v295 = vld [vmem:[%s0 + $0x220] sm:$0xff]
      %v296 = vld [vmem:[%s0 + $0x228] sm:$0xff]
      %v297 = vld [vmem:[%s0 + $0x230] sm:$0xff]
      %v298 = vld [vmem:[%s0 + $0x238] sm:$0xff]
      %v299 = vld [vmem:[%s0 + $0x240] sm:$0xff]
      %v300 = vld [vmem:[%s0 + $0x248] sm:$0xff]
      %v301 = vld [vmem:[%s0 + $0x250] sm:$0xff]
      %v302 = vld [vmem:[%s0 + $0x258] sm:$0xff]
      %v303 = vld [vmem:[%s0 + $0x260] sm:$0xff]
      %v304 = vld [vmem:[%s0 + $0x268] sm:$0xff]
      %v305 = vld [vmem:[%s0 + $0x270] sm:$0xff]
      %v306 = vld [vmem:[%s0 + $0x278] sm:$0xff]
      %v307 = vld [vmem:[%s0 + $0x280] sm:$0xff]
      %v308 = vld [vmem:[%s0 + $0x288] sm:$0xff]
      %v309 = vld [vmem:[%s0 + $0x290] sm:$0xff]
      %v310 = vld [vmem:[%s0 + $0x298] sm:$0xff]
      %v311 = vld [vmem:[%s0 + $0x2a0] sm:$0xff]
      %v312 = vld [vmem:[%s0 + $0x2a8] sm:$0xff]
      %v313 = vld [vmem:[%s0 + $0x2b0] sm:$0xff]
      %v314 = vld [vmem:[%s0 + $0x2b8] sm:$0xff]
      %v315 = vld [vmem:[%s0 + $0x2c0] sm:$0xff]
      %v316 = vld [vmem:[%s0 + $0x2c8] sm:$0xff]
      %v317 = vld [vmem:[%s0 + $0x2d0] sm:$0xff]
      %v318 = vld [vmem:[%s0 + $0x2d8] sm:$0xff]
      %v319 = vld [vmem:[%s0 + $0x2e0] sm:$0xff]
      %v320 = vld [vmem:[%s0 + $0x2e8] sm:$0xff]
      %v321 = vld [vmem:[%s0 + $0x2f0] sm:$0xff]
      %v322 = vld [vmem:[%s0 + $0x2f8] sm:$0xff]
      %v323 = vld [vmem:[%s0 + $0x300] sm:$0xff]
      %v324 = vld [vmem:[%s0 + $0x308] sm:$0xff]
      %v325 = vld [vmem:[%s0 + $0x310] sm:$0xff]
      %v326 = vld [vmem:[%s0 + $0x318] sm:$0xff]
      %v327 = vld [vmem:[%s0 + $0x320] sm:$0xff]
      %v328 = vld [vmem:[%s0 + $0x328] sm:$0xff]
      %v329 = vld [vmem:[%s0 + $0x330] sm:$0xff]
      %v330 = vld [vmem:[%s0 + $0x338] sm:$0xff]
      %v331 = vld [vmem:[%s0 + $0x340] sm:$0xff]
      %v332 = vld [vmem:[%s0 + $0x348] sm:$0xff]
      %v333 = vld [vmem:[%s0 + $0x350] sm:$0xff]
      %v334 = vld [vmem:[%s0 + $0x358] sm:$0xff]
      %v335 = vld [vmem:[%s0 + $0x360] sm:$0xff]
      %v336 = vld [vmem:[%s0 + $0x368] sm:$0xff]
      %v337 = vld [vmem:[%s0 + $0x370] sm:$0xff]
      %v338 = vld [vmem:[%s0 + $0x378] sm:$0xff]
      %v339 = vld [vmem:[%s0 + $0x380] sm:$0xff]
      %v340 = vld [vmem:[%s0 + $0x388] sm:$0xff]
      %v341 = vld [vmem:[%s0 + $0x390] sm:$0xff]
      %v342 = vld [vmem:[%s0 + $0x398] sm:$0xff]
      %v343 = vld [vmem:[%s0 + $0x3a0] sm:$0xff]
      %v344 = vld [vmem:[%s0 + $0x3a8] sm:$0xff]
      %v345 = vld [vmem:[%s0 + $0x3b0] sm:$0xff]
      %v346 = vld [vmem:[%s0 + $0x3b8] sm:$0xff]
      %v347 = vld [vmem:[%s0 + $0x3c0] sm:$0xff]
      %v348 = vld [vmem:[%s0 + $0x3c8] sm:$0xff]
      %v349 = vld [vmem:[%s0 + $0x3d0] sm:$0xff]
      %v350 = vld [vmem:[%s0 + $0x3d8] sm:$0xff]
      %v351 = vld [vmem:[%s0 + $0x3e0] sm:$0xff]
      %v352 = vld [vmem:[%s0 + $0x3e8] sm:$0xff]
      %v353 = vld [vmem:[%s0 + $0x3f0] sm:$0xff]
      %v354 = vld [vmem:[%s0 + $0x3f8] sm:$0xff]
      %v355 = vld [vmem:[%s0 + $0x400] sm:$0xff]
      %v356 = vld [vmem:[%s0 + $0x408] sm:$0xff]
      %v357 = vld [vmem:[%s0 + $0x410] sm:$0xff]
      %v358 = vld [vmem:[%s0 + $0x418] sm:$0xff]
      %v359 = vld [vmem:[%s0 + $0x420] sm:$0xff]
      %v360 = vld [vmem:[%s0 + $0x428] sm:$0xff]
      %v361 = vld [vmem:[%s0 + $0x430] sm:$0xff]
      %v362 = vld [vmem:[%s0 + $0x438] sm:$0xff]
      %v363 = vld [vmem:[%s0 + $0x440] sm:$0xff]
      %v364 = vld [vmem:[%s0 + $0x448] sm:$0xff]
      %v365 = vld [vmem:[%s0 + $0x450] sm:$0xff]
      %v366 = vld [vmem:[%s0 + $0x458] sm:$0xff]
      %v367 = vld [vmem:[%s0 + $0x460] sm:$0xff]
      %v368 = vld [vmem:[%s0 + $0x468] sm:$0xff]
      %v369 = vld [vmem:[%s0 + $0x470] sm:$0xff]
      %v370 = vld [vmem:[%s0 + $0x478] sm:$0xff]
      %v371 = vld [vmem:[%s0 + $0x480] sm:$0xff]
      %v372 = vld [vmem:[%s0 + $0x488] sm:$0xff]
      %v373 = vld [vmem:[%s0 + $0x490] sm:$0xff]
      %v374 = vld [vmem:[%s0 + $0x498] sm:$0xff]
      %v375 = vld [vmem:[%s0 + $0x4a0] sm:$0xff]
      %v376 = vld [vmem:[%s0 + $0x4a8] sm:$0xff]
      %v377 = vld [vmem:[%s0 + $0x4b0] sm:$0xff]
      %v378 = vld [vmem:[%s0 + $0x4b8] sm:$0xff]
      %v379 = vld [vmem:[%s0 + $0x4c0] sm:$0xff]
      %v380 = vld [vmem:[%s0 + $0x4c8] sm:$0xff]
      %v381 = vld [vmem:[%s0 + $0x4d0] sm:$0xff]
      %v382 = vld [vmem:[%s0 + $0x4d8] sm:$0xff]
      %v383 = vld [vmem:[%s0 + $0x4e0] sm:$0xff]
      %v384 = vld [vmem:[%s0 + $0x4e8] sm:$0xff]
      %v385 = vld [vmem:[%s0 + $0x4f0] sm:$0xff]
      %v386 = vld [vmem:[%s0 + $0x4f8] sm:$0xff]
      %v387 = vld [vmem:[%s0 + $0x500] sm:$0xff]
      %v388 = vld [vmem:[%s0 + $0x508] sm:$0xff]
      %v389 = vld [vmem:[%s0 + $0x510] sm:$0xff]
      %v390 = vld [vmem:[%s0 + $0x518] sm:$0xff]
      %v391 = vld [vmem:[%s0 + $0x520] sm:$0xff]
      %v392 = vld [vmem:[%s0 + $0x528] sm:$0xff]
      %v393 = vld [vmem:[%s0 + $0x530] sm:$0xff]
      %v394 = vld [vmem:[%s0 + $0x538] sm:$0xff]
      %v395 = vld [vmem:[%s0 + $0x540] sm:$0xff]
      %v396 = vld [vmem:[%s0 + $0x548] sm:$0xff]
      %v397 = vld [vmem:[%s0 + $0x550] sm:$0xff]
      %v398 = vld [vmem:[%s0 + $0x558] sm:$0xff]
      %v399 = vld [vmem:[%s0 + $0x560] sm:$0xff]
      %v400 = vld [vmem:[%s0 + $0x568] sm:$0xff]
      %v401 = vld [vmem:[%s0 + $0x570] sm:$0xff]
      %v402 = vld [vmem:[%s0 + $0x578] sm:$0xff]
      %v403 = vld [vmem:[%s0 + $0x580] sm:$0xff]
      %v404 = vld [vmem:[%s0 + $0x588] sm:$0xff]
      %v405 = vld [vmem:[%s0 + $0x590] sm:$0xff]
      %v406 = vld [vmem:[%s0 + $0x598] sm:$0xff]
      %v407 = vld [vmem:[%s0 + $0x5a0] sm:$0xff]
      %v408 = vld [vmem:[%s0 + $0x5a8] sm:$0xff]
      %v409 = vld [vmem:[%s0 + $0x5b0] sm:$0xff]
      %v410 = vld [vmem:[%s0 + $0x5b8] sm:$0xff]
      %v411 = vld [vmem:[%s0 + $0x5c0] sm:$0xff]
      %v412 = vld [vmem:[%s0 + $0x5c8] sm:$0xff]
      %v413 = vld [vmem:[%s0 + $0x5d0] sm:$0xff]
      %v414 = vld [vmem:[%s0 + $0x5d8] sm:$0xff]
      %v415 = vld [vmem:[%s0 + $0x5e0] sm:$0xff]
      %v416 = vld [vmem:[%s0 + $0x5e8] sm:$0xff]
      %v417 = vld [vmem:[%s0 + $0x5f0] sm:$0xff]
      %v418 = vld [vmem:[%s0 + $0x5f8] sm:$0xff]
      %v419 = vld [vmem:[%s0 + $0x600] sm:$0xff]
      %v420 = vld [vmem:[%s0 + $0x608] sm:$0xff]
      %v421 = vld [vmem:[%s0 + $0x610] sm:$0xff]
      %v422 = vld [vmem:[%s0 + $0x618] sm:$0xff]
      %v423 = vld [vmem:[%s0 + $0x620] sm:$0xff]
      %v424 = vld [vmem:[%s0 + $0x628] sm:$0xff]
      %v425 = vld [vmem:[%s0 + $0x630] sm:$0xff]
      %v426 = vld [vmem:[%s0 + $0x638] sm:$0xff]
      %v427 = vld [vmem:[%s0 + $0x640] sm:$0xff]
      %v428 = vld [vmem:[%s0 + $0x648] sm:$0xff]
      %v429 = vld [vmem:[%s0 + $0x650] sm:$0xff]
      %v430 = vld [vmem:[%s0 + $0x658] sm:$0xff]
      %v431 = vld [vmem:[%s0 + $0x660] sm:$0xff]
      %v432 = vld [vmem:[%s0 + $0x668] sm:$0xff]
      %v433 = vld [vmem:[%s0 + $0x670] sm:$0xff]
      %v434 = vld [vmem:[%s0 + $0x678] sm:$0xff]
      %v435 = vld [vmem:[%s0 + $0x680] sm:$0xff]
      %v436 = vld [vmem:[%s0 + $0x688] sm:$0xff]
      %v437 = vld [vmem:[%s0 + $0x690] sm:$0xff]
      %v438 = vld [vmem:[%s0 + $0x698] sm:$0xff]
      %v439 = vld [vmem:[%s0 + $0x6a0] sm:$0xff]
      %v440 = vld [vmem:[%s0 + $0x6a8] sm:$0xff]
      %v441 = vld [vmem:[%s0 + $0x6b0] sm:$0xff]
      %v442 = vld [vmem:[%s0 + $0x6b8] sm:$0xff]
      %v443 = vld [vmem:[%s0 + $0x6c0] sm:$0xff]
      %v444 = vld [vmem:[%s0 + $0x6c8] sm:$0xff]
      %v445 = vld [vmem:[%s0 + $0x6d0] sm:$0xff]
      %v446 = vld [vmem:[%s0 + $0x6d8] sm:$0xff]
      %v447 = vld [vmem:[%s0 + $0x6e0] sm:$0xff]
      %v448 = vld [vmem:[%s0 + $0x6e8] sm:$0xff]
      %v449 = vld [vmem:[%s0 + $0x6f0] sm:$0xff]
      %v450 = vld [vmem:[%s0 + $0x6f8] sm:$0xff]
      %v451 = vld [vmem:[%s0 + $0x700] sm:$0xff]
      %v452 = vld [vmem:[%s0 + $0x708] sm:$0xff]
      %v453 = vld [vmem:[%s0 + $0x710] sm:$0xff]
      %v454 = vld [vmem:[%s0 + $0x718] sm:$0xff]
      %v455 = vld [vmem:[%s0 + $0x720] sm:$0xff]
      %v456 = vld [vmem:[%s0 + $0x728] sm:$0xff]
      %v457 = vld [vmem:[%s0 + $0x730] sm:$0xff]
      %v458 = vld [vmem:[%s0 + $0x738] sm:$0xff]
      %v459 = vld [vmem:[%s0 + $0x740] sm:$0xff]
      %v460 = vld [vmem:[%s0 + $0x748] sm:$0xff]
      %v461 = vld [vmem:[%s0 + $0x750] sm:$0xff]
      %v462 = vld [vmem:[%s0 + $0x758] sm:$0xff]
      %v463 = vld [vmem:[%s0 + $0x760] sm:$0xff]
      %v464 = vld [vmem:[%s0 + $0x768] sm:$0xff]
      %v465 = vld [vmem:[%s0 + $0x770] sm:$0xff]
      %v466 = vld [vmem:[%s0 + $0x778] sm:$0xff]
      %v467 = vld [vmem:[%s0 + $0x780] sm:$0xff]
      %v468 = vld [vmem:[%s0 + $0x788] sm:$0xff]
      %v469 = vld [vmem:[%s0 + $0x790] sm:$0xff]
      %v470 = vld [vmem:[%s0 + $0x798] sm:$0xff]
      %v471 = vld [vmem:[%s0 + $0x7a0] sm:$0xff]
      %v472 = vld [vmem:[%s0 + $0x7a8] sm:$0xff]
      %v473 = vld [vmem:[%s0 + $0x7b0] sm:$0xff]
      %v474 = vld [vmem:[%s0 + $0x7b8] sm:$0xff]
      %v475 = vld [vmem:[%s0 + $0x7c0] sm:$0xff]
      %v476 = vld [vmem:[%s0 + $0x7c8] sm:$0xff]
      %v477 = vld [vmem:[%s0 + $0x7d0] sm:$0xff]
      %v478 = vld [vmem:[%s0 + $0x7d8] sm:$0xff]
      %v479 = vld [vmem:[%s0 + $0x7e0] sm:$0xff]
      %v480 = vld [vmem:[%s0 + $0x7e8] sm:$0xff]
      %v481 = vld [vmem:[%s0 + $0x7f0] sm:$0xff]
      %v482 = vld [vmem:[%s0 + $0x7f8] sm:$0xff]
      %v483 = vld [vmem:[%s0 + $0x800] sm:$0xff]
      %v484 = vld [vmem:[%s0 + $0x808] sm:$0xff]
      %v485 = vld [vmem:[%s0 + $0x810] sm:$0xff]
      %v486 = vld [vmem:[%s0 + $0x818] sm:$0xff]
      %v487 = vld [vmem:[%s0 + $0x820] sm:$0xff]
      %v488 = vld [vmem:[%s0 + $0x828] sm:$0xff]
      %v489 = vld [vmem:[%s0 + $0x830] sm:$0xff]
      %v490 = vld [vmem:[%s0 + $0x838] sm:$0xff]
      %v491 = vld [vmem:[%s0 + $0x840] sm:$0xff]
      %v492 = vld [vmem:[%s0 + $0x848] sm:$0xff]
      %v493 = vld [vmem:[%s0 + $0x850] sm:$0xff]
      %v494 = vld [vmem:[%s0 + $0x858] sm:$0xff]
      %v495 = vld [vmem:[%s0 + $0x860] sm:$0xff]
      %v496 = vld [vmem:[%s0 + $0x868] sm:$0xff]
      %v497 = vld [vmem:[%s0 + $0x870] sm:$0xff]
      %v498 = vld [vmem:[%s0 + $0x878] sm:$0xff]
      %v499 = vld [vmem:[%s0 + $0x880] sm:$0xff]
      %v500 = vld [vmem:[%s0 + $0x888] sm:$0xff]
      %v501 = vld [vmem:[%s0 + $0x890] sm:$0xff]
      %v502 = vld [vmem:[%s0 + $0x898] sm:$0xff]
      %v503 = vld [vmem:[%s0 + $0x8a0] sm:$0xff]
      %v504 = vld [vmem:[%s0 + $0x8a8] sm:$0xff]
      %v505 = vld [vmem:[%s0 + $0x8b0] sm:$0xff]
      %v506 = vld [vmem:[%s0 + $0x8b8] sm:$0xff]
      %v507 = vld [vmem:[%s0 + $0x8c0] sm:$0xff]
      %v508 = vld [vmem:[%s0 + $0x8c8] sm:$0xff]
      %v509 = vld [vmem:[%s0 + $0x8d0] sm:$0xff]
      %v510 = vld [vmem:[%s0 + $0x8d8] sm:$0xff]
      %v511 = vld [vmem:[%s0 + $0x8e0] sm:$0xff]
      %v512 = vld [vmem:[%s0 + $0x8e8] sm:$0xff]
      %v513 = vld [vmem:[%s0 + $0x8f0] sm:$0xff]
      %v514 = vld [vmem:[%s0 + $0x8f8] sm:$0xff]
      %v515 = vxor.u32 %v227, 2147483648
      %v516 = vxor.u32 %v228, 2147483648
      %v517 = vxor.u32 %v229, 2147483648
      %v518 = vxor.u32 %v230, 2147483648
      %v519 = vxor.u32 %v231, 2147483648
      %v520 = vxor.u32 %v232, 2147483648
      %v521 = vxor.u32 %v233, 2147483648
      %v522 = vxor.u32 %v234, 2147483648
      %v523 = vxor.u32 %v235, 2147483648
      %v524 = vxor.u32 %v236, 2147483648
      %v525 = vxor.u32 %v237, 2147483648
      %v526 = vxor.u32 %v238, 2147483648
      %v527 = vxor.u32 %v239, 2147483648
      %v528 = vxor.u32 %v240, 2147483648
      %v529 = vxor.u32 %v241, 2147483648
      %v530 = vxor.u32 %v242, 2147483648
      %v531 = vxor.u32 %v243, 2147483648
      %v532 = vxor.u32 %v244, 2147483648
      %v533 = vxor.u32 %v245, 2147483648
      %v534 = vxor.u32 %v246, 2147483648
      %v535 = vxor.u32 %v247, 2147483648
      %v536 = vxor.u32 %v248, 2147483648
      %v537 = vxor.u32 %v249, 2147483648
      %v538 = vxor.u32 %v250, 2147483648
      %v539 = vxor.u32 %v251, 2147483648
      %v540 = vxor.u32 %v252, 2147483648
      %v541 = vxor.u32 %v253, 2147483648
      %v542 = vxor.u32 %v254, 2147483648
      %v543 = vxor.u32 %v255, 2147483648
      %v544 = vxor.u32 %v256, 2147483648
      %v545 = vxor.u32 %v257, 2147483648
      %v546 = vxor.u32 %v258, 2147483648
      %v547 = vxor.u32 %v259, 2147483648
      %v548 = vxor.u32 %v260, 2147483648
      %v549 = vxor.u32 %v261, 2147483648
      %v550 = vxor.u32 %v262, 2147483648
      %v551 = vxor.u32 %v263, 2147483648
      %v552 = vxor.u32 %v264, 2147483648
      %v553 = vxor.u32 %v265, 2147483648
      %v554 = vxor.u32 %v266, 2147483648
      %v555 = vxor.u32 %v267, 2147483648
      %v556 = vxor.u32 %v268, 2147483648
      %v557 = vxor.u32 %v269, 2147483648
      %v558 = vxor.u32 %v270, 2147483648
      %v559 = vxor.u32 %v271, 2147483648
      %v560 = vxor.u32 %v272, 2147483648
      %v561 = vxor.u32 %v273, 2147483648
      %v562 = vxor.u32 %v274, 2147483648
      %v563 = vxor.u32 %v275, 2147483648
      %v564 = vxor.u32 %v276, 2147483648
      %v565 = vxor.u32 %v277, 2147483648
      %v566 = vxor.u32 %v278, 2147483648
      %v567 = vxor.u32 %v279, 2147483648
      %v568 = vxor.u32 %v280, 2147483648
      %v569 = vxor.u32 %v281, 2147483648
      %v570 = vxor.u32 %v282, 2147483648
      %v571 = vxor.u32 %v283, 2147483648
      %v572 = vxor.u32 %v284, 2147483648
      %v573 = vxor.u32 %v285, 2147483648
      %v574 = vxor.u32 %v286, 2147483648
      %v575 = vxor.u32 %v287, 2147483648
      %v576 = vxor.u32 %v288, 2147483648
      %v577 = vxor.u32 %v289, 2147483648
      %v578 = vxor.u32 %v290, 2147483648
      %v579 = vxor.u32 %v291, 2147483648
      %v580 = vxor.u32 %v292, 2147483648
      %v581 = vxor.u32 %v293, 2147483648
      %v582 = vxor.u32 %v294, 2147483648
      %v583 = vxor.u32 %v295, 2147483648
      %v584 = vxor.u32 %v296, 2147483648
      %v585 = vxor.u32 %v297, 2147483648
      %v586 = vxor.u32 %v298, 2147483648
      %v587 = vxor.u32 %v299, 2147483648
      %v588 = vxor.u32 %v300, 2147483648
      %v589 = vxor.u32 %v301, 2147483648
      %v590 = vxor.u32 %v302, 2147483648
      %v591 = vxor.u32 %v303, 2147483648
      %v592 = vxor.u32 %v304, 2147483648
      %v593 = vxor.u32 %v305, 2147483648
      %v594 = vxor.u32 %v306, 2147483648
      %v595 = vxor.u32 %v307, 2147483648
      %v596 = vxor.u32 %v308, 2147483648
      %v597 = vxor.u32 %v309, 2147483648
      %v598 = vxor.u32 %v310, 2147483648
      %v599 = vxor.u32 %v311, 2147483648
      %v600 = vxor.u32 %v312, 2147483648
      %v601 = vxor.u32 %v313, 2147483648
      %v602 = vxor.u32 %v314, 2147483648
      %v603 = vxor.u32 %v315, 2147483648
      %v604 = vxor.u32 %v316, 2147483648
      %v605 = vxor.u32 %v317, 2147483648
      %v606 = vxor.u32 %v318, 2147483648
      %v607 = vxor.u32 %v319, 2147483648
      %v608 = vxor.u32 %v320, 2147483648
      %v609 = vxor.u32 %v321, 2147483648
      %v610 = vxor.u32 %v322, 2147483648
      %v611 = vxor.u32 %v323, 2147483648
      %v612 = vxor.u32 %v324, 2147483648
      %v613 = vxor.u32 %v325, 2147483648
      %v614 = vxor.u32 %v326, 2147483648
      %v615 = vxor.u32 %v327, 2147483648
      %v616 = vxor.u32 %v328, 2147483648
      %v617 = vxor.u32 %v329, 2147483648
      %v618 = vxor.u32 %v330, 2147483648
      %v619 = vxor.u32 %v331, 2147483648
      %v620 = vxor.u32 %v332, 2147483648
      %v621 = vxor.u32 %v333, 2147483648
      %v622 = vxor.u32 %v334, 2147483648
      %v623 = vxor.u32 %v335, 2147483648
      %v624 = vxor.u32 %v336, 2147483648
      %v625 = vxor.u32 %v337, 2147483648
      %v626 = vxor.u32 %v338, 2147483648
      %v627 = vxor.u32 %v339, 2147483648
      %v628 = vxor.u32 %v340, 2147483648
      %v629 = vxor.u32 %v341, 2147483648
      %v630 = vxor.u32 %v342, 2147483648
      %v631 = vxor.u32 %v343, 2147483648
      %v632 = vxor.u32 %v344, 2147483648
      %v633 = vxor.u32 %v345, 2147483648
      %v634 = vxor.u32 %v346, 2147483648
      %v635 = vxor.u32 %v347, 2147483648
      %v636 = vxor.u32 %v348, 2147483648
      %v637 = vxor.u32 %v349, 2147483648
      %v638 = vxor.u32 %v350, 2147483648
      %v639 = vxor.u32 %v351, 2147483648
      %v640 = vxor.u32 %v352, 2147483648
      %v641 = vxor.u32 %v353, 2147483648
      %v642 = vxor.u32 %v354, 2147483648
      %v643 = vxor.u32 %v355, 2147483648
      %v644 = vxor.u32 %v356, 2147483648
      %v645 = vxor.u32 %v357, 2147483648
      %v646 = vxor.u32 %v358, 2147483648
      %v647 = vxor.u32 %v359, 2147483648
      %v648 = vxor.u32 %v360, 2147483648
      %v649 = vxor.u32 %v361, 2147483648
      %v650 = vxor.u32 %v362, 2147483648
      %v651 = vxor.u32 %v363, 2147483648
      %v652 = vxor.u32 %v364, 2147483648
      %v653 = vxor.u32 %v365, 2147483648
      %v654 = vxor.u32 %v366, 2147483648
      %v655 = vxor.u32 %v367, 2147483648
      %v656 = vxor.u32 %v368, 2147483648
      %v657 = vxor.u32 %v369, 2147483648
      %v658 = vxor.u32 %v370, 2147483648
      %v659 = vxor.u32 %v371, 2147483648
      %v660 = vxor.u32 %v372, 2147483648
      %v661 = vxor.u32 %v373, 2147483648
      %v662 = vxor.u32 %v374, 2147483648
      %v663 = vxor.u32 %v375, 2147483648
      %v664 = vxor.u32 %v376, 2147483648
      %v665 = vxor.u32 %v377, 2147483648
      %v666 = vxor.u32 %v378, 2147483648
      %v667 = vxor.u32 %v379, 2147483648
      %v668 = vxor.u32 %v380, 2147483648
      %v669 = vxor.u32 %v381, 2147483648
      %v670 = vxor.u32 %v382, 2147483648
      %v671 = vxor.u32 %v383, 2147483648
      %v672 = vxor.u32 %v384, 2147483648
      %v673 = vxor.u32 %v385, 2147483648
      %v674 = vxor.u32 %v386, 2147483648
      %v675 = vxor.u32 %v387, 2147483648
      %v676 = vxor.u32 %v388, 2147483648
      %v677 = vxor.u32 %v389, 2147483648
      %v678 = vxor.u32 %v390, 2147483648
      %v679 = vxor.u32 %v391, 2147483648
      %v680 = vxor.u32 %v392, 2147483648
      %v681 = vxor.u32 %v393, 2147483648
      %v682 = vxor.u32 %v394, 2147483648
      %v683 = vxor.u32 %v395, 2147483648
      %v684 = vxor.u32 %v396, 2147483648
      %v685 = vxor.u32 %v397, 2147483648
      %v686 = vxor.u32 %v398, 2147483648
      %v687 = vxor.u32 %v399, 2147483648
      %v688 = vxor.u32 %v400, 2147483648
      %v689 = vxor.u32 %v401, 2147483648
      %v690 = vxor.u32 %v402, 2147483648
      %v691 = vxor.u32 %v403, 2147483648
      %v692 = vxor.u32 %v404, 2147483648
      %v693 = vxor.u32 %v405, 2147483648
      %v694 = vxor.u32 %v406, 2147483648
      %v695 = vxor.u32 %v407, 2147483648
      %v696 = vxor.u32 %v408, 2147483648
      %v697 = vxor.u32 %v409, 2147483648
      %v698 = vxor.u32 %v410, 2147483648
      %v699 = vxor.u32 %v411, 2147483648
      %v700 = vxor.u32 %v412, 2147483648
      %v701 = vxor.u32 %v413, 2147483648
      %v702 = vxor.u32 %v414, 2147483648
      %v703 = vxor.u32 %v415, 2147483648
      %v704 = vxor.u32 %v416, 2147483648
      %v705 = vxor.u32 %v417, 2147483648
      %v706 = vxor.u32 %v418, 2147483648
      %v707 = vxor.u32 %v419, 2147483648
      %v708 = vxor.u32 %v420, 2147483648
      %v709 = vxor.u32 %v421, 2147483648
      %v710 = vxor.u32 %v422, 2147483648
      %v711 = vxor.u32 %v423, 2147483648
      %v712 = vxor.u32 %v424, 2147483648
      %v713 = vxor.u32 %v425, 2147483648
      %v714 = vxor.u32 %v426, 2147483648
      %v715 = vxor.u32 %v427, 2147483648
      %v716 = vxor.u32 %v428, 2147483648
      %v717 = vxor.u32 %v429, 2147483648
      %v718 = vxor.u32 %v430, 2147483648
      %v719 = vxor.u32 %v431, 2147483648
      %v720 = vxor.u32 %v432, 2147483648
      %v721 = vxor.u32 %v433, 2147483648
      %v722 = vxor.u32 %v434, 2147483648
      %v723 = vxor.u32 %v435, 2147483648
      %v724 = vxor.u32 %v436, 2147483648
      %v725 = vxor.u32 %v437, 2147483648
      %v726 = vxor.u32 %v438, 2147483648
      %v727 = vxor.u32 %v439, 2147483648
      %v728 = vxor.u32 %v440, 2147483648
      %v729 = vxor.u32 %v441, 2147483648
      %v730 = vxor.u32 %v442, 2147483648
      %v731 = vxor.u32 %v443, 2147483648
      %v732 = vxor.u32 %v444, 2147483648
      %v733 = vxor.u32 %v445, 2147483648
      %v734 = vxor.u32 %v446, 2147483648
      %v735 = vxor.u32 %v447, 2147483648
      %v736 = vxor.u32 %v448, 2147483648
      %v737 = vxor.u32 %v449, 2147483648
      %v738 = vxor.u32 %v450, 2147483648
      %v739 = vxor.u32 %v451, 2147483648
      %v740 = vxor.u32 %v452, 2147483648
      %v741 = vxor.u32 %v453, 2147483648
      %v742 = vxor.u32 %v454, 2147483648
      %v743 = vxor.u32 %v455, 2147483648
      %v744 = vxor.u32 %v456, 2147483648
      %v745 = vxor.u32 %v457, 2147483648
      %v746 = vxor.u32 %v458, 2147483648
      %v747 = vxor.u32 %v459, 2147483648
      %v748 = vxor.u32 %v460, 2147483648
      %v749 = vxor.u32 %v461, 2147483648
      %v750 = vxor.u32 %v462, 2147483648
      %v751 = vxor.u32 %v463, 2147483648
      %v752 = vxor.u32 %v464, 2147483648
      %v753 = vxor.u32 %v465, 2147483648
      %v754 = vxor.u32 %v466, 2147483648
      %v755 = vxor.u32 %v467, 2147483648
      %v756 = vxor.u32 %v468, 2147483648
      %v757 = vxor.u32 %v469, 2147483648
      %v758 = vxor.u32 %v470, 2147483648
      %v759 = vxor.u32 %v471, 2147483648
      %v760 = vxor.u32 %v472, 2147483648
      %v761 = vxor.u32 %v473, 2147483648
      %v762 = vxor.u32 %v474, 2147483648
      %v763 = vxor.u32 %v475, 2147483648
      %v764 = vxor.u32 %v476, 2147483648
      %v765 = vxor.u32 %v477, 2147483648
      %v766 = vxor.u32 %v478, 2147483648
      %v767 = vxor.u32 %v479, 2147483648
      %v768 = vxor.u32 %v480, 2147483648
      %v769 = vxor.u32 %v481, 2147483648
      %v770 = vxor.u32 %v482, 2147483648
      %v771 = vxor.u32 %v483, 2147483648
      %v772 = vxor.u32 %v484, 2147483648
      %v773 = vxor.u32 %v485, 2147483648
      %v774 = vxor.u32 %v486, 2147483648
      %v775 = vxor.u32 %v487, 2147483648
      %v776 = vxor.u32 %v488, 2147483648
      %v777 = vxor.u32 %v489, 2147483648
      %v778 = vxor.u32 %v490, 2147483648
      %v779 = vxor.u32 %v491, 2147483648
      %v780 = vxor.u32 %v492, 2147483648
      %v781 = vxor.u32 %v493, 2147483648
      %v782 = vxor.u32 %v494, 2147483648
      %v783 = vxor.u32 %v495, 2147483648
      %v784 = vxor.u32 %v496, 2147483648
      %v785 = vxor.u32 %v497, 2147483648
      %v786 = vxor.u32 %v498, 2147483648
      %v787 = vxor.u32 %v499, 2147483648
      %v788 = vxor.u32 %v500, 2147483648
      %v789 = vxor.u32 %v501, 2147483648
      %v790 = vxor.u32 %v502, 2147483648
      %v791 = vxor.u32 %v503, 2147483648
      %v792 = vxor.u32 %v504, 2147483648
      %v793 = vxor.u32 %v505, 2147483648
      %v794 = vxor.u32 %v506, 2147483648
      %v795 = vxor.u32 %v507, 2147483648
      %v796 = vxor.u32 %v508, 2147483648
      %v797 = vxor.u32 %v509, 2147483648
      %v798 = vxor.u32 %v510, 2147483648
      %v799 = vxor.u32 %v511, 2147483648
      %v800 = vxor.u32 %v512, 2147483648
      %v801 = vxor.u32 %v513, 2147483648
      %v802 = vxor.u32 %v514, 2147483648
      %v803 = vmul.f32 %v515, 1.442695
      %v804 = vpow.pop %v803
      %v805 = vmul.f32 %v516, 1.442695
      %v806 = vpow.pop %v805
      %v807 = vmul.f32 %v517, 1.442695
      %v808 = vpow.pop %v807
      %v809 = vmul.f32 %v518, 1.442695
      %v810 = vpow.pop %v809
      %v811 = vmul.f32 %v519, 1.442695
      %v812 = vpow.pop %v811
      %v813 = vmul.f32 %v520, 1.442695
      %v814 = vpow.pop %v813
      %v815 = vmul.f32 %v521, 1.442695
      %v816 = vpow.pop %v815
      %v817 = vmul.f32 %v522, 1.442695
      %v818 = vpow.pop %v817
      %v819 = vmul.f32 %v523, 1.442695
      %v820 = vpow.pop %v819
      %v821 = vmul.f32 %v524, 1.442695
      %v822 = vpow.pop %v821
      %v823 = vmul.f32 %v525, 1.442695
      %v824 = vpow.pop %v823
      %v825 = vmul.f32 %v526, 1.442695
      %v826 = vpow.pop %v825
      %v827 = vmul.f32 %v527, 1.442695
      %v828 = vpow.pop %v827
      %v829 = vmul.f32 %v528, 1.442695
      %v830 = vpow.pop %v829
      %v831 = vmul.f32 %v529, 1.442695
      %v832 = vpow.pop %v831
      %v833 = vmul.f32 %v530, 1.442695
      %v834 = vpow.pop %v833
      %v835 = vmul.f32 %v531, 1.442695
      %v836 = vpow.pop %v835
      %v837 = vmul.f32 %v532, 1.442695
      %v838 = vpow.pop %v837
      %v839 = vmul.f32 %v533, 1.442695
      %v840 = vpow.pop %v839
      %v841 = vmul.f32 %v534, 1.442695
      %v842 = vpow.pop %v841
      %v843 = vmul.f32 %v535, 1.442695
      %v844 = vpow.pop %v843
      %v845 = vmul.f32 %v536, 1.442695
      %v846 = vpow.pop %v845
      %v847 = vmul.f32 %v537, 1.442695
      %v848 = vpow.pop %v847
      %v849 = vmul.f32 %v538, 1.442695
      %v850 = vpow.pop %v849
      %v851 = vmul.f32 %v539, 1.442695
      %v852 = vpow.pop %v851
      %v853 = vmul.f32 %v540, 1.442695
      %v854 = vpow.pop %v853
      %v855 = vmul.f32 %v541, 1.442695
      %v856 = vpow.pop %v855
      %v857 = vmul.f32 %v542, 1.442695
      %v858 = vpow.pop %v857
      %v859 = vmul.f32 %v543, 1.442695
      %v860 = vpow.pop %v859
      %v861 = vmul.f32 %v544, 1.442695
      %v862 = vpow.pop %v861
      %v863 = vmul.f32 %v545, 1.442695
      %v864 = vpow.pop %v863
      %v865 = vmul.f32 %v546, 1.442695
      %v866 = vpow.pop %v865
      %v867 = vmul.f32 %v547, 1.442695
      %v868 = vpow.pop %v867
      %v869 = vmul.f32 %v548, 1.442695
      %v870 = vpow.pop %v869
      %v871 = vmul.f32 %v549, 1.442695
      %v872 = vpow.pop %v871
      %v873 = vmul.f32 %v550, 1.442695
      %v874 = vpow.pop %v873
      %v875 = vmul.f32 %v551, 1.442695
      %v876 = vpow.pop %v875
      %v877 = vmul.f32 %v552, 1.442695
      %v878 = vpow.pop %v877
      %v879 = vmul.f32 %v553, 1.442695
      %v880 = vpow.pop %v879
      %v881 = vmul.f32 %v554, 1.442695
      %v882 = vpow.pop %v881
      %v883 = vmul.f32 %v555, 1.442695
      %v884 = vpow.pop %v883
      %v885 = vmul.f32 %v556, 1.442695
      %v886 = vpow.pop %v885
      %v887 = vmul.f32 %v557, 1.442695
      %v888 = vpow.pop %v887
      %v889 = vmul.f32 %v558, 1.442695
      %v890 = vpow.pop %v889
      %v891 = vmul.f32 %v559, 1.442695
      %v892 = vpow.pop %v891
      %v893 = vmul.f32 %v560, 1.442695
      %v894 = vpow.pop %v893
      %v895 = vmul.f32 %v561, 1.442695
      %v896 = vpow.pop %v895
      %v897 = vmul.f32 %v562, 1.442695
      %v898 = vpow.pop %v897
      %v899 = vmul.f32 %v563, 1.442695
      %v900 = vpow.pop %v899
      %v901 = vmul.f32 %v564, 1.442695
      %v902 = vpow.pop %v901
      %v903 = vmul.f32 %v565, 1.442695
      %v904 = vpow.pop %v903
      %v905 = vmul.f32 %v566, 1.442695
      %v906 = vpow.pop %v905
      %v907 = vmul.f32 %v567, 1.442695
      %v908 = vpow.pop %v907
      %v909 = vmul.f32 %v568, 1.442695
      %v910 = vpow.pop %v909
      %v911 = vmul.f32 %v569, 1.442695
      %v912 = vpow.pop %v911
      %v913 = vmul.f32 %v570, 1.442695
      %v914 = vpow.pop %v913
      %v915 = vmul.f32 %v571, 1.442695
      %v916 = vpow.pop %v915
      %v917 = vmul.f32 %v572, 1.442695
      %v918 = vpow.pop %v917
      %v919 = vmul.f32 %v573, 1.442695
      %v920 = vpow.pop %v919
      %v921 = vmul.f32 %v574, 1.442695
      %v922 = vpow.pop %v921
      %v923 = vmul.f32 %v575, 1.442695
      %v924 = vpow.pop %v923
      %v925 = vmul.f32 %v576, 1.442695
      %v926 = vpow.pop %v925
      %v927 = vmul.f32 %v577, 1.442695
      %v928 = vpow.pop %v927
      %v929 = vmul.f32 %v578, 1.442695
      %v930 = vpow.pop %v929
      %v931 = vmul.f32 %v579, 1.442695
      %v932 = vpow.pop %v931
      %v933 = vmul.f32 %v580, 1.442695
      %v934 = vpow.pop %v933
      %v935 = vmul.f32 %v581, 1.442695
      %v936 = vpow.pop %v935
      %v937 = vmul.f32 %v582, 1.442695
      %v938 = vpow.pop %v937
      %v939 = vmul.f32 %v583, 1.442695
      %v940 = vpow.pop %v939
      %v941 = vmul.f32 %v584, 1.442695
      %v942 = vpow.pop %v941
      %v943 = vmul.f32 %v585, 1.442695
      %v944 = vpow.pop %v943
      %v945 = vmul.f32 %v586, 1.442695
      %v946 = vpow.pop %v945
      %v947 = vmul.f32 %v587, 1.442695
      %v948 = vpow.pop %v947
      %v949 = vmul.f32 %v588, 1.442695
      %v950 = vpow.pop %v949
      %v951 = vmul.f32 %v589, 1.442695
      %v952 = vpow.pop %v951
      %v953 = vmul.f32 %v590, 1.442695
      %v954 = vpow.pop %v953
      %v955 = vmul.f32 %v591, 1.442695
      %v956 = vpow.pop %v955
      %v957 = vmul.f32 %v592, 1.442695
      %v958 = vpow.pop %v957
      %v959 = vmul.f32 %v593, 1.442695
      %v960 = vpow.pop %v959
      %v961 = vmul.f32 %v594, 1.442695
      %v962 = vpow.pop %v961
      %v963 = vmul.f32 %v595, 1.442695
      %v964 = vpow.pop %v963
      %v965 = vmul.f32 %v596, 1.442695
      %v966 = vpow.pop %v965
      %v967 = vmul.f32 %v597, 1.442695
      %v968 = vpow.pop %v967
      %v969 = vmul.f32 %v598, 1.442695
      %v970 = vpow.pop %v969
      %v971 = vmul.f32 %v599, 1.442695
      %v972 = vpow.pop %v971
      %v973 = vmul.f32 %v600, 1.442695
      %v974 = vpow.pop %v973
      %v975 = vmul.f32 %v601, 1.442695
      %v976 = vpow.pop %v975
      %v977 = vmul.f32 %v602, 1.442695
      %v978 = vpow.pop %v977
      %v979 = vmul.f32 %v603, 1.442695
      %v980 = vpow.pop %v979
      %v981 = vmul.f32 %v604, 1.442695
      %v982 = vpow.pop %v981
      %v983 = vmul.f32 %v605, 1.442695
      %v984 = vpow.pop %v983
      %v985 = vmul.f32 %v606, 1.442695
      %v986 = vpow.pop %v985
      %v987 = vmul.f32 %v607, 1.442695
      %v988 = vpow.pop %v987
      %v989 = vmul.f32 %v608, 1.442695
      %v990 = vpow.pop %v989
      %v991 = vmul.f32 %v609, 1.442695
      %v992 = vpow.pop %v991
      %v993 = vmul.f32 %v610, 1.442695
      %v994 = vpow.pop %v993
      %v995 = vmul.f32 %v611, 1.442695
      %v996 = vpow.pop %v995
      %v997 = vmul.f32 %v612, 1.442695
      %v998 = vpow.pop %v997
      %v999 = vmul.f32 %v613, 1.442695
      %v1000 = vpow.pop %v999
      %v1001 = vmul.f32 %v614, 1.442695
      %v1002 = vpow.pop %v1001
      %v1003 = vmul.f32 %v615, 1.442695
      %v1004 = vpow.pop %v1003
      %v1005 = vmul.f32 %v616, 1.442695
      %v1006 = vpow.pop %v1005
      %v1007 = vmul.f32 %v617, 1.442695
      %v1008 = vpow.pop %v1007
      %v1009 = vmul.f32 %v618, 1.442695
      %v1010 = vpow.pop %v1009
      %v1011 = vmul.f32 %v619, 1.442695
      %v1012 = vpow.pop %v1011
      %v1013 = vmul.f32 %v620, 1.442695
      %v1014 = vpow.pop %v1013
      %v1015 = vmul.f32 %v621, 1.442695
      %v1016 = vpow.pop %v1015
      %v1017 = vmul.f32 %v622, 1.442695
      %v1018 = vpow.pop %v1017
      %v1019 = vmul.f32 %v623, 1.442695
      %v1020 = vpow.pop %v1019
      %v1021 = vmul.f32 %v624, 1.442695
      %v1022 = vpow.pop %v1021
      %v1023 = vmul.f32 %v625, 1.442695
      %v1024 = vpow.pop %v1023
      %v1025 = vmul.f32 %v626, 1.442695
      %v1026 = vpow.pop %v1025
      %v1027 = vmul.f32 %v627, 1.442695
      %v1028 = vpow.pop %v1027
      %v1029 = vmul.f32 %v628, 1.442695
      %v1030 = vpow.pop %v1029
      %v1031 = vmul.f32 %v629, 1.442695
      %v1032 = vpow.pop %v1031
      %v1033 = vmul.f32 %v630, 1.442695
      %v1034 = vpow.pop %v1033
      %v1035 = vmul.f32 %v631, 1.442695
      %v1036 = vpow.pop %v1035
      %v1037 = vmul.f32 %v632, 1.442695
      %v1038 = vpow.pop %v1037
      %v1039 = vmul.f32 %v633, 1.442695
      %v1040 = vpow.pop %v1039
      %v1041 = vmul.f32 %v634, 1.442695
      %v1042 = vpow.pop %v1041
      %v1043 = vmul.f32 %v635, 1.442695
      %v1044 = vpow.pop %v1043
      %v1045 = vmul.f32 %v636, 1.442695
      %v1046 = vpow.pop %v1045
      %v1047 = vmul.f32 %v637, 1.442695
      %v1048 = vpow.pop %v1047
      %v1049 = vmul.f32 %v638, 1.442695
      %v1050 = vpow.pop %v1049
      %v1051 = vmul.f32 %v639, 1.442695
      %v1052 = vpow.pop %v1051
      %v1053 = vmul.f32 %v640, 1.442695
      %v1054 = vpow.pop %v1053
      %v1055 = vmul.f32 %v641, 1.442695
      %v1056 = vpow.pop %v1055
      %v1057 = vmul.f32 %v642, 1.442695
      %v1058 = vpow.pop %v1057
      %v1059 = vmul.f32 %v643, 1.442695
      %v1060 = vpow.pop %v1059
      %v1061 = vmul.f32 %v644, 1.442695
      %v1062 = vpow.pop %v1061
      %v1063 = vmul.f32 %v645, 1.442695
      %v1064 = vpow.pop %v1063
      %v1065 = vmul.f32 %v646, 1.442695
      %v1066 = vpow.pop %v1065
      %v1067 = vmul.f32 %v647, 1.442695
      %v1068 = vpow.pop %v1067
      %v1069 = vmul.f32 %v648, 1.442695
      %v1070 = vpow.pop %v1069
      %v1071 = vmul.f32 %v649, 1.442695
      %v1072 = vpow.pop %v1071
      %v1073 = vmul.f32 %v650, 1.442695
      %v1074 = vpow.pop %v1073
      %v1075 = vmul.f32 %v651, 1.442695
      %v1076 = vpow.pop %v1075
      %v1077 = vmul.f32 %v652, 1.442695
      %v1078 = vpow.pop %v1077
      %v1079 = vmul.f32 %v653, 1.442695
      %v1080 = vpow.pop %v1079
      %v1081 = vmul.f32 %v654, 1.442695
      %v1082 = vpow.pop %v1081
      %v1083 = vmul.f32 %v655, 1.442695
      %v1084 = vpow.pop %v1083
      %v1085 = vmul.f32 %v656, 1.442695
      %v1086 = vpow.pop %v1085
      %v1087 = vmul.f32 %v657, 1.442695
      %v1088 = vpow.pop %v1087
      %v1089 = vmul.f32 %v658, 1.442695
      %v1090 = vpow.pop %v1089
      %v1091 = vmul.f32 %v659, 1.442695
      %v1092 = vpow.pop %v1091
      %v1093 = vmul.f32 %v660, 1.442695
      %v1094 = vpow.pop %v1093
      %v1095 = vmul.f32 %v661, 1.442695
      %v1096 = vpow.pop %v1095
      %v1097 = vmul.f32 %v662, 1.442695
      %v1098 = vpow.pop %v1097
      %v1099 = vmul.f32 %v663, 1.442695
      %v1100 = vpow.pop %v1099
      %v1101 = vmul.f32 %v664, 1.442695
      %v1102 = vpow.pop %v1101
      %v1103 = vmul.f32 %v665, 1.442695
      %v1104 = vpow.pop %v1103
      %v1105 = vmul.f32 %v666, 1.442695
      %v1106 = vpow.pop %v1105
      %v1107 = vmul.f32 %v667, 1.442695
      %v1108 = vpow.pop %v1107
      %v1109 = vmul.f32 %v668, 1.442695
      %v1110 = vpow.pop %v1109
      %v1111 = vmul.f32 %v669, 1.442695
      %v1112 = vpow.pop %v1111
      %v1113 = vmul.f32 %v670, 1.442695
      %v1114 = vpow.pop %v1113
      %v1115 = vmul.f32 %v671, 1.442695
      %v1116 = vpow.pop %v1115
      %v1117 = vmul.f32 %v672, 1.442695
      %v1118 = vpow.pop %v1117
      %v1119 = vmul.f32 %v673, 1.442695
      %v1120 = vpow.pop %v1119
      %v1121 = vmul.f32 %v674, 1.442695
      %v1122 = vpow.pop %v1121
      %v1123 = vmul.f32 %v675, 1.442695
      %v1124 = vpow.pop %v1123
      %v1125 = vmul.f32 %v676, 1.442695
      %v1126 = vpow.pop %v1125
      %v1127 = vmul.f32 %v677, 1.442695
      %v1128 = vpow.pop %v1127
      %v1129 = vmul.f32 %v678, 1.442695
      %v1130 = vpow.pop %v1129
      %v1131 = vmul.f32 %v679, 1.442695
      %v1132 = vpow.pop %v1131
      %v1133 = vmul.f32 %v680, 1.442695
      %v1134 = vpow.pop %v1133
      %v1135 = vmul.f32 %v681, 1.442695
      %v1136 = vpow.pop %v1135
      %v1137 = vmul.f32 %v682, 1.442695
      %v1138 = vpow.pop %v1137
      %v1139 = vmul.f32 %v683, 1.442695
      %v1140 = vpow.pop %v1139
      %v1141 = vmul.f32 %v684, 1.442695
      %v1142 = vpow.pop %v1141
      %v1143 = vmul.f32 %v685, 1.442695
      %v1144 = vpow.pop %v1143
      %v1145 = vmul.f32 %v686, 1.442695
      %v1146 = vpow.pop %v1145
      %v1147 = vmul.f32 %v687, 1.442695
      %v1148 = vpow.pop %v1147
      %v1149 = vmul.f32 %v688, 1.442695
      %v1150 = vpow.pop %v1149
      %v1151 = vmul.f32 %v689, 1.442695
      %v1152 = vpow.pop %v1151
      %v1153 = vmul.f32 %v690, 1.442695
      %v1154 = vpow.pop %v1153
      %v1155 = vmul.f32 %v691, 1.442695
      %v1156 = vpow.pop %v1155
      %v1157 = vmul.f32 %v692, 1.442695
      %v1158 = vpow.pop %v1157
      %v1159 = vmul.f32 %v693, 1.442695
      %v1160 = vpow.pop %v1159
      %v1161 = vmul.f32 %v694, 1.442695
      %v1162 = vpow.pop %v1161
      %v1163 = vmul.f32 %v695, 1.442695
      %v1164 = vpow.pop %v1163
      %v1165 = vmul.f32 %v696, 1.442695
      %v1166 = vpow.pop %v1165
      %v1167 = vmul.f32 %v697, 1.442695
      %v1168 = vpow.pop %v1167
      %v1169 = vmul.f32 %v698, 1.442695
      %v1170 = vpow.pop %v1169
      %v1171 = vmul.f32 %v699, 1.442695
      %v1172 = vpow.pop %v1171
      %v1173 = vmul.f32 %v700, 1.442695
      %v1174 = vpow.pop %v1173
      %v1175 = vmul.f32 %v701, 1.442695
      %v1176 = vpow.pop %v1175
      %v1177 = vmul.f32 %v702, 1.442695
      %v1178 = vpow.pop %v1177
      %v1179 = vmul.f32 %v703, 1.442695
      %v1180 = vpow.pop %v1179
      %v1181 = vmul.f32 %v704, 1.442695
      %v1182 = vpow.pop %v1181
      %v1183 = vmul.f32 %v705, 1.442695
      %v1184 = vpow.pop %v1183
      %v1185 = vmul.f32 %v706, 1.442695
      %v1186 = vpow.pop %v1185
      %v1187 = vmul.f32 %v707, 1.442695
      %v1188 = vpow.pop %v1187
      %v1189 = vmul.f32 %v708, 1.442695
      %v1190 = vpow.pop %v1189
      %v1191 = vmul.f32 %v709, 1.442695
      %v1192 = vpow.pop %v1191
      %v1193 = vmul.f32 %v710, 1.442695
      %v1194 = vpow.pop %v1193
      %v1195 = vmul.f32 %v711, 1.442695
      %v1196 = vpow.pop %v1195
      %v1197 = vmul.f32 %v712, 1.442695
      %v1198 = vpow.pop %v1197
      %v1199 = vmul.f32 %v713, 1.442695
      %v1200 = vpow.pop %v1199
      %v1201 = vmul.f32 %v714, 1.442695
      %v1202 = vpow.pop %v1201
      %v1203 = vmul.f32 %v715, 1.442695
      %v1204 = vpow.pop %v1203
      %v1205 = vmul.f32 %v716, 1.442695
      %v1206 = vpow.pop %v1205
      %v1207 = vmul.f32 %v717, 1.442695
      %v1208 = vpow.pop %v1207
      %v1209 = vmul.f32 %v718, 1.442695
      %v1210 = vpow.pop %v1209
      %v1211 = vmul.f32 %v719, 1.442695
      %v1212 = vpow.pop %v1211
      %v1213 = vmul.f32 %v720, 1.442695
      %v1214 = vpow.pop %v1213
      %v1215 = vmul.f32 %v721, 1.442695
      %v1216 = vpow.pop %v1215
      %v1217 = vmul.f32 %v722, 1.442695
      %v1218 = vpow.pop %v1217
      %v1219 = vmul.f32 %v723, 1.442695
      %v1220 = vpow.pop %v1219
      %v1221 = vmul.f32 %v724, 1.442695
      %v1222 = vpow.pop %v1221
      %v1223 = vmul.f32 %v725, 1.442695
      %v1224 = vpow.pop %v1223
      %v1225 = vmul.f32 %v726, 1.442695
      %v1226 = vpow.pop %v1225
      %v1227 = vmul.f32 %v727, 1.442695
      %v1228 = vpow.pop %v1227
      %v1229 = vmul.f32 %v728, 1.442695
      %v1230 = vpow.pop %v1229
      %v1231 = vmul.f32 %v729, 1.442695
      %v1232 = vpow.pop %v1231
      %v1233 = vmul.f32 %v730, 1.442695
      %v1234 = vpow.pop %v1233
      %v1235 = vmul.f32 %v731, 1.442695
      %v1236 = vpow.pop %v1235
      %v1237 = vmul.f32 %v732, 1.442695
      %v1238 = vpow.pop %v1237
      %v1239 = vmul.f32 %v733, 1.442695
      %v1240 = vpow.pop %v1239
      %v1241 = vmul.f32 %v734, 1.442695
      %v1242 = vpow.pop %v1241
      %v1243 = vmul.f32 %v735, 1.442695
      %v1244 = vpow.pop %v1243
      %v1245 = vmul.f32 %v736, 1.442695
      %v1246 = vpow.pop %v1245
      %v1247 = vmul.f32 %v737, 1.442695
      %v1248 = vpow.pop %v1247
      %v1249 = vmul.f32 %v738, 1.442695
      %v1250 = vpow.pop %v1249
      %v1251 = vmul.f32 %v739, 1.442695
      %v1252 = vpow.pop %v1251
      %v1253 = vmul.f32 %v740, 1.442695
      %v1254 = vpow.pop %v1253
      %v1255 = vmul.f32 %v741, 1.442695
      %v1256 = vpow.pop %v1255
      %v1257 = vmul.f32 %v742, 1.442695
      %v1258 = vpow.pop %v1257
      %v1259 = vmul.f32 %v743, 1.442695
      %v1260 = vpow.pop %v1259
      %v1261 = vmul.f32 %v744, 1.442695
      %v1262 = vpow.pop %v1261
      %v1263 = vmul.f32 %v745, 1.442695
      %v1264 = vpow.pop %v1263
      %v1265 = vmul.f32 %v746, 1.442695
      %v1266 = vpow.pop %v1265
      %v1267 = vmul.f32 %v747, 1.442695
      %v1268 = vpow.pop %v1267
      %v1269 = vmul.f32 %v748, 1.442695
      %v1270 = vpow.pop %v1269
      %v1271 = vmul.f32 %v749, 1.442695
      %v1272 = vpow.pop %v1271
      %v1273 = vmul.f32 %v750, 1.442695
      %v1274 = vpow.pop %v1273
      %v1275 = vmul.f32 %v751, 1.442695
      %v1276 = vpow.pop %v1275
      %v1277 = vmul.f32 %v752, 1.442695
      %v1278 = vpow.pop %v1277
      %v1279 = vmul.f32 %v753, 1.442695
      %v1280 = vpow.pop %v1279
      %v1281 = vmul.f32 %v754, 1.442695
      %v1282 = vpow.pop %v1281
      %v1283 = vmul.f32 %v755, 1.442695
      %v1284 = vpow.pop %v1283
      %v1285 = vmul.f32 %v756, 1.442695
      %v1286 = vpow.pop %v1285
      %v1287 = vmul.f32 %v757, 1.442695
      %v1288 = vpow.pop %v1287
      %v1289 = vmul.f32 %v758, 1.442695
      %v1290 = vpow.pop %v1289
      %v1291 = vmul.f32 %v759, 1.442695
      %v1292 = vpow.pop %v1291
      %v1293 = vmul.f32 %v760, 1.442695
      %v1294 = vpow.pop %v1293
      %v1295 = vmul.f32 %v761, 1.442695
      %v1296 = vpow.pop %v1295
      %v1297 = vmul.f32 %v762, 1.442695
      %v1298 = vpow.pop %v1297
      %v1299 = vmul.f32 %v763, 1.442695
      %v1300 = vpow.pop %v1299
      %v1301 = vmul.f32 %v764, 1.442695
      %v1302 = vpow.pop %v1301
      %v1303 = vmul.f32 %v765, 1.442695
      %v1304 = vpow.pop %v1303
      %v1305 = vmul.f32 %v766, 1.442695
      %v1306 = vpow.pop %v1305
      %v1307 = vmul.f32 %v767, 1.442695
      %v1308 = vpow.pop %v1307
      %v1309 = vmul.f32 %v768, 1.442695
      %v1310 = vpow.pop %v1309
      %v1311 = vmul.f32 %v769, 1.442695
      %v1312 = vpow.pop %v1311
      %v1313 = vmul.f32 %v770, 1.442695
      %v1314 = vpow.pop %v1313
      %v1315 = vmul.f32 %v771, 1.442695
      %v1316 = vpow.pop %v1315
      %v1317 = vmul.f32 %v772, 1.442695
      %v1318 = vpow.pop %v1317
      %v1319 = vmul.f32 %v773, 1.442695
      %v1320 = vpow.pop %v1319
      %v1321 = vmul.f32 %v774, 1.442695
      %v1322 = vpow.pop %v1321
      %v1323 = vmul.f32 %v775, 1.442695
      %v1324 = vpow.pop %v1323
      %v1325 = vmul.f32 %v776, 1.442695
      %v1326 = vpow.pop %v1325
      %v1327 = vmul.f32 %v777, 1.442695
      %v1328 = vpow.pop %v1327
      %v1329 = vmul.f32 %v778, 1.442695
      %v1330 = vpow.pop %v1329
      %v1331 = vmul.f32 %v779, 1.442695
      %v1332 = vpow.pop %v1331
      %v1333 = vmul.f32 %v780, 1.442695
      %v1334 = vpow.pop %v1333
      %v1335 = vmul.f32 %v781, 1.442695
      %v1336 = vpow.pop %v1335
      %v1337 = vmul.f32 %v782, 1.442695
      %v1338 = vpow.pop %v1337
      %v1339 = vmul.f32 %v783, 1.442695
      %v1340 = vpow.pop %v1339
      %v1341 = vmul.f32 %v784, 1.442695
      %v1342 = vpow.pop %v1341
      %v1343 = vmul.f32 %v785, 1.442695
      %v1344 = vpow.pop %v1343
      %v1345 = vmul.f32 %v786, 1.442695
      %v1346 = vpow.pop %v1345
      %v1347 = vmul.f32 %v787, 1.442695
      %v1348 = vpow.pop %v1347
      %v1349 = vmul.f32 %v788, 1.442695
      %v1350 = vpow.pop %v1349
      %v1351 = vmul.f32 %v789, 1.442695
      %v1352 = vpow.pop %v1351
      %v1353 = vmul.f32 %v790, 1.442695
      %v1354 = vpow.pop %v1353
      %v1355 = vmul.f32 %v791, 1.442695
      %v1356 = vpow.pop %v1355
      %v1357 = vmul.f32 %v792, 1.442695
      %v1358 = vpow.pop %v1357
      %v1359 = vmul.f32 %v793, 1.442695
      %v1360 = vpow.pop %v1359
      %v1361 = vmul.f32 %v794, 1.442695
      %v1362 = vpow.pop %v1361
      %v1363 = vmul.f32 %v795, 1.442695
      %v1364 = vpow.pop %v1363
      %v1365 = vmul.f32 %v796, 1.442695
      %v1366 = vpow.pop %v1365
      %v1367 = vmul.f32 %v797, 1.442695
      %v1368 = vpow.pop %v1367
      %v1369 = vmul.f32 %v798, 1.442695
      %v1370 = vpow.pop %v1369
      %v1371 = vmul.f32 %v799, 1.442695
      %v1372 = vpow.pop %v1371
      %v1373 = vmul.f32 %v800, 1.442695
      %v1374 = vpow.pop %v1373
      %v1375 = vmul.f32 %v801, 1.442695
      %v1376 = vpow.pop %v1375
      %v1377 = vmul.f32 %v802, 1.442695
      %v1378 = vpow.pop %v1377
      %v1379 = vadd.f32 %v804, 1.0
      %v1380 = vadd.f32 %v806, 1.0
      %v1381 = vadd.f32 %v808, 1.0
      %v1382 = vadd.f32 %v810, 1.0
      %v1383 = vadd.f32 %v812, 1.0
      %v1384 = vadd.f32 %v814, 1.0
      %v1385 = vadd.f32 %v816, 1.0
      %v1386 = vadd.f32 %v818, 1.0
      %v1387 = vadd.f32 %v820, 1.0
      %v1388 = vadd.f32 %v822, 1.0
      %v1389 = vadd.f32 %v824, 1.0
      %v1390 = vadd.f32 %v826, 1.0
      %v1391 = vadd.f32 %v828, 1.0
      %v1392 = vadd.f32 %v830, 1.0
      %v1393 = vadd.f32 %v832, 1.0
      %v1394 = vadd.f32 %v834, 1.0
      %v1395 = vadd.f32 %v836, 1.0
      %v1396 = vadd.f32 %v838, 1.0
      %v1397 = vadd.f32 %v840, 1.0
      %v1398 = vadd.f32 %v842, 1.0
      %v1399 = vadd.f32 %v844, 1.0
      %v1400 = vadd.f32 %v846, 1.0
      %v1401 = vadd.f32 %v848, 1.0
      %v1402 = vadd.f32 %v850, 1.0
      %v1403 = vadd.f32 %v852, 1.0
      %v1404 = vadd.f32 %v854, 1.0
      %v1405 = vadd.f32 %v856, 1.0
      %v1406 = vadd.f32 %v858, 1.0
      %v1407 = vadd.f32 %v860, 1.0
      %v1408 = vadd.f32 %v862, 1.0
      %v1409 = vadd.f32 %v864, 1.0
      %v1410 = vadd.f32 %v866, 1.0
      %v1411 = vadd.f32 %v868, 1.0
      %v1412 = vadd.f32 %v870, 1.0
      %v1413 = vadd.f32 %v872, 1.0
      %v1414 = vadd.f32 %v874, 1.0
      %v1415 = vadd.f32 %v876, 1.0
      %v1416 = vadd.f32 %v878, 1.0
      %v1417 = vadd.f32 %v880, 1.0
      %v1418 = vadd.f32 %v882, 1.0
      %v1419 = vadd.f32 %v884, 1.0
      %v1420 = vadd.f32 %v886, 1.0
      %v1421 = vadd.f32 %v888, 1.0
      %v1422 = vadd.f32 %v890, 1.0
      %v1423 = vadd.f32 %v892, 1.0
      %v1424 = vadd.f32 %v894, 1.0
      %v1425 = vadd.f32 %v896, 1.0
      %v1426 = vadd.f32 %v898, 1.0
      %v1427 = vadd.f32 %v900, 1.0
      %v1428 = vadd.f32 %v902, 1.0
      %v1429 = vadd.f32 %v904, 1.0
      %v1430 = vadd.f32 %v906, 1.0
      %v1431 = vadd.f32 %v908, 1.0
      %v1432 = vadd.f32 %v910, 1.0
      %v1433 = vadd.f32 %v912, 1.0
      %v1434 = vadd.f32 %v914, 1.0
      %v1435 = vadd.f32 %v916, 1.0
      %v1436 = vadd.f32 %v918, 1.0
      %v1437 = vadd.f32 %v920, 1.0
      %v1438 = vadd.f32 %v922, 1.0
      %v1439 = vadd.f32 %v924, 1.0
      %v1440 = vadd.f32 %v926, 1.0
      %v1441 = vadd.f32 %v928, 1.0
      %v1442 = vadd.f32 %v930, 1.0
      %v1443 = vadd.f32 %v932, 1.0
      %v1444 = vadd.f32 %v934, 1.0
      %v1445 = vadd.f32 %v936, 1.0
      %v1446 = vadd.f32 %v938, 1.0
      %v1447 = vadd.f32 %v940, 1.0
      %v1448 = vadd.f32 %v942, 1.0
      %v1449 = vadd.f32 %v944, 1.0
      %v1450 = vadd.f32 %v946, 1.0
      %v1451 = vadd.f32 %v948, 1.0
      %v1452 = vadd.f32 %v950, 1.0
      %v1453 = vadd.f32 %v952, 1.0
      %v1454 = vadd.f32 %v954, 1.0
      %v1455 = vadd.f32 %v956, 1.0
      %v1456 = vadd.f32 %v958, 1.0
      %v1457 = vadd.f32 %v960, 1.0
      %v1458 = vadd.f32 %v962, 1.0
      %v1459 = vadd.f32 %v964, 1.0
      %v1460 = vadd.f32 %v966, 1.0
      %v1461 = vadd.f32 %v968, 1.0
      %v1462 = vadd.f32 %v970, 1.0
      %v1463 = vadd.f32 %v972, 1.0
      %v1464 = vadd.f32 %v974, 1.0
      %v1465 = vadd.f32 %v976, 1.0
      %v1466 = vadd.f32 %v978, 1.0
      %v1467 = vadd.f32 %v980, 1.0
      %v1468 = vadd.f32 %v982, 1.0
      %v1469 = vadd.f32 %v984, 1.0
      %v1470 = vadd.f32 %v986, 1.0
      %v1471 = vadd.f32 %v988, 1.0
      %v1472 = vadd.f32 %v990, 1.0
      %v1473 = vadd.f32 %v992, 1.0
      %v1474 = vadd.f32 %v994, 1.0
      %v1475 = vadd.f32 %v996, 1.0
      %v1476 = vadd.f32 %v998, 1.0
      %v1477 = vadd.f32 %v1000, 1.0
      %v1478 = vadd.f32 %v1002, 1.0
      %v1479 = vadd.f32 %v1004, 1.0
      %v1480 = vadd.f32 %v1006, 1.0
      %v1481 = vadd.f32 %v1008, 1.0
      %v1482 = vadd.f32 %v1010, 1.0
      %v1483 = vadd.f32 %v1012, 1.0
      %v1484 = vadd.f32 %v1014, 1.0
      %v1485 = vadd.f32 %v1016, 1.0
      %v1486 = vadd.f32 %v1018, 1.0
      %v1487 = vadd.f32 %v1020, 1.0
      %v1488 = vadd.f32 %v1022, 1.0
      %v1489 = vadd.f32 %v1024, 1.0
      %v1490 = vadd.f32 %v1026, 1.0
      %v1491 = vadd.f32 %v1028, 1.0
      %v1492 = vadd.f32 %v1030, 1.0
      %v1493 = vadd.f32 %v1032, 1.0
      %v1494 = vadd.f32 %v1034, 1.0
      %v1495 = vadd.f32 %v1036, 1.0
      %v1496 = vadd.f32 %v1038, 1.0
      %v1497 = vadd.f32 %v1040, 1.0
      %v1498 = vadd.f32 %v1042, 1.0
      %v1499 = vadd.f32 %v1044, 1.0
      %v1500 = vadd.f32 %v1046, 1.0
      %v1501 = vadd.f32 %v1048, 1.0
      %v1502 = vadd.f32 %v1050, 1.0
      %v1503 = vadd.f32 %v1052, 1.0
      %v1504 = vadd.f32 %v1054, 1.0
      %v1505 = vadd.f32 %v1056, 1.0
      %v1506 = vadd.f32 %v1058, 1.0
      %v1507 = vadd.f32 %v1060, 1.0
      %v1508 = vadd.f32 %v1062, 1.0
      %v1509 = vadd.f32 %v1064, 1.0
      %v1510 = vadd.f32 %v1066, 1.0
      %v1511 = vadd.f32 %v1068, 1.0
      %v1512 = vadd.f32 %v1070, 1.0
      %v1513 = vadd.f32 %v1072, 1.0
      %v1514 = vadd.f32 %v1074, 1.0
      %v1515 = vadd.f32 %v1076, 1.0
      %v1516 = vadd.f32 %v1078, 1.0
      %v1517 = vadd.f32 %v1080, 1.0
      %v1518 = vadd.f32 %v1082, 1.0
      %v1519 = vadd.f32 %v1084, 1.0
      %v1520 = vadd.f32 %v1086, 1.0
      %v1521 = vadd.f32 %v1088, 1.0
      %v1522 = vadd.f32 %v1090, 1.0
      %v1523 = vadd.f32 %v1092, 1.0
      %v1524 = vadd.f32 %v1094, 1.0
      %v1525 = vadd.f32 %v1096, 1.0
      %v1526 = vadd.f32 %v1098, 1.0
      %v1527 = vadd.f32 %v1100, 1.0
      %v1528 = vadd.f32 %v1102, 1.0
      %v1529 = vadd.f32 %v1104, 1.0
      %v1530 = vadd.f32 %v1106, 1.0
      %v1531 = vadd.f32 %v1108, 1.0
      %v1532 = vadd.f32 %v1110, 1.0
      %v1533 = vadd.f32 %v1112, 1.0
      %v1534 = vadd.f32 %v1114, 1.0
      %v1535 = vadd.f32 %v1116, 1.0
      %v1536 = vadd.f32 %v1118, 1.0
      %v1537 = vadd.f32 %v1120, 1.0
      %v1538 = vadd.f32 %v1122, 1.0
      %v1539 = vadd.f32 %v1124, 1.0
      %v1540 = vadd.f32 %v1126, 1.0
      %v1541 = vadd.f32 %v1128, 1.0
      %v1542 = vadd.f32 %v1130, 1.0
      %v1543 = vadd.f32 %v1132, 1.0
      %v1544 = vadd.f32 %v1134, 1.0
      %v1545 = vadd.f32 %v1136, 1.0
      %v1546 = vadd.f32 %v1138, 1.0
      %v1547 = vadd.f32 %v1140, 1.0
      %v1548 = vadd.f32 %v1142, 1.0
      %v1549 = vadd.f32 %v1144, 1.0
      %v1550 = vadd.f32 %v1146, 1.0
      %v1551 = vadd.f32 %v1148, 1.0
      %v1552 = vadd.f32 %v1150, 1.0
      %v1553 = vadd.f32 %v1152, 1.0
      %v1554 = vadd.f32 %v1154, 1.0
      %v1555 = vadd.f32 %v1156, 1.0
      %v1556 = vadd.f32 %v1158, 1.0
      %v1557 = vadd.f32 %v1160, 1.0
      %v1558 = vadd.f32 %v1162, 1.0
      %v1559 = vadd.f32 %v1164, 1.0
      %v1560 = vadd.f32 %v1166, 1.0
      %v1561 = vadd.f32 %v1168, 1.0
      %v1562 = vadd.f32 %v1170, 1.0
      %v1563 = vadd.f32 %v1172, 1.0
      %v1564 = vadd.f32 %v1174, 1.0
      %v1565 = vadd.f32 %v1176, 1.0
      %v1566 = vadd.f32 %v1178, 1.0
      %v1567 = vadd.f32 %v1180, 1.0
      %v1568 = vadd.f32 %v1182, 1.0
      %v1569 = vadd.f32 %v1184, 1.0
      %v1570 = vadd.f32 %v1186, 1.0
      %v1571 = vadd.f32 %v1188, 1.0
      %v1572 = vadd.f32 %v1190, 1.0
      %v1573 = vadd.f32 %v1192, 1.0
      %v1574 = vadd.f32 %v1194, 1.0
      %v1575 = vadd.f32 %v1196, 1.0
      %v1576 = vadd.f32 %v1198, 1.0
      %v1577 = vadd.f32 %v1200, 1.0
      %v1578 = vadd.f32 %v1202, 1.0
      %v1579 = vadd.f32 %v1204, 1.0
      %v1580 = vadd.f32 %v1206, 1.0
      %v1581 = vadd.f32 %v1208, 1.0
      %v1582 = vadd.f32 %v1210, 1.0
      %v1583 = vadd.f32 %v1212, 1.0
      %v1584 = vadd.f32 %v1214, 1.0
      %v1585 = vadd.f32 %v1216, 1.0
      %v1586 = vadd.f32 %v1218, 1.0
      %v1587 = vadd.f32 %v1220, 1.0
      %v1588 = vadd.f32 %v1222, 1.0
      %v1589 = vadd.f32 %v1224, 1.0
      %v1590 = vadd.f32 %v1226, 1.0
      %v1591 = vadd.f32 %v1228, 1.0
      %v1592 = vadd.f32 %v1230, 1.0
      %v1593 = vadd.f32 %v1232, 1.0
      %v1594 = vadd.f32 %v1234, 1.0
      %v1595 = vadd.f32 %v1236, 1.0
      %v1596 = vadd.f32 %v1238, 1.0
      %v1597 = vadd.f32 %v1240, 1.0
      %v1598 = vadd.f32 %v1242, 1.0
      %v1599 = vadd.f32 %v1244, 1.0
      %v1600 = vadd.f32 %v1246, 1.0
      %v1601 = vadd.f32 %v1248, 1.0
      %v1602 = vadd.f32 %v1250, 1.0
      %v1603 = vadd.f32 %v1252, 1.0
      %v1604 = vadd.f32 %v1254, 1.0
      %v1605 = vadd.f32 %v1256, 1.0
      %v1606 = vadd.f32 %v1258, 1.0
      %v1607 = vadd.f32 %v1260, 1.0
      %v1608 = vadd.f32 %v1262, 1.0
      %v1609 = vadd.f32 %v1264, 1.0
      %v1610 = vadd.f32 %v1266, 1.0
      %v1611 = vadd.f32 %v1268, 1.0
      %v1612 = vadd.f32 %v1270, 1.0
      %v1613 = vadd.f32 %v1272, 1.0
      %v1614 = vadd.f32 %v1274, 1.0
      %v1615 = vadd.f32 %v1276, 1.0
      %v1616 = vadd.f32 %v1278, 1.0
      %v1617 = vadd.f32 %v1280, 1.0
      %v1618 = vadd.f32 %v1282, 1.0
      %v1619 = vadd.f32 %v1284, 1.0
      %v1620 = vadd.f32 %v1286, 1.0
      %v1621 = vadd.f32 %v1288, 1.0
      %v1622 = vadd.f32 %v1290, 1.0
      %v1623 = vadd.f32 %v1292, 1.0
      %v1624 = vadd.f32 %v1294, 1.0
      %v1625 = vadd.f32 %v1296, 1.0
      %v1626 = vadd.f32 %v1298, 1.0
      %v1627 = vadd.f32 %v1300, 1.0
      %v1628 = vadd.f32 %v1302, 1.0
      %v1629 = vadd.f32 %v1304, 1.0
      %v1630 = vadd.f32 %v1306, 1.0
      %v1631 = vadd.f32 %v1308, 1.0
      %v1632 = vadd.f32 %v1310, 1.0
      %v1633 = vadd.f32 %v1312, 1.0
      %v1634 = vadd.f32 %v1314, 1.0
      %v1635 = vadd.f32 %v1316, 1.0
      %v1636 = vadd.f32 %v1318, 1.0
      %v1637 = vadd.f32 %v1320, 1.0
      %v1638 = vadd.f32 %v1322, 1.0
      %v1639 = vadd.f32 %v1324, 1.0
      %v1640 = vadd.f32 %v1326, 1.0
      %v1641 = vadd.f32 %v1328, 1.0
      %v1642 = vadd.f32 %v1330, 1.0
      %v1643 = vadd.f32 %v1332, 1.0
      %v1644 = vadd.f32 %v1334, 1.0
      %v1645 = vadd.f32 %v1336, 1.0
      %v1646 = vadd.f32 %v1338, 1.0
      %v1647 = vadd.f32 %v1340, 1.0
      %v1648 = vadd.f32 %v1342, 1.0
      %v1649 = vadd.f32 %v1344, 1.0
      %v1650 = vadd.f32 %v1346, 1.0
      %v1651 = vadd.f32 %v1348, 1.0
      %v1652 = vadd.f32 %v1350, 1.0
      %v1653 = vadd.f32 %v1352, 1.0
      %v1654 = vadd.f32 %v1354, 1.0
      %v1655 = vadd.f32 %v1356, 1.0
      %v1656 = vadd.f32 %v1358, 1.0
      %v1657 = vadd.f32 %v1360, 1.0
      %v1658 = vadd.f32 %v1362, 1.0
      %v1659 = vadd.f32 %v1364, 1.0
      %v1660 = vadd.f32 %v1366, 1.0
      %v1661 = vadd.f32 %v1368, 1.0
      %v1662 = vadd.f32 %v1370, 1.0
      %v1663 = vadd.f32 %v1372, 1.0
      %v1664 = vadd.f32 %v1374, 1.0
      %v1665 = vadd.f32 %v1376, 1.0
      %v1666 = vadd.f32 %v1378, 1.0
      %v1667 = vrcp.pop %v1379
      %v1668 = vmul.f32 1.0, %v1667
      %v1669 = vrcp.pop %v1380
      %v1670 = vmul.f32 1.0, %v1669
      %v1671 = vrcp.pop %v1381
      %v1672 = vmul.f32 1.0, %v1671
      %v1673 = vrcp.pop %v1382
      %v1674 = vmul.f32 1.0, %v1673
      %v1675 = vrcp.pop %v1383
      %v1676 = vmul.f32 1.0, %v1675
      %v1677 = vrcp.pop %v1384
      %v1678 = vmul.f32 1.0, %v1677
      %v1679 = vrcp.pop %v1385
      %v1680 = vmul.f32 1.0, %v1679
      %v1681 = vrcp.pop %v1386
      %v1682 = vmul.f32 1.0, %v1681
      %v1683 = vrcp.pop %v1387
      %v1684 = vmul.f32 1.0, %v1683
      %v1685 = vrcp.pop %v1388
      %v1686 = vmul.f32 1.0, %v1685
      %v1687 = vrcp.pop %v1389
      %v1688 = vmul.f32 1.0, %v1687
      %v1689 = vrcp.pop %v1390
      %v1690 = vmul.f32 1.0, %v1689
      %v1691 = vrcp.pop %v1391
      %v1692 = vmul.f32 1.0, %v1691
      %v1693 = vrcp.pop %v1392
      %v1694 = vmul.f32 1.0, %v1693
      %v1695 = vrcp.pop %v1393
      %v1696 = vmul.f32 1.0, %v1695
      %v1697 = vrcp.pop %v1394
      %v1698 = vmul.f32 1.0, %v1697
      %v1699 = vrcp.pop %v1395
      %v1700 = vmul.f32 1.0, %v1699
      %v1701 = vrcp.pop %v1396
      %v1702 = vmul.f32 1.0, %v1701
      %v1703 = vrcp.pop %v1397
      %v1704 = vmul.f32 1.0, %v1703
      %v1705 = vrcp.pop %v1398
      %v1706 = vmul.f32 1.0, %v1705
      %v1707 = vrcp.pop %v1399
      %v1708 = vmul.f32 1.0, %v1707
      %v1709 = vrcp.pop %v1400
      %v1710 = vmul.f32 1.0, %v1709
      %v1711 = vrcp.pop %v1401
      %v1712 = vmul.f32 1.0, %v1711
      %v1713 = vrcp.pop %v1402
      %v1714 = vmul.f32 1.0, %v1713
      %v1715 = vrcp.pop %v1403
      %v1716 = vmul.f32 1.0, %v1715
      %v1717 = vrcp.pop %v1404
      %v1718 = vmul.f32 1.0, %v1717
      %v1719 = vrcp.pop %v1405
      %v1720 = vmul.f32 1.0, %v1719
      %v1721 = vrcp.pop %v1406
      %v1722 = vmul.f32 1.0, %v1721
      %v1723 = vrcp.pop %v1407
      %v1724 = vmul.f32 1.0, %v1723
      %v1725 = vrcp.pop %v1408
      %v1726 = vmul.f32 1.0, %v1725
      %v1727 = vrcp.pop %v1409
      %v1728 = vmul.f32 1.0, %v1727
      %v1729 = vrcp.pop %v1410
      %v1730 = vmul.f32 1.0, %v1729
      %v1731 = vrcp.pop %v1411
      %v1732 = vmul.f32 1.0, %v1731
      %v1733 = vrcp.pop %v1412
      %v1734 = vmul.f32 1.0, %v1733
      %v1735 = vrcp.pop %v1413
      %v1736 = vmul.f32 1.0, %v1735
      %v1737 = vrcp.pop %v1414
      %v1738 = vmul.f32 1.0, %v1737
      %v1739 = vrcp.pop %v1415
      %v1740 = vmul.f32 1.0, %v1739
      %v1741 = vrcp.pop %v1416
      %v1742 = vmul.f32 1.0, %v1741
      %v1743 = vrcp.pop %v1417
      %v1744 = vmul.f32 1.0, %v1743
      %v1745 = vrcp.pop %v1418
      %v1746 = vmul.f32 1.0, %v1745
      %v1747 = vrcp.pop %v1419
      %v1748 = vmul.f32 1.0, %v1747
      %v1749 = vrcp.pop %v1420
      %v1750 = vmul.f32 1.0, %v1749
      %v1751 = vrcp.pop %v1421
      %v1752 = vmul.f32 1.0, %v1751
      %v1753 = vrcp.pop %v1422
      %v1754 = vmul.f32 1.0, %v1753
      %v1755 = vrcp.pop %v1423
      %v1756 = vmul.f32 1.0, %v1755
      %v1757 = vrcp.pop %v1424
      %v1758 = vmul.f32 1.0, %v1757
      %v1759 = vrcp.pop %v1425
      %v1760 = vmul.f32 1.0, %v1759
      %v1761 = vrcp.pop %v1426
      %v1762 = vmul.f32 1.0, %v1761
      %v1763 = vrcp.pop %v1427
      %v1764 = vmul.f32 1.0, %v1763
      %v1765 = vrcp.pop %v1428
      %v1766 = vmul.f32 1.0, %v1765
      %v1767 = vrcp.pop %v1429
      %v1768 = vmul.f32 1.0, %v1767
      %v1769 = vrcp.pop %v1430
      %v1770 = vmul.f32 1.0, %v1769
      %v1771 = vrcp.pop %v1431
      %v1772 = vmul.f32 1.0, %v1771
      %v1773 = vrcp.pop %v1432
      %v1774 = vmul.f32 1.0, %v1773
      %v1775 = vrcp.pop %v1433
      %v1776 = vmul.f32 1.0, %v1775
      %v1777 = vrcp.pop %v1434
      %v1778 = vmul.f32 1.0, %v1777
      %v1779 = vrcp.pop %v1435
      %v1780 = vmul.f32 1.0, %v1779
      %v1781 = vrcp.pop %v1436
      %v1782 = vmul.f32 1.0, %v1781
      %v1783 = vrcp.pop %v1437
      %v1784 = vmul.f32 1.0, %v1783
      %v1785 = vrcp.pop %v1438
      %v1786 = vmul.f32 1.0, %v1785
      %v1787 = vrcp.pop %v1439
      %v1788 = vmul.f32 1.0, %v1787
      %v1789 = vrcp.pop %v1440
      %v1790 = vmul.f32 1.0, %v1789
      %v1791 = vrcp.pop %v1441
      %v1792 = vmul.f32 1.0, %v1791
      %v1793 = vrcp.pop %v1442
      %v1794 = vmul.f32 1.0, %v1793
      %v1795 = vrcp.pop %v1443
      %v1796 = vmul.f32 1.0, %v1795
      %v1797 = vrcp.pop %v1444
      %v1798 = vmul.f32 1.0, %v1797
      %v1799 = vrcp.pop %v1445
      %v1800 = vmul.f32 1.0, %v1799
      %v1801 = vrcp.pop %v1446
      %v1802 = vmul.f32 1.0, %v1801
      %v1803 = vrcp.pop %v1447
      %v1804 = vmul.f32 1.0, %v1803
      %v1805 = vrcp.pop %v1448
      %v1806 = vmul.f32 1.0, %v1805
      %v1807 = vrcp.pop %v1449
      %v1808 = vmul.f32 1.0, %v1807
      %v1809 = vrcp.pop %v1450
      %v1810 = vmul.f32 1.0, %v1809
      %v1811 = vrcp.pop %v1451
      %v1812 = vmul.f32 1.0, %v1811
      %v1813 = vrcp.pop %v1452
      %v1814 = vmul.f32 1.0, %v1813
      %v1815 = vrcp.pop %v1453
      %v1816 = vmul.f32 1.0, %v1815
      %v1817 = vrcp.pop %v1454
      %v1818 = vmul.f32 1.0, %v1817
      %v1819 = vrcp.pop %v1455
      %v1820 = vmul.f32 1.0, %v1819
      %v1821 = vrcp.pop %v1456
      %v1822 = vmul.f32 1.0, %v1821
      %v1823 = vrcp.pop %v1457
      %v1824 = vmul.f32 1.0, %v1823
      %v1825 = vrcp.pop %v1458
      %v1826 = vmul.f32 1.0, %v1825
      %v1827 = vrcp.pop %v1459
      %v1828 = vmul.f32 1.0, %v1827
      %v1829 = vrcp.pop %v1460
      %v1830 = vmul.f32 1.0, %v1829
      %v1831 = vrcp.pop %v1461
      %v1832 = vmul.f32 1.0, %v1831
      %v1833 = vrcp.pop %v1462
      %v1834 = vmul.f32 1.0, %v1833
      %v1835 = vrcp.pop %v1463
      %v1836 = vmul.f32 1.0, %v1835
      %v1837 = vrcp.pop %v1464
      %v1838 = vmul.f32 1.0, %v1837
      %v1839 = vrcp.pop %v1465
      %v1840 = vmul.f32 1.0, %v1839
      %v1841 = vrcp.pop %v1466
      %v1842 = vmul.f32 1.0, %v1841
      %v1843 = vrcp.pop %v1467
      %v1844 = vmul.f32 1.0, %v1843
      %v1845 = vrcp.pop %v1468
      %v1846 = vmul.f32 1.0, %v1845
      %v1847 = vrcp.pop %v1469
      %v1848 = vmul.f32 1.0, %v1847
      %v1849 = vrcp.pop %v1470
      %v1850 = vmul.f32 1.0, %v1849
      %v1851 = vrcp.pop %v1471
      %v1852 = vmul.f32 1.0, %v1851
      %v1853 = vrcp.pop %v1472
      %v1854 = vmul.f32 1.0, %v1853
      %v1855 = vrcp.pop %v1473
      %v1856 = vmul.f32 1.0, %v1855
      %v1857 = vrcp.pop %v1474
      %v1858 = vmul.f32 1.0, %v1857
      %v1859 = vrcp.pop %v1475
      %v1860 = vmul.f32 1.0, %v1859
      %v1861 = vrcp.pop %v1476
      %v1862 = vmul.f32 1.0, %v1861
      %v1863 = vrcp.pop %v1477
      %v1864 = vmul.f32 1.0, %v1863
      %v1865 = vrcp.pop %v1478
      %v1866 = vmul.f32 1.0, %v1865
      %v1867 = vrcp.pop %v1479
      %v1868 = vmul.f32 1.0, %v1867
      %v1869 = vrcp.pop %v1480
      %v1870 = vmul.f32 1.0, %v1869
      %v1871 = vrcp.pop %v1481
      %v1872 = vmul.f32 1.0, %v1871
      %v1873 = vrcp.pop %v1482
      %v1874 = vmul.f32 1.0, %v1873
      %v1875 = vrcp.pop %v1483
      %v1876 = vmul.f32 1.0, %v1875
      %v1877 = vrcp.pop %v1484
      %v1878 = vmul.f32 1.0, %v1877
      %v1879 = vrcp.pop %v1485
      %v1880 = vmul.f32 1.0, %v1879
      %v1881 = vrcp.pop %v1486
      %v1882 = vmul.f32 1.0, %v1881
      %v1883 = vrcp.pop %v1487
      %v1884 = vmul.f32 1.0, %v1883
      %v1885 = vrcp.pop %v1488
      %v1886 = vmul.f32 1.0, %v1885
      %v1887 = vrcp.pop %v1489
      %v1888 = vmul.f32 1.0, %v1887
      %v1889 = vrcp.pop %v1490
      %v1890 = vmul.f32 1.0, %v1889
      %v1891 = vrcp.pop %v1491
      %v1892 = vmul.f32 1.0, %v1891
      %v1893 = vrcp.pop %v1492
      %v1894 = vmul.f32 1.0, %v1893
      %v1895 = vrcp.pop %v1493
      %v1896 = vmul.f32 1.0, %v1895
      %v1897 = vrcp.pop %v1494
      %v1898 = vmul.f32 1.0, %v1897
      %v1899 = vrcp.pop %v1495
      %v1900 = vmul.f32 1.0, %v1899
      %v1901 = vrcp.pop %v1496
      %v1902 = vmul.f32 1.0, %v1901
      %v1903 = vrcp.pop %v1497
      %v1904 = vmul.f32 1.0, %v1903
      %v1905 = vrcp.pop %v1498
      %v1906 = vmul.f32 1.0, %v1905
      %v1907 = vrcp.pop %v1499
      %v1908 = vmul.f32 1.0, %v1907
      %v1909 = vrcp.pop %v1500
      %v1910 = vmul.f32 1.0, %v1909
      %v1911 = vrcp.pop %v1501
      %v1912 = vmul.f32 1.0, %v1911
      %v1913 = vrcp.pop %v1502
      %v1914 = vmul.f32 1.0, %v1913
      %v1915 = vrcp.pop %v1503
      %v1916 = vmul.f32 1.0, %v1915
      %v1917 = vrcp.pop %v1504
      %v1918 = vmul.f32 1.0, %v1917
      %v1919 = vrcp.pop %v1505
      %v1920 = vmul.f32 1.0, %v1919
      %v1921 = vrcp.pop %v1506
      %v1922 = vmul.f32 1.0, %v1921
      %v1923 = vrcp.pop %v1507
      %v1924 = vmul.f32 1.0, %v1923
      %v1925 = vrcp.pop %v1508
      %v1926 = vmul.f32 1.0, %v1925
      %v1927 = vrcp.pop %v1509
      %v1928 = vmul.f32 1.0, %v1927
      %v1929 = vrcp.pop %v1510
      %v1930 = vmul.f32 1.0, %v1929
      %v1931 = vrcp.pop %v1511
      %v1932 = vmul.f32 1.0, %v1931
      %v1933 = vrcp.pop %v1512
      %v1934 = vmul.f32 1.0, %v1933
      %v1935 = vrcp.pop %v1513
      %v1936 = vmul.f32 1.0, %v1935
      %v1937 = vrcp.pop %v1514
      %v1938 = vmul.f32 1.0, %v1937
      %v1939 = vrcp.pop %v1515
      %v1940 = vmul.f32 1.0, %v1939
      %v1941 = vrcp.pop %v1516
      %v1942 = vmul.f32 1.0, %v1941
      %v1943 = vrcp.pop %v1517
      %v1944 = vmul.f32 1.0, %v1943
      %v1945 = vrcp.pop %v1518
      %v1946 = vmul.f32 1.0, %v1945
      %v1947 = vrcp.pop %v1519
      %v1948 = vmul.f32 1.0, %v1947
      %v1949 = vrcp.pop %v1520
      %v1950 = vmul.f32 1.0, %v1949
      %v1951 = vrcp.pop %v1521
      %v1952 = vmul.f32 1.0, %v1951
      %v1953 = vrcp.pop %v1522
      %v1954 = vmul.f32 1.0, %v1953
      %v1955 = vrcp.pop %v1523
      %v1956 = vmul.f32 1.0, %v1955
      %v1957 = vrcp.pop %v1524
      %v1958 = vmul.f32 1.0, %v1957
      %v1959 = vrcp.pop %v1525
      %v1960 = vmul.f32 1.0, %v1959
      %v1961 = vrcp.pop %v1526
      %v1962 = vmul.f32 1.0, %v1961
      %v1963 = vrcp.pop %v1527
      %v1964 = vmul.f32 1.0, %v1963
      %v1965 = vrcp.pop %v1528
      %v1966 = vmul.f32 1.0, %v1965
      %v1967 = vrcp.pop %v1529
      %v1968 = vmul.f32 1.0, %v1967
      %v1969 = vrcp.pop %v1530
      %v1970 = vmul.f32 1.0, %v1969
      %v1971 = vrcp.pop %v1531
      %v1972 = vmul.f32 1.0, %v1971
      %v1973 = vrcp.pop %v1532
      %v1974 = vmul.f32 1.0, %v1973
      %v1975 = vrcp.pop %v1533
      %v1976 = vmul.f32 1.0, %v1975
      %v1977 = vrcp.pop %v1534
      %v1978 = vmul.f32 1.0, %v1977
      %v1979 = vrcp.pop %v1535
      %v1980 = vmul.f32 1.0, %v1979
      %v1981 = vrcp.pop %v1536
      %v1982 = vmul.f32 1.0, %v1981
      %v1983 = vrcp.pop %v1537
      %v1984 = vmul.f32 1.0, %v1983
      %v1985 = vrcp.pop %v1538
      %v1986 = vmul.f32 1.0, %v1985
      %v1987 = vrcp.pop %v1539
      %v1988 = vmul.f32 1.0, %v1987
      %v1989 = vrcp.pop %v1540
      %v1990 = vmul.f32 1.0, %v1989
      %v1991 = vrcp.pop %v1541
      %v1992 = vmul.f32 1.0, %v1991
      %v1993 = vrcp.pop %v1542
      %v1994 = vmul.f32 1.0, %v1993
      %v1995 = vrcp.pop %v1543
      %v1996 = vmul.f32 1.0, %v1995
      %v1997 = vrcp.pop %v1544
      %v1998 = vmul.f32 1.0, %v1997
      %v1999 = vrcp.pop %v1545
      %v2000 = vmul.f32 1.0, %v1999
      %v2001 = vrcp.pop %v1546
      %v2002 = vmul.f32 1.0, %v2001
      %v2003 = vrcp.pop %v1547
      %v2004 = vmul.f32 1.0, %v2003
      %v2005 = vrcp.pop %v1548
      %v2006 = vmul.f32 1.0, %v2005
      %v2007 = vrcp.pop %v1549
      %v2008 = vmul.f32 1.0, %v2007
      %v2009 = vrcp.pop %v1550
      %v2010 = vmul.f32 1.0, %v2009
      %v2011 = vrcp.pop %v1551
      %v2012 = vmul.f32 1.0, %v2011
      %v2013 = vrcp.pop %v1552
      %v2014 = vmul.f32 1.0, %v2013
      %v2015 = vrcp.pop %v1553
      %v2016 = vmul.f32 1.0, %v2015
      %v2017 = vrcp.pop %v1554
      %v2018 = vmul.f32 1.0, %v2017
      %v2019 = vrcp.pop %v1555
      %v2020 = vmul.f32 1.0, %v2019
      %v2021 = vrcp.pop %v1556
      %v2022 = vmul.f32 1.0, %v2021
      %v2023 = vrcp.pop %v1557
      %v2024 = vmul.f32 1.0, %v2023
      %v2025 = vrcp.pop %v1558
      %v2026 = vmul.f32 1.0, %v2025
      %v2027 = vrcp.pop %v1559
      %v2028 = vmul.f32 1.0, %v2027
      %v2029 = vrcp.pop %v1560
      %v2030 = vmul.f32 1.0, %v2029
      %v2031 = vrcp.pop %v1561
      %v2032 = vmul.f32 1.0, %v2031
      %v2033 = vrcp.pop %v1562
      %v2034 = vmul.f32 1.0, %v2033
      %v2035 = vrcp.pop %v1563
      %v2036 = vmul.f32 1.0, %v2035
      %v2037 = vrcp.pop %v1564
      %v2038 = vmul.f32 1.0, %v2037
      %v2039 = vrcp.pop %v1565
      %v2040 = vmul.f32 1.0, %v2039
      %v2041 = vrcp.pop %v1566
      %v2042 = vmul.f32 1.0, %v2041
      %v2043 = vrcp.pop %v1567
      %v2044 = vmul.f32 1.0, %v2043
      %v2045 = vrcp.pop %v1568
      %v2046 = vmul.f32 1.0, %v2045
      %v2047 = vrcp.pop %v1569
      %v2048 = vmul.f32 1.0, %v2047
      %v2049 = vrcp.pop %v1570
      %v2050 = vmul.f32 1.0, %v2049
      %v2051 = vrcp.pop %v1571
      %v2052 = vmul.f32 1.0, %v2051
      %v2053 = vrcp.pop %v1572
      %v2054 = vmul.f32 1.0, %v2053
      %v2055 = vrcp.pop %v1573
      %v2056 = vmul.f32 1.0, %v2055
      %v2057 = vrcp.pop %v1574
      %v2058 = vmul.f32 1.0, %v2057
      %v2059 = vrcp.pop %v1575
      %v2060 = vmul.f32 1.0, %v2059
      %v2061 = vrcp.pop %v1576
      %v2062 = vmul.f32 1.0, %v2061
      %v2063 = vrcp.pop %v1577
      %v2064 = vmul.f32 1.0, %v2063
      %v2065 = vrcp.pop %v1578
      %v2066 = vmul.f32 1.0, %v2065
      %v2067 = vrcp.pop %v1579
      %v2068 = vmul.f32 1.0, %v2067
      %v2069 = vrcp.pop %v1580
      %v2070 = vmul.f32 1.0, %v2069
      %v2071 = vrcp.pop %v1581
      %v2072 = vmul.f32 1.0, %v2071
      %v2073 = vrcp.pop %v1582
      %v2074 = vmul.f32 1.0, %v2073
      %v2075 = vrcp.pop %v1583
      %v2076 = vmul.f32 1.0, %v2075
      %v2077 = vrcp.pop %v1584
      %v2078 = vmul.f32 1.0, %v2077
      %v2079 = vrcp.pop %v1585
      %v2080 = vmul.f32 1.0, %v2079
      %v2081 = vrcp.pop %v1586
      %v2082 = vmul.f32 1.0, %v2081
      %v2083 = vrcp.pop %v1587
      %v2084 = vmul.f32 1.0, %v2083
      %v2085 = vrcp.pop %v1588
      %v2086 = vmul.f32 1.0, %v2085
      %v2087 = vrcp.pop %v1589
      %v2088 = vmul.f32 1.0, %v2087
      %v2089 = vrcp.pop %v1590
      %v2090 = vmul.f32 1.0, %v2089
      %v2091 = vrcp.pop %v1591
      %v2092 = vmul.f32 1.0, %v2091
      %v2093 = vrcp.pop %v1592
      %v2094 = vmul.f32 1.0, %v2093
      %v2095 = vrcp.pop %v1593
      %v2096 = vmul.f32 1.0, %v2095
      %v2097 = vrcp.pop %v1594
      %v2098 = vmul.f32 1.0, %v2097
      %v2099 = vrcp.pop %v1595
      %v2100 = vmul.f32 1.0, %v2099
      %v2101 = vrcp.pop %v1596
      %v2102 = vmul.f32 1.0, %v2101
      %v2103 = vrcp.pop %v1597
      %v2104 = vmul.f32 1.0, %v2103
      %v2105 = vrcp.pop %v1598
      %v2106 = vmul.f32 1.0, %v2105
      %v2107 = vrcp.pop %v1599
      %v2108 = vmul.f32 1.0, %v2107
      %v2109 = vrcp.pop %v1600
      %v2110 = vmul.f32 1.0, %v2109
      %v2111 = vrcp.pop %v1601
      %v2112 = vmul.f32 1.0, %v2111
      %v2113 = vrcp.pop %v1602
      %v2114 = vmul.f32 1.0, %v2113
      %v2115 = vrcp.pop %v1603
      %v2116 = vmul.f32 1.0, %v2115
      %v2117 = vrcp.pop %v1604
      %v2118 = vmul.f32 1.0, %v2117
      %v2119 = vrcp.pop %v1605
      %v2120 = vmul.f32 1.0, %v2119
      %v2121 = vrcp.pop %v1606
      %v2122 = vmul.f32 1.0, %v2121
      %v2123 = vrcp.pop %v1607
      %v2124 = vmul.f32 1.0, %v2123
      %v2125 = vrcp.pop %v1608
      %v2126 = vmul.f32 1.0, %v2125
      %v2127 = vrcp.pop %v1609
      %v2128 = vmul.f32 1.0, %v2127
      %v2129 = vrcp.pop %v1610
      %v2130 = vmul.f32 1.0, %v2129
      %v2131 = vrcp.pop %v1611
      %v2132 = vmul.f32 1.0, %v2131
      %v2133 = vrcp.pop %v1612
      %v2134 = vmul.f32 1.0, %v2133
      %v2135 = vrcp.pop %v1613
      %v2136 = vmul.f32 1.0, %v2135
      %v2137 = vrcp.pop %v1614
      %v2138 = vmul.f32 1.0, %v2137
      %v2139 = vrcp.pop %v1615
      %v2140 = vmul.f32 1.0, %v2139
      %v2141 = vrcp.pop %v1616
      %v2142 = vmul.f32 1.0, %v2141
      %v2143 = vrcp.pop %v1617
      %v2144 = vmul.f32 1.0, %v2143
      %v2145 = vrcp.pop %v1618
      %v2146 = vmul.f32 1.0, %v2145
      %v2147 = vrcp.pop %v1619
      %v2148 = vmul.f32 1.0, %v2147
      %v2149 = vrcp.pop %v1620
      %v2150 = vmul.f32 1.0, %v2149
      %v2151 = vrcp.pop %v1621
      %v2152 = vmul.f32 1.0, %v2151
      %v2153 = vrcp.pop %v1622
      %v2154 = vmul.f32 1.0, %v2153
      %v2155 = vrcp.pop %v1623
      %v2156 = vmul.f32 1.0, %v2155
      %v2157 = vrcp.pop %v1624
      %v2158 = vmul.f32 1.0, %v2157
      %v2159 = vrcp.pop %v1625
      %v2160 = vmul.f32 1.0, %v2159
      %v2161 = vrcp.pop %v1626
      %v2162 = vmul.f32 1.0, %v2161
      %v2163 = vrcp.pop %v1627
      %v2164 = vmul.f32 1.0, %v2163
      %v2165 = vrcp.pop %v1628
      %v2166 = vmul.f32 1.0, %v2165
      %v2167 = vrcp.pop %v1629
      %v2168 = vmul.f32 1.0, %v2167
      %v2169 = vrcp.pop %v1630
      %v2170 = vmul.f32 1.0, %v2169
      %v2171 = vrcp.pop %v1631
      %v2172 = vmul.f32 1.0, %v2171
      %v2173 = vrcp.pop %v1632
      %v2174 = vmul.f32 1.0, %v2173
      %v2175 = vrcp.pop %v1633
      %v2176 = vmul.f32 1.0, %v2175
      %v2177 = vrcp.pop %v1634
      %v2178 = vmul.f32 1.0, %v2177
      %v2179 = vrcp.pop %v1635
      %v2180 = vmul.f32 1.0, %v2179
      %v2181 = vrcp.pop %v1636
      %v2182 = vmul.f32 1.0, %v2181
      %v2183 = vrcp.pop %v1637
      %v2184 = vmul.f32 1.0, %v2183
      %v2185 = vrcp.pop %v1638
      %v2186 = vmul.f32 1.0, %v2185
      %v2187 = vrcp.pop %v1639
      %v2188 = vmul.f32 1.0, %v2187
      %v2189 = vrcp.pop %v1640
      %v2190 = vmul.f32 1.0, %v2189
      %v2191 = vrcp.pop %v1641
      %v2192 = vmul.f32 1.0, %v2191
      %v2193 = vrcp.pop %v1642
      %v2194 = vmul.f32 1.0, %v2193
      %v2195 = vrcp.pop %v1643
      %v2196 = vmul.f32 1.0, %v2195
      %v2197 = vrcp.pop %v1644
      %v2198 = vmul.f32 1.0, %v2197
      %v2199 = vrcp.pop %v1645
      %v2200 = vmul.f32 1.0, %v2199
      %v2201 = vrcp.pop %v1646
      %v2202 = vmul.f32 1.0, %v2201
      %v2203 = vrcp.pop %v1647
      %v2204 = vmul.f32 1.0, %v2203
      %v2205 = vrcp.pop %v1648
      %v2206 = vmul.f32 1.0, %v2205
      %v2207 = vrcp.pop %v1649
      %v2208 = vmul.f32 1.0, %v2207
      %v2209 = vrcp.pop %v1650
      %v2210 = vmul.f32 1.0, %v2209
      %v2211 = vrcp.pop %v1651
      %v2212 = vmul.f32 1.0, %v2211
      %v2213 = vrcp.pop %v1652
      %v2214 = vmul.f32 1.0, %v2213
      %v2215 = vrcp.pop %v1653
      %v2216 = vmul.f32 1.0, %v2215
      %v2217 = vrcp.pop %v1654
      %v2218 = vmul.f32 1.0, %v2217
      %v2219 = vrcp.pop %v1655
      %v2220 = vmul.f32 1.0, %v2219
      %v2221 = vrcp.pop %v1656
      %v2222 = vmul.f32 1.0, %v2221
      %v2223 = vrcp.pop %v1657
      %v2224 = vmul.f32 1.0, %v2223
      %v2225 = vrcp.pop %v1658
      %v2226 = vmul.f32 1.0, %v2225
      %v2227 = vrcp.pop %v1659
      %v2228 = vmul.f32 1.0, %v2227
      %v2229 = vrcp.pop %v1660
      %v2230 = vmul.f32 1.0, %v2229
      %v2231 = vrcp.pop %v1661
      %v2232 = vmul.f32 1.0, %v2231
      %v2233 = vrcp.pop %v1662
      %v2234 = vmul.f32 1.0, %v2233
      %v2235 = vrcp.pop %v1663
      %v2236 = vmul.f32 1.0, %v2235
      %v2237 = vrcp.pop %v1664
      %v2238 = vmul.f32 1.0, %v2237
      %v2239 = vrcp.pop %v1665
      %v2240 = vmul.f32 1.0, %v2239
      %v2241 = vrcp.pop %v1666
      %v2242 = vmul.f32 1.0, %v2241
      %v2243 = vld [vmem:[%s1] sm:$0xff]
      %v2244 = vld [vmem:[%s1 + $0x8] sm:$0xff]
      %v2245 = vld [vmem:[%s1 + $0x10] sm:$0xff]
      %v2246 = vld [vmem:[%s1 + $0x18] sm:$0xff]
      %v2247 = vld [vmem:[%s1 + $0x20] sm:$0xff]
      %v2248 = vld [vmem:[%s1 + $0x28] sm:$0xff]
      %v2249 = vld [vmem:[%s1 + $0x30] sm:$0xff]
      %v2250 = vld [vmem:[%s1 + $0x38] sm:$0xff]
      %v2251 = vld [vmem:[%s1 + $0x40] sm:$0xff]
      %v2252 = vld [vmem:[%s1 + $0x48] sm:$0xff]
      %v2253 = vld [vmem:[%s1 + $0x50] sm:$0xff]
      %v2254 = vld [vmem:[%s1 + $0x58] sm:$0xff]
      %v2255 = vld [vmem:[%s1 + $0x60] sm:$0xff]
      %v2256 = vld [vmem:[%s1 + $0x68] sm:$0xff]
      %v2257 = vld [vmem:[%s1 + $0x70] sm:$0xff]
      %v2258 = vld [vmem:[%s1 + $0x78] sm:$0xff]
      %v2259 = vld [vmem:[%s1 + $0x80] sm:$0xff]
      %v2260 = vld [vmem:[%s1 + $0x88] sm:$0xff]
      %v2261 = vld [vmem:[%s1 + $0x90] sm:$0xff]
      %v2262 = vld [vmem:[%s1 + $0x98] sm:$0xff]
      %v2263 = vld [vmem:[%s1 + $0xa0] sm:$0xff]
      %v2264 = vld [vmem:[%s1 + $0xa8] sm:$0xff]
      %v2265 = vld [vmem:[%s1 + $0xb0] sm:$0xff]
      %v2266 = vld [vmem:[%s1 + $0xb8] sm:$0xff]
      %v2267 = vld [vmem:[%s1 + $0xc0] sm:$0xff]
      %v2268 = vld [vmem:[%s1 + $0xc8] sm:$0xff]
      %v2269 = vld [vmem:[%s1 + $0xd0] sm:$0xff]
      %v2270 = vld [vmem:[%s1 + $0xd8] sm:$0xff]
      %v2271 = vld [vmem:[%s1 + $0xe0] sm:$0xff]
      %v2272 = vld [vmem:[%s1 + $0xe8] sm:$0xff]
      %v2273 = vld [vmem:[%s1 + $0xf0] sm:$0xff]
      %v2274 = vld [vmem:[%s1 + $0xf8] sm:$0xff]
      %v2275 = vld [vmem:[%s1 + $0x100] sm:$0xff]
      %v2276 = vld [vmem:[%s1 + $0x108] sm:$0xff]
      %v2277 = vld [vmem:[%s1 + $0x110] sm:$0xff]
      %v2278 = vld [vmem:[%s1 + $0x118] sm:$0xff]
      %v2279 = vld [vmem:[%s1 + $0x120] sm:$0xff]
      %v2280 = vld [vmem:[%s1 + $0x128] sm:$0xff]
      %v2281 = vld [vmem:[%s1 + $0x130] sm:$0xff]
      %v2282 = vld [vmem:[%s1 + $0x138] sm:$0xff]
      %v2283 = vld [vmem:[%s1 + $0x140] sm:$0xff]
      %v2284 = vld [vmem:[%s1 + $0x148] sm:$0xff]
      %v2285 = vld [vmem:[%s1 + $0x150] sm:$0xff]
      %v2286 = vld [vmem:[%s1 + $0x158] sm:$0xff]
      %v2287 = vld [vmem:[%s1 + $0x160] sm:$0xff]
      %v2288 = vld [vmem:[%s1 + $0x168] sm:$0xff]
      %v2289 = vld [vmem:[%s1 + $0x170] sm:$0xff]
      %v2290 = vld [vmem:[%s1 + $0x178] sm:$0xff]
      %v2291 = vld [vmem:[%s1 + $0x180] sm:$0xff]
      %v2292 = vld [vmem:[%s1 + $0x188] sm:$0xff]
      %v2293 = vld [vmem:[%s1 + $0x190] sm:$0xff]
      %v2294 = vld [vmem:[%s1 + $0x198] sm:$0xff]
      %v2295 = vld [vmem:[%s1 + $0x1a0] sm:$0xff]
      %v2296 = vld [vmem:[%s1 + $0x1a8] sm:$0xff]
      %v2297 = vld [vmem:[%s1 + $0x1b0] sm:$0xff]
      %v2298 = vld [vmem:[%s1 + $0x1b8] sm:$0xff]
      %v2299 = vld [vmem:[%s1 + $0x1c0] sm:$0xff]
      %v2300 = vld [vmem:[%s1 + $0x1c8] sm:$0xff]
      %v2301 = vld [vmem:[%s1 + $0x1d0] sm:$0xff]
      %v2302 = vld [vmem:[%s1 + $0x1d8] sm:$0xff]
      %v2303 = vld [vmem:[%s1 + $0x1e0] sm:$0xff]
      %v2304 = vld [vmem:[%s1 + $0x1e8] sm:$0xff]
      %v2305 = vld [vmem:[%s1 + $0x1f0] sm:$0xff]
      %v2306 = vld [vmem:[%s1 + $0x1f8] sm:$0xff]
      %v2307 = vld [vmem:[%s1 + $0x200] sm:$0xff]
      %v2308 = vld [vmem:[%s1 + $0x208] sm:$0xff]
      %v2309 = vld [vmem:[%s1 + $0x210] sm:$0xff]
      %v2310 = vld [vmem:[%s1 + $0x218] sm:$0xff]
      %v2311 = vld [vmem:[%s1 + $0x220] sm:$0xff]
      %v2312 = vld [vmem:[%s1 + $0x228] sm:$0xff]
      %v2313 = vld [vmem:[%s1 + $0x230] sm:$0xff]
      %v2314 = vld [vmem:[%s1 + $0x238] sm:$0xff]
      %v2315 = vld [vmem:[%s1 + $0x240] sm:$0xff]
      %v2316 = vld [vmem:[%s1 + $0x248] sm:$0xff]
      %v2317 = vld [vmem:[%s1 + $0x250] sm:$0xff]
      %v2318 = vld [vmem:[%s1 + $0x258] sm:$0xff]
      %v2319 = vld [vmem:[%s1 + $0x260] sm:$0xff]
      %v2320 = vld [vmem:[%s1 + $0x268] sm:$0xff]
      %v2321 = vld [vmem:[%s1 + $0x270] sm:$0xff]
      %v2322 = vld [vmem:[%s1 + $0x278] sm:$0xff]
      %v2323 = vld [vmem:[%s1 + $0x280] sm:$0xff]
      %v2324 = vld [vmem:[%s1 + $0x288] sm:$0xff]
      %v2325 = vld [vmem:[%s1 + $0x290] sm:$0xff]
      %v2326 = vld [vmem:[%s1 + $0x298] sm:$0xff]
      %v2327 = vld [vmem:[%s1 + $0x2a0] sm:$0xff]
      %v2328 = vld [vmem:[%s1 + $0x2a8] sm:$0xff]
      %v2329 = vld [vmem:[%s1 + $0x2b0] sm:$0xff]
      %v2330 = vld [vmem:[%s1 + $0x2b8] sm:$0xff]
      %v2331 = vld [vmem:[%s1 + $0x2c0] sm:$0xff]
      %v2332 = vld [vmem:[%s1 + $0x2c8] sm:$0xff]
      %v2333 = vld [vmem:[%s1 + $0x2d0] sm:$0xff]
      %v2334 = vld [vmem:[%s1 + $0x2d8] sm:$0xff]
      %v2335 = vld [vmem:[%s1 + $0x2e0] sm:$0xff]
      %v2336 = vld [vmem:[%s1 + $0x2e8] sm:$0xff]
      %v2337 = vld [vmem:[%s1 + $0x2f0] sm:$0xff]
      %v2338 = vld [vmem:[%s1 + $0x2f8] sm:$0xff]
      %v2339 = vld [vmem:[%s1 + $0x300] sm:$0xff]
      %v2340 = vld [vmem:[%s1 + $0x308] sm:$0xff]
      %v2341 = vld [vmem:[%s1 + $0x310] sm:$0xff]
      %v2342 = vld [vmem:[%s1 + $0x318] sm:$0xff]
      %v2343 = vld [vmem:[%s1 + $0x320] sm:$0xff]
      %v2344 = vld [vmem:[%s1 + $0x328] sm:$0xff]
      %v2345 = vld [vmem:[%s1 + $0x330] sm:$0xff]
      %v2346 = vld [vmem:[%s1 + $0x338] sm:$0xff]
      %v2347 = vld [vmem:[%s1 + $0x340] sm:$0xff]
      %v2348 = vld [vmem:[%s1 + $0x348] sm:$0xff]
      %v2349 = vld [vmem:[%s1 + $0x350] sm:$0xff]
      %v2350 = vld [vmem:[%s1 + $0x358] sm:$0xff]
      %v2351 = vld [vmem:[%s1 + $0x360] sm:$0xff]
      %v2352 = vld [vmem:[%s1 + $0x368] sm:$0xff]
      %v2353 = vld [vmem:[%s1 + $0x370] sm:$0xff]
      %v2354 = vld [vmem:[%s1 + $0x378] sm:$0xff]
      %v2355 = vld [vmem:[%s1 + $0x380] sm:$0xff]
      %v2356 = vld [vmem:[%s1 + $0x388] sm:$0xff]
      %v2357 = vld [vmem:[%s1 + $0x390] sm:$0xff]
      %v2358 = vld [vmem:[%s1 + $0x398] sm:$0xff]
      %v2359 = vld [vmem:[%s1 + $0x3a0] sm:$0xff]
      %v2360 = vld [vmem:[%s1 + $0x3a8] sm:$0xff]
      %v2361 = vld [vmem:[%s1 + $0x3b0] sm:$0xff]
      %v2362 = vld [vmem:[%s1 + $0x3b8] sm:$0xff]
      %v2363 = vld [vmem:[%s1 + $0x3c0] sm:$0xff]
      %v2364 = vld [vmem:[%s1 + $0x3c8] sm:$0xff]
      %v2365 = vld [vmem:[%s1 + $0x3d0] sm:$0xff]
      %v2366 = vld [vmem:[%s1 + $0x3d8] sm:$0xff]
      %v2367 = vld [vmem:[%s1 + $0x3e0] sm:$0xff]
      %v2368 = vld [vmem:[%s1 + $0x3e8] sm:$0xff]
      %v2369 = vld [vmem:[%s1 + $0x3f0] sm:$0xff]
      %v2370 = vld [vmem:[%s1 + $0x3f8] sm:$0xff]
      %v2371 = vld [vmem:[%s1 + $0x400] sm:$0xff]
      %v2372 = vld [vmem:[%s1 + $0x408] sm:$0xff]
      %v2373 = vld [vmem:[%s1 + $0x410] sm:$0xff]
      %v2374 = vld [vmem:[%s1 + $0x418] sm:$0xff]
      %v2375 = vld [vmem:[%s1 + $0x420] sm:$0xff]
      %v2376 = vld [vmem:[%s1 + $0x428] sm:$0xff]
      %v2377 = vld [vmem:[%s1 + $0x430] sm:$0xff]
      %v2378 = vld [vmem:[%s1 + $0x438] sm:$0xff]
      %v2379 = vld [vmem:[%s1 + $0x440] sm:$0xff]
      %v2380 = vld [vmem:[%s1 + $0x448] sm:$0xff]
      %v2381 = vld [vmem:[%s1 + $0x450] sm:$0xff]
      %v2382 = vld [vmem:[%s1 + $0x458] sm:$0xff]
      %v2383 = vld [vmem:[%s1 + $0x460] sm:$0xff]
      %v2384 = vld [vmem:[%s1 + $0x468] sm:$0xff]
      %v2385 = vld [vmem:[%s1 + $0x470] sm:$0xff]
      %v2386 = vld [vmem:[%s1 + $0x478] sm:$0xff]
      %v2387 = vld [vmem:[%s1 + $0x480] sm:$0xff]
      %v2388 = vld [vmem:[%s1 + $0x488] sm:$0xff]
      %v2389 = vld [vmem:[%s1 + $0x490] sm:$0xff]
      %v2390 = vld [vmem:[%s1 + $0x498] sm:$0xff]
      %v2391 = vld [vmem:[%s1 + $0x4a0] sm:$0xff]
      %v2392 = vld [vmem:[%s1 + $0x4a8] sm:$0xff]
      %v2393 = vld [vmem:[%s1 + $0x4b0] sm:$0xff]
      %v2394 = vld [vmem:[%s1 + $0x4b8] sm:$0xff]
      %v2395 = vld [vmem:[%s1 + $0x4c0] sm:$0xff]
      %v2396 = vld [vmem:[%s1 + $0x4c8] sm:$0xff]
      %v2397 = vld [vmem:[%s1 + $0x4d0] sm:$0xff]
      %v2398 = vld [vmem:[%s1 + $0x4d8] sm:$0xff]
      %v2399 = vld [vmem:[%s1 + $0x4e0] sm:$0xff]
      %v2400 = vld [vmem:[%s1 + $0x4e8] sm:$0xff]
      %v2401 = vld [vmem:[%s1 + $0x4f0] sm:$0xff]
      %v2402 = vld [vmem:[%s1 + $0x4f8] sm:$0xff]
      %v2403 = vld [vmem:[%s1 + $0x500] sm:$0xff]
      %v2404 = vld [vmem:[%s1 + $0x508] sm:$0xff]
      %v2405 = vld [vmem:[%s1 + $0x510] sm:$0xff]
      %v2406 = vld [vmem:[%s1 + $0x518] sm:$0xff]
      %v2407 = vld [vmem:[%s1 + $0x520] sm:$0xff]
      %v2408 = vld [vmem:[%s1 + $0x528] sm:$0xff]
      %v2409 = vld [vmem:[%s1 + $0x530] sm:$0xff]
      %v2410 = vld [vmem:[%s1 + $0x538] sm:$0xff]
      %v2411 = vld [vmem:[%s1 + $0x540] sm:$0xff]
      %v2412 = vld [vmem:[%s1 + $0x548] sm:$0xff]
      %v2413 = vld [vmem:[%s1 + $0x550] sm:$0xff]
      %v2414 = vld [vmem:[%s1 + $0x558] sm:$0xff]
      %v2415 = vld [vmem:[%s1 + $0x560] sm:$0xff]
      %v2416 = vld [vmem:[%s1 + $0x568] sm:$0xff]
      %v2417 = vld [vmem:[%s1 + $0x570] sm:$0xff]
      %v2418 = vld [vmem:[%s1 + $0x578] sm:$0xff]
      %v2419 = vld [vmem:[%s1 + $0x580] sm:$0xff]
      %v2420 = vld [vmem:[%s1 + $0x588] sm:$0xff]
      %v2421 = vld [vmem:[%s1 + $0x590] sm:$0xff]
      %v2422 = vld [vmem:[%s1 + $0x598] sm:$0xff]
      %v2423 = vld [vmem:[%s1 + $0x5a0] sm:$0xff]
      %v2424 = vld [vmem:[%s1 + $0x5a8] sm:$0xff]
      %v2425 = vld [vmem:[%s1 + $0x5b0] sm:$0xff]
      %v2426 = vld [vmem:[%s1 + $0x5b8] sm:$0xff]
      %v2427 = vld [vmem:[%s1 + $0x5c0] sm:$0xff]
      %v2428 = vld [vmem:[%s1 + $0x5c8] sm:$0xff]
      %v2429 = vld [vmem:[%s1 + $0x5d0] sm:$0xff]
      %v2430 = vld [vmem:[%s1 + $0x5d8] sm:$0xff]
      %v2431 = vld [vmem:[%s1 + $0x5e0] sm:$0xff]
      %v2432 = vld [vmem:[%s1 + $0x5e8] sm:$0xff]
      %v2433 = vld [vmem:[%s1 + $0x5f0] sm:$0xff]
      %v2434 = vld [vmem:[%s1 + $0x5f8] sm:$0xff]
      %v2435 = vld [vmem:[%s1 + $0x600] sm:$0xff]
      %v2436 = vld [vmem:[%s1 + $0x608] sm:$0xff]
      %v2437 = vld [vmem:[%s1 + $0x610] sm:$0xff]
      %v2438 = vld [vmem:[%s1 + $0x618] sm:$0xff]
      %v2439 = vld [vmem:[%s1 + $0x620] sm:$0xff]
      %v2440 = vld [vmem:[%s1 + $0x628] sm:$0xff]
      %v2441 = vld [vmem:[%s1 + $0x630] sm:$0xff]
      %v2442 = vld [vmem:[%s1 + $0x638] sm:$0xff]
      %v2443 = vld [vmem:[%s1 + $0x640] sm:$0xff]
      %v2444 = vld [vmem:[%s1 + $0x648] sm:$0xff]
      %v2445 = vld [vmem:[%s1 + $0x650] sm:$0xff]
      %v2446 = vld [vmem:[%s1 + $0x658] sm:$0xff]
      %v2447 = vld [vmem:[%s1 + $0x660] sm:$0xff]
      %v2448 = vld [vmem:[%s1 + $0x668] sm:$0xff]
      %v2449 = vld [vmem:[%s1 + $0x670] sm:$0xff]
      %v2450 = vld [vmem:[%s1 + $0x678] sm:$0xff]
      %v2451 = vld [vmem:[%s1 + $0x680] sm:$0xff]
      %v2452 = vld [vmem:[%s1 + $0x688] sm:$0xff]
      %v2453 = vld [vmem:[%s1 + $0x690] sm:$0xff]
      %v2454 = vld [vmem:[%s1 + $0x698] sm:$0xff]
      %v2455 = vld [vmem:[%s1 + $0x6a0] sm:$0xff]
      %v2456 = vld [vmem:[%s1 + $0x6a8] sm:$0xff]
      %v2457 = vld [vmem:[%s1 + $0x6b0] sm:$0xff]
      %v2458 = vld [vmem:[%s1 + $0x6b8] sm:$0xff]
      %v2459 = vld [vmem:[%s1 + $0x6c0] sm:$0xff]
      %v2460 = vld [vmem:[%s1 + $0x6c8] sm:$0xff]
      %v2461 = vld [vmem:[%s1 + $0x6d0] sm:$0xff]
      %v2462 = vld [vmem:[%s1 + $0x6d8] sm:$0xff]
      %v2463 = vld [vmem:[%s1 + $0x6e0] sm:$0xff]
      %v2464 = vld [vmem:[%s1 + $0x6e8] sm:$0xff]
      %v2465 = vld [vmem:[%s1 + $0x6f0] sm:$0xff]
      %v2466 = vld [vmem:[%s1 + $0x6f8] sm:$0xff]
      %v2467 = vld [vmem:[%s1 + $0x700] sm:$0xff]
      %v2468 = vld [vmem:[%s1 + $0x708] sm:$0xff]
      %v2469 = vld [vmem:[%s1 + $0x710] sm:$0xff]
      %v2470 = vld [vmem:[%s1 + $0x718] sm:$0xff]
      %v2471 = vld [vmem:[%s1 + $0x720] sm:$0xff]
      %v2472 = vld [vmem:[%s1 + $0x728] sm:$0xff]
      %v2473 = vld [vmem:[%s1 + $0x730] sm:$0xff]
      %v2474 = vld [vmem:[%s1 + $0x738] sm:$0xff]
      %v2475 = vld [vmem:[%s1 + $0x740] sm:$0xff]
      %v2476 = vld [vmem:[%s1 + $0x748] sm:$0xff]
      %v2477 = vld [vmem:[%s1 + $0x750] sm:$0xff]
      %v2478 = vld [vmem:[%s1 + $0x758] sm:$0xff]
      %v2479 = vld [vmem:[%s1 + $0x760] sm:$0xff]
      %v2480 = vld [vmem:[%s1 + $0x768] sm:$0xff]
      %v2481 = vld [vmem:[%s1 + $0x770] sm:$0xff]
      %v2482 = vld [vmem:[%s1 + $0x778] sm:$0xff]
      %v2483 = vld [vmem:[%s1 + $0x780] sm:$0xff]
      %v2484 = vld [vmem:[%s1 + $0x788] sm:$0xff]
      %v2485 = vld [vmem:[%s1 + $0x790] sm:$0xff]
      %v2486 = vld [vmem:[%s1 + $0x798] sm:$0xff]
      %v2487 = vld [vmem:[%s1 + $0x7a0] sm:$0xff]
      %v2488 = vld [vmem:[%s1 + $0x7a8] sm:$0xff]
      %v2489 = vld [vmem:[%s1 + $0x7b0] sm:$0xff]
      %v2490 = vld [vmem:[%s1 + $0x7b8] sm:$0xff]
      %v2491 = vld [vmem:[%s1 + $0x7c0] sm:$0xff]
      %v2492 = vld [vmem:[%s1 + $0x7c8] sm:$0xff]
      %v2493 = vld [vmem:[%s1 + $0x7d0] sm:$0xff]
      %v2494 = vld [vmem:[%s1 + $0x7d8] sm:$0xff]
      %v2495 = vld [vmem:[%s1 + $0x7e0] sm:$0xff]
      %v2496 = vld [vmem:[%s1 + $0x7e8] sm:$0xff]
      %v2497 = vld [vmem:[%s1 + $0x7f0] sm:$0xff]
      %v2498 = vld [vmem:[%s1 + $0x7f8] sm:$0xff]
      %v2499 = vld [vmem:[%s1 + $0x800] sm:$0xff]
      %v2500 = vld [vmem:[%s1 + $0x808] sm:$0xff]
      %v2501 = vld [vmem:[%s1 + $0x810] sm:$0xff]
      %v2502 = vld [vmem:[%s1 + $0x818] sm:$0xff]
      %v2503 = vld [vmem:[%s1 + $0x820] sm:$0xff]
      %v2504 = vld [vmem:[%s1 + $0x828] sm:$0xff]
      %v2505 = vld [vmem:[%s1 + $0x830] sm:$0xff]
      %v2506 = vld [vmem:[%s1 + $0x838] sm:$0xff]
      %v2507 = vld [vmem:[%s1 + $0x840] sm:$0xff]
      %v2508 = vld [vmem:[%s1 + $0x848] sm:$0xff]
      %v2509 = vld [vmem:[%s1 + $0x850] sm:$0xff]
      %v2510 = vld [vmem:[%s1 + $0x858] sm:$0xff]
      %v2511 = vld [vmem:[%s1 + $0x860] sm:$0xff]
      %v2512 = vld [vmem:[%s1 + $0x868] sm:$0xff]
      %v2513 = vld [vmem:[%s1 + $0x870] sm:$0xff]
      %v2514 = vld [vmem:[%s1 + $0x878] sm:$0xff]
      %v2515 = vld [vmem:[%s1 + $0x880] sm:$0xff]
      %v2516 = vld [vmem:[%s1 + $0x888] sm:$0xff]
      %v2517 = vld [vmem:[%s1 + $0x890] sm:$0xff]
      %v2518 = vld [vmem:[%s1 + $0x898] sm:$0xff]
      %v2519 = vld [vmem:[%s1 + $0x8a0] sm:$0xff]
      %v2520 = vld [vmem:[%s1 + $0x8a8] sm:$0xff]
      %v2521 = vld [vmem:[%s1 + $0x8b0] sm:$0xff]
      %v2522 = vld [vmem:[%s1 + $0x8b8] sm:$0xff]
      %v2523 = vld [vmem:[%s1 + $0x8c0] sm:$0xff]
      %v2524 = vld [vmem:[%s1 + $0x8c8] sm:$0xff]
      %v2525 = vld [vmem:[%s1 + $0x8d0] sm:$0xff]
      %v2526 = vld [vmem:[%s1 + $0x8d8] sm:$0xff]
      %v2527 = vld [vmem:[%s1 + $0x8e0] sm:$0xff]
      %v2528 = vld [vmem:[%s1 + $0x8e8] sm:$0xff]
      %v2529 = vld [vmem:[%s1 + $0x8f0] sm:$0xff]
      %v2530 = vld [vmem:[%s1 + $0x8f8] sm:$0xff]
      %2532 = vset.pattern.permute.xlu0 0
      %2533 = vperm.xlu0 %2532, %v1668
      %v2534 = vpop.permute.xlu0 %2533
      %2537 = vset.pattern.permute.xlu0 0
      %2538 = vperm.xlu0 %2537, %v1670
      %v2539 = vpop.permute.xlu0 %2538
      %2542 = vset.pattern.permute.xlu0 0
      %2543 = vperm.xlu0 %2542, %v1672
      %v2544 = vpop.permute.xlu0 %2543
      %2547 = vset.pattern.permute.xlu0 0
      %2548 = vperm.xlu0 %2547, %v1674
      %v2549 = vpop.permute.xlu0 %2548
      %2552 = vset.pattern.permute.xlu0 0
      %2553 = vperm.xlu0 %2552, %v1676
      %v2554 = vpop.permute.xlu0 %2553
      %2557 = vset.pattern.permute.xlu0 0
      %2558 = vperm.xlu0 %2557, %v1678
      %v2559 = vpop.permute.xlu0 %2558
      %2562 = vset.pattern.permute.xlu0 0
      %2563 = vperm.xlu0 %2562, %v1680
      %v2564 = vpop.permute.xlu0 %2563
      %2567 = vset.pattern.permute.xlu0 0
      %2568 = vperm.xlu0 %2567, %v1682
      %v2569 = vpop.permute.xlu0 %2568
      %2572 = vset.pattern.permute.xlu0 0
      %2573 = vperm.xlu0 %2572, %v1684
      %v2574 = vpop.permute.xlu0 %2573
      %2577 = vset.pattern.permute.xlu0 0
      %2578 = vperm.xlu0 %2577, %v1686
      %v2579 = vpop.permute.xlu0 %2578
      %2582 = vset.pattern.permute.xlu0 0
      %2583 = vperm.xlu0 %2582, %v1688
      %v2584 = vpop.permute.xlu0 %2583
      %2587 = vset.pattern.permute.xlu0 0
      %2588 = vperm.xlu0 %2587, %v1690
      %v2589 = vpop.permute.xlu0 %2588
      %2592 = vset.pattern.permute.xlu0 0
      %2593 = vperm.xlu0 %2592, %v1692
      %v2594 = vpop.permute.xlu0 %2593
      %2597 = vset.pattern.permute.xlu0 0
      %2598 = vperm.xlu0 %2597, %v1694
      %v2599 = vpop.permute.xlu0 %2598
      %2602 = vset.pattern.permute.xlu0 0
      %2603 = vperm.xlu0 %2602, %v1696
      %v2604 = vpop.permute.xlu0 %2603
      %2607 = vset.pattern.permute.xlu0 0
      %2608 = vperm.xlu0 %2607, %v1698
      %v2609 = vpop.permute.xlu0 %2608
      %2612 = vset.pattern.permute.xlu0 0
      %2613 = vperm.xlu0 %2612, %v1700
      %v2614 = vpop.permute.xlu0 %2613
      %2617 = vset.pattern.permute.xlu0 0
      %2618 = vperm.xlu0 %2617, %v1702
      %v2619 = vpop.permute.xlu0 %2618
      %2622 = vset.pattern.permute.xlu0 0
      %2623 = vperm.xlu0 %2622, %v1704
      %v2624 = vpop.permute.xlu0 %2623
      %2627 = vset.pattern.permute.xlu0 0
      %2628 = vperm.xlu0 %2627, %v1706
      %v2629 = vpop.permute.xlu0 %2628
      %2632 = vset.pattern.permute.xlu0 0
      %2633 = vperm.xlu0 %2632, %v1708
      %v2634 = vpop.permute.xlu0 %2633
      %2637 = vset.pattern.permute.xlu0 0
      %2638 = vperm.xlu0 %2637, %v1710
      %v2639 = vpop.permute.xlu0 %2638
      %2642 = vset.pattern.permute.xlu0 0
      %2643 = vperm.xlu0 %2642, %v1712
      %v2644 = vpop.permute.xlu0 %2643
      %2647 = vset.pattern.permute.xlu0 0
      %2648 = vperm.xlu0 %2647, %v1714
      %v2649 = vpop.permute.xlu0 %2648
      %2652 = vset.pattern.permute.xlu0 0
      %2653 = vperm.xlu0 %2652, %v1716
      %v2654 = vpop.permute.xlu0 %2653
      %2657 = vset.pattern.permute.xlu0 0
      %2658 = vperm.xlu0 %2657, %v1718
      %v2659 = vpop.permute.xlu0 %2658
      %2662 = vset.pattern.permute.xlu0 0
      %2663 = vperm.xlu0 %2662, %v1720
      %v2664 = vpop.permute.xlu0 %2663
      %2667 = vset.pattern.permute.xlu0 0
      %2668 = vperm.xlu0 %2667, %v1722
      %v2669 = vpop.permute.xlu0 %2668
      %2672 = vset.pattern.permute.xlu0 0
      %2673 = vperm.xlu0 %2672, %v1724
      %v2674 = vpop.permute.xlu0 %2673
      %2677 = vset.pattern.permute.xlu0 0
      %2678 = vperm.xlu0 %2677, %v1726
      %v2679 = vpop.permute.xlu0 %2678
      %2682 = vset.pattern.permute.xlu0 0
      %2683 = vperm.xlu0 %2682, %v1728
      %v2684 = vpop.permute.xlu0 %2683
      %2687 = vset.pattern.permute.xlu0 0
      %2688 = vperm.xlu0 %2687, %v1730
      %v2689 = vpop.permute.xlu0 %2688
      %2692 = vset.pattern.permute.xlu0 0
      %2693 = vperm.xlu0 %2692, %v1732
      %v2694 = vpop.permute.xlu0 %2693
      %2697 = vset.pattern.permute.xlu0 0
      %2698 = vperm.xlu0 %2697, %v1734
      %v2699 = vpop.permute.xlu0 %2698
      %2702 = vset.pattern.permute.xlu0 0
      %2703 = vperm.xlu0 %2702, %v1736
      %v2704 = vpop.permute.xlu0 %2703
      %2707 = vset.pattern.permute.xlu0 0
      %2708 = vperm.xlu0 %2707, %v1738
      %v2709 = vpop.permute.xlu0 %2708
      %2712 = vset.pattern.permute.xlu0 0
      %2713 = vperm.xlu0 %2712, %v1740
      %v2714 = vpop.permute.xlu0 %2713
      %2717 = vset.pattern.permute.xlu0 0
      %2718 = vperm.xlu0 %2717, %v1742
      %v2719 = vpop.permute.xlu0 %2718
      %2722 = vset.pattern.permute.xlu0 0
      %2723 = vperm.xlu0 %2722, %v1744
      %v2724 = vpop.permute.xlu0 %2723
      %2727 = vset.pattern.permute.xlu0 0
      %2728 = vperm.xlu0 %2727, %v1746
      %v2729 = vpop.permute.xlu0 %2728
      %2732 = vset.pattern.permute.xlu0 0
      %2733 = vperm.xlu0 %2732, %v1748
      %v2734 = vpop.permute.xlu0 %2733
      %2737 = vset.pattern.permute.xlu0 0
      %2738 = vperm.xlu0 %2737, %v1750
      %v2739 = vpop.permute.xlu0 %2738
      %2742 = vset.pattern.permute.xlu0 0
      %2743 = vperm.xlu0 %2742, %v1752
      %v2744 = vpop.permute.xlu0 %2743
      %2747 = vset.pattern.permute.xlu0 0
      %2748 = vperm.xlu0 %2747, %v1754
      %v2749 = vpop.permute.xlu0 %2748
      %2752 = vset.pattern.permute.xlu0 0
      %2753 = vperm.xlu0 %2752, %v1756
      %v2754 = vpop.permute.xlu0 %2753
      %2757 = vset.pattern.permute.xlu0 0
      %2758 = vperm.xlu0 %2757, %v1758
      %v2759 = vpop.permute.xlu0 %2758
      %2762 = vset.pattern.permute.xlu0 0
      %2763 = vperm.xlu0 %2762, %v1760
      %v2764 = vpop.permute.xlu0 %2763
      %2767 = vset.pattern.permute.xlu0 0
      %2768 = vperm.xlu0 %2767, %v1762
      %v2769 = vpop.permute.xlu0 %2768
      %2772 = vset.pattern.permute.xlu0 0
      %2773 = vperm.xlu0 %2772, %v1764
      %v2774 = vpop.permute.xlu0 %2773
      %2777 = vset.pattern.permute.xlu0 0
      %2778 = vperm.xlu0 %2777, %v1766
      %v2779 = vpop.permute.xlu0 %2778
      %2782 = vset.pattern.permute.xlu0 0
      %2783 = vperm.xlu0 %2782, %v1768
      %v2784 = vpop.permute.xlu0 %2783
      %2787 = vset.pattern.permute.xlu0 0
      %2788 = vperm.xlu0 %2787, %v1770
      %v2789 = vpop.permute.xlu0 %2788
      %2792 = vset.pattern.permute.xlu0 0
      %2793 = vperm.xlu0 %2792, %v1772
      %v2794 = vpop.permute.xlu0 %2793
      %2797 = vset.pattern.permute.xlu0 0
      %2798 = vperm.xlu0 %2797, %v1774
      %v2799 = vpop.permute.xlu0 %2798
      %2802 = vset.pattern.permute.xlu0 0
      %2803 = vperm.xlu0 %2802, %v1776
      %v2804 = vpop.permute.xlu0 %2803
      %2807 = vset.pattern.permute.xlu0 0
      %2808 = vperm.xlu0 %2807, %v1778
      %v2809 = vpop.permute.xlu0 %2808
      %2812 = vset.pattern.permute.xlu0 0
      %2813 = vperm.xlu0 %2812, %v1780
      %v2814 = vpop.permute.xlu0 %2813
      %2817 = vset.pattern.permute.xlu0 0
      %2818 = vperm.xlu0 %2817, %v1782
      %v2819 = vpop.permute.xlu0 %2818
      %2822 = vset.pattern.permute.xlu0 0
      %2823 = vperm.xlu0 %2822, %v1784
      %v2824 = vpop.permute.xlu0 %2823
      %2827 = vset.pattern.permute.xlu0 0
      %2828 = vperm.xlu0 %2827, %v1786
      %v2829 = vpop.permute.xlu0 %2828
      %2832 = vset.pattern.permute.xlu0 0
      %2833 = vperm.xlu0 %2832, %v1788
      %v2834 = vpop.permute.xlu0 %2833
      %2837 = vset.pattern.permute.xlu0 0
      %2838 = vperm.xlu0 %2837, %v1790
      %v2839 = vpop.permute.xlu0 %2838
      %2842 = vset.pattern.permute.xlu0 0
      %2843 = vperm.xlu0 %2842, %v1792
      %v2844 = vpop.permute.xlu0 %2843
      %2847 = vset.pattern.permute.xlu0 0
      %2848 = vperm.xlu0 %2847, %v1794
      %v2849 = vpop.permute.xlu0 %2848
      %2852 = vset.pattern.permute.xlu0 0
      %2853 = vperm.xlu0 %2852, %v1796
      %v2854 = vpop.permute.xlu0 %2853
      %2857 = vset.pattern.permute.xlu0 0
      %2858 = vperm.xlu0 %2857, %v1798
      %v2859 = vpop.permute.xlu0 %2858
      %2862 = vset.pattern.permute.xlu0 0
      %2863 = vperm.xlu0 %2862, %v1800
      %v2864 = vpop.permute.xlu0 %2863
      %2867 = vset.pattern.permute.xlu0 0
      %2868 = vperm.xlu0 %2867, %v1802
      %v2869 = vpop.permute.xlu0 %2868
      %2872 = vset.pattern.permute.xlu0 0
      %2873 = vperm.xlu0 %2872, %v1804
      %v2874 = vpop.permute.xlu0 %2873
      %2877 = vset.pattern.permute.xlu0 0
      %2878 = vperm.xlu0 %2877, %v1806
      %v2879 = vpop.permute.xlu0 %2878
      %2882 = vset.pattern.permute.xlu0 0
      %2883 = vperm.xlu0 %2882, %v1808
      %v2884 = vpop.permute.xlu0 %2883
      %2887 = vset.pattern.permute.xlu0 0
      %2888 = vperm.xlu0 %2887, %v1810
      %v2889 = vpop.permute.xlu0 %2888
      %2892 = vset.pattern.permute.xlu0 0
      %2893 = vperm.xlu0 %2892, %v1812
      %v2894 = vpop.permute.xlu0 %2893
      %2897 = vset.pattern.permute.xlu0 0
      %2898 = vperm.xlu0 %2897, %v1814
      %v2899 = vpop.permute.xlu0 %2898
      %2902 = vset.pattern.permute.xlu0 0
      %2903 = vperm.xlu0 %2902, %v1816
      %v2904 = vpop.permute.xlu0 %2903
      %2907 = vset.pattern.permute.xlu0 0
      %2908 = vperm.xlu0 %2907, %v1818
      %v2909 = vpop.permute.xlu0 %2908
      %2912 = vset.pattern.permute.xlu0 0
      %2913 = vperm.xlu0 %2912, %v1820
      %v2914 = vpop.permute.xlu0 %2913
      %2917 = vset.pattern.permute.xlu0 0
      %2918 = vperm.xlu0 %2917, %v1822
      %v2919 = vpop.permute.xlu0 %2918
      %2922 = vset.pattern.permute.xlu0 0
      %2923 = vperm.xlu0 %2922, %v1824
      %v2924 = vpop.permute.xlu0 %2923
      %2927 = vset.pattern.permute.xlu0 0
      %2928 = vperm.xlu0 %2927, %v1826
      %v2929 = vpop.permute.xlu0 %2928
      %2932 = vset.pattern.permute.xlu0 0
      %2933 = vperm.xlu0 %2932, %v1828
      %v2934 = vpop.permute.xlu0 %2933
      %2937 = vset.pattern.permute.xlu0 0
      %2938 = vperm.xlu0 %2937, %v1830
      %v2939 = vpop.permute.xlu0 %2938
      %2942 = vset.pattern.permute.xlu0 0
      %2943 = vperm.xlu0 %2942, %v1832
      %v2944 = vpop.permute.xlu0 %2943
      %2947 = vset.pattern.permute.xlu0 0
      %2948 = vperm.xlu0 %2947, %v1834
      %v2949 = vpop.permute.xlu0 %2948
      %2952 = vset.pattern.permute.xlu0 0
      %2953 = vperm.xlu0 %2952, %v1836
      %v2954 = vpop.permute.xlu0 %2953
      %2957 = vset.pattern.permute.xlu0 0
      %2958 = vperm.xlu0 %2957, %v1838
      %v2959 = vpop.permute.xlu0 %2958
      %2962 = vset.pattern.permute.xlu0 0
      %2963 = vperm.xlu0 %2962, %v1840
      %v2964 = vpop.permute.xlu0 %2963
      %2967 = vset.pattern.permute.xlu0 0
      %2968 = vperm.xlu0 %2967, %v1842
      %v2969 = vpop.permute.xlu0 %2968
      %2972 = vset.pattern.permute.xlu0 0
      %2973 = vperm.xlu0 %2972, %v1844
      %v2974 = vpop.permute.xlu0 %2973
      %2977 = vset.pattern.permute.xlu0 0
      %2978 = vperm.xlu0 %2977, %v1846
      %v2979 = vpop.permute.xlu0 %2978
      %2982 = vset.pattern.permute.xlu0 0
      %2983 = vperm.xlu0 %2982, %v1848
      %v2984 = vpop.permute.xlu0 %2983
      %2987 = vset.pattern.permute.xlu0 0
      %2988 = vperm.xlu0 %2987, %v1850
      %v2989 = vpop.permute.xlu0 %2988
      %2992 = vset.pattern.permute.xlu0 0
      %2993 = vperm.xlu0 %2992, %v1852
      %v2994 = vpop.permute.xlu0 %2993
      %2997 = vset.pattern.permute.xlu0 0
      %2998 = vperm.xlu0 %2997, %v1854
      %v2999 = vpop.permute.xlu0 %2998
      %3002 = vset.pattern.permute.xlu0 0
      %3003 = vperm.xlu0 %3002, %v1856
      %v3004 = vpop.permute.xlu0 %3003
      %3007 = vset.pattern.permute.xlu0 0
      %3008 = vperm.xlu0 %3007, %v1858
      %v3009 = vpop.permute.xlu0 %3008
      %3012 = vset.pattern.permute.xlu0 0
      %3013 = vperm.xlu0 %3012, %v1860
      %v3014 = vpop.permute.xlu0 %3013
      %3017 = vset.pattern.permute.xlu0 0
      %3018 = vperm.xlu0 %3017, %v1862
      %v3019 = vpop.permute.xlu0 %3018
      %3022 = vset.pattern.permute.xlu0 0
      %3023 = vperm.xlu0 %3022, %v1864
      %v3024 = vpop.permute.xlu0 %3023
      %3027 = vset.pattern.permute.xlu0 0
      %3028 = vperm.xlu0 %3027, %v1866
      %v3029 = vpop.permute.xlu0 %3028
      %3032 = vset.pattern.permute.xlu0 0
      %3033 = vperm.xlu0 %3032, %v1868
      %v3034 = vpop.permute.xlu0 %3033
      %3037 = vset.pattern.permute.xlu0 0
      %3038 = vperm.xlu0 %3037, %v1870
      %v3039 = vpop.permute.xlu0 %3038
      %3042 = vset.pattern.permute.xlu0 0
      %3043 = vperm.xlu0 %3042, %v1872
      %v3044 = vpop.permute.xlu0 %3043
      %3047 = vset.pattern.permute.xlu0 0
      %3048 = vperm.xlu0 %3047, %v1874
      %v3049 = vpop.permute.xlu0 %3048
      %3052 = vset.pattern.permute.xlu0 0
      %3053 = vperm.xlu0 %3052, %v1876
      %v3054 = vpop.permute.xlu0 %3053
      %3057 = vset.pattern.permute.xlu0 0
      %3058 = vperm.xlu0 %3057, %v1878
      %v3059 = vpop.permute.xlu0 %3058
      %3062 = vset.pattern.permute.xlu0 0
      %3063 = vperm.xlu0 %3062, %v1880
      %v3064 = vpop.permute.xlu0 %3063
      %3067 = vset.pattern.permute.xlu0 0
      %3068 = vperm.xlu0 %3067, %v1882
      %v3069 = vpop.permute.xlu0 %3068
      %3072 = vset.pattern.permute.xlu0 0
      %3073 = vperm.xlu0 %3072, %v1884
      %v3074 = vpop.permute.xlu0 %3073
      %3077 = vset.pattern.permute.xlu0 0
      %3078 = vperm.xlu0 %3077, %v1886
      %v3079 = vpop.permute.xlu0 %3078
      %3082 = vset.pattern.permute.xlu0 0
      %3083 = vperm.xlu0 %3082, %v1888
      %v3084 = vpop.permute.xlu0 %3083
      %3087 = vset.pattern.permute.xlu0 0
      %3088 = vperm.xlu0 %3087, %v1890
      %v3089 = vpop.permute.xlu0 %3088
      %3092 = vset.pattern.permute.xlu0 0
      %3093 = vperm.xlu0 %3092, %v1892
      %v3094 = vpop.permute.xlu0 %3093
      %3097 = vset.pattern.permute.xlu0 0
      %3098 = vperm.xlu0 %3097, %v1894
      %v3099 = vpop.permute.xlu0 %3098
      %3102 = vset.pattern.permute.xlu0 0
      %3103 = vperm.xlu0 %3102, %v1896
      %v3104 = vpop.permute.xlu0 %3103
      %3107 = vset.pattern.permute.xlu0 0
      %3108 = vperm.xlu0 %3107, %v1898
      %v3109 = vpop.permute.xlu0 %3108
      %3112 = vset.pattern.permute.xlu0 0
      %3113 = vperm.xlu0 %3112, %v1900
      %v3114 = vpop.permute.xlu0 %3113
      %3117 = vset.pattern.permute.xlu0 0
      %3118 = vperm.xlu0 %3117, %v1902
      %v3119 = vpop.permute.xlu0 %3118
      %3122 = vset.pattern.permute.xlu0 0
      %3123 = vperm.xlu0 %3122, %v1904
      %v3124 = vpop.permute.xlu0 %3123
      %3127 = vset.pattern.permute.xlu0 0
      %3128 = vperm.xlu0 %3127, %v1906
      %v3129 = vpop.permute.xlu0 %3128
      %3132 = vset.pattern.permute.xlu0 0
      %3133 = vperm.xlu0 %3132, %v1908
      %v3134 = vpop.permute.xlu0 %3133
      %3137 = vset.pattern.permute.xlu0 0
      %3138 = vperm.xlu0 %3137, %v1910
      %v3139 = vpop.permute.xlu0 %3138
      %3142 = vset.pattern.permute.xlu0 0
      %3143 = vperm.xlu0 %3142, %v1912
      %v3144 = vpop.permute.xlu0 %3143
      %3147 = vset.pattern.permute.xlu0 0
      %3148 = vperm.xlu0 %3147, %v1914
      %v3149 = vpop.permute.xlu0 %3148
      %3152 = vset.pattern.permute.xlu0 0
      %3153 = vperm.xlu0 %3152, %v1916
      %v3154 = vpop.permute.xlu0 %3153
      %3157 = vset.pattern.permute.xlu0 0
      %3158 = vperm.xlu0 %3157, %v1918
      %v3159 = vpop.permute.xlu0 %3158
      %3162 = vset.pattern.permute.xlu0 0
      %3163 = vperm.xlu0 %3162, %v1920
      %v3164 = vpop.permute.xlu0 %3163
      %3167 = vset.pattern.permute.xlu0 0
      %3168 = vperm.xlu0 %3167, %v1922
      %v3169 = vpop.permute.xlu0 %3168
      %3172 = vset.pattern.permute.xlu0 0
      %3173 = vperm.xlu0 %3172, %v1924
      %v3174 = vpop.permute.xlu0 %3173
      %3177 = vset.pattern.permute.xlu0 0
      %3178 = vperm.xlu0 %3177, %v1926
      %v3179 = vpop.permute.xlu0 %3178
      %3182 = vset.pattern.permute.xlu0 0
      %3183 = vperm.xlu0 %3182, %v1928
      %v3184 = vpop.permute.xlu0 %3183
      %3187 = vset.pattern.permute.xlu0 0
      %3188 = vperm.xlu0 %3187, %v1930
      %v3189 = vpop.permute.xlu0 %3188
      %3192 = vset.pattern.permute.xlu0 0
      %3193 = vperm.xlu0 %3192, %v1932
      %v3194 = vpop.permute.xlu0 %3193
      %3197 = vset.pattern.permute.xlu0 0
      %3198 = vperm.xlu0 %3197, %v1934
      %v3199 = vpop.permute.xlu0 %3198
      %3202 = vset.pattern.permute.xlu0 0
      %3203 = vperm.xlu0 %3202, %v1936
      %v3204 = vpop.permute.xlu0 %3203
      %3207 = vset.pattern.permute.xlu0 0
      %3208 = vperm.xlu0 %3207, %v1938
      %v3209 = vpop.permute.xlu0 %3208
      %3212 = vset.pattern.permute.xlu0 0
      %3213 = vperm.xlu0 %3212, %v1940
      %v3214 = vpop.permute.xlu0 %3213
      %3217 = vset.pattern.permute.xlu0 0
      %3218 = vperm.xlu0 %3217, %v1942
      %v3219 = vpop.permute.xlu0 %3218
      %3222 = vset.pattern.permute.xlu0 0
      %3223 = vperm.xlu0 %3222, %v1944
      %v3224 = vpop.permute.xlu0 %3223
      %3227 = vset.pattern.permute.xlu0 0
      %3228 = vperm.xlu0 %3227, %v1946
      %v3229 = vpop.permute.xlu0 %3228
      %3232 = vset.pattern.permute.xlu0 0
      %3233 = vperm.xlu0 %3232, %v1948
      %v3234 = vpop.permute.xlu0 %3233
      %3237 = vset.pattern.permute.xlu0 0
      %3238 = vperm.xlu0 %3237, %v1950
      %v3239 = vpop.permute.xlu0 %3238
      %3242 = vset.pattern.permute.xlu0 0
      %3243 = vperm.xlu0 %3242, %v1952
      %v3244 = vpop.permute.xlu0 %3243
      %3247 = vset.pattern.permute.xlu0 0
      %3248 = vperm.xlu0 %3247, %v1954
      %v3249 = vpop.permute.xlu0 %3248
      %3252 = vset.pattern.permute.xlu0 0
      %3253 = vperm.xlu0 %3252, %v1956
      %v3254 = vpop.permute.xlu0 %3253
      %3257 = vset.pattern.permute.xlu0 0
      %3258 = vperm.xlu0 %3257, %v1958
      %v3259 = vpop.permute.xlu0 %3258
      %3262 = vset.pattern.permute.xlu0 0
      %3263 = vperm.xlu0 %3262, %v1960
      %v3264 = vpop.permute.xlu0 %3263
      %3267 = vset.pattern.permute.xlu0 0
      %3268 = vperm.xlu0 %3267, %v1962
      %v3269 = vpop.permute.xlu0 %3268
      %3272 = vset.pattern.permute.xlu0 0
      %3273 = vperm.xlu0 %3272, %v1964
      %v3274 = vpop.permute.xlu0 %3273
      %3277 = vset.pattern.permute.xlu0 0
      %3278 = vperm.xlu0 %3277, %v1966
      %v3279 = vpop.permute.xlu0 %3278
      %3282 = vset.pattern.permute.xlu0 0
      %3283 = vperm.xlu0 %3282, %v1968
      %v3284 = vpop.permute.xlu0 %3283
      %3287 = vset.pattern.permute.xlu0 0
      %3288 = vperm.xlu0 %3287, %v1970
      %v3289 = vpop.permute.xlu0 %3288
      %3292 = vset.pattern.permute.xlu0 0
      %3293 = vperm.xlu0 %3292, %v1972
      %v3294 = vpop.permute.xlu0 %3293
      %3297 = vset.pattern.permute.xlu0 0
      %3298 = vperm.xlu0 %3297, %v1974
      %v3299 = vpop.permute.xlu0 %3298
      %3302 = vset.pattern.permute.xlu0 0
      %3303 = vperm.xlu0 %3302, %v1976
      %v3304 = vpop.permute.xlu0 %3303
      %3307 = vset.pattern.permute.xlu0 0
      %3308 = vperm.xlu0 %3307, %v1978
      %v3309 = vpop.permute.xlu0 %3308
      %3312 = vset.pattern.permute.xlu0 0
      %3313 = vperm.xlu0 %3312, %v1980
      %v3314 = vpop.permute.xlu0 %3313
      %3317 = vset.pattern.permute.xlu0 0
      %3318 = vperm.xlu0 %3317, %v1982
      %v3319 = vpop.permute.xlu0 %3318
      %3322 = vset.pattern.permute.xlu0 0
      %3323 = vperm.xlu0 %3322, %v1984
      %v3324 = vpop.permute.xlu0 %3323
      %3327 = vset.pattern.permute.xlu0 0
      %3328 = vperm.xlu0 %3327, %v1986
      %v3329 = vpop.permute.xlu0 %3328
      %3332 = vset.pattern.permute.xlu0 0
      %3333 = vperm.xlu0 %3332, %v1988
      %v3334 = vpop.permute.xlu0 %3333
      %3337 = vset.pattern.permute.xlu0 0
      %3338 = vperm.xlu0 %3337, %v1990
      %v3339 = vpop.permute.xlu0 %3338
      %3342 = vset.pattern.permute.xlu0 0
      %3343 = vperm.xlu0 %3342, %v1992
      %v3344 = vpop.permute.xlu0 %3343
      %3347 = vset.pattern.permute.xlu0 0
      %3348 = vperm.xlu0 %3347, %v1994
      %v3349 = vpop.permute.xlu0 %3348
      %3352 = vset.pattern.permute.xlu0 0
      %3353 = vperm.xlu0 %3352, %v1996
      %v3354 = vpop.permute.xlu0 %3353
      %3357 = vset.pattern.permute.xlu0 0
      %3358 = vperm.xlu0 %3357, %v1998
      %v3359 = vpop.permute.xlu0 %3358
      %3362 = vset.pattern.permute.xlu0 0
      %3363 = vperm.xlu0 %3362, %v2000
      %v3364 = vpop.permute.xlu0 %3363
      %3367 = vset.pattern.permute.xlu0 0
      %3368 = vperm.xlu0 %3367, %v2002
      %v3369 = vpop.permute.xlu0 %3368
      %3372 = vset.pattern.permute.xlu0 0
      %3373 = vperm.xlu0 %3372, %v2004
      %v3374 = vpop.permute.xlu0 %3373
      %3377 = vset.pattern.permute.xlu0 0
      %3378 = vperm.xlu0 %3377, %v2006
      %v3379 = vpop.permute.xlu0 %3378
      %3382 = vset.pattern.permute.xlu0 0
      %3383 = vperm.xlu0 %3382, %v2008
      %v3384 = vpop.permute.xlu0 %3383
      %3387 = vset.pattern.permute.xlu0 0
      %3388 = vperm.xlu0 %3387, %v2010
      %v3389 = vpop.permute.xlu0 %3388
      %3392 = vset.pattern.permute.xlu0 0
      %3393 = vperm.xlu0 %3392, %v2012
      %v3394 = vpop.permute.xlu0 %3393
      %3397 = vset.pattern.permute.xlu0 0
      %3398 = vperm.xlu0 %3397, %v2014
      %v3399 = vpop.permute.xlu0 %3398
      %3402 = vset.pattern.permute.xlu0 0
      %3403 = vperm.xlu0 %3402, %v2016
      %v3404 = vpop.permute.xlu0 %3403
      %3407 = vset.pattern.permute.xlu0 0
      %3408 = vperm.xlu0 %3407, %v2018
      %v3409 = vpop.permute.xlu0 %3408
      %3412 = vset.pattern.permute.xlu0 0
      %3413 = vperm.xlu0 %3412, %v2020
      %v3414 = vpop.permute.xlu0 %3413
      %3417 = vset.pattern.permute.xlu0 0
      %3418 = vperm.xlu0 %3417, %v2022
      %v3419 = vpop.permute.xlu0 %3418
      %3422 = vset.pattern.permute.xlu0 0
      %3423 = vperm.xlu0 %3422, %v2024
      %v3424 = vpop.permute.xlu0 %3423
      %3427 = vset.pattern.permute.xlu0 0
      %3428 = vperm.xlu0 %3427, %v2026
      %v3429 = vpop.permute.xlu0 %3428
      %3432 = vset.pattern.permute.xlu0 0
      %3433 = vperm.xlu0 %3432, %v2028
      %v3434 = vpop.permute.xlu0 %3433
      %3437 = vset.pattern.permute.xlu0 0
      %3438 = vperm.xlu0 %3437, %v2030
      %v3439 = vpop.permute.xlu0 %3438
      %3442 = vset.pattern.permute.xlu0 0
      %3443 = vperm.xlu0 %3442, %v2032
      %v3444 = vpop.permute.xlu0 %3443
      %3447 = vset.pattern.permute.xlu0 0
      %3448 = vperm.xlu0 %3447, %v2034
      %v3449 = vpop.permute.xlu0 %3448
      %3452 = vset.pattern.permute.xlu0 0
      %3453 = vperm.xlu0 %3452, %v2036
      %v3454 = vpop.permute.xlu0 %3453
      %3457 = vset.pattern.permute.xlu0 0
      %3458 = vperm.xlu0 %3457, %v2038
      %v3459 = vpop.permute.xlu0 %3458
      %3462 = vset.pattern.permute.xlu0 0
      %3463 = vperm.xlu0 %3462, %v2040
      %v3464 = vpop.permute.xlu0 %3463
      %3467 = vset.pattern.permute.xlu0 0
      %3468 = vperm.xlu0 %3467, %v2042
      %v3469 = vpop.permute.xlu0 %3468
      %3472 = vset.pattern.permute.xlu0 0
      %3473 = vperm.xlu0 %3472, %v2044
      %v3474 = vpop.permute.xlu0 %3473
      %3477 = vset.pattern.permute.xlu0 0
      %3478 = vperm.xlu0 %3477, %v2046
      %v3479 = vpop.permute.xlu0 %3478
      %3482 = vset.pattern.permute.xlu0 0
      %3483 = vperm.xlu0 %3482, %v2048
      %v3484 = vpop.permute.xlu0 %3483
      %3487 = vset.pattern.permute.xlu0 0
      %3488 = vperm.xlu0 %3487, %v2050
      %v3489 = vpop.permute.xlu0 %3488
      %3492 = vset.pattern.permute.xlu0 0
      %3493 = vperm.xlu0 %3492, %v2052
      %v3494 = vpop.permute.xlu0 %3493
      %3497 = vset.pattern.permute.xlu0 0
      %3498 = vperm.xlu0 %3497, %v2054
      %v3499 = vpop.permute.xlu0 %3498
      %3502 = vset.pattern.permute.xlu0 0
      %3503 = vperm.xlu0 %3502, %v2056
      %v3504 = vpop.permute.xlu0 %3503
      %3507 = vset.pattern.permute.xlu0 0
      %3508 = vperm.xlu0 %3507, %v2058
      %v3509 = vpop.permute.xlu0 %3508
      %3512 = vset.pattern.permute.xlu0 0
      %3513 = vperm.xlu0 %3512, %v2060
      %v3514 = vpop.permute.xlu0 %3513
      %3517 = vset.pattern.permute.xlu0 0
      %3518 = vperm.xlu0 %3517, %v2062
      %v3519 = vpop.permute.xlu0 %3518
      %3522 = vset.pattern.permute.xlu0 0
      %3523 = vperm.xlu0 %3522, %v2064
      %v3524 = vpop.permute.xlu0 %3523
      %3527 = vset.pattern.permute.xlu0 0
      %3528 = vperm.xlu0 %3527, %v2066
      %v3529 = vpop.permute.xlu0 %3528
      %3532 = vset.pattern.permute.xlu0 0
      %3533 = vperm.xlu0 %3532, %v2068
      %v3534 = vpop.permute.xlu0 %3533
      %3537 = vset.pattern.permute.xlu0 0
      %3538 = vperm.xlu0 %3537, %v2070
      %v3539 = vpop.permute.xlu0 %3538
      %3542 = vset.pattern.permute.xlu0 0
      %3543 = vperm.xlu0 %3542, %v2072
      %v3544 = vpop.permute.xlu0 %3543
      %3547 = vset.pattern.permute.xlu0 0
      %3548 = vperm.xlu0 %3547, %v2074
      %v3549 = vpop.permute.xlu0 %3548
      %3552 = vset.pattern.permute.xlu0 0
      %3553 = vperm.xlu0 %3552, %v2076
      %v3554 = vpop.permute.xlu0 %3553
      %3557 = vset.pattern.permute.xlu0 0
      %3558 = vperm.xlu0 %3557, %v2078
      %v3559 = vpop.permute.xlu0 %3558
      %3562 = vset.pattern.permute.xlu0 0
      %3563 = vperm.xlu0 %3562, %v2080
      %v3564 = vpop.permute.xlu0 %3563
      %3567 = vset.pattern.permute.xlu0 0
      %3568 = vperm.xlu0 %3567, %v2082
      %v3569 = vpop.permute.xlu0 %3568
      %3572 = vset.pattern.permute.xlu0 0
      %3573 = vperm.xlu0 %3572, %v2084
      %v3574 = vpop.permute.xlu0 %3573
      %3577 = vset.pattern.permute.xlu0 0
      %3578 = vperm.xlu0 %3577, %v2086
      %v3579 = vpop.permute.xlu0 %3578
      %3582 = vset.pattern.permute.xlu0 0
      %3583 = vperm.xlu0 %3582, %v2088
      %v3584 = vpop.permute.xlu0 %3583
      %3587 = vset.pattern.permute.xlu0 0
      %3588 = vperm.xlu0 %3587, %v2090
      %v3589 = vpop.permute.xlu0 %3588
      %3592 = vset.pattern.permute.xlu0 0
      %3593 = vperm.xlu0 %3592, %v2092
      %v3594 = vpop.permute.xlu0 %3593
      %3597 = vset.pattern.permute.xlu0 0
      %3598 = vperm.xlu0 %3597, %v2094
      %v3599 = vpop.permute.xlu0 %3598
      %3602 = vset.pattern.permute.xlu0 0
      %3603 = vperm.xlu0 %3602, %v2096
      %v3604 = vpop.permute.xlu0 %3603
      %3607 = vset.pattern.permute.xlu0 0
      %3608 = vperm.xlu0 %3607, %v2098
      %v3609 = vpop.permute.xlu0 %3608
      %3612 = vset.pattern.permute.xlu0 0
      %3613 = vperm.xlu0 %3612, %v2100
      %v3614 = vpop.permute.xlu0 %3613
      %3617 = vset.pattern.permute.xlu0 0
      %3618 = vperm.xlu0 %3617, %v2102
      %v3619 = vpop.permute.xlu0 %3618
      %3622 = vset.pattern.permute.xlu0 0
      %3623 = vperm.xlu0 %3622, %v2104
      %v3624 = vpop.permute.xlu0 %3623
      %3627 = vset.pattern.permute.xlu0 0
      %3628 = vperm.xlu0 %3627, %v2106
      %v3629 = vpop.permute.xlu0 %3628
      %3632 = vset.pattern.permute.xlu0 0
      %3633 = vperm.xlu0 %3632, %v2108
      %v3634 = vpop.permute.xlu0 %3633
      %3637 = vset.pattern.permute.xlu0 0
      %3638 = vperm.xlu0 %3637, %v2110
      %v3639 = vpop.permute.xlu0 %3638
      %3642 = vset.pattern.permute.xlu0 0
      %3643 = vperm.xlu0 %3642, %v2112
      %v3644 = vpop.permute.xlu0 %3643
      %3647 = vset.pattern.permute.xlu0 0
      %3648 = vperm.xlu0 %3647, %v2114
      %v3649 = vpop.permute.xlu0 %3648
      %3652 = vset.pattern.permute.xlu0 0
      %3653 = vperm.xlu0 %3652, %v2116
      %v3654 = vpop.permute.xlu0 %3653
      %3657 = vset.pattern.permute.xlu0 0
      %3658 = vperm.xlu0 %3657, %v2118
      %v3659 = vpop.permute.xlu0 %3658
      %3662 = vset.pattern.permute.xlu0 0
      %3663 = vperm.xlu0 %3662, %v2120
      %v3664 = vpop.permute.xlu0 %3663
      %3667 = vset.pattern.permute.xlu0 0
      %3668 = vperm.xlu0 %3667, %v2122
      %v3669 = vpop.permute.xlu0 %3668
      %3672 = vset.pattern.permute.xlu0 0
      %3673 = vperm.xlu0 %3672, %v2124
      %v3674 = vpop.permute.xlu0 %3673
      %3677 = vset.pattern.permute.xlu0 0
      %3678 = vperm.xlu0 %3677, %v2126
      %v3679 = vpop.permute.xlu0 %3678
      %3682 = vset.pattern.permute.xlu0 0
      %3683 = vperm.xlu0 %3682, %v2128
      %v3684 = vpop.permute.xlu0 %3683
      %3687 = vset.pattern.permute.xlu0 0
      %3688 = vperm.xlu0 %3687, %v2130
      %v3689 = vpop.permute.xlu0 %3688
      %3692 = vset.pattern.permute.xlu0 0
      %3693 = vperm.xlu0 %3692, %v2132
      %v3694 = vpop.permute.xlu0 %3693
      %3697 = vset.pattern.permute.xlu0 0
      %3698 = vperm.xlu0 %3697, %v2134
      %v3699 = vpop.permute.xlu0 %3698
      %3702 = vset.pattern.permute.xlu0 0
      %3703 = vperm.xlu0 %3702, %v2136
      %v3704 = vpop.permute.xlu0 %3703
      %3707 = vset.pattern.permute.xlu0 0
      %3708 = vperm.xlu0 %3707, %v2138
      %v3709 = vpop.permute.xlu0 %3708
      %3712 = vset.pattern.permute.xlu0 0
      %3713 = vperm.xlu0 %3712, %v2140
      %v3714 = vpop.permute.xlu0 %3713
      %3717 = vset.pattern.permute.xlu0 0
      %3718 = vperm.xlu0 %3717, %v2142
      %v3719 = vpop.permute.xlu0 %3718
      %3722 = vset.pattern.permute.xlu0 0
      %3723 = vperm.xlu0 %3722, %v2144
      %v3724 = vpop.permute.xlu0 %3723
      %3727 = vset.pattern.permute.xlu0 0
      %3728 = vperm.xlu0 %3727, %v2146
      %v3729 = vpop.permute.xlu0 %3728
      %3732 = vset.pattern.permute.xlu0 0
      %3733 = vperm.xlu0 %3732, %v2148
      %v3734 = vpop.permute.xlu0 %3733
      %3737 = vset.pattern.permute.xlu0 0
      %3738 = vperm.xlu0 %3737, %v2150
      %v3739 = vpop.permute.xlu0 %3738
      %3742 = vset.pattern.permute.xlu0 0
      %3743 = vperm.xlu0 %3742, %v2152
      %v3744 = vpop.permute.xlu0 %3743
      %3747 = vset.pattern.permute.xlu0 0
      %3748 = vperm.xlu0 %3747, %v2154
      %v3749 = vpop.permute.xlu0 %3748
      %3752 = vset.pattern.permute.xlu0 0
      %3753 = vperm.xlu0 %3752, %v2156
      %v3754 = vpop.permute.xlu0 %3753
      %3757 = vset.pattern.permute.xlu0 0
      %3758 = vperm.xlu0 %3757, %v2158
      %v3759 = vpop.permute.xlu0 %3758
      %3762 = vset.pattern.permute.xlu0 0
      %3763 = vperm.xlu0 %3762, %v2160
      %v3764 = vpop.permute.xlu0 %3763
      %3767 = vset.pattern.permute.xlu0 0
      %3768 = vperm.xlu0 %3767, %v2162
      %v3769 = vpop.permute.xlu0 %3768
      %3772 = vset.pattern.permute.xlu0 0
      %3773 = vperm.xlu0 %3772, %v2164
      %v3774 = vpop.permute.xlu0 %3773
      %3777 = vset.pattern.permute.xlu0 0
      %3778 = vperm.xlu0 %3777, %v2166
      %v3779 = vpop.permute.xlu0 %3778
      %3782 = vset.pattern.permute.xlu0 0
      %3783 = vperm.xlu0 %3782, %v2168
      %v3784 = vpop.permute.xlu0 %3783
      %3787 = vset.pattern.permute.xlu0 0
      %3788 = vperm.xlu0 %3787, %v2170
      %v3789 = vpop.permute.xlu0 %3788
      %3792 = vset.pattern.permute.xlu0 0
      %3793 = vperm.xlu0 %3792, %v2172
      %v3794 = vpop.permute.xlu0 %3793
      %3797 = vset.pattern.permute.xlu0 0
      %3798 = vperm.xlu0 %3797, %v2174
      %v3799 = vpop.permute.xlu0 %3798
      %3802 = vset.pattern.permute.xlu0 0
      %3803 = vperm.xlu0 %3802, %v2176
      %v3804 = vpop.permute.xlu0 %3803
      %3807 = vset.pattern.permute.xlu0 0
      %3808 = vperm.xlu0 %3807, %v2178
      %v3809 = vpop.permute.xlu0 %3808
      %3812 = vset.pattern.permute.xlu0 0
      %3813 = vperm.xlu0 %3812, %v2180
      %v3814 = vpop.permute.xlu0 %3813
      %3817 = vset.pattern.permute.xlu0 0
      %3818 = vperm.xlu0 %3817, %v2182
      %v3819 = vpop.permute.xlu0 %3818
      %3822 = vset.pattern.permute.xlu0 0
      %3823 = vperm.xlu0 %3822, %v2184
      %v3824 = vpop.permute.xlu0 %3823
      %3827 = vset.pattern.permute.xlu0 0
      %3828 = vperm.xlu0 %3827, %v2186
      %v3829 = vpop.permute.xlu0 %3828
      %3832 = vset.pattern.permute.xlu0 0
      %3833 = vperm.xlu0 %3832, %v2188
      %v3834 = vpop.permute.xlu0 %3833
      %3837 = vset.pattern.permute.xlu0 0
      %3838 = vperm.xlu0 %3837, %v2190
      %v3839 = vpop.permute.xlu0 %3838
      %3842 = vset.pattern.permute.xlu0 0
      %3843 = vperm.xlu0 %3842, %v2192
      %v3844 = vpop.permute.xlu0 %3843
      %3847 = vset.pattern.permute.xlu0 0
      %3848 = vperm.xlu0 %3847, %v2194
      %v3849 = vpop.permute.xlu0 %3848
      %3852 = vset.pattern.permute.xlu0 0
      %3853 = vperm.xlu0 %3852, %v2196
      %v3854 = vpop.permute.xlu0 %3853
      %3857 = vset.pattern.permute.xlu0 0
      %3858 = vperm.xlu0 %3857, %v2198
      %v3859 = vpop.permute.xlu0 %3858
      %3862 = vset.pattern.permute.xlu0 0
      %3863 = vperm.xlu0 %3862, %v2200
      %v3864 = vpop.permute.xlu0 %3863
      %3867 = vset.pattern.permute.xlu0 0
      %3868 = vperm.xlu0 %3867, %v2202
      %v3869 = vpop.permute.xlu0 %3868
      %3872 = vset.pattern.permute.xlu0 0
      %3873 = vperm.xlu0 %3872, %v2204
      %v3874 = vpop.permute.xlu0 %3873
      %3877 = vset.pattern.permute.xlu0 0
      %3878 = vperm.xlu0 %3877, %v2206
      %v3879 = vpop.permute.xlu0 %3878
      %3882 = vset.pattern.permute.xlu0 0
      %3883 = vperm.xlu0 %3882, %v2208
      %v3884 = vpop.permute.xlu0 %3883
      %3887 = vset.pattern.permute.xlu0 0
      %3888 = vperm.xlu0 %3887, %v2210
      %v3889 = vpop.permute.xlu0 %3888
      %3892 = vset.pattern.permute.xlu0 0
      %3893 = vperm.xlu0 %3892, %v2212
      %v3894 = vpop.permute.xlu0 %3893
      %3897 = vset.pattern.permute.xlu0 0
      %3898 = vperm.xlu0 %3897, %v2214
      %v3899 = vpop.permute.xlu0 %3898
      %3902 = vset.pattern.permute.xlu0 0
      %3903 = vperm.xlu0 %3902, %v2216
      %v3904 = vpop.permute.xlu0 %3903
      %3907 = vset.pattern.permute.xlu0 0
      %3908 = vperm.xlu0 %3907, %v2218
      %v3909 = vpop.permute.xlu0 %3908
      %3912 = vset.pattern.permute.xlu0 0
      %3913 = vperm.xlu0 %3912, %v2220
      %v3914 = vpop.permute.xlu0 %3913
      %3917 = vset.pattern.permute.xlu0 0
      %3918 = vperm.xlu0 %3917, %v2222
      %v3919 = vpop.permute.xlu0 %3918
      %3922 = vset.pattern.permute.xlu0 0
      %3923 = vperm.xlu0 %3922, %v2224
      %v3924 = vpop.permute.xlu0 %3923
      %3927 = vset.pattern.permute.xlu0 0
      %3928 = vperm.xlu0 %3927, %v2226
      %v3929 = vpop.permute.xlu0 %3928
      %3932 = vset.pattern.permute.xlu0 0
      %3933 = vperm.xlu0 %3932, %v2228
      %v3934 = vpop.permute.xlu0 %3933
      %3937 = vset.pattern.permute.xlu0 0
      %3938 = vperm.xlu0 %3937, %v2230
      %v3939 = vpop.permute.xlu0 %3938
      %3942 = vset.pattern.permute.xlu0 0
      %3943 = vperm.xlu0 %3942, %v2232
      %v3944 = vpop.permute.xlu0 %3943
      %3947 = vset.pattern.permute.xlu0 0
      %3948 = vperm.xlu0 %3947, %v2234
      %v3949 = vpop.permute.xlu0 %3948
      %3952 = vset.pattern.permute.xlu0 0
      %3953 = vperm.xlu0 %3952, %v2236
      %v3954 = vpop.permute.xlu0 %3953
      %3957 = vset.pattern.permute.xlu0 0
      %3958 = vperm.xlu0 %3957, %v2238
      %v3959 = vpop.permute.xlu0 %3958
      %3962 = vset.pattern.permute.xlu0 0
      %3963 = vperm.xlu0 %3962, %v2240
      %v3964 = vpop.permute.xlu0 %3963
      %3967 = vset.pattern.permute.xlu0 0
      %3968 = vperm.xlu0 %3967, %v2242
      %v3969 = vpop.permute.xlu0 %3968
      %v3971 = vmul.f32 %v2243, %v2534
      %v3972 = vmul.f32 %v2244, %v2539
      %v3973 = vmul.f32 %v2245, %v2544
      %v3974 = vmul.f32 %v2246, %v2549
      %v3975 = vmul.f32 %v2247, %v2554
      %v3976 = vmul.f32 %v2248, %v2559
      %v3977 = vmul.f32 %v2249, %v2564
      %v3978 = vmul.f32 %v2250, %v2569
      %v3979 = vmul.f32 %v2251, %v2574
      %v3980 = vmul.f32 %v2252, %v2579
      %v3981 = vmul.f32 %v2253, %v2584
      %v3982 = vmul.f32 %v2254, %v2589
      %v3983 = vmul.f32 %v2255, %v2594
      %v3984 = vmul.f32 %v2256, %v2599
      %v3985 = vmul.f32 %v2257, %v2604
      %v3986 = vmul.f32 %v2258, %v2609
      %v3987 = vmul.f32 %v2259, %v2614
      %v3988 = vmul.f32 %v2260, %v2619
      %v3989 = vmul.f32 %v2261, %v2624
      %v3990 = vmul.f32 %v2262, %v2629
      %v3991 = vmul.f32 %v2263, %v2634
      %v3992 = vmul.f32 %v2264, %v2639
      %v3993 = vmul.f32 %v2265, %v2644
      %v3994 = vmul.f32 %v2266, %v2649
      %v3995 = vmul.f32 %v2267, %v2654
      %v3996 = vmul.f32 %v2268, %v2659
      %v3997 = vmul.f32 %v2269, %v2664
      %v3998 = vmul.f32 %v2270, %v2669
      %v3999 = vmul.f32 %v2271, %v2674
      %v4000 = vmul.f32 %v2272, %v2679
      %v4001 = vmul.f32 %v2273, %v2684
      %v4002 = vmul.f32 %v2274, %v2689
      %v4003 = vmul.f32 %v2275, %v2694
      %v4004 = vmul.f32 %v2276, %v2699
      %v4005 = vmul.f32 %v2277, %v2704
      %v4006 = vmul.f32 %v2278, %v2709
      %v4007 = vmul.f32 %v2279, %v2714
      %v4008 = vmul.f32 %v2280, %v2719
      %v4009 = vmul.f32 %v2281, %v2724
      %v4010 = vmul.f32 %v2282, %v2729
      %v4011 = vmul.f32 %v2283, %v2734
      %v4012 = vmul.f32 %v2284, %v2739
      %v4013 = vmul.f32 %v2285, %v2744
      %v4014 = vmul.f32 %v2286, %v2749
      %v4015 = vmul.f32 %v2287, %v2754
      %v4016 = vmul.f32 %v2288, %v2759
      %v4017 = vmul.f32 %v2289, %v2764
      %v4018 = vmul.f32 %v2290, %v2769
      %v4019 = vmul.f32 %v2291, %v2774
      %v4020 = vmul.f32 %v2292, %v2779
      %v4021 = vmul.f32 %v2293, %v2784
      %v4022 = vmul.f32 %v2294, %v2789
      %v4023 = vmul.f32 %v2295, %v2794
      %v4024 = vmul.f32 %v2296, %v2799
      %v4025 = vmul.f32 %v2297, %v2804
      %v4026 = vmul.f32 %v2298, %v2809
      %v4027 = vmul.f32 %v2299, %v2814
      %v4028 = vmul.f32 %v2300, %v2819
      %v4029 = vmul.f32 %v2301, %v2824
      %v4030 = vmul.f32 %v2302, %v2829
      %v4031 = vmul.f32 %v2303, %v2834
      %v4032 = vmul.f32 %v2304, %v2839
      %v4033 = vmul.f32 %v2305, %v2844
      %v4034 = vmul.f32 %v2306, %v2849
      %v4035 = vmul.f32 %v2307, %v2854
      %v4036 = vmul.f32 %v2308, %v2859
      %v4037 = vmul.f32 %v2309, %v2864
      %v4038 = vmul.f32 %v2310, %v2869
      %v4039 = vmul.f32 %v2311, %v2874
      %v4040 = vmul.f32 %v2312, %v2879
      %v4041 = vmul.f32 %v2313, %v2884
      %v4042 = vmul.f32 %v2314, %v2889
      %v4043 = vmul.f32 %v2315, %v2894
      %v4044 = vmul.f32 %v2316, %v2899
      %v4045 = vmul.f32 %v2317, %v2904
      %v4046 = vmul.f32 %v2318, %v2909
      %v4047 = vmul.f32 %v2319, %v2914
      %v4048 = vmul.f32 %v2320, %v2919
      %v4049 = vmul.f32 %v2321, %v2924
      %v4050 = vmul.f32 %v2322, %v2929
      %v4051 = vmul.f32 %v2323, %v2934
      %v4052 = vmul.f32 %v2324, %v2939
      %v4053 = vmul.f32 %v2325, %v2944
      %v4054 = vmul.f32 %v2326, %v2949
      %v4055 = vmul.f32 %v2327, %v2954
      %v4056 = vmul.f32 %v2328, %v2959
      %v4057 = vmul.f32 %v2329, %v2964
      %v4058 = vmul.f32 %v2330, %v2969
      %v4059 = vmul.f32 %v2331, %v2974
      %v4060 = vmul.f32 %v2332, %v2979
      %v4061 = vmul.f32 %v2333, %v2984
      %v4062 = vmul.f32 %v2334, %v2989
      %v4063 = vmul.f32 %v2335, %v2994
      %v4064 = vmul.f32 %v2336, %v2999
      %v4065 = vmul.f32 %v2337, %v3004
      %v4066 = vmul.f32 %v2338, %v3009
      %v4067 = vmul.f32 %v2339, %v3014
      %v4068 = vmul.f32 %v2340, %v3019
      %v4069 = vmul.f32 %v2341, %v3024
      %v4070 = vmul.f32 %v2342, %v3029
      %v4071 = vmul.f32 %v2343, %v3034
      %v4072 = vmul.f32 %v2344, %v3039
      %v4073 = vmul.f32 %v2345, %v3044
      %v4074 = vmul.f32 %v2346, %v3049
      %v4075 = vmul.f32 %v2347, %v3054
      %v4076 = vmul.f32 %v2348, %v3059
      %v4077 = vmul.f32 %v2349, %v3064
      %v4078 = vmul.f32 %v2350, %v3069
      %v4079 = vmul.f32 %v2351, %v3074
      %v4080 = vmul.f32 %v2352, %v3079
      %v4081 = vmul.f32 %v2353, %v3084
      %v4082 = vmul.f32 %v2354, %v3089
      %v4083 = vmul.f32 %v2355, %v3094
      %v4084 = vmul.f32 %v2356, %v3099
      %v4085 = vmul.f32 %v2357, %v3104
      %v4086 = vmul.f32 %v2358, %v3109
      %v4087 = vmul.f32 %v2359, %v3114
      %v4088 = vmul.f32 %v2360, %v3119
      %v4089 = vmul.f32 %v2361, %v3124
      %v4090 = vmul.f32 %v2362, %v3129
      %v4091 = vmul.f32 %v2363, %v3134
      %v4092 = vmul.f32 %v2364, %v3139
      %v4093 = vmul.f32 %v2365, %v3144
      %v4094 = vmul.f32 %v2366, %v3149
      %v4095 = vmul.f32 %v2367, %v3154
      %v4096 = vmul.f32 %v2368, %v3159
      %v4097 = vmul.f32 %v2369, %v3164
      %v4098 = vmul.f32 %v2370, %v3169
      %v4099 = vmul.f32 %v2371, %v3174
      %v4100 = vmul.f32 %v2372, %v3179
      %v4101 = vmul.f32 %v2373, %v3184
      %v4102 = vmul.f32 %v2374, %v3189
      %v4103 = vmul.f32 %v2375, %v3194
      %v4104 = vmul.f32 %v2376, %v3199
      %v4105 = vmul.f32 %v2377, %v3204
      %v4106 = vmul.f32 %v2378, %v3209
      %v4107 = vmul.f32 %v2379, %v3214
      %v4108 = vmul.f32 %v2380, %v3219
      %v4109 = vmul.f32 %v2381, %v3224
      %v4110 = vmul.f32 %v2382, %v3229
      %v4111 = vmul.f32 %v2383, %v3234
      %v4112 = vmul.f32 %v2384, %v3239
      %v4113 = vmul.f32 %v2385, %v3244
      %v4114 = vmul.f32 %v2386, %v3249
      %v4115 = vmul.f32 %v2387, %v3254
      %v4116 = vmul.f32 %v2388, %v3259
      %v4117 = vmul.f32 %v2389, %v3264
      %v4118 = vmul.f32 %v2390, %v3269
      %v4119 = vmul.f32 %v2391, %v3274
      %v4120 = vmul.f32 %v2392, %v3279
      %v4121 = vmul.f32 %v2393, %v3284
      %v4122 = vmul.f32 %v2394, %v3289
      %v4123 = vmul.f32 %v2395, %v3294
      %v4124 = vmul.f32 %v2396, %v3299
      %v4125 = vmul.f32 %v2397, %v3304
      %v4126 = vmul.f32 %v2398, %v3309
      %v4127 = vmul.f32 %v2399, %v3314
      %v4128 = vmul.f32 %v2400, %v3319
      %v4129 = vmul.f32 %v2401, %v3324
      %v4130 = vmul.f32 %v2402, %v3329
      %v4131 = vmul.f32 %v2403, %v3334
      %v4132 = vmul.f32 %v2404, %v3339
      %v4133 = vmul.f32 %v2405, %v3344
      %v4134 = vmul.f32 %v2406, %v3349
      %v4135 = vmul.f32 %v2407, %v3354
      %v4136 = vmul.f32 %v2408, %v3359
      %v4137 = vmul.f32 %v2409, %v3364
      %v4138 = vmul.f32 %v2410, %v3369
      %v4139 = vmul.f32 %v2411, %v3374
      %v4140 = vmul.f32 %v2412, %v3379
      %v4141 = vmul.f32 %v2413, %v3384
      %v4142 = vmul.f32 %v2414, %v3389
      %v4143 = vmul.f32 %v2415, %v3394
      %v4144 = vmul.f32 %v2416, %v3399
      %v4145 = vmul.f32 %v2417, %v3404
      %v4146 = vmul.f32 %v2418, %v3409
      %v4147 = vmul.f32 %v2419, %v3414
      %v4148 = vmul.f32 %v2420, %v3419
      %v4149 = vmul.f32 %v2421, %v3424
      %v4150 = vmul.f32 %v2422, %v3429
      %v4151 = vmul.f32 %v2423, %v3434
      %v4152 = vmul.f32 %v2424, %v3439
      %v4153 = vmul.f32 %v2425, %v3444
      %v4154 = vmul.f32 %v2426, %v3449
      %v4155 = vmul.f32 %v2427, %v3454
      %v4156 = vmul.f32 %v2428, %v3459
      %v4157 = vmul.f32 %v2429, %v3464
      %v4158 = vmul.f32 %v2430, %v3469
      %v4159 = vmul.f32 %v2431, %v3474
      %v4160 = vmul.f32 %v2432, %v3479
      %v4161 = vmul.f32 %v2433, %v3484
      %v4162 = vmul.f32 %v2434, %v3489
      %v4163 = vmul.f32 %v2435, %v3494
      %v4164 = vmul.f32 %v2436, %v3499
      %v4165 = vmul.f32 %v2437, %v3504
      %v4166 = vmul.f32 %v2438, %v3509
      %v4167 = vmul.f32 %v2439, %v3514
      %v4168 = vmul.f32 %v2440, %v3519
      %v4169 = vmul.f32 %v2441, %v3524
      %v4170 = vmul.f32 %v2442, %v3529
      %v4171 = vmul.f32 %v2443, %v3534
      %v4172 = vmul.f32 %v2444, %v3539
      %v4173 = vmul.f32 %v2445, %v3544
      %v4174 = vmul.f32 %v2446, %v3549
      %v4175 = vmul.f32 %v2447, %v3554
      %v4176 = vmul.f32 %v2448, %v3559
      %v4177 = vmul.f32 %v2449, %v3564
      %v4178 = vmul.f32 %v2450, %v3569
      %v4179 = vmul.f32 %v2451, %v3574
      %v4180 = vmul.f32 %v2452, %v3579
      %v4181 = vmul.f32 %v2453, %v3584
      %v4182 = vmul.f32 %v2454, %v3589
      %v4183 = vmul.f32 %v2455, %v3594
      %v4184 = vmul.f32 %v2456, %v3599
      %v4185 = vmul.f32 %v2457, %v3604
      %v4186 = vmul.f32 %v2458, %v3609
      %v4187 = vmul.f32 %v2459, %v3614
      %v4188 = vmul.f32 %v2460, %v3619
      %v4189 = vmul.f32 %v2461, %v3624
      %v4190 = vmul.f32 %v2462, %v3629
      %v4191 = vmul.f32 %v2463, %v3634
      %v4192 = vmul.f32 %v2464, %v3639
      %v4193 = vmul.f32 %v2465, %v3644
      %v4194 = vmul.f32 %v2466, %v3649
      %v4195 = vmul.f32 %v2467, %v3654
      %v4196 = vmul.f32 %v2468, %v3659
      %v4197 = vmul.f32 %v2469, %v3664
      %v4198 = vmul.f32 %v2470, %v3669
      %v4199 = vmul.f32 %v2471, %v3674
      %v4200 = vmul.f32 %v2472, %v3679
      %v4201 = vmul.f32 %v2473, %v3684
      %v4202 = vmul.f32 %v2474, %v3689
      %v4203 = vmul.f32 %v2475, %v3694
      %v4204 = vmul.f32 %v2476, %v3699
      %v4205 = vmul.f32 %v2477, %v3704
      %v4206 = vmul.f32 %v2478, %v3709
      %v4207 = vmul.f32 %v2479, %v3714
      %v4208 = vmul.f32 %v2480, %v3719
      %v4209 = vmul.f32 %v2481, %v3724
      %v4210 = vmul.f32 %v2482, %v3729
      %v4211 = vmul.f32 %v2483, %v3734
      %v4212 = vmul.f32 %v2484, %v3739
      %v4213 = vmul.f32 %v2485, %v3744
      %v4214 = vmul.f32 %v2486, %v3749
      %v4215 = vmul.f32 %v2487, %v3754
      %v4216 = vmul.f32 %v2488, %v3759
      %v4217 = vmul.f32 %v2489, %v3764
      %v4218 = vmul.f32 %v2490, %v3769
      %v4219 = vmul.f32 %v2491, %v3774
      %v4220 = vmul.f32 %v2492, %v3779
      %v4221 = vmul.f32 %v2493, %v3784
      %v4222 = vmul.f32 %v2494, %v3789
      %v4223 = vmul.f32 %v2495, %v3794
      %v4224 = vmul.f32 %v2496, %v3799
      %v4225 = vmul.f32 %v2497, %v3804
      %v4226 = vmul.f32 %v2498, %v3809
      %v4227 = vmul.f32 %v2499, %v3814
      %v4228 = vmul.f32 %v2500, %v3819
      %v4229 = vmul.f32 %v2501, %v3824
      %v4230 = vmul.f32 %v2502, %v3829
      %v4231 = vmul.f32 %v2503, %v3834
      %v4232 = vmul.f32 %v2504, %v3839
      %v4233 = vmul.f32 %v2505, %v3844
      %v4234 = vmul.f32 %v2506, %v3849
      %v4235 = vmul.f32 %v2507, %v3854
      %v4236 = vmul.f32 %v2508, %v3859
      %v4237 = vmul.f32 %v2509, %v3864
      %v4238 = vmul.f32 %v2510, %v3869
      %v4239 = vmul.f32 %v2511, %v3874
      %v4240 = vmul.f32 %v2512, %v3879
      %v4241 = vmul.f32 %v2513, %v3884
      %v4242 = vmul.f32 %v2514, %v3889
      %v4243 = vmul.f32 %v2515, %v3894
      %v4244 = vmul.f32 %v2516, %v3899
      %v4245 = vmul.f32 %v2517, %v3904
      %v4246 = vmul.f32 %v2518, %v3909
      %v4247 = vmul.f32 %v2519, %v3914
      %v4248 = vmul.f32 %v2520, %v3919
      %v4249 = vmul.f32 %v2521, %v3924
      %v4250 = vmul.f32 %v2522, %v3929
      %v4251 = vmul.f32 %v2523, %v3934
      %v4252 = vmul.f32 %v2524, %v3939
      %v4253 = vmul.f32 %v2525, %v3944
      %v4254 = vmul.f32 %v2526, %v3949
      %v4255 = vmul.f32 %v2527, %v3954
      %v4256 = vmul.f32 %v2528, %v3959
      %v4257 = vmul.f32 %v2529, %v3964
      %v4258 = vmul.f32 %v2530, %v3969
      %v4259 = vpack.c.bf16 %v3972, %v3971
      %v4260 = vpack.c.bf16 %v3974, %v3973
      %v4261 = vpack.c.bf16 %v3976, %v3975
      %v4262 = vpack.c.bf16 %v3978, %v3977
      %v4263 = vpack.c.bf16 %v3980, %v3979
      %v4264 = vpack.c.bf16 %v3982, %v3981
      %v4265 = vpack.c.bf16 %v3984, %v3983
      %v4266 = vpack.c.bf16 %v3986, %v3985
      %v4267 = vpack.c.bf16 %v3988, %v3987
      %v4268 = vpack.c.bf16 %v3990, %v3989
      %v4269 = vpack.c.bf16 %v3992, %v3991
      %v4270 = vpack.c.bf16 %v3994, %v3993
      %v4271 = vpack.c.bf16 %v3996, %v3995
      %v4272 = vpack.c.bf16 %v3998, %v3997
      %v4273 = vpack.c.bf16 %v4000, %v3999
      %v4274 = vpack.c.bf16 %v4002, %v4001
      %v4275 = vpack.c.bf16 %v4004, %v4003
      %v4276 = vpack.c.bf16 %v4006, %v4005
      %v4277 = vpack.c.bf16 %v4008, %v4007
      %v4278 = vpack.c.bf16 %v4010, %v4009
      %v4279 = vpack.c.bf16 %v4012, %v4011
      %v4280 = vpack.c.bf16 %v4014, %v4013
      %v4281 = vpack.c.bf16 %v4016, %v4015
      %v4282 = vpack.c.bf16 %v4018, %v4017
      %v4283 = vpack.c.bf16 %v4020, %v4019
      %v4284 = vpack.c.bf16 %v4022, %v4021
      %v4285 = vpack.c.bf16 %v4024, %v4023
      %v4286 = vpack.c.bf16 %v4026, %v4025
      %v4287 = vpack.c.bf16 %v4028, %v4027
      %v4288 = vpack.c.bf16 %v4030, %v4029
      %v4289 = vpack.c.bf16 %v4032, %v4031
      %v4290 = vpack.c.bf16 %v4034, %v4033
      %v4291 = vpack.c.bf16 %v4036, %v4035
      %v4292 = vpack.c.bf16 %v4038, %v4037
      %v4293 = vpack.c.bf16 %v4040, %v4039
      %v4294 = vpack.c.bf16 %v4042, %v4041
      %v4295 = vpack.c.bf16 %v4044, %v4043
      %v4296 = vpack.c.bf16 %v4046, %v4045
      %v4297 = vpack.c.bf16 %v4048, %v4047
      %v4298 = vpack.c.bf16 %v4050, %v4049
      %v4299 = vpack.c.bf16 %v4052, %v4051
      %v4300 = vpack.c.bf16 %v4054, %v4053
      %v4301 = vpack.c.bf16 %v4056, %v4055
      %v4302 = vpack.c.bf16 %v4058, %v4057
      %v4303 = vpack.c.bf16 %v4060, %v4059
      %v4304 = vpack.c.bf16 %v4062, %v4061
      %v4305 = vpack.c.bf16 %v4064, %v4063
      %v4306 = vpack.c.bf16 %v4066, %v4065
      %v4307 = vpack.c.bf16 %v4068, %v4067
      %v4308 = vpack.c.bf16 %v4070, %v4069
      %v4309 = vpack.c.bf16 %v4072, %v4071
      %v4310 = vpack.c.bf16 %v4074, %v4073
      %v4311 = vpack.c.bf16 %v4076, %v4075
      %v4312 = vpack.c.bf16 %v4078, %v4077
      %v4313 = vpack.c.bf16 %v4080, %v4079
      %v4314 = vpack.c.bf16 %v4082, %v4081
      %v4315 = vpack.c.bf16 %v4084, %v4083
      %v4316 = vpack.c.bf16 %v4086, %v4085
      %v4317 = vpack.c.bf16 %v4088, %v4087
      %v4318 = vpack.c.bf16 %v4090, %v4089
      %v4319 = vpack.c.bf16 %v4092, %v4091
      %v4320 = vpack.c.bf16 %v4094, %v4093
      %v4321 = vpack.c.bf16 %v4096, %v4095
      %v4322 = vpack.c.bf16 %v4098, %v4097
      %v4323 = vpack.c.bf16 %v4100, %v4099
      %v4324 = vpack.c.bf16 %v4102, %v4101
      %v4325 = vpack.c.bf16 %v4104, %v4103
      %v4326 = vpack.c.bf16 %v4106, %v4105
      %v4327 = vpack.c.bf16 %v4108, %v4107
      %v4328 = vpack.c.bf16 %v4110, %v4109
      %v4329 = vpack.c.bf16 %v4112, %v4111
      %v4330 = vpack.c.bf16 %v4114, %v4113
      %v4331 = vpack.c.bf16 %v4116, %v4115
      %v4332 = vpack.c.bf16 %v4118, %v4117
      %v4333 = vpack.c.bf16 %v4120, %v4119
      %v4334 = vpack.c.bf16 %v4122, %v4121
      %v4335 = vpack.c.bf16 %v4124, %v4123
      %v4336 = vpack.c.bf16 %v4126, %v4125
      %v4337 = vpack.c.bf16 %v4128, %v4127
      %v4338 = vpack.c.bf16 %v4130, %v4129
      %v4339 = vpack.c.bf16 %v4132, %v4131
      %v4340 = vpack.c.bf16 %v4134, %v4133
      %v4341 = vpack.c.bf16 %v4136, %v4135
      %v4342 = vpack.c.bf16 %v4138, %v4137
      %v4343 = vpack.c.bf16 %v4140, %v4139
      %v4344 = vpack.c.bf16 %v4142, %v4141
      %v4345 = vpack.c.bf16 %v4144, %v4143
      %v4346 = vpack.c.bf16 %v4146, %v4145
      %v4347 = vpack.c.bf16 %v4148, %v4147
      %v4348 = vpack.c.bf16 %v4150, %v4149
      %v4349 = vpack.c.bf16 %v4152, %v4151
      %v4350 = vpack.c.bf16 %v4154, %v4153
      %v4351 = vpack.c.bf16 %v4156, %v4155
      %v4352 = vpack.c.bf16 %v4158, %v4157
      %v4353 = vpack.c.bf16 %v4160, %v4159
      %v4354 = vpack.c.bf16 %v4162, %v4161
      %v4355 = vpack.c.bf16 %v4164, %v4163
      %v4356 = vpack.c.bf16 %v4166, %v4165
      %v4357 = vpack.c.bf16 %v4168, %v4167
      %v4358 = vpack.c.bf16 %v4170, %v4169
      %v4359 = vpack.c.bf16 %v4172, %v4171
      %v4360 = vpack.c.bf16 %v4174, %v4173
      %v4361 = vpack.c.bf16 %v4176, %v4175
      %v4362 = vpack.c.bf16 %v4178, %v4177
      %v4363 = vpack.c.bf16 %v4180, %v4179
      %v4364 = vpack.c.bf16 %v4182, %v4181
      %v4365 = vpack.c.bf16 %v4184, %v4183
      %v4366 = vpack.c.bf16 %v4186, %v4185
      %v4367 = vpack.c.bf16 %v4188, %v4187
      %v4368 = vpack.c.bf16 %v4190, %v4189
      %v4369 = vpack.c.bf16 %v4192, %v4191
      %v4370 = vpack.c.bf16 %v4194, %v4193
      %v4371 = vpack.c.bf16 %v4196, %v4195
      %v4372 = vpack.c.bf16 %v4198, %v4197
      %v4373 = vpack.c.bf16 %v4200, %v4199
      %v4374 = vpack.c.bf16 %v4202, %v4201
      %v4375 = vpack.c.bf16 %v4204, %v4203
      %v4376 = vpack.c.bf16 %v4206, %v4205
      %v4377 = vpack.c.bf16 %v4208, %v4207
      %v4378 = vpack.c.bf16 %v4210, %v4209
      %v4379 = vpack.c.bf16 %v4212, %v4211
      %v4380 = vpack.c.bf16 %v4214, %v4213
      %v4381 = vpack.c.bf16 %v4216, %v4215
      %v4382 = vpack.c.bf16 %v4218, %v4217
      %v4383 = vpack.c.bf16 %v4220, %v4219
      %v4384 = vpack.c.bf16 %v4222, %v4221
      %v4385 = vpack.c.bf16 %v4224, %v4223
      %v4386 = vpack.c.bf16 %v4226, %v4225
      %v4387 = vpack.c.bf16 %v4228, %v4227
      %v4388 = vpack.c.bf16 %v4230, %v4229
      %v4389 = vpack.c.bf16 %v4232, %v4231
      %v4390 = vpack.c.bf16 %v4234, %v4233
      %v4391 = vpack.c.bf16 %v4236, %v4235
      %v4392 = vpack.c.bf16 %v4238, %v4237
      %v4393 = vpack.c.bf16 %v4240, %v4239
      %v4394 = vpack.c.bf16 %v4242, %v4241
      %v4395 = vpack.c.bf16 %v4244, %v4243
      %v4396 = vpack.c.bf16 %v4246, %v4245
      %v4397 = vpack.c.bf16 %v4248, %v4247
      %v4398 = vpack.c.bf16 %v4250, %v4249
      %v4399 = vpack.c.bf16 %v4252, %v4251
      %v4400 = vpack.c.bf16 %v4254, %v4253
      %v4401 = vpack.c.bf16 %v4256, %v4255
      %v4402 = vpack.c.bf16 %v4258, %v4257
      %v4403 = vld [vmem:[%s212] sm:$0xff]
      %v4404 = vld [vmem:[%s212 + $0x8] sm:$0xff]
      %v4405 = vld [vmem:[%s212 + $0x10] sm:$0xff]
      %v4406 = vld [vmem:[%s212 + $0x18] sm:$0xff]
      %v4407 = vld [vmem:[%s212 + $0x20] sm:$0xff]
      %v4408 = vld [vmem:[%s212 + $0x28] sm:$0xff]
      %v4409 = vld [vmem:[%s212 + $0x30] sm:$0xff]
      %v4410 = vld [vmem:[%s212 + $0x38] sm:$0xff]
      %v4411 = vld [vmem:[%s212 + $0x40] sm:$0xff]
      %v4412 = vld [vmem:[%s212 + $0x48] sm:$0xff]
      %v4413 = vld [vmem:[%s212 + $0x50] sm:$0xff]
      %v4414 = vld [vmem:[%s212 + $0x58] sm:$0xff]
      %v4415 = vld [vmem:[%s212 + $0x60] sm:$0xff]
      %v4416 = vld [vmem:[%s212 + $0x68] sm:$0xff]
      %v4417 = vld [vmem:[%s212 + $0x70] sm:$0xff]
      %v4418 = vld [vmem:[%s212 + $0x78] sm:$0xff]
      %v4419 = vld [vmem:[%s212 + $0x80] sm:$0xff]
      %v4420 = vld [vmem:[%s212 + $0x88] sm:$0xff]
      %v4421 = vld [vmem:[%s212 + $0x90] sm:$0xff]
      %v4422 = vld [vmem:[%s212 + $0x98] sm:$0xff]
      %v4423 = vld [vmem:[%s212 + $0xa0] sm:$0xff]
      %v4424 = vld [vmem:[%s212 + $0xa8] sm:$0xff]
      %v4425 = vld [vmem:[%s212 + $0xb0] sm:$0xff]
      %v4426 = vld [vmem:[%s212 + $0xb8] sm:$0xff]
      %v4427 = vld [vmem:[%s212 + $0xc0] sm:$0xff]
      %v4428 = vld [vmem:[%s212 + $0xc8] sm:$0xff]
      %v4429 = vld [vmem:[%s212 + $0xd0] sm:$0xff]
      %v4430 = vld [vmem:[%s212 + $0xd8] sm:$0xff]
      %v4431 = vld [vmem:[%s212 + $0xe0] sm:$0xff]
      %v4432 = vld [vmem:[%s212 + $0xe8] sm:$0xff]
      %v4433 = vld [vmem:[%s212 + $0xf0] sm:$0xff]
      %v4434 = vld [vmem:[%s212 + $0xf8] sm:$0xff]
      %v4435 = vld [vmem:[%s212 + $0x100] sm:$0xff]
      %v4436 = vld [vmem:[%s212 + $0x108] sm:$0xff]
      %v4437 = vld [vmem:[%s212 + $0x110] sm:$0xff]
      %v4438 = vld [vmem:[%s212 + $0x118] sm:$0xff]
      %v4439 = vld [vmem:[%s212 + $0x120] sm:$0xff]
      %v4440 = vld [vmem:[%s212 + $0x128] sm:$0xff]
      %v4441 = vld [vmem:[%s212 + $0x130] sm:$0xff]
      %v4442 = vld [vmem:[%s212 + $0x138] sm:$0xff]
      %v4443 = vld [vmem:[%s212 + $0x140] sm:$0xff]
      %v4444 = vld [vmem:[%s212 + $0x148] sm:$0xff]
      %v4445 = vld [vmem:[%s212 + $0x150] sm:$0xff]
      %v4446 = vld [vmem:[%s212 + $0x158] sm:$0xff]
      %v4447 = vld [vmem:[%s212 + $0x160] sm:$0xff]
      %v4448 = vld [vmem:[%s212 + $0x168] sm:$0xff]
      %v4449 = vld [vmem:[%s212 + $0x170] sm:$0xff]
      %v4450 = vld [vmem:[%s212 + $0x178] sm:$0xff]
      %v4451 = vld [vmem:[%s212 + $0x180] sm:$0xff]
      %v4452 = vld [vmem:[%s212 + $0x188] sm:$0xff]
      %v4453 = vld [vmem:[%s212 + $0x190] sm:$0xff]
      %v4454 = vld [vmem:[%s212 + $0x198] sm:$0xff]
      %v4455 = vld [vmem:[%s212 + $0x1a0] sm:$0xff]
      %v4456 = vld [vmem:[%s212 + $0x1a8] sm:$0xff]
      %v4457 = vld [vmem:[%s212 + $0x1b0] sm:$0xff]
      %v4458 = vld [vmem:[%s212 + $0x1b8] sm:$0xff]
      %v4459 = vld [vmem:[%s212 + $0x1c0] sm:$0xff]
      %v4460 = vld [vmem:[%s212 + $0x1c8] sm:$0xff]
      %v4461 = vld [vmem:[%s212 + $0x1d0] sm:$0xff]
      %v4462 = vld [vmem:[%s212 + $0x1d8] sm:$0xff]
      %v4463 = vld [vmem:[%s212 + $0x1e0] sm:$0xff]
      %v4464 = vld [vmem:[%s212 + $0x1e8] sm:$0xff]
      %v4465 = vld [vmem:[%s212 + $0x1f0] sm:$0xff]
      %v4466 = vld [vmem:[%s212 + $0x1f8] sm:$0xff]
      %v4467 = vld [vmem:[%s212 + $0x200] sm:$0xff]
      %v4468 = vld [vmem:[%s212 + $0x208] sm:$0xff]
      %v4469 = vld [vmem:[%s212 + $0x210] sm:$0xff]
      %v4470 = vld [vmem:[%s212 + $0x218] sm:$0xff]
      %v4471 = vld [vmem:[%s212 + $0x220] sm:$0xff]
      %v4472 = vld [vmem:[%s212 + $0x228] sm:$0xff]
      %v4473 = vld [vmem:[%s212 + $0x230] sm:$0xff]
      %v4474 = vld [vmem:[%s212 + $0x238] sm:$0xff]
      %v4475 = vld [vmem:[%s212 + $0x240] sm:$0xff]
      %v4476 = vld [vmem:[%s212 + $0x248] sm:$0xff]
      %v4477 = vld [vmem:[%s212 + $0x250] sm:$0xff]
      %v4478 = vld [vmem:[%s212 + $0x258] sm:$0xff]
      %v4479 = vld [vmem:[%s212 + $0x260] sm:$0xff]
      %v4480 = vld [vmem:[%s212 + $0x268] sm:$0xff]
      %v4481 = vld [vmem:[%s212 + $0x270] sm:$0xff]
      %v4482 = vld [vmem:[%s212 + $0x278] sm:$0xff]
      %v4483 = vld [vmem:[%s212 + $0x280] sm:$0xff]
      %v4484 = vld [vmem:[%s212 + $0x288] sm:$0xff]
      %v4485 = vld [vmem:[%s212 + $0x290] sm:$0xff]
      %v4486 = vld [vmem:[%s212 + $0x298] sm:$0xff]
      %v4487 = vld [vmem:[%s212 + $0x2a0] sm:$0xff]
      %v4488 = vld [vmem:[%s212 + $0x2a8] sm:$0xff]
      %v4489 = vld [vmem:[%s212 + $0x2b0] sm:$0xff]
      %v4490 = vld [vmem:[%s212 + $0x2b8] sm:$0xff]
      %v4491 = vld [vmem:[%s212 + $0x2c0] sm:$0xff]
      %v4492 = vld [vmem:[%s212 + $0x2c8] sm:$0xff]
      %v4493 = vld [vmem:[%s212 + $0x2d0] sm:$0xff]
      %v4494 = vld [vmem:[%s212 + $0x2d8] sm:$0xff]
      %v4495 = vld [vmem:[%s212 + $0x2e0] sm:$0xff]
      %v4496 = vld [vmem:[%s212 + $0x2e8] sm:$0xff]
      %v4497 = vld [vmem:[%s212 + $0x2f0] sm:$0xff]
      %v4498 = vld [vmem:[%s212 + $0x2f8] sm:$0xff]
      %v4499 = vld [vmem:[%s212 + $0x300] sm:$0xff]
      %v4500 = vld [vmem:[%s212 + $0x308] sm:$0xff]
      %v4501 = vld [vmem:[%s212 + $0x310] sm:$0xff]
      %v4502 = vld [vmem:[%s212 + $0x318] sm:$0xff]
      %v4503 = vld [vmem:[%s212 + $0x320] sm:$0xff]
      %v4504 = vld [vmem:[%s212 + $0x328] sm:$0xff]
      %v4505 = vld [vmem:[%s212 + $0x330] sm:$0xff]
      %v4506 = vld [vmem:[%s212 + $0x338] sm:$0xff]
      %v4507 = vld [vmem:[%s212 + $0x340] sm:$0xff]
      %v4508 = vld [vmem:[%s212 + $0x348] sm:$0xff]
      %v4509 = vld [vmem:[%s212 + $0x350] sm:$0xff]
      %v4510 = vld [vmem:[%s212 + $0x358] sm:$0xff]
      %v4511 = vld [vmem:[%s212 + $0x360] sm:$0xff]
      %v4512 = vld [vmem:[%s212 + $0x368] sm:$0xff]
      %v4513 = vld [vmem:[%s212 + $0x370] sm:$0xff]
      %v4514 = vld [vmem:[%s212 + $0x378] sm:$0xff]
      %v4515 = vld [vmem:[%s212 + $0x380] sm:$0xff]
      %v4516 = vld [vmem:[%s212 + $0x388] sm:$0xff]
      %v4517 = vld [vmem:[%s212 + $0x390] sm:$0xff]
      %v4518 = vld [vmem:[%s212 + $0x398] sm:$0xff]
      %v4519 = vld [vmem:[%s212 + $0x3a0] sm:$0xff]
      %v4520 = vld [vmem:[%s212 + $0x3a8] sm:$0xff]
      %v4521 = vld [vmem:[%s212 + $0x3b0] sm:$0xff]
      %v4522 = vld [vmem:[%s212 + $0x3b8] sm:$0xff]
      %v4523 = vld [vmem:[%s212 + $0x3c0] sm:$0xff]
      %v4524 = vld [vmem:[%s212 + $0x3c8] sm:$0xff]
      %v4525 = vld [vmem:[%s212 + $0x3d0] sm:$0xff]
      %v4526 = vld [vmem:[%s212 + $0x3d8] sm:$0xff]
      %v4527 = vld [vmem:[%s212 + $0x3e0] sm:$0xff]
      %v4528 = vld [vmem:[%s212 + $0x3e8] sm:$0xff]
      %v4529 = vld [vmem:[%s212 + $0x3f0] sm:$0xff]
      %v4530 = vld [vmem:[%s212 + $0x3f8] sm:$0xff]
      %v4531 = vld [vmem:[%s212 + $0x400] sm:$0xff]
      %v4532 = vld [vmem:[%s212 + $0x408] sm:$0xff]
      %v4533 = vld [vmem:[%s212 + $0x410] sm:$0xff]
      %v4534 = vld [vmem:[%s212 + $0x418] sm:$0xff]
      %v4535 = vld [vmem:[%s212 + $0x420] sm:$0xff]
      %v4536 = vld [vmem:[%s212 + $0x428] sm:$0xff]
      %v4537 = vld [vmem:[%s212 + $0x430] sm:$0xff]
      %v4538 = vld [vmem:[%s212 + $0x438] sm:$0xff]
      %v4539 = vld [vmem:[%s212 + $0x440] sm:$0xff]
      %v4540 = vld [vmem:[%s212 + $0x448] sm:$0xff]
      %v4541 = vld [vmem:[%s212 + $0x450] sm:$0xff]
      %v4542 = vld [vmem:[%s212 + $0x458] sm:$0xff]
      %v4543 = vld [vmem:[%s212 + $0x460] sm:$0xff]
      %v4544 = vld [vmem:[%s212 + $0x468] sm:$0xff]
      %v4545 = vld [vmem:[%s212 + $0x470] sm:$0xff]
      %v4546 = vld [vmem:[%s212 + $0x478] sm:$0xff]
      %v4547 = vld [vmem:[%s212 + $0x480] sm:$0xff]
      %v4548 = vld [vmem:[%s212 + $0x488] sm:$0xff]
      %v4549 = vld [vmem:[%s212 + $0x490] sm:$0xff]
      %v4550 = vld [vmem:[%s212 + $0x498] sm:$0xff]
      %v4551 = vld [vmem:[%s212 + $0x4a0] sm:$0xff]
      %v4552 = vld [vmem:[%s212 + $0x4a8] sm:$0xff]
      %v4553 = vld [vmem:[%s212 + $0x4b0] sm:$0xff]
      %v4554 = vld [vmem:[%s212 + $0x4b8] sm:$0xff]
      %v4555 = vld [vmem:[%s212 + $0x4c0] sm:$0xff]
      %v4556 = vld [vmem:[%s212 + $0x4c8] sm:$0xff]
      %v4557 = vld [vmem:[%s212 + $0x4d0] sm:$0xff]
      %v4558 = vld [vmem:[%s212 + $0x4d8] sm:$0xff]
      %v4559 = vld [vmem:[%s212 + $0x4e0] sm:$0xff]
      %v4560 = vld [vmem:[%s212 + $0x4e8] sm:$0xff]
      %v4561 = vld [vmem:[%s212 + $0x4f0] sm:$0xff]
      %v4562 = vld [vmem:[%s212 + $0x4f8] sm:$0xff]
      %v4563 = vld [vmem:[%s212 + $0x500] sm:$0xff]
      %v4564 = vld [vmem:[%s212 + $0x508] sm:$0xff]
      %v4565 = vld [vmem:[%s212 + $0x510] sm:$0xff]
      %v4566 = vld [vmem:[%s212 + $0x518] sm:$0xff]
      %v4567 = vld [vmem:[%s212 + $0x520] sm:$0xff]
      %v4568 = vld [vmem:[%s212 + $0x528] sm:$0xff]
      %v4569 = vld [vmem:[%s212 + $0x530] sm:$0xff]
      %v4570 = vld [vmem:[%s212 + $0x538] sm:$0xff]
      %v4571 = vld [vmem:[%s212 + $0x540] sm:$0xff]
      %v4572 = vld [vmem:[%s212 + $0x548] sm:$0xff]
      %v4573 = vld [vmem:[%s212 + $0x550] sm:$0xff]
      %v4574 = vld [vmem:[%s212 + $0x558] sm:$0xff]
      %v4575 = vld [vmem:[%s212 + $0x560] sm:$0xff]
      %v4576 = vld [vmem:[%s212 + $0x568] sm:$0xff]
      %v4577 = vld [vmem:[%s212 + $0x570] sm:$0xff]
      %v4578 = vld [vmem:[%s212 + $0x578] sm:$0xff]
      %v4579 = vld [vmem:[%s212 + $0x580] sm:$0xff]
      %v4580 = vld [vmem:[%s212 + $0x588] sm:$0xff]
      %v4581 = vld [vmem:[%s212 + $0x590] sm:$0xff]
      %v4582 = vld [vmem:[%s212 + $0x598] sm:$0xff]
      %v4583 = vld [vmem:[%s212 + $0x5a0] sm:$0xff]
      %v4584 = vld [vmem:[%s212 + $0x5a8] sm:$0xff]
      %v4585 = vld [vmem:[%s212 + $0x5b0] sm:$0xff]
      %v4586 = vld [vmem:[%s212 + $0x5b8] sm:$0xff]
      %v4587 = vld [vmem:[%s212 + $0x5c0] sm:$0xff]
      %v4588 = vld [vmem:[%s212 + $0x5c8] sm:$0xff]
      %v4589 = vld [vmem:[%s212 + $0x5d0] sm:$0xff]
      %v4590 = vld [vmem:[%s212 + $0x5d8] sm:$0xff]
      %v4591 = vld [vmem:[%s212 + $0x5e0] sm:$0xff]
      %v4592 = vld [vmem:[%s212 + $0x5e8] sm:$0xff]
      %v4593 = vld [vmem:[%s212 + $0x5f0] sm:$0xff]
      %v4594 = vld [vmem:[%s212 + $0x5f8] sm:$0xff]
      %v4595 = vld [vmem:[%s212 + $0x600] sm:$0xff]
      %v4596 = vld [vmem:[%s212 + $0x608] sm:$0xff]
      %v4597 = vld [vmem:[%s212 + $0x610] sm:$0xff]
      %v4598 = vld [vmem:[%s212 + $0x618] sm:$0xff]
      %v4599 = vld [vmem:[%s212 + $0x620] sm:$0xff]
      %v4600 = vld [vmem:[%s212 + $0x628] sm:$0xff]
      %v4601 = vld [vmem:[%s212 + $0x630] sm:$0xff]
      %v4602 = vld [vmem:[%s212 + $0x638] sm:$0xff]
      %v4603 = vld [vmem:[%s212 + $0x640] sm:$0xff]
      %v4604 = vld [vmem:[%s212 + $0x648] sm:$0xff]
      %v4605 = vld [vmem:[%s212 + $0x650] sm:$0xff]
      %v4606 = vld [vmem:[%s212 + $0x658] sm:$0xff]
      %v4607 = vld [vmem:[%s212 + $0x660] sm:$0xff]
      %v4608 = vld [vmem:[%s212 + $0x668] sm:$0xff]
      %v4609 = vld [vmem:[%s212 + $0x670] sm:$0xff]
      %v4610 = vld [vmem:[%s212 + $0x678] sm:$0xff]
      %v4611 = vld [vmem:[%s212 + $0x680] sm:$0xff]
      %v4612 = vld [vmem:[%s212 + $0x688] sm:$0xff]
      %v4613 = vld [vmem:[%s212 + $0x690] sm:$0xff]
      %v4614 = vld [vmem:[%s212 + $0x698] sm:$0xff]
      %v4615 = vld [vmem:[%s212 + $0x6a0] sm:$0xff]
      %v4616 = vld [vmem:[%s212 + $0x6a8] sm:$0xff]
      %v4617 = vld [vmem:[%s212 + $0x6b0] sm:$0xff]
      %v4618 = vld [vmem:[%s212 + $0x6b8] sm:$0xff]
      %v4619 = vld [vmem:[%s212 + $0x6c0] sm:$0xff]
      %v4620 = vld [vmem:[%s212 + $0x6c8] sm:$0xff]
      %v4621 = vld [vmem:[%s212 + $0x6d0] sm:$0xff]
      %v4622 = vld [vmem:[%s212 + $0x6d8] sm:$0xff]
      %v4623 = vld [vmem:[%s212 + $0x6e0] sm:$0xff]
      %v4624 = vld [vmem:[%s212 + $0x6e8] sm:$0xff]
      %v4625 = vld [vmem:[%s212 + $0x6f0] sm:$0xff]
      %v4626 = vld [vmem:[%s212 + $0x6f8] sm:$0xff]
      %v4627 = vld [vmem:[%s212 + $0x700] sm:$0xff]
      %v4628 = vld [vmem:[%s212 + $0x708] sm:$0xff]
      %v4629 = vld [vmem:[%s212 + $0x710] sm:$0xff]
      %v4630 = vld [vmem:[%s212 + $0x718] sm:$0xff]
      %v4631 = vld [vmem:[%s212 + $0x720] sm:$0xff]
      %v4632 = vld [vmem:[%s212 + $0x728] sm:$0xff]
      %v4633 = vld [vmem:[%s212 + $0x730] sm:$0xff]
      %v4634 = vld [vmem:[%s212 + $0x738] sm:$0xff]
      %v4635 = vld [vmem:[%s212 + $0x740] sm:$0xff]
      %v4636 = vld [vmem:[%s212 + $0x748] sm:$0xff]
      %v4637 = vld [vmem:[%s212 + $0x750] sm:$0xff]
      %v4638 = vld [vmem:[%s212 + $0x758] sm:$0xff]
      %v4639 = vld [vmem:[%s212 + $0x760] sm:$0xff]
      %v4640 = vld [vmem:[%s212 + $0x768] sm:$0xff]
      %v4641 = vld [vmem:[%s212 + $0x770] sm:$0xff]
      %v4642 = vld [vmem:[%s212 + $0x778] sm:$0xff]
      %v4643 = vld [vmem:[%s212 + $0x780] sm:$0xff]
      %v4644 = vld [vmem:[%s212 + $0x788] sm:$0xff]
      %v4645 = vld [vmem:[%s212 + $0x790] sm:$0xff]
      %v4646 = vld [vmem:[%s212 + $0x798] sm:$0xff]
      %v4647 = vld [vmem:[%s212 + $0x7a0] sm:$0xff]
      %v4648 = vld [vmem:[%s212 + $0x7a8] sm:$0xff]
      %v4649 = vld [vmem:[%s212 + $0x7b0] sm:$0xff]
      %v4650 = vld [vmem:[%s212 + $0x7b8] sm:$0xff]
      %v4651 = vld [vmem:[%s212 + $0x7c0] sm:$0xff]
      %v4652 = vld [vmem:[%s212 + $0x7c8] sm:$0xff]
      %v4653 = vld [vmem:[%s212 + $0x7d0] sm:$0xff]
      %v4654 = vld [vmem:[%s212 + $0x7d8] sm:$0xff]
      %v4655 = vld [vmem:[%s212 + $0x7e0] sm:$0xff]
      %v4656 = vld [vmem:[%s212 + $0x7e8] sm:$0xff]
      %v4657 = vld [vmem:[%s212 + $0x7f0] sm:$0xff]
      %v4658 = vld [vmem:[%s212 + $0x7f8] sm:$0xff]
      %v4659 = vld [vmem:[%s212 + $0x800] sm:$0xff]
      %v4660 = vld [vmem:[%s212 + $0x808] sm:$0xff]
      %v4661 = vld [vmem:[%s212 + $0x810] sm:$0xff]
      %v4662 = vld [vmem:[%s212 + $0x818] sm:$0xff]
      %v4663 = vld [vmem:[%s212 + $0x820] sm:$0xff]
      %v4664 = vld [vmem:[%s212 + $0x828] sm:$0xff]
      %v4665 = vld [vmem:[%s212 + $0x830] sm:$0xff]
      %v4666 = vld [vmem:[%s212 + $0x838] sm:$0xff]
      %v4667 = vld [vmem:[%s212 + $0x840] sm:$0xff]
      %v4668 = vld [vmem:[%s212 + $0x848] sm:$0xff]
      %v4669 = vld [vmem:[%s212 + $0x850] sm:$0xff]
      %v4670 = vld [vmem:[%s212 + $0x858] sm:$0xff]
      %v4671 = vld [vmem:[%s212 + $0x860] sm:$0xff]
      %v4672 = vld [vmem:[%s212 + $0x868] sm:$0xff]
      %v4673 = vld [vmem:[%s212 + $0x870] sm:$0xff]
      %v4674 = vld [vmem:[%s212 + $0x878] sm:$0xff]
      %v4675 = vld [vmem:[%s212 + $0x880] sm:$0xff]
      %v4676 = vld [vmem:[%s212 + $0x888] sm:$0xff]
      %v4677 = vld [vmem:[%s212 + $0x890] sm:$0xff]
      %v4678 = vld [vmem:[%s212 + $0x898] sm:$0xff]
      %v4679 = vld [vmem:[%s212 + $0x8a0] sm:$0xff]
      %v4680 = vld [vmem:[%s212 + $0x8a8] sm:$0xff]
      %v4681 = vld [vmem:[%s212 + $0x8b0] sm:$0xff]
      %v4682 = vld [vmem:[%s212 + $0x8b8] sm:$0xff]
      %v4683 = vld [vmem:[%s212 + $0x8c0] sm:$0xff]
      %v4684 = vld [vmem:[%s212 + $0x8c8] sm:$0xff]
      %v4685 = vld [vmem:[%s212 + $0x8d0] sm:$0xff]
      %v4686 = vld [vmem:[%s212 + $0x8d8] sm:$0xff]
      %v4687 = vld [vmem:[%s212 + $0x8e0] sm:$0xff]
      %v4688 = vld [vmem:[%s212 + $0x8e8] sm:$0xff]
      %v4689 = vld [vmem:[%s212 + $0x8f0] sm:$0xff]
      %v4690 = vld [vmem:[%s212 + $0x8f8] sm:$0xff]
      %v4691 = vld [vmem:[%s212 + $0x900] sm:$0xff]
      %v4692 = vld [vmem:[%s212 + $0x908] sm:$0xff]
      %v4693 = vld [vmem:[%s212 + $0x910] sm:$0xff]
      %v4694 = vld [vmem:[%s212 + $0x918] sm:$0xff]
      %v4695 = vld [vmem:[%s212 + $0x920] sm:$0xff]
      %v4696 = vld [vmem:[%s212 + $0x928] sm:$0xff]
      %v4697 = vld [vmem:[%s212 + $0x930] sm:$0xff]
      %v4698 = vld [vmem:[%s212 + $0x938] sm:$0xff]
      %v4699 = vld [vmem:[%s212 + $0x940] sm:$0xff]
      %v4700 = vld [vmem:[%s212 + $0x948] sm:$0xff]
      %v4701 = vld [vmem:[%s212 + $0x950] sm:$0xff]
      %v4702 = vld [vmem:[%s212 + $0x958] sm:$0xff]
      %v4703 = vld [vmem:[%s212 + $0x960] sm:$0xff]
      %v4704 = vld [vmem:[%s212 + $0x968] sm:$0xff]
      %v4705 = vld [vmem:[%s212 + $0x970] sm:$0xff]
      %v4706 = vld [vmem:[%s212 + $0x978] sm:$0xff]
      %v4707 = vld [vmem:[%s212 + $0x980] sm:$0xff]
      %v4708 = vld [vmem:[%s212 + $0x988] sm:$0xff]
      %v4709 = vld [vmem:[%s212 + $0x990] sm:$0xff]
      %v4710 = vld [vmem:[%s212 + $0x998] sm:$0xff]
      %v4711 = vld [vmem:[%s212 + $0x9a0] sm:$0xff]
      %v4712 = vld [vmem:[%s212 + $0x9a8] sm:$0xff]
      %v4713 = vld [vmem:[%s212 + $0x9b0] sm:$0xff]
      %v4714 = vld [vmem:[%s212 + $0x9b8] sm:$0xff]
      %v4715 = vld [vmem:[%s212 + $0x9c0] sm:$0xff]
      %v4716 = vld [vmem:[%s212 + $0x9c8] sm:$0xff]
      %v4717 = vld [vmem:[%s212 + $0x9d0] sm:$0xff]
      %v4718 = vld [vmem:[%s212 + $0x9d8] sm:$0xff]
      %v4719 = vld [vmem:[%s212 + $0x9e0] sm:$0xff]
      %v4720 = vld [vmem:[%s212 + $0x9e8] sm:$0xff]
      %v4721 = vld [vmem:[%s212 + $0x9f0] sm:$0xff]
      %v4722 = vld [vmem:[%s212 + $0x9f8] sm:$0xff]
      %v4723 = vld [vmem:[%s212 + $0xa00] sm:$0xff]
      %v4724 = vld [vmem:[%s212 + $0xa08] sm:$0xff]
      %v4725 = vld [vmem:[%s212 + $0xa10] sm:$0xff]
      %v4726 = vld [vmem:[%s212 + $0xa18] sm:$0xff]
      %v4727 = vld [vmem:[%s212 + $0xa20] sm:$0xff]
      %v4728 = vld [vmem:[%s212 + $0xa28] sm:$0xff]
      %v4729 = vld [vmem:[%s212 + $0xa30] sm:$0xff]
      %v4730 = vld [vmem:[%s212 + $0xa38] sm:$0xff]
      %v4731 = vld [vmem:[%s212 + $0xa40] sm:$0xff]
      %v4732 = vld [vmem:[%s212 + $0xa48] sm:$0xff]
      %v4733 = vld [vmem:[%s212 + $0xa50] sm:$0xff]
      %v4734 = vld [vmem:[%s212 + $0xa58] sm:$0xff]
      %v4735 = vld [vmem:[%s212 + $0xa60] sm:$0xff]
      %v4736 = vld [vmem:[%s212 + $0xa68] sm:$0xff]
      %v4737 = vld [vmem:[%s212 + $0xa70] sm:$0xff]
      %v4738 = vld [vmem:[%s212 + $0xa78] sm:$0xff]
      %v4739 = vld [vmem:[%s212 + $0xa80] sm:$0xff]
      %v4740 = vld [vmem:[%s212 + $0xa88] sm:$0xff]
      %v4741 = vld [vmem:[%s212 + $0xa90] sm:$0xff]
      %v4742 = vld [vmem:[%s212 + $0xa98] sm:$0xff]
      %v4743 = vld [vmem:[%s212 + $0xaa0] sm:$0xff]
      %v4744 = vld [vmem:[%s212 + $0xaa8] sm:$0xff]
      %v4745 = vld [vmem:[%s212 + $0xab0] sm:$0xff]
      %v4746 = vld [vmem:[%s212 + $0xab8] sm:$0xff]
      %v4747 = vld [vmem:[%s212 + $0xac0] sm:$0xff]
      %v4748 = vld [vmem:[%s212 + $0xac8] sm:$0xff]
      %v4749 = vld [vmem:[%s212 + $0xad0] sm:$0xff]
      %v4750 = vld [vmem:[%s212 + $0xad8] sm:$0xff]
      %v4751 = vld [vmem:[%s212 + $0xae0] sm:$0xff]
      %v4752 = vld [vmem:[%s212 + $0xae8] sm:$0xff]
      %v4753 = vld [vmem:[%s212 + $0xaf0] sm:$0xff]
      %v4754 = vld [vmem:[%s212 + $0xaf8] sm:$0xff]
      %v4755 = vld [vmem:[%s212 + $0xb00] sm:$0xff]
      %v4756 = vld [vmem:[%s212 + $0xb08] sm:$0xff]
      %v4757 = vld [vmem:[%s212 + $0xb10] sm:$0xff]
      %v4758 = vld [vmem:[%s212 + $0xb18] sm:$0xff]
      %v4759 = vld [vmem:[%s212 + $0xb20] sm:$0xff]
      %v4760 = vld [vmem:[%s212 + $0xb28] sm:$0xff]
      %v4761 = vld [vmem:[%s212 + $0xb30] sm:$0xff]
      %v4762 = vld [vmem:[%s212 + $0xb38] sm:$0xff]
      %v5123 = vunpack.c.l.b16 %v4403
      %v5124 = vunpack.c.h.b16 %v4403
      %v5125 = vunpack.c.l.b16 %v4404
      %v5126 = vunpack.c.h.b16 %v4404
      %v5127 = vunpack.c.l.b16 %v4405
      %v5128 = vunpack.c.h.b16 %v4405
      %v5129 = vunpack.c.l.b16 %v4406
      %v5130 = vunpack.c.h.b16 %v4406
      %v5131 = vunpack.c.l.b16 %v4407
      %v5132 = vunpack.c.h.b16 %v4407
      %v5133 = vunpack.c.l.b16 %v4408
      %v5134 = vunpack.c.h.b16 %v4408
      %v5135 = vunpack.c.l.b16 %v4409
      %v5136 = vunpack.c.h.b16 %v4409
      %v5137 = vunpack.c.l.b16 %v4410
      %v5138 = vunpack.c.h.b16 %v4410
      %v5139 = vunpack.c.l.b16 %v4411
      %v5140 = vunpack.c.h.b16 %v4411
      %v5141 = vunpack.c.l.b16 %v4412
      %v5142 = vunpack.c.h.b16 %v4412
      %v5143 = vunpack.c.l.b16 %v4413
      %v5144 = vunpack.c.h.b16 %v4413
      %v5145 = vunpack.c.l.b16 %v4414
      %v5146 = vunpack.c.h.b16 %v4414
      %v5147 = vunpack.c.l.b16 %v4415
      %v5148 = vunpack.c.h.b16 %v4415
      %v5149 = vunpack.c.l.b16 %v4416
      %v5150 = vunpack.c.h.b16 %v4416
      %v5151 = vunpack.c.l.b16 %v4417
      %v5152 = vunpack.c.h.b16 %v4417
      %v5153 = vunpack.c.l.b16 %v4418
      %v5154 = vunpack.c.h.b16 %v4418
      %v5155 = vunpack.c.l.b16 %v4419
      %v5156 = vunpack.c.h.b16 %v4419
      %v5157 = vunpack.c.l.b16 %v4420
      %v5158 = vunpack.c.h.b16 %v4420
      %v5159 = vunpack.c.l.b16 %v4421
      %v5160 = vunpack.c.h.b16 %v4421
      %v5161 = vunpack.c.l.b16 %v4422
      %v5162 = vunpack.c.h.b16 %v4422
      %v5163 = vunpack.c.l.b16 %v4423
      %v5164 = vunpack.c.h.b16 %v4423
      %v5165 = vunpack.c.l.b16 %v4424
      %v5166 = vunpack.c.h.b16 %v4424
      %v5167 = vunpack.c.l.b16 %v4425
      %v5168 = vunpack.c.h.b16 %v4425
      %v5169 = vunpack.c.l.b16 %v4426
      %v5170 = vunpack.c.h.b16 %v4426
      %v5171 = vunpack.c.l.b16 %v4427
      %v5172 = vunpack.c.h.b16 %v4427
      %v5173 = vunpack.c.l.b16 %v4428
      %v5174 = vunpack.c.h.b16 %v4428
      %v5175 = vunpack.c.l.b16 %v4429
      %v5176 = vunpack.c.h.b16 %v4429
      %v5177 = vunpack.c.l.b16 %v4430
      %v5178 = vunpack.c.h.b16 %v4430
      %v5179 = vunpack.c.l.b16 %v4431
      %v5180 = vunpack.c.h.b16 %v4431
      %v5181 = vunpack.c.l.b16 %v4432
      %v5182 = vunpack.c.h.b16 %v4432
      %v5183 = vunpack.c.l.b16 %v4433
      %v5184 = vunpack.c.h.b16 %v4433
      %v5185 = vunpack.c.l.b16 %v4434
      %v5186 = vunpack.c.h.b16 %v4434
      %v5187 = vunpack.c.l.b16 %v4435
      %v5188 = vunpack.c.h.b16 %v4435
      %v5189 = vunpack.c.l.b16 %v4436
      %v5190 = vunpack.c.h.b16 %v4436
      %v5191 = vunpack.c.l.b16 %v4437
      %v5192 = vunpack.c.h.b16 %v4437
      %v5193 = vunpack.c.l.b16 %v4438
      %v5194 = vunpack.c.h.b16 %v4438
      %v5195 = vunpack.c.l.b16 %v4439
      %v5196 = vunpack.c.h.b16 %v4439
      %v5197 = vunpack.c.l.b16 %v4440
      %v5198 = vunpack.c.h.b16 %v4440
      %v5199 = vunpack.c.l.b16 %v4441
      %v5200 = vunpack.c.h.b16 %v4441
      %v5201 = vunpack.c.l.b16 %v4442
      %v5202 = vunpack.c.h.b16 %v4442
      %v5203 = vunpack.c.l.b16 %v4443
      %v5204 = vunpack.c.h.b16 %v4443
      %v5205 = vunpack.c.l.b16 %v4444
      %v5206 = vunpack.c.h.b16 %v4444
      %v5207 = vunpack.c.l.b16 %v4445
      %v5208 = vunpack.c.h.b16 %v4445
      %v5209 = vunpack.c.l.b16 %v4446
      %v5210 = vunpack.c.h.b16 %v4446
      %v5211 = vunpack.c.l.b16 %v4447
      %v5212 = vunpack.c.h.b16 %v4447
      %v5213 = vunpack.c.l.b16 %v4448
      %v5214 = vunpack.c.h.b16 %v4448
      %v5215 = vunpack.c.l.b16 %v4449
      %v5216 = vunpack.c.h.b16 %v4449
      %v5217 = vunpack.c.l.b16 %v4450
      %v5218 = vunpack.c.h.b16 %v4450
      %v5219 = vunpack.c.l.b16 %v4451
      %v5220 = vunpack.c.h.b16 %v4451
      %v5221 = vunpack.c.l.b16 %v4452
      %v5222 = vunpack.c.h.b16 %v4452
      %v5223 = vunpack.c.l.b16 %v4453
      %v5224 = vunpack.c.h.b16 %v4453
      %v5225 = vunpack.c.l.b16 %v4454
      %v5226 = vunpack.c.h.b16 %v4454
      %v5227 = vunpack.c.l.b16 %v4455
      %v5228 = vunpack.c.h.b16 %v4455
      %v5229 = vunpack.c.l.b16 %v4456
      %v5230 = vunpack.c.h.b16 %v4456
      %v5231 = vunpack.c.l.b16 %v4457
      %v5232 = vunpack.c.h.b16 %v4457
      %v5233 = vunpack.c.l.b16 %v4458
      %v5234 = vunpack.c.h.b16 %v4458
      %v5235 = vunpack.c.l.b16 %v4459
      %v5236 = vunpack.c.h.b16 %v4459
      %v5237 = vunpack.c.l.b16 %v4460
      %v5238 = vunpack.c.h.b16 %v4460
      %v5239 = vunpack.c.l.b16 %v4461
      %v5240 = vunpack.c.h.b16 %v4461
      %v5241 = vunpack.c.l.b16 %v4462
      %v5242 = vunpack.c.h.b16 %v4462
      %v5243 = vunpack.c.l.b16 %v4463
      %v5244 = vunpack.c.h.b16 %v4463
      %v5245 = vunpack.c.l.b16 %v4464
      %v5246 = vunpack.c.h.b16 %v4464
      %v5247 = vunpack.c.l.b16 %v4465
      %v5248 = vunpack.c.h.b16 %v4465
      %v5249 = vunpack.c.l.b16 %v4466
      %v5250 = vunpack.c.h.b16 %v4466
      %v5251 = vunpack.c.l.b16 %v4467
      %v5252 = vunpack.c.h.b16 %v4467
      %v5253 = vunpack.c.l.b16 %v4468
      %v5254 = vunpack.c.h.b16 %v4468
      %v5255 = vunpack.c.l.b16 %v4469
      %v5256 = vunpack.c.h.b16 %v4469
      %v5257 = vunpack.c.l.b16 %v4470
      %v5258 = vunpack.c.h.b16 %v4470
      %v5259 = vunpack.c.l.b16 %v4471
      %v5260 = vunpack.c.h.b16 %v4471
      %v5261 = vunpack.c.l.b16 %v4472
      %v5262 = vunpack.c.h.b16 %v4472
      %v5263 = vunpack.c.l.b16 %v4473
      %v5264 = vunpack.c.h.b16 %v4473
      %v5265 = vunpack.c.l.b16 %v4474
      %v5266 = vunpack.c.h.b16 %v4474
      %v5267 = vunpack.c.l.b16 %v4475
      %v5268 = vunpack.c.h.b16 %v4475
      %v5269 = vunpack.c.l.b16 %v4476
      %v5270 = vunpack.c.h.b16 %v4476
      %v5271 = vunpack.c.l.b16 %v4477
      %v5272 = vunpack.c.h.b16 %v4477
      %v5273 = vunpack.c.l.b16 %v4478
      %v5274 = vunpack.c.h.b16 %v4478
      %v5275 = vunpack.c.l.b16 %v4479
      %v5276 = vunpack.c.h.b16 %v4479
      %v5277 = vunpack.c.l.b16 %v4480
      %v5278 = vunpack.c.h.b16 %v4480
      %v5279 = vunpack.c.l.b16 %v4481
      %v5280 = vunpack.c.h.b16 %v4481
      %v5281 = vunpack.c.l.b16 %v4482
      %v5282 = vunpack.c.h.b16 %v4482
      %v5283 = vunpack.c.l.b16 %v4483
      %v5284 = vunpack.c.h.b16 %v4483
      %v5285 = vunpack.c.l.b16 %v4484
      %v5286 = vunpack.c.h.b16 %v4484
      %v5287 = vunpack.c.l.b16 %v4485
      %v5288 = vunpack.c.h.b16 %v4485
      %v5289 = vunpack.c.l.b16 %v4486
      %v5290 = vunpack.c.h.b16 %v4486
      %v5291 = vunpack.c.l.b16 %v4487
      %v5292 = vunpack.c.h.b16 %v4487
      %v5293 = vunpack.c.l.b16 %v4488
      %v5294 = vunpack.c.h.b16 %v4488
      %v5295 = vunpack.c.l.b16 %v4489
      %v5296 = vunpack.c.h.b16 %v4489
      %v5297 = vunpack.c.l.b16 %v4490
      %v5298 = vunpack.c.h.b16 %v4490
      %v5299 = vunpack.c.l.b16 %v4491
      %v5300 = vunpack.c.h.b16 %v4491
      %v5301 = vunpack.c.l.b16 %v4492
      %v5302 = vunpack.c.h.b16 %v4492
      %v5303 = vunpack.c.l.b16 %v4493
      %v5304 = vunpack.c.h.b16 %v4493
      %v5305 = vunpack.c.l.b16 %v4494
      %v5306 = vunpack.c.h.b16 %v4494
      %v5307 = vunpack.c.l.b16 %v4495
      %v5308 = vunpack.c.h.b16 %v4495
      %v5309 = vunpack.c.l.b16 %v4496
      %v5310 = vunpack.c.h.b16 %v4496
      %v5311 = vunpack.c.l.b16 %v4497
      %v5312 = vunpack.c.h.b16 %v4497
      %v5313 = vunpack.c.l.b16 %v4498
      %v5314 = vunpack.c.h.b16 %v4498
      %v5315 = vunpack.c.l.b16 %v4499
      %v5316 = vunpack.c.h.b16 %v4499
      %v5317 = vunpack.c.l.b16 %v4500
      %v5318 = vunpack.c.h.b16 %v4500
      %v5319 = vunpack.c.l.b16 %v4501
      %v5320 = vunpack.c.h.b16 %v4501
      %v5321 = vunpack.c.l.b16 %v4502
      %v5322 = vunpack.c.h.b16 %v4502
      %v5323 = vunpack.c.l.b16 %v4503
      %v5324 = vunpack.c.h.b16 %v4503
      %v5325 = vunpack.c.l.b16 %v4504
      %v5326 = vunpack.c.h.b16 %v4504
      %v5327 = vunpack.c.l.b16 %v4505
      %v5328 = vunpack.c.h.b16 %v4505
      %v5329 = vunpack.c.l.b16 %v4506
      %v5330 = vunpack.c.h.b16 %v4506
      %v5331 = vunpack.c.l.b16 %v4507
      %v5332 = vunpack.c.h.b16 %v4507
      %v5333 = vunpack.c.l.b16 %v4508
      %v5334 = vunpack.c.h.b16 %v4508
      %v5335 = vunpack.c.l.b16 %v4509
      %v5336 = vunpack.c.h.b16 %v4509
      %v5337 = vunpack.c.l.b16 %v4510
      %v5338 = vunpack.c.h.b16 %v4510
      %v5339 = vunpack.c.l.b16 %v4511
      %v5340 = vunpack.c.h.b16 %v4511
      %v5341 = vunpack.c.l.b16 %v4512
      %v5342 = vunpack.c.h.b16 %v4512
      %v5343 = vunpack.c.l.b16 %v4513
      %v5344 = vunpack.c.h.b16 %v4513
      %v5345 = vunpack.c.l.b16 %v4514
      %v5346 = vunpack.c.h.b16 %v4514
      %v5347 = vunpack.c.l.b16 %v4515
      %v5348 = vunpack.c.h.b16 %v4515
      %v5349 = vunpack.c.l.b16 %v4516
      %v5350 = vunpack.c.h.b16 %v4516
      %v5351 = vunpack.c.l.b16 %v4517
      %v5352 = vunpack.c.h.b16 %v4517
      %v5353 = vunpack.c.l.b16 %v4518
      %v5354 = vunpack.c.h.b16 %v4518
      %v5355 = vunpack.c.l.b16 %v4519
      %v5356 = vunpack.c.h.b16 %v4519
      %v5357 = vunpack.c.l.b16 %v4520
      %v5358 = vunpack.c.h.b16 %v4520
      %v5359 = vunpack.c.l.b16 %v4521
      %v5360 = vunpack.c.h.b16 %v4521
      %v5361 = vunpack.c.l.b16 %v4522
      %v5362 = vunpack.c.h.b16 %v4522
      %v5363 = vunpack.c.l.b16 %v4523
      %v5364 = vunpack.c.h.b16 %v4523
      %v5365 = vunpack.c.l.b16 %v4524
      %v5366 = vunpack.c.h.b16 %v4524
      %v5367 = vunpack.c.l.b16 %v4525
      %v5368 = vunpack.c.h.b16 %v4525
      %v5369 = vunpack.c.l.b16 %v4526
      %v5370 = vunpack.c.h.b16 %v4526
      %v5371 = vunpack.c.l.b16 %v4527
      %v5372 = vunpack.c.h.b16 %v4527
      %v5373 = vunpack.c.l.b16 %v4528
      %v5374 = vunpack.c.h.b16 %v4528
      %v5375 = vunpack.c.l.b16 %v4529
      %v5376 = vunpack.c.h.b16 %v4529
      %v5377 = vunpack.c.l.b16 %v4530
      %v5378 = vunpack.c.h.b16 %v4530
      %v5379 = vunpack.c.l.b16 %v4531
      %v5380 = vunpack.c.h.b16 %v4531
      %v5381 = vunpack.c.l.b16 %v4532
      %v5382 = vunpack.c.h.b16 %v4532
      %v5383 = vunpack.c.l.b16 %v4533
      %v5384 = vunpack.c.h.b16 %v4533
      %v5385 = vunpack.c.l.b16 %v4534
      %v5386 = vunpack.c.h.b16 %v4534
      %v5387 = vunpack.c.l.b16 %v4535
      %v5388 = vunpack.c.h.b16 %v4535
      %v5389 = vunpack.c.l.b16 %v4536
      %v5390 = vunpack.c.h.b16 %v4536
      %v5391 = vunpack.c.l.b16 %v4537
      %v5392 = vunpack.c.h.b16 %v4537
      %v5393 = vunpack.c.l.b16 %v4538
      %v5394 = vunpack.c.h.b16 %v4538
      %v5395 = vunpack.c.l.b16 %v4539
      %v5396 = vunpack.c.h.b16 %v4539
      %v5397 = vunpack.c.l.b16 %v4540
      %v5398 = vunpack.c.h.b16 %v4540
      %v5399 = vunpack.c.l.b16 %v4541
      %v5400 = vunpack.c.h.b16 %v4541
      %v5401 = vunpack.c.l.b16 %v4542
      %v5402 = vunpack.c.h.b16 %v4542
      %v5403 = vunpack.c.l.b16 %v4543
      %v5404 = vunpack.c.h.b16 %v4543
      %v5405 = vunpack.c.l.b16 %v4544
      %v5406 = vunpack.c.h.b16 %v4544
      %v5407 = vunpack.c.l.b16 %v4545
      %v5408 = vunpack.c.h.b16 %v4545
      %v5409 = vunpack.c.l.b16 %v4546
      %v5410 = vunpack.c.h.b16 %v4546
      %v5411 = vunpack.c.l.b16 %v4547
      %v5412 = vunpack.c.h.b16 %v4547
      %v5413 = vunpack.c.l.b16 %v4548
      %v5414 = vunpack.c.h.b16 %v4548
      %v5415 = vunpack.c.l.b16 %v4549
      %v5416 = vunpack.c.h.b16 %v4549
      %v5417 = vunpack.c.l.b16 %v4550
      %v5418 = vunpack.c.h.b16 %v4550
      %v5419 = vunpack.c.l.b16 %v4551
      %v5420 = vunpack.c.h.b16 %v4551
      %v5421 = vunpack.c.l.b16 %v4552
      %v5422 = vunpack.c.h.b16 %v4552
      %v5423 = vunpack.c.l.b16 %v4553
      %v5424 = vunpack.c.h.b16 %v4553
      %v5425 = vunpack.c.l.b16 %v4554
      %v5426 = vunpack.c.h.b16 %v4554
      %v5427 = vunpack.c.l.b16 %v4555
      %v5428 = vunpack.c.h.b16 %v4555
      %v5429 = vunpack.c.l.b16 %v4556
      %v5430 = vunpack.c.h.b16 %v4556
      %v5431 = vunpack.c.l.b16 %v4557
      %v5432 = vunpack.c.h.b16 %v4557
      %v5433 = vunpack.c.l.b16 %v4558
      %v5434 = vunpack.c.h.b16 %v4558
      %v5435 = vunpack.c.l.b16 %v4559
      %v5436 = vunpack.c.h.b16 %v4559
      %v5437 = vunpack.c.l.b16 %v4560
      %v5438 = vunpack.c.h.b16 %v4560
      %v5439 = vunpack.c.l.b16 %v4561
      %v5440 = vunpack.c.h.b16 %v4561
      %v5441 = vunpack.c.l.b16 %v4562
      %v5442 = vunpack.c.h.b16 %v4562
      %v5443 = vunpack.c.l.b16 %v4563
      %v5444 = vunpack.c.h.b16 %v4563
      %v5445 = vunpack.c.l.b16 %v4564
      %v5446 = vunpack.c.h.b16 %v4564
      %v5447 = vunpack.c.l.b16 %v4565
      %v5448 = vunpack.c.h.b16 %v4565
      %v5449 = vunpack.c.l.b16 %v4566
      %v5450 = vunpack.c.h.b16 %v4566
      %v5451 = vunpack.c.l.b16 %v4567
      %v5452 = vunpack.c.h.b16 %v4567
      %v5453 = vunpack.c.l.b16 %v4568
      %v5454 = vunpack.c.h.b16 %v4568
      %v5455 = vunpack.c.l.b16 %v4569
      %v5456 = vunpack.c.h.b16 %v4569
      %v5457 = vunpack.c.l.b16 %v4570
      %v5458 = vunpack.c.h.b16 %v4570
      %v5459 = vunpack.c.l.b16 %v4571
      %v5460 = vunpack.c.h.b16 %v4571
      %v5461 = vunpack.c.l.b16 %v4572
      %v5462 = vunpack.c.h.b16 %v4572
      %v5463 = vunpack.c.l.b16 %v4573
      %v5464 = vunpack.c.h.b16 %v4573
      %v5465 = vunpack.c.l.b16 %v4574
      %v5466 = vunpack.c.h.b16 %v4574
      %v5467 = vunpack.c.l.b16 %v4575
      %v5468 = vunpack.c.h.b16 %v4575
      %v5469 = vunpack.c.l.b16 %v4576
      %v5470 = vunpack.c.h.b16 %v4576
      %v5471 = vunpack.c.l.b16 %v4577
      %v5472 = vunpack.c.h.b16 %v4577
      %v5473 = vunpack.c.l.b16 %v4578
      %v5474 = vunpack.c.h.b16 %v4578
      %v5475 = vunpack.c.l.b16 %v4579
      %v5476 = vunpack.c.h.b16 %v4579
      %v5477 = vunpack.c.l.b16 %v4580
      %v5478 = vunpack.c.h.b16 %v4580
      %v5479 = vunpack.c.l.b16 %v4581
      %v5480 = vunpack.c.h.b16 %v4581
      %v5481 = vunpack.c.l.b16 %v4582
      %v5482 = vunpack.c.h.b16 %v4582
      %v5483 = vunpack.c.l.b16 %v4583
      %v5484 = vunpack.c.h.b16 %v4583
      %v5485 = vunpack.c.l.b16 %v4584
      %v5486 = vunpack.c.h.b16 %v4584
      %v5487 = vunpack.c.l.b16 %v4585
      %v5488 = vunpack.c.h.b16 %v4585
      %v5489 = vunpack.c.l.b16 %v4586
      %v5490 = vunpack.c.h.b16 %v4586
      %v5491 = vunpack.c.l.b16 %v4587
      %v5492 = vunpack.c.h.b16 %v4587
      %v5493 = vunpack.c.l.b16 %v4588
      %v5494 = vunpack.c.h.b16 %v4588
      %v5495 = vunpack.c.l.b16 %v4589
      %v5496 = vunpack.c.h.b16 %v4589
      %v5497 = vunpack.c.l.b16 %v4590
      %v5498 = vunpack.c.h.b16 %v4590
      %v5499 = vunpack.c.l.b16 %v4591
      %v5500 = vunpack.c.h.b16 %v4591
      %v5501 = vunpack.c.l.b16 %v4592
      %v5502 = vunpack.c.h.b16 %v4592
      %v5503 = vunpack.c.l.b16 %v4593
      %v5504 = vunpack.c.h.b16 %v4593
      %v5505 = vunpack.c.l.b16 %v4594
      %v5506 = vunpack.c.h.b16 %v4594
      %v5507 = vunpack.c.l.b16 %v4595
      %v5508 = vunpack.c.h.b16 %v4595
      %v5509 = vunpack.c.l.b16 %v4596
      %v5510 = vunpack.c.h.b16 %v4596
      %v5511 = vunpack.c.l.b16 %v4597
      %v5512 = vunpack.c.h.b16 %v4597
      %v5513 = vunpack.c.l.b16 %v4598
      %v5514 = vunpack.c.h.b16 %v4598
      %v5515 = vunpack.c.l.b16 %v4599
      %v5516 = vunpack.c.h.b16 %v4599
      %v5517 = vunpack.c.l.b16 %v4600
      %v5518 = vunpack.c.h.b16 %v4600
      %v5519 = vunpack.c.l.b16 %v4601
      %v5520 = vunpack.c.h.b16 %v4601
      %v5521 = vunpack.c.l.b16 %v4602
      %v5522 = vunpack.c.h.b16 %v4602
      %v5523 = vunpack.c.l.b16 %v4603
      %v5524 = vunpack.c.h.b16 %v4603
      %v5525 = vunpack.c.l.b16 %v4604
      %v5526 = vunpack.c.h.b16 %v4604
      %v5527 = vunpack.c.l.b16 %v4605
      %v5528 = vunpack.c.h.b16 %v4605
      %v5529 = vunpack.c.l.b16 %v4606
      %v5530 = vunpack.c.h.b16 %v4606
      %v5531 = vunpack.c.l.b16 %v4607
      %v5532 = vunpack.c.h.b16 %v4607
      %v5533 = vunpack.c.l.b16 %v4608
      %v5534 = vunpack.c.h.b16 %v4608
      %v5535 = vunpack.c.l.b16 %v4609
      %v5536 = vunpack.c.h.b16 %v4609
      %v5537 = vunpack.c.l.b16 %v4610
      %v5538 = vunpack.c.h.b16 %v4610
      %v5539 = vunpack.c.l.b16 %v4611
      %v5540 = vunpack.c.h.b16 %v4611
      %v5541 = vunpack.c.l.b16 %v4612
      %v5542 = vunpack.c.h.b16 %v4612
      %v5543 = vunpack.c.l.b16 %v4613
      %v5544 = vunpack.c.h.b16 %v4613
      %v5545 = vunpack.c.l.b16 %v4614
      %v5546 = vunpack.c.h.b16 %v4614
      %v5547 = vunpack.c.l.b16 %v4615
      %v5548 = vunpack.c.h.b16 %v4615
      %v5549 = vunpack.c.l.b16 %v4616
      %v5550 = vunpack.c.h.b16 %v4616
      %v5551 = vunpack.c.l.b16 %v4617
      %v5552 = vunpack.c.h.b16 %v4617
      %v5553 = vunpack.c.l.b16 %v4618
      %v5554 = vunpack.c.h.b16 %v4618
      %v5555 = vunpack.c.l.b16 %v4619
      %v5556 = vunpack.c.h.b16 %v4619
      %v5557 = vunpack.c.l.b16 %v4620
      %v5558 = vunpack.c.h.b16 %v4620
      %v5559 = vunpack.c.l.b16 %v4621
      %v5560 = vunpack.c.h.b16 %v4621
      %v5561 = vunpack.c.l.b16 %v4622
      %v5562 = vunpack.c.h.b16 %v4622
      %v5563 = vunpack.c.l.b16 %v4623
      %v5564 = vunpack.c.h.b16 %v4623
      %v5565 = vunpack.c.l.b16 %v4624
      %v5566 = vunpack.c.h.b16 %v4624
      %v5567 = vunpack.c.l.b16 %v4625
      %v5568 = vunpack.c.h.b16 %v4625
      %v5569 = vunpack.c.l.b16 %v4626
      %v5570 = vunpack.c.h.b16 %v4626
      %v5571 = vunpack.c.l.b16 %v4627
      %v5572 = vunpack.c.h.b16 %v4627
      %v5573 = vunpack.c.l.b16 %v4628
      %v5574 = vunpack.c.h.b16 %v4628
      %v5575 = vunpack.c.l.b16 %v4629
      %v5576 = vunpack.c.h.b16 %v4629
      %v5577 = vunpack.c.l.b16 %v4630
      %v5578 = vunpack.c.h.b16 %v4630
      %v5579 = vunpack.c.l.b16 %v4631
      %v5580 = vunpack.c.h.b16 %v4631
      %v5581 = vunpack.c.l.b16 %v4632
      %v5582 = vunpack.c.h.b16 %v4632
      %v5583 = vunpack.c.l.b16 %v4633
      %v5584 = vunpack.c.h.b16 %v4633
      %v5585 = vunpack.c.l.b16 %v4634
      %v5586 = vunpack.c.h.b16 %v4634
      %v5587 = vunpack.c.l.b16 %v4635
      %v5588 = vunpack.c.h.b16 %v4635
      %v5589 = vunpack.c.l.b16 %v4636
      %v5590 = vunpack.c.h.b16 %v4636
      %v5591 = vunpack.c.l.b16 %v4637
      %v5592 = vunpack.c.h.b16 %v4637
      %v5593 = vunpack.c.l.b16 %v4638
      %v5594 = vunpack.c.h.b16 %v4638
      %v5595 = vunpack.c.l.b16 %v4639
      %v5596 = vunpack.c.h.b16 %v4639
      %v5597 = vunpack.c.l.b16 %v4640
      %v5598 = vunpack.c.h.b16 %v4640
      %v5599 = vunpack.c.l.b16 %v4641
      %v5600 = vunpack.c.h.b16 %v4641
      %v5601 = vunpack.c.l.b16 %v4642
      %v5602 = vunpack.c.h.b16 %v4642
      %v5603 = vunpack.c.l.b16 %v4643
      %v5604 = vunpack.c.h.b16 %v4643
      %v5605 = vunpack.c.l.b16 %v4644
      %v5606 = vunpack.c.h.b16 %v4644
      %v5607 = vunpack.c.l.b16 %v4645
      %v5608 = vunpack.c.h.b16 %v4645
      %v5609 = vunpack.c.l.b16 %v4646
      %v5610 = vunpack.c.h.b16 %v4646
      %v5611 = vunpack.c.l.b16 %v4647
      %v5612 = vunpack.c.h.b16 %v4647
      %v5613 = vunpack.c.l.b16 %v4648
      %v5614 = vunpack.c.h.b16 %v4648
      %v5615 = vunpack.c.l.b16 %v4649
      %v5616 = vunpack.c.h.b16 %v4649
      %v5617 = vunpack.c.l.b16 %v4650
      %v5618 = vunpack.c.h.b16 %v4650
      %v5619 = vunpack.c.l.b16 %v4651
      %v5620 = vunpack.c.h.b16 %v4651
      %v5621 = vunpack.c.l.b16 %v4652
      %v5622 = vunpack.c.h.b16 %v4652
      %v5623 = vunpack.c.l.b16 %v4653
      %v5624 = vunpack.c.h.b16 %v4653
      %v5625 = vunpack.c.l.b16 %v4654
      %v5626 = vunpack.c.h.b16 %v4654
      %v5627 = vunpack.c.l.b16 %v4655
      %v5628 = vunpack.c.h.b16 %v4655
      %v5629 = vunpack.c.l.b16 %v4656
      %v5630 = vunpack.c.h.b16 %v4656
      %v5631 = vunpack.c.l.b16 %v4657
      %v5632 = vunpack.c.h.b16 %v4657
      %v5633 = vunpack.c.l.b16 %v4658
      %v5634 = vunpack.c.h.b16 %v4658
      %v5635 = vunpack.c.l.b16 %v4659
      %v5636 = vunpack.c.h.b16 %v4659
      %v5637 = vunpack.c.l.b16 %v4660
      %v5638 = vunpack.c.h.b16 %v4660
      %v5639 = vunpack.c.l.b16 %v4661
      %v5640 = vunpack.c.h.b16 %v4661
      %v5641 = vunpack.c.l.b16 %v4662
      %v5642 = vunpack.c.h.b16 %v4662
      %v5643 = vunpack.c.l.b16 %v4663
      %v5644 = vunpack.c.h.b16 %v4663
      %v5645 = vunpack.c.l.b16 %v4664
      %v5646 = vunpack.c.h.b16 %v4664
      %v5647 = vunpack.c.l.b16 %v4665
      %v5648 = vunpack.c.h.b16 %v4665
      %v5649 = vunpack.c.l.b16 %v4666
      %v5650 = vunpack.c.h.b16 %v4666
      %v5651 = vunpack.c.l.b16 %v4667
      %v5652 = vunpack.c.h.b16 %v4667
      %v5653 = vunpack.c.l.b16 %v4668
      %v5654 = vunpack.c.h.b16 %v4668
      %v5655 = vunpack.c.l.b16 %v4669
      %v5656 = vunpack.c.h.b16 %v4669
      %v5657 = vunpack.c.l.b16 %v4670
      %v5658 = vunpack.c.h.b16 %v4670
      %v5659 = vunpack.c.l.b16 %v4671
      %v5660 = vunpack.c.h.b16 %v4671
      %v5661 = vunpack.c.l.b16 %v4672
      %v5662 = vunpack.c.h.b16 %v4672
      %v5663 = vunpack.c.l.b16 %v4673
      %v5664 = vunpack.c.h.b16 %v4673
      %v5665 = vunpack.c.l.b16 %v4674
      %v5666 = vunpack.c.h.b16 %v4674
      %v5667 = vunpack.c.l.b16 %v4675
      %v5668 = vunpack.c.h.b16 %v4675
      %v5669 = vunpack.c.l.b16 %v4676
      %v5670 = vunpack.c.h.b16 %v4676
      %v5671 = vunpack.c.l.b16 %v4677
      %v5672 = vunpack.c.h.b16 %v4677
      %v5673 = vunpack.c.l.b16 %v4678
      %v5674 = vunpack.c.h.b16 %v4678
      %v5675 = vunpack.c.l.b16 %v4679
      %v5676 = vunpack.c.h.b16 %v4679
      %v5677 = vunpack.c.l.b16 %v4680
      %v5678 = vunpack.c.h.b16 %v4680
      %v5679 = vunpack.c.l.b16 %v4681
      %v5680 = vunpack.c.h.b16 %v4681
      %v5681 = vunpack.c.l.b16 %v4682
      %v5682 = vunpack.c.h.b16 %v4682
      %v5683 = vunpack.c.l.b16 %v4683
      %v5684 = vunpack.c.h.b16 %v4683
      %v5685 = vunpack.c.l.b16 %v4684
      %v5686 = vunpack.c.h.b16 %v4684
      %v5687 = vunpack.c.l.b16 %v4685
      %v5688 = vunpack.c.h.b16 %v4685
      %v5689 = vunpack.c.l.b16 %v4686
      %v5690 = vunpack.c.h.b16 %v4686
      %v5691 = vunpack.c.l.b16 %v4687
      %v5692 = vunpack.c.h.b16 %v4687
      %v5693 = vunpack.c.l.b16 %v4688
      %v5694 = vunpack.c.h.b16 %v4688
      %v5695 = vunpack.c.l.b16 %v4689
      %v5696 = vunpack.c.h.b16 %v4689
      %v5697 = vunpack.c.l.b16 %v4690
      %v5698 = vunpack.c.h.b16 %v4690
      %v5699 = vunpack.c.l.b16 %v4691
      %v5700 = vunpack.c.h.b16 %v4691
      %v5701 = vunpack.c.l.b16 %v4692
      %v5702 = vunpack.c.h.b16 %v4692
      %v5703 = vunpack.c.l.b16 %v4693
      %v5704 = vunpack.c.h.b16 %v4693
      %v5705 = vunpack.c.l.b16 %v4694
      %v5706 = vunpack.c.h.b16 %v4694
      %v5707 = vunpack.c.l.b16 %v4695
      %v5708 = vunpack.c.h.b16 %v4695
      %v5709 = vunpack.c.l.b16 %v4696
      %v5710 = vunpack.c.h.b16 %v4696
      %v5711 = vunpack.c.l.b16 %v4697
      %v5712 = vunpack.c.h.b16 %v4697
      %v5713 = vunpack.c.l.b16 %v4698
      %v5714 = vunpack.c.h.b16 %v4698
      %v5715 = vunpack.c.l.b16 %v4699
      %v5716 = vunpack.c.h.b16 %v4699
      %v5717 = vunpack.c.l.b16 %v4700
      %v5718 = vunpack.c.h.b16 %v4700
      %v5719 = vunpack.c.l.b16 %v4701
      %v5720 = vunpack.c.h.b16 %v4701
      %v5721 = vunpack.c.l.b16 %v4702
      %v5722 = vunpack.c.h.b16 %v4702
      %v5723 = vunpack.c.l.b16 %v4703
      %v5724 = vunpack.c.h.b16 %v4703
      %v5725 = vunpack.c.l.b16 %v4704
      %v5726 = vunpack.c.h.b16 %v4704
      %v5727 = vunpack.c.l.b16 %v4705
      %v5728 = vunpack.c.h.b16 %v4705
      %v5729 = vunpack.c.l.b16 %v4706
      %v5730 = vunpack.c.h.b16 %v4706
      %v5731 = vunpack.c.l.b16 %v4707
      %v5732 = vunpack.c.h.b16 %v4707
      %v5733 = vunpack.c.l.b16 %v4708
      %v5734 = vunpack.c.h.b16 %v4708
      %v5735 = vunpack.c.l.b16 %v4709
      %v5736 = vunpack.c.h.b16 %v4709
      %v5737 = vunpack.c.l.b16 %v4710
      %v5738 = vunpack.c.h.b16 %v4710
      %v5739 = vunpack.c.l.b16 %v4711
      %v5740 = vunpack.c.h.b16 %v4711
      %v5741 = vunpack.c.l.b16 %v4712
      %v5742 = vunpack.c.h.b16 %v4712
      %v5743 = vunpack.c.l.b16 %v4713
      %v5744 = vunpack.c.h.b16 %v4713
      %v5745 = vunpack.c.l.b16 %v4714
      %v5746 = vunpack.c.h.b16 %v4714
      %v5747 = vunpack.c.l.b16 %v4715
      %v5748 = vunpack.c.h.b16 %v4715
      %v5749 = vunpack.c.l.b16 %v4716
      %v5750 = vunpack.c.h.b16 %v4716
      %v5751 = vunpack.c.l.b16 %v4717
      %v5752 = vunpack.c.h.b16 %v4717
      %v5753 = vunpack.c.l.b16 %v4718
      %v5754 = vunpack.c.h.b16 %v4718
      %v5755 = vunpack.c.l.b16 %v4719
      %v5756 = vunpack.c.h.b16 %v4719
      %v5757 = vunpack.c.l.b16 %v4720
      %v5758 = vunpack.c.h.b16 %v4720
      %v5759 = vunpack.c.l.b16 %v4721
      %v5760 = vunpack.c.h.b16 %v4721
      %v5761 = vunpack.c.l.b16 %v4722
      %v5762 = vunpack.c.h.b16 %v4722
      %v5763 = vunpack.c.l.b16 %v4723
      %v5764 = vunpack.c.h.b16 %v4723
      %v5765 = vunpack.c.l.b16 %v4724
      %v5766 = vunpack.c.h.b16 %v4724
      %v5767 = vunpack.c.l.b16 %v4725
      %v5768 = vunpack.c.h.b16 %v4725
      %v5769 = vunpack.c.l.b16 %v4726
      %v5770 = vunpack.c.h.b16 %v4726
      %v5771 = vunpack.c.l.b16 %v4727
      %v5772 = vunpack.c.h.b16 %v4727
      %v5773 = vunpack.c.l.b16 %v4728
      %v5774 = vunpack.c.h.b16 %v4728
      %v5775 = vunpack.c.l.b16 %v4729
      %v5776 = vunpack.c.h.b16 %v4729
      %v5777 = vunpack.c.l.b16 %v4730
      %v5778 = vunpack.c.h.b16 %v4730
      %v5779 = vunpack.c.l.b16 %v4731
      %v5780 = vunpack.c.h.b16 %v4731
      %v5781 = vunpack.c.l.b16 %v4732
      %v5782 = vunpack.c.h.b16 %v4732
      %v5783 = vunpack.c.l.b16 %v4733
      %v5784 = vunpack.c.h.b16 %v4733
      %v5785 = vunpack.c.l.b16 %v4734
      %v5786 = vunpack.c.h.b16 %v4734
      %v5787 = vunpack.c.l.b16 %v4735
      %v5788 = vunpack.c.h.b16 %v4735
      %v5789 = vunpack.c.l.b16 %v4736
      %v5790 = vunpack.c.h.b16 %v4736
      %v5791 = vunpack.c.l.b16 %v4737
      %v5792 = vunpack.c.h.b16 %v4737
      %v5793 = vunpack.c.l.b16 %v4738
      %v5794 = vunpack.c.h.b16 %v4738
      %v5795 = vunpack.c.l.b16 %v4739
      %v5796 = vunpack.c.h.b16 %v4739
      %v5797 = vunpack.c.l.b16 %v4740
      %v5798 = vunpack.c.h.b16 %v4740
      %v5799 = vunpack.c.l.b16 %v4741
      %v5800 = vunpack.c.h.b16 %v4741
      %v5801 = vunpack.c.l.b16 %v4742
      %v5802 = vunpack.c.h.b16 %v4742
      %v5803 = vunpack.c.l.b16 %v4743
      %v5804 = vunpack.c.h.b16 %v4743
      %v5805 = vunpack.c.l.b16 %v4744
      %v5806 = vunpack.c.h.b16 %v4744
      %v5807 = vunpack.c.l.b16 %v4745
      %v5808 = vunpack.c.h.b16 %v4745
      %v5809 = vunpack.c.l.b16 %v4746
      %v5810 = vunpack.c.h.b16 %v4746
      %v5811 = vunpack.c.l.b16 %v4747
      %v5812 = vunpack.c.h.b16 %v4747
      %v5813 = vunpack.c.l.b16 %v4748
      %v5814 = vunpack.c.h.b16 %v4748
      %v5815 = vunpack.c.l.b16 %v4749
      %v5816 = vunpack.c.h.b16 %v4749
      %v5817 = vunpack.c.l.b16 %v4750
      %v5818 = vunpack.c.h.b16 %v4750
      %v5819 = vunpack.c.l.b16 %v4751
      %v5820 = vunpack.c.h.b16 %v4751
      %v5821 = vunpack.c.l.b16 %v4752
      %v5822 = vunpack.c.h.b16 %v4752
      %v5823 = vunpack.c.l.b16 %v4753
      %v5824 = vunpack.c.h.b16 %v4753
      %v5825 = vunpack.c.l.b16 %v4754
      %v5826 = vunpack.c.h.b16 %v4754
      %v5827 = vunpack.c.l.b16 %v4755
      %v5828 = vunpack.c.h.b16 %v4755
      %v5829 = vunpack.c.l.b16 %v4756
      %v5830 = vunpack.c.h.b16 %v4756
      %v5831 = vunpack.c.l.b16 %v4757
      %v5832 = vunpack.c.h.b16 %v4757
      %v5833 = vunpack.c.l.b16 %v4758
      %v5834 = vunpack.c.h.b16 %v4758
      %v5835 = vunpack.c.l.b16 %v4759
      %v5836 = vunpack.c.h.b16 %v4759
      %v5837 = vunpack.c.l.b16 %v4760
      %v5838 = vunpack.c.h.b16 %v4760
      %v5839 = vunpack.c.l.b16 %v4761
      %v5840 = vunpack.c.h.b16 %v4761
      %v5841 = vunpack.c.l.b16 %v4762
      %v5842 = vunpack.c.h.b16 %v4762
      %v5843 = vpack.c.b16 %v5141, %v5123
      %v5844 = vpack.c.b16 %v5142, %v5124
      %v5845 = vpack.c.b16 %v5143, %v5125
      %v5846 = vpack.c.b16 %v5144, %v5126
      %v5847 = vpack.c.b16 %v5145, %v5127
      %v5848 = vpack.c.b16 %v5146, %v5128
      %v5849 = vpack.c.b16 %v5147, %v5129
      %v5850 = vpack.c.b16 %v5148, %v5130
      %v5851 = vpack.c.b16 %v5149, %v5131
      %v5852 = vpack.c.b16 %v5150, %v5132
      %v5853 = vpack.c.b16 %v5151, %v5133
      %v5854 = vpack.c.b16 %v5152, %v5134
      %v5855 = vpack.c.b16 %v5153, %v5135
      %v5856 = vpack.c.b16 %v5154, %v5136
      %v5857 = vpack.c.b16 %v5155, %v5137
      %v5858 = vpack.c.b16 %v5156, %v5138
      %v5859 = vpack.c.b16 %v5157, %v5139
      %v5860 = vpack.c.b16 %v5158, %v5140
      %v5861 = vpack.c.b16 %v5177, %v5159
      %v5862 = vpack.c.b16 %v5178, %v5160
      %v5863 = vpack.c.b16 %v5179, %v5161
      %v5864 = vpack.c.b16 %v5180, %v5162
      %v5865 = vpack.c.b16 %v5181, %v5163
      %v5866 = vpack.c.b16 %v5182, %v5164
      %v5867 = vpack.c.b16 %v5183, %v5165
      %v5868 = vpack.c.b16 %v5184, %v5166
      %v5869 = vpack.c.b16 %v5185, %v5167
      %v5870 = vpack.c.b16 %v5186, %v5168
      %v5871 = vpack.c.b16 %v5187, %v5169
      %v5872 = vpack.c.b16 %v5188, %v5170
      %v5873 = vpack.c.b16 %v5189, %v5171
      %v5874 = vpack.c.b16 %v5190, %v5172
      %v5875 = vpack.c.b16 %v5191, %v5173
      %v5876 = vpack.c.b16 %v5192, %v5174
      %v5877 = vpack.c.b16 %v5193, %v5175
      %v5878 = vpack.c.b16 %v5194, %v5176
      %v5879 = vpack.c.b16 %v5213, %v5195
      %v5880 = vpack.c.b16 %v5214, %v5196
      %v5881 = vpack.c.b16 %v5215, %v5197
      %v5882 = vpack.c.b16 %v5216, %v5198
      %v5883 = vpack.c.b16 %v5217, %v5199
      %v5884 = vpack.c.b16 %v5218, %v5200
      %v5885 = vpack.c.b16 %v5219, %v5201
      %v5886 = vpack.c.b16 %v5220, %v5202
      %v5887 = vpack.c.b16 %v5221, %v5203
      %v5888 = vpack.c.b16 %v5222, %v5204
      %v5889 = vpack.c.b16 %v5223, %v5205
      %v5890 = vpack.c.b16 %v5224, %v5206
      %v5891 = vpack.c.b16 %v5225, %v5207
      %v5892 = vpack.c.b16 %v5226, %v5208
      %v5893 = vpack.c.b16 %v5227, %v5209
      %v5894 = vpack.c.b16 %v5228, %v5210
      %v5895 = vpack.c.b16 %v5229, %v5211
      %v5896 = vpack.c.b16 %v5230, %v5212
      %v5897 = vpack.c.b16 %v5249, %v5231
      %v5898 = vpack.c.b16 %v5250, %v5232
      %v5899 = vpack.c.b16 %v5251, %v5233
      %v5900 = vpack.c.b16 %v5252, %v5234
      %v5901 = vpack.c.b16 %v5253, %v5235
      %v5902 = vpack.c.b16 %v5254, %v5236
      %v5903 = vpack.c.b16 %v5255, %v5237
      %v5904 = vpack.c.b16 %v5256, %v5238
      %v5905 = vpack.c.b16 %v5257, %v5239
      %v5906 = vpack.c.b16 %v5258, %v5240
      %v5907 = vpack.c.b16 %v5259, %v5241
      %v5908 = vpack.c.b16 %v5260, %v5242
      %v5909 = vpack.c.b16 %v5261, %v5243
      %v5910 = vpack.c.b16 %v5262, %v5244
      %v5911 = vpack.c.b16 %v5263, %v5245
      %v5912 = vpack.c.b16 %v5264, %v5246
      %v5913 = vpack.c.b16 %v5265, %v5247
      %v5914 = vpack.c.b16 %v5266, %v5248
      %v5915 = vpack.c.b16 %v5285, %v5267
      %v5916 = vpack.c.b16 %v5286, %v5268
      %v5917 = vpack.c.b16 %v5287, %v5269
      %v5918 = vpack.c.b16 %v5288, %v5270
      %v5919 = vpack.c.b16 %v5289, %v5271
      %v5920 = vpack.c.b16 %v5290, %v5272
      %v5921 = vpack.c.b16 %v5291, %v5273
      %v5922 = vpack.c.b16 %v5292, %v5274
      %v5923 = vpack.c.b16 %v5293, %v5275
      %v5924 = vpack.c.b16 %v5294, %v5276
      %v5925 = vpack.c.b16 %v5295, %v5277
      %v5926 = vpack.c.b16 %v5296, %v5278
      %v5927 = vpack.c.b16 %v5297, %v5279
      %v5928 = vpack.c.b16 %v5298, %v5280
      %v5929 = vpack.c.b16 %v5299, %v5281
      %v5930 = vpack.c.b16 %v5300, %v5282
      %v5931 = vpack.c.b16 %v5301, %v5283
      %v5932 = vpack.c.b16 %v5302, %v5284
      %v5933 = vpack.c.b16 %v5321, %v5303
      %v5934 = vpack.c.b16 %v5322, %v5304
      %v5935 = vpack.c.b16 %v5323, %v5305
      %v5936 = vpack.c.b16 %v5324, %v5306
      %v5937 = vpack.c.b16 %v5325, %v5307
      %v5938 = vpack.c.b16 %v5326, %v5308
      %v5939 = vpack.c.b16 %v5327, %v5309
      %v5940 = vpack.c.b16 %v5328, %v5310
      %v5941 = vpack.c.b16 %v5329, %v5311
      %v5942 = vpack.c.b16 %v5330, %v5312
      %v5943 = vpack.c.b16 %v5331, %v5313
      %v5944 = vpack.c.b16 %v5332, %v5314
      %v5945 = vpack.c.b16 %v5333, %v5315
      %v5946 = vpack.c.b16 %v5334, %v5316
      %v5947 = vpack.c.b16 %v5335, %v5317
      %v5948 = vpack.c.b16 %v5336, %v5318
      %v5949 = vpack.c.b16 %v5337, %v5319
      %v5950 = vpack.c.b16 %v5338, %v5320
      %v5951 = vpack.c.b16 %v5357, %v5339
      %v5952 = vpack.c.b16 %v5358, %v5340
      %v5953 = vpack.c.b16 %v5359, %v5341
      %v5954 = vpack.c.b16 %v5360, %v5342
      %v5955 = vpack.c.b16 %v5361, %v5343
      %v5956 = vpack.c.b16 %v5362, %v5344
      %v5957 = vpack.c.b16 %v5363, %v5345
      %v5958 = vpack.c.b16 %v5364, %v5346
      %v5959 = vpack.c.b16 %v5365, %v5347
      %v5960 = vpack.c.b16 %v5366, %v5348
      %v5961 = vpack.c.b16 %v5367, %v5349
      %v5962 = vpack.c.b16 %v5368, %v5350
      %v5963 = vpack.c.b16 %v5369, %v5351
      %v5964 = vpack.c.b16 %v5370, %v5352
      %v5965 = vpack.c.b16 %v5371, %v5353
      %v5966 = vpack.c.b16 %v5372, %v5354
      %v5967 = vpack.c.b16 %v5373, %v5355
      %v5968 = vpack.c.b16 %v5374, %v5356
      %v5969 = vpack.c.b16 %v5393, %v5375
      %v5970 = vpack.c.b16 %v5394, %v5376
      %v5971 = vpack.c.b16 %v5395, %v5377
      %v5972 = vpack.c.b16 %v5396, %v5378
      %v5973 = vpack.c.b16 %v5397, %v5379
      %v5974 = vpack.c.b16 %v5398, %v5380
      %v5975 = vpack.c.b16 %v5399, %v5381
      %v5976 = vpack.c.b16 %v5400, %v5382
      %v5977 = vpack.c.b16 %v5401, %v5383
      %v5978 = vpack.c.b16 %v5402, %v5384
      %v5979 = vpack.c.b16 %v5403, %v5385
      %v5980 = vpack.c.b16 %v5404, %v5386
      %v5981 = vpack.c.b16 %v5405, %v5387
      %v5982 = vpack.c.b16 %v5406, %v5388
      %v5983 = vpack.c.b16 %v5407, %v5389
      %v5984 = vpack.c.b16 %v5408, %v5390
      %v5985 = vpack.c.b16 %v5409, %v5391
      %v5986 = vpack.c.b16 %v5410, %v5392
      %v5987 = vpack.c.b16 %v5429, %v5411
      %v5988 = vpack.c.b16 %v5430, %v5412
      %v5989 = vpack.c.b16 %v5431, %v5413
      %v5990 = vpack.c.b16 %v5432, %v5414
      %v5991 = vpack.c.b16 %v5433, %v5415
      %v5992 = vpack.c.b16 %v5434, %v5416
      %v5993 = vpack.c.b16 %v5435, %v5417
      %v5994 = vpack.c.b16 %v5436, %v5418
      %v5995 = vpack.c.b16 %v5437, %v5419
      %v5996 = vpack.c.b16 %v5438, %v5420
      %v5997 = vpack.c.b16 %v5439, %v5421
      %v5998 = vpack.c.b16 %v5440, %v5422
      %v5999 = vpack.c.b16 %v5441, %v5423
      %v6000 = vpack.c.b16 %v5442, %v5424
      %v6001 = vpack.c.b16 %v5443, %v5425
      %v6002 = vpack.c.b16 %v5444, %v5426
      %v6003 = vpack.c.b16 %v5445, %v5427
      %v6004 = vpack.c.b16 %v5446, %v5428
      %v6005 = vpack.c.b16 %v5465, %v5447
      %v6006 = vpack.c.b16 %v5466, %v5448
      %v6007 = vpack.c.b16 %v5467, %v5449
      %v6008 = vpack.c.b16 %v5468, %v5450
      %v6009 = vpack.c.b16 %v5469, %v5451
      %v6010 = vpack.c.b16 %v5470, %v5452
      %v6011 = vpack.c.b16 %v5471, %v5453
      %v6012 = vpack.c.b16 %v5472, %v5454
      %v6013 = vpack.c.b16 %v5473, %v5455
      %v6014 = vpack.c.b16 %v5474, %v5456
      %v6015 = vpack.c.b16 %v5475, %v5457
      %v6016 = vpack.c.b16 %v5476, %v5458
      %v6017 = vpack.c.b16 %v5477, %v5459
      %v6018 = vpack.c.b16 %v5478, %v5460
      %v6019 = vpack.c.b16 %v5479, %v5461
      %v6020 = vpack.c.b16 %v5480, %v5462
      %v6021 = vpack.c.b16 %v5481, %v5463
      %v6022 = vpack.c.b16 %v5482, %v5464
      %v6023 = vpack.c.b16 %v5501, %v5483
      %v6024 = vpack.c.b16 %v5502, %v5484
      %v6025 = vpack.c.b16 %v5503, %v5485
      %v6026 = vpack.c.b16 %v5504, %v5486
      %v6027 = vpack.c.b16 %v5505, %v5487
      %v6028 = vpack.c.b16 %v5506, %v5488
      %v6029 = vpack.c.b16 %v5507, %v5489
      %v6030 = vpack.c.b16 %v5508, %v5490
      %v6031 = vpack.c.b16 %v5509, %v5491
      %v6032 = vpack.c.b16 %v5510, %v5492
      %v6033 = vpack.c.b16 %v5511, %v5493
      %v6034 = vpack.c.b16 %v5512, %v5494
      %v6035 = vpack.c.b16 %v5513, %v5495
      %v6036 = vpack.c.b16 %v5514, %v5496
      %v6037 = vpack.c.b16 %v5515, %v5497
      %v6038 = vpack.c.b16 %v5516, %v5498
      %v6039 = vpack.c.b16 %v5517, %v5499
      %v6040 = vpack.c.b16 %v5518, %v5500
      %v6041 = vpack.c.b16 %v5537, %v5519
      %v6042 = vpack.c.b16 %v5538, %v5520
      %v6043 = vpack.c.b16 %v5539, %v5521
      %v6044 = vpack.c.b16 %v5540, %v5522
      %v6045 = vpack.c.b16 %v5541, %v5523
      %v6046 = vpack.c.b16 %v5542, %v5524
      %v6047 = vpack.c.b16 %v5543, %v5525
      %v6048 = vpack.c.b16 %v5544, %v5526
      %v6049 = vpack.c.b16 %v5545, %v5527
      %v6050 = vpack.c.b16 %v5546, %v5528
      %v6051 = vpack.c.b16 %v5547, %v5529
      %v6052 = vpack.c.b16 %v5548, %v5530
      %v6053 = vpack.c.b16 %v5549, %v5531
      %v6054 = vpack.c.b16 %v5550, %v5532
      %v6055 = vpack.c.b16 %v5551, %v5533
      %v6056 = vpack.c.b16 %v5552, %v5534
      %v6057 = vpack.c.b16 %v5553, %v5535
      %v6058 = vpack.c.b16 %v5554, %v5536
      %v6059 = vpack.c.b16 %v5573, %v5555
      %v6060 = vpack.c.b16 %v5574, %v5556
      %v6061 = vpack.c.b16 %v5575, %v5557
      %v6062 = vpack.c.b16 %v5576, %v5558
      %v6063 = vpack.c.b16 %v5577, %v5559
      %v6064 = vpack.c.b16 %v5578, %v5560
      %v6065 = vpack.c.b16 %v5579, %v5561
      %v6066 = vpack.c.b16 %v5580, %v5562
      %v6067 = vpack.c.b16 %v5581, %v5563
      %v6068 = vpack.c.b16 %v5582, %v5564
      %v6069 = vpack.c.b16 %v5583, %v5565
      %v6070 = vpack.c.b16 %v5584, %v5566
      %v6071 = vpack.c.b16 %v5585, %v5567
      %v6072 = vpack.c.b16 %v5586, %v5568
      %v6073 = vpack.c.b16 %v5587, %v5569
      %v6074 = vpack.c.b16 %v5588, %v5570
      %v6075 = vpack.c.b16 %v5589, %v5571
      %v6076 = vpack.c.b16 %v5590, %v5572
      %v6077 = vpack.c.b16 %v5609, %v5591
      %v6078 = vpack.c.b16 %v5610, %v5592
      %v6079 = vpack.c.b16 %v5611, %v5593
      %v6080 = vpack.c.b16 %v5612, %v5594
      %v6081 = vpack.c.b16 %v5613, %v5595
      %v6082 = vpack.c.b16 %v5614, %v5596
      %v6083 = vpack.c.b16 %v5615, %v5597
      %v6084 = vpack.c.b16 %v5616, %v5598
      %v6085 = vpack.c.b16 %v5617, %v5599
      %v6086 = vpack.c.b16 %v5618, %v5600
      %v6087 = vpack.c.b16 %v5619, %v5601
      %v6088 = vpack.c.b16 %v5620, %v5602
      %v6089 = vpack.c.b16 %v5621, %v5603
      %v6090 = vpack.c.b16 %v5622, %v5604
      %v6091 = vpack.c.b16 %v5623, %v5605
      %v6092 = vpack.c.b16 %v5624, %v5606
      %v6093 = vpack.c.b16 %v5625, %v5607
      %v6094 = vpack.c.b16 %v5626, %v5608
      %v6095 = vpack.c.b16 %v5645, %v5627
      %v6096 = vpack.c.b16 %v5646, %v5628
      %v6097 = vpack.c.b16 %v5647, %v5629
      %v6098 = vpack.c.b16 %v5648, %v5630
      %v6099 = vpack.c.b16 %v5649, %v5631
      %v6100 = vpack.c.b16 %v5650, %v5632
      %v6101 = vpack.c.b16 %v5651, %v5633
      %v6102 = vpack.c.b16 %v5652, %v5634
      %v6103 = vpack.c.b16 %v5653, %v5635
      %v6104 = vpack.c.b16 %v5654, %v5636
      %v6105 = vpack.c.b16 %v5655, %v5637
      %v6106 = vpack.c.b16 %v5656, %v5638
      %v6107 = vpack.c.b16 %v5657, %v5639
      %v6108 = vpack.c.b16 %v5658, %v5640
      %v6109 = vpack.c.b16 %v5659, %v5641
      %v6110 = vpack.c.b16 %v5660, %v5642
      %v6111 = vpack.c.b16 %v5661, %v5643
      %v6112 = vpack.c.b16 %v5662, %v5644
      %v6113 = vpack.c.b16 %v5681, %v5663
      %v6114 = vpack.c.b16 %v5682, %v5664
      %v6115 = vpack.c.b16 %v5683, %v5665
      %v6116 = vpack.c.b16 %v5684, %v5666
      %v6117 = vpack.c.b16 %v5685, %v5667
      %v6118 = vpack.c.b16 %v5686, %v5668
      %v6119 = vpack.c.b16 %v5687, %v5669
      %v6120 = vpack.c.b16 %v5688, %v5670
      %v6121 = vpack.c.b16 %v5689, %v5671
      %v6122 = vpack.c.b16 %v5690, %v5672
      %v6123 = vpack.c.b16 %v5691, %v5673
      %v6124 = vpack.c.b16 %v5692, %v5674
      %v6125 = vpack.c.b16 %v5693, %v5675
      %v6126 = vpack.c.b16 %v5694, %v5676
      %v6127 = vpack.c.b16 %v5695, %v5677
      %v6128 = vpack.c.b16 %v5696, %v5678
      %v6129 = vpack.c.b16 %v5697, %v5679
      %v6130 = vpack.c.b16 %v5698, %v5680
      %v6131 = vpack.c.b16 %v5717, %v5699
      %v6132 = vpack.c.b16 %v5718, %v5700
      %v6133 = vpack.c.b16 %v5719, %v5701
      %v6134 = vpack.c.b16 %v5720, %v5702
      %v6135 = vpack.c.b16 %v5721, %v5703
      %v6136 = vpack.c.b16 %v5722, %v5704
      %v6137 = vpack.c.b16 %v5723, %v5705
      %v6138 = vpack.c.b16 %v5724, %v5706
      %v6139 = vpack.c.b16 %v5725, %v5707
      %v6140 = vpack.c.b16 %v5726, %v5708
      %v6141 = vpack.c.b16 %v5727, %v5709
      %v6142 = vpack.c.b16 %v5728, %v5710
      %v6143 = vpack.c.b16 %v5729, %v5711
      %v6144 = vpack.c.b16 %v5730, %v5712
      %v6145 = vpack.c.b16 %v5731, %v5713
      %v6146 = vpack.c.b16 %v5732, %v5714
      %v6147 = vpack.c.b16 %v5733, %v5715
      %v6148 = vpack.c.b16 %v5734, %v5716
      %v6149 = vpack.c.b16 %v5753, %v5735
      %v6150 = vpack.c.b16 %v5754, %v5736
      %v6151 = vpack.c.b16 %v5755, %v5737
      %v6152 = vpack.c.b16 %v5756, %v5738
      %v6153 = vpack.c.b16 %v5757, %v5739
      %v6154 = vpack.c.b16 %v5758, %v5740
      %v6155 = vpack.c.b16 %v5759, %v5741
      %v6156 = vpack.c.b16 %v5760, %v5742
      %v6157 = vpack.c.b16 %v5761, %v5743
      %v6158 = vpack.c.b16 %v5762, %v5744
      %v6159 = vpack.c.b16 %v5763, %v5745
      %v6160 = vpack.c.b16 %v5764, %v5746
      %v6161 = vpack.c.b16 %v5765, %v5747
      %v6162 = vpack.c.b16 %v5766, %v5748
      %v6163 = vpack.c.b16 %v5767, %v5749
      %v6164 = vpack.c.b16 %v5768, %v5750
      %v6165 = vpack.c.b16 %v5769, %v5751
      %v6166 = vpack.c.b16 %v5770, %v5752
      %v6167 = vpack.c.b16 %v5789, %v5771
      %v6168 = vpack.c.b16 %v5790, %v5772
      %v6169 = vpack.c.b16 %v5791, %v5773
      %v6170 = vpack.c.b16 %v5792, %v5774
      %v6171 = vpack.c.b16 %v5793, %v5775
      %v6172 = vpack.c.b16 %v5794, %v5776
      %v6173 = vpack.c.b16 %v5795, %v5777
      %v6174 = vpack.c.b16 %v5796, %v5778
      %v6175 = vpack.c.b16 %v5797, %v5779
      %v6176 = vpack.c.b16 %v5798, %v5780
      %v6177 = vpack.c.b16 %v5799, %v5781
      %v6178 = vpack.c.b16 %v5800, %v5782
      %v6179 = vpack.c.b16 %v5801, %v5783
      %v6180 = vpack.c.b16 %v5802, %v5784
      %v6181 = vpack.c.b16 %v5803, %v5785
      %v6182 = vpack.c.b16 %v5804, %v5786
      %v6183 = vpack.c.b16 %v5805, %v5787
      %v6184 = vpack.c.b16 %v5806, %v5788
      %v6185 = vpack.c.b16 %v5825, %v5807
      %v6186 = vpack.c.b16 %v5826, %v5808
      %v6187 = vpack.c.b16 %v5827, %v5809
      %v6188 = vpack.c.b16 %v5828, %v5810
      %v6189 = vpack.c.b16 %v5829, %v5811
      %v6190 = vpack.c.b16 %v5830, %v5812
      %v6191 = vpack.c.b16 %v5831, %v5813
      %v6192 = vpack.c.b16 %v5832, %v5814
      %v6193 = vpack.c.b16 %v5833, %v5815
      %v6194 = vpack.c.b16 %v5834, %v5816
      %v6195 = vpack.c.b16 %v5835, %v5817
      %v6196 = vpack.c.b16 %v5836, %v5818
      %v6197 = vpack.c.b16 %v5837, %v5819
      %v6198 = vpack.c.b16 %v5838, %v5820
      %v6199 = vpack.c.b16 %v5839, %v5821
      %v6200 = vpack.c.b16 %v5840, %v5822
      %v6201 = vpack.c.b16 %v5841, %v5823
      %v6202 = vpack.c.b16 %v5842, %v5824
      %6563 = vmatprep.subr.bf16.mxu0 0
      %6564 = vmatpush1.bf16.msra.mxu0 %v4259
      %6565 = vmatprep.subr.bf16.mxu0 0
      %6566 = vmatpush1.bf16.msra.mxu0 %v4260
      %6567 = vmatprep.subr.bf16.mxu0 0
      %6568 = vmatpush1.bf16.msra.mxu0 %v4261
      %6569 = vmatprep.subr.bf16.mxu0 0
      %6570 = vmatpush1.bf16.msra.mxu0 %v4262
      %6571 = vmatprep.subr.bf16.mxu0 0
      %6572 = vmatpush1.bf16.msra.mxu0 %v4263
      %6573 = vmatprep.subr.bf16.mxu0 0
      %6574 = vmatpush1.bf16.msra.mxu0 %v4264
      %6575 = vmatprep.subr.bf16.mxu0 0
      %6576 = vmatpush1.bf16.msra.mxu0 %v4265
      %6577 = vmatprep.subr.bf16.mxu0 0
      %6578 = vmatpush1.bf16.msra.mxu0 %v4266
      %6579 = vmatprep.subr.bf16.mxu0 0
      %6580 = vmatpush1.bf16.msra.mxu0 %v4267
      %6581 = vmatprep.subr.bf16.mxu0 0
      %6582 = vmatpush1.bf16.msra.mxu0 %v4268
      %6583 = vmatprep.subr.bf16.mxu0 0
      %6584 = vmatpush1.bf16.msra.mxu0 %v4269
      %6585 = vmatprep.subr.bf16.mxu0 0
      %6586 = vmatpush1.bf16.msra.mxu0 %v4270
      %6587 = vmatprep.subr.bf16.mxu0 0
      %6588 = vmatpush1.bf16.msra.mxu0 %v4271
      %6589 = vmatprep.subr.bf16.mxu0 0
      %6590 = vmatpush1.bf16.msra.mxu0 %v4272
      %6591 = vmatprep.subr.bf16.mxu0 0
      %6592 = vmatpush1.bf16.msra.mxu0 %v4273
      %6593 = vmatprep.subr.bf16.mxu0 0
      %6594 = vmatpush1.bf16.msra.mxu0 %v4274
      %6595 = vmatprep.mubr.bf16.mxu0 %v5844
      %6596 = vmatmul.mubr.bf16.gmra.mrb[0].mxu0 %v5843
      %v6597 = vpop.f32.mrb[0].mxu0
      %v6598 = vadd.f32 0.0, %v6597
      %v6599 = vpop.f32.mrb[0].mxu0
      %v6600 = vpop.f32.mrb[0].mxu0
      %v6601 = vadd.f32 0.0, %v6600
      %v6602 = vpop.f32.mrb[0].mxu0
      %6603 = vmatprep.mubr.bf16.mxu0 %v5862
      %6604 = vmatmul.mubr.bf16.gmra.mrb[0].mxu0 %v5861
      %v6605 = vpop.f32.mrb[0].mxu0
      %v6606 = vadd.f32 0.0, %v6605
      %v6607 = vpop.f32.mrb[0].mxu0
      %v6608 = vpop.f32.mrb[0].mxu0
      %v6609 = vadd.f32 0.0, %v6608
      %v6610 = vpop.f32.mrb[0].mxu0
      %6611 = vmatprep.mubr.bf16.mxu0 %v5880
      %6612 = vmatmul.mubr.bf16.gmra.mrb[0].mxu0 %v5879
      %v6613 = vpop.f32.mrb[0].mxu0
      %v6614 = vadd.f32 0.0, %v6613
      %v6615 = vpop.f32.mrb[0].mxu0
      %v6616 = vpop.f32.mrb[0].mxu0
      %v6617 = vadd.f32 0.0, %v6616
      %v6618 = vpop.f32.mrb[0].mxu0
      %6619 = vmatprep.mubr.bf16.mxu0 %v5898
      %6620 = vmatmul.mubr.bf16.gmra.mrb[0].mxu0 %v5897
      %v6621 = vpop.f32.mrb[0].mxu0
      %v6622 = vadd.f32 0.0, %v6621
      %v6623 = vpop.f32.mrb[0].mxu0
      %v6624 = vpop.f32.mrb[0].mxu0
      %v6625 = vadd.f32 0.0, %v6624
      %v6626 = vpop.f32.mrb[0].mxu0
      %6627 = vmatprep.mubr.bf16.mxu0 %v5916
      %6628 = vmatmul.mubr.bf16.gmra.mrb[0].mxu0 %v5915
      %v6629 = vpop.f32.mrb[0].mxu0
      %v6630 = vadd.f32 0.0, %v6629
      %v6631 = vpop.f32.mrb[0].mxu0
      %v6632 = vpop.f32.mrb[0].mxu0
      %v6633 = vadd.f32 0.0, %v6632
      %v6634 = vpop.f32.mrb[0].mxu0
      %6635 = vmatprep.mubr.bf16.mxu0 %v5934
      %6636 = vmatmul.mubr.bf16.gmra.mrb[0].mxu0 %v5933
      %v6637 = vpop.f32.mrb[0].mxu0
      %v6638 = vadd.f32 0.0, %v6637
      %v6639 = vpop.f32.mrb[0].mxu0
      %v6640 = vpop.f32.mrb[0].mxu0
      %v6641 = vadd.f32 0.0, %v6640
      %v6642 = vpop.f32.mrb[0].mxu0
      %6643 = vmatprep.mubr.bf16.mxu0 %v5952
      %6644 = vmatmul.mubr.bf16.gmra.mrb[0].mxu0 %v5951
      %v6645 = vpop.f32.mrb[0].mxu0
      %v6646 = vadd.f32 0.0, %v6645
      %v6647 = vpop.f32.mrb[0].mxu0
      %v6648 = vpop.f32.mrb[0].mxu0
      %v6649 = vadd.f32 0.0, %v6648
      %v6650 = vpop.f32.mrb[0].mxu0
      %6651 = vmatprep.mubr.bf16.mxu0 %v5970
      %6652 = vmatmul.mubr.bf16.gmra.mrb[0].mxu0 %v5969
      %v6653 = vpop.f32.mrb[0].mxu0
      %v6654 = vadd.f32 0.0, %v6653
      %v6655 = vpop.f32.mrb[0].mxu0
      %v6656 = vpop.f32.mrb[0].mxu0
      %v6657 = vadd.f32 0.0, %v6656
      %v6658 = vpop.f32.mrb[0].mxu0
      %6659 = vmatprep.mubr.bf16.mxu0 %v5988
      %6660 = vmatmul.mubr.bf16.gmra.mrb[0].mxu0 %v5987
      %v6661 = vpop.f32.mrb[0].mxu0
      %v6662 = vadd.f32 0.0, %v6661
      %v6663 = vpop.f32.mrb[0].mxu0
      %v6664 = vpop.f32.mrb[0].mxu0
      %v6665 = vadd.f32 0.0, %v6664
      %v6666 = vpop.f32.mrb[0].mxu0
      %6667 = vmatprep.mubr.bf16.mxu0 %v6006
      %6668 = vmatmul.mubr.bf16.gmra.mrb[0].mxu0 %v6005
      %v6669 = vpop.f32.mrb[0].mxu0
      %v6670 = vadd.f32 0.0, %v6669
      %v6671 = vpop.f32.mrb[0].mxu0
      %v6672 = vpop.f32.mrb[0].mxu0
      %v6673 = vadd.f32 0.0, %v6672
      %v6674 = vpop.f32.mrb[0].mxu0
      %6675 = vmatprep.mubr.bf16.mxu0 %v6024
      %6676 = vmatmul.mubr.bf16.gmra.mrb[0].mxu0 %v6023
      %v6677 = vpop.f32.mrb[0].mxu0
      %v6678 = vadd.f32 0.0, %v6677
      %v6679 = vpop.f32.mrb[0].mxu0
      %v6680 = vpop.f32.mrb[0].mxu0
      %v6681 = vadd.f32 0.0, %v6680
      %v6682 = vpop.f32.mrb[0].mxu0
      %6683 = vmatprep.mubr.bf16.mxu0 %v6042
      %6684 = vmatmul.mubr.bf16.gmra.mrb[0].mxu0 %v6041
      %v6685 = vpop.f32.mrb[0].mxu0
      %v6686 = vadd.f32 0.0, %v6685
      %v6687 = vpop.f32.mrb[0].mxu0
      %v6688 = vpop.f32.mrb[0].mxu0
      %v6689 = vadd.f32 0.0, %v6688
      %v6690 = vpop.f32.mrb[0].mxu0
      %6691 = vmatprep.mubr.bf16.mxu0 %v6060
      %6692 = vmatmul.mubr.bf16.gmra.mrb[0].mxu0 %v6059
      %v6693 = vpop.f32.mrb[0].mxu0
      %v6694 = vadd.f32 0.0, %v6693
      %v6695 = vpop.f32.mrb[0].mxu0
      %v6696 = vpop.f32.mrb[0].mxu0
      %v6697 = vadd.f32 0.0, %v6696
      %v6698 = vpop.f32.mrb[0].mxu0
      %6699 = vmatprep.mubr.bf16.mxu0 %v6078
      %6700 = vmatmul.mubr.bf16.gmra.mrb[0].mxu0 %v6077
      %v6701 = vpop.f32.mrb[0].mxu0
      %v6702 = vadd.f32 0.0, %v6701
      %v6703 = vpop.f32.mrb[0].mxu0
      %v6704 = vpop.f32.mrb[0].mxu0
      %v6705 = vadd.f32 0.0, %v6704
      %v6706 = vpop.f32.mrb[0].mxu0
      %6707 = vmatprep.mubr.bf16.mxu0 %v6096
      %6708 = vmatmul.mubr.bf16.gmra.mrb[0].mxu0 %v6095
      %v6709 = vpop.f32.mrb[0].mxu0
      %v6710 = vadd.f32 0.0, %v6709
      %v6711 = vpop.f32.mrb[0].mxu0
      %v6712 = vpop.f32.mrb[0].mxu0
      %v6713 = vadd.f32 0.0, %v6712
      %v6714 = vpop.f32.mrb[0].mxu0
      %6715 = vmatprep.mubr.bf16.mxu0 %v6114
      %6716 = vmatmul.mubr.bf16.gmra.mrb[0].mxu0 %v6113
      %v6717 = vpop.f32.mrb[0].mxu0
      %v6718 = vadd.f32 0.0, %v6717
      %v6719 = vpop.f32.mrb[0].mxu0
      %v6720 = vpop.f32.mrb[0].mxu0
      %v6721 = vadd.f32 0.0, %v6720
      %v6722 = vpop.f32.mrb[0].mxu0
      %6723 = vmatprep.mubr.bf16.mxu0 %v6132
      %6724 = vmatmul.mubr.bf16.gmra.mrb[0].mxu0 %v6131
      %v6725 = vpop.f32.mrb[0].mxu0
      %v6726 = vadd.f32 0.0, %v6725
      %v6727 = vpop.f32.mrb[0].mxu0
      %v6728 = vpop.f32.mrb[0].mxu0
      %v6729 = vadd.f32 0.0, %v6728
      %v6730 = vpop.f32.mrb[0].mxu0
      %6731 = vmatprep.mubr.bf16.mxu0 %v6150
      %6732 = vmatmul.mubr.bf16.gmra.mrb[0].mxu0 %v6149
      %v6733 = vpop.f32.mrb[0].mxu0
      %v6734 = vadd.f32 0.0, %v6733
      %v6735 = vpop.f32.mrb[0].mxu0
      %v6736 = vpop.f32.mrb[0].mxu0
      %v6737 = vadd.f32 0.0, %v6736
      %v6738 = vpop.f32.mrb[0].mxu0
      %6739 = vmatprep.mubr.bf16.mxu0 %v6168
      %6740 = vmatmul.mubr.bf16.gmra.mrb[0].mxu0 %v6167
      %v6741 = vpop.f32.mrb[0].mxu0
      %v6742 = vadd.f32 0.0, %v6741
      %v6743 = vpop.f32.mrb[0].mxu0
      %v6744 = vpop.f32.mrb[0].mxu0
      %v6745 = vadd.f32 0.0, %v6744
      %v6746 = vpop.f32.mrb[0].mxu0
      %6747 = vmatprep.mubr.bf16.mxu0 %v6186
      %6748 = vmatmul.mubr.bf16.gmra.mrb[0].mxu0 %v6185
      %v6749 = vpop.f32.mrb[0].mxu0
      %v6750 = vadd.f32 0.0, %v6749
      %v6751 = vpop.f32.mrb[0].mxu0
      %v6752 = vpop.f32.mrb[0].mxu0
      %v6753 = vadd.f32 0.0, %v6752
      %v6754 = vpop.f32.mrb[0].mxu0
      %6755 = vdwg.mxu0
      %6756 = vmatprep.subr.bf16.mxu0 0
      %6757 = vmatpush1.bf16.msra.mxu0 %v4275
      %6758 = vmatprep.subr.bf16.mxu0 0
      %6759 = vmatpush1.bf16.msra.mxu0 %v4276
      %6760 = vmatprep.subr.bf16.mxu0 0
      %6761 = vmatpush1.bf16.msra.mxu0 %v4277
      %6762 = vmatprep.subr.bf16.mxu0 0
      %6763 = vmatpush1.bf16.msra.mxu0 %v4278
      %6764 = vmatprep.subr.bf16.mxu0 0
      %6765 = vmatpush1.bf16.msra.mxu0 %v4279
      %6766 = vmatprep.subr.bf16.mxu0 0
      %6767 = vmatpush1.bf16.msra.mxu0 %v4280
      %6768 = vmatprep.subr.bf16.mxu0 0
      %6769 = vmatpush1.bf16.msra.mxu0 %v4281
      %6770 = vmatprep.subr.bf16.mxu0 0
      %6771 = vmatpush1.bf16.msra.mxu0 %v4282
      %6772 = vmatprep.subr.bf16.mxu0 0
      %6773 = vmatpush1.bf16.msra.mxu0 %v4283
      %6774 = vmatprep.subr.bf16.mxu0 0
      %6775 = vmatpush1.bf16.msra.mxu0 %v4284
      %6776 = vmatprep.subr.bf16.mxu0 0
      %6777 = vmatpush1.bf16.msra.mxu0 %v4285
      %6778 = vmatprep.subr.bf16.mxu0 0
      %6779 = vmatpush1.bf16.msra.mxu0 %v4286
      %6780 = vmatprep.subr.bf16.mxu0 0
      %6781 = vmatpush1.bf16.msra.mxu0 %v4287
      %6782 = vmatprep.subr.bf16.mxu0 0
      %6783 = vmatpush1.bf16.msra.mxu0 %v4288
      %6784 = vmatprep.subr.bf16.mxu0 0
      %6785 = vmatpush1.bf16.msra.mxu0 %v4289
      %6786 = vmatprep.subr.bf16.mxu0 0
      %6787 = vmatpush1.bf16.msra.mxu0 %v4290
      %6788 = vmatprep.mubr.bf16.mxu0 %v5846
      %6789 = vmatmul.mubr.bf16.gmra.mrb[0].mxu0 %v5845
      %v6790 = vpop.f32.mrb[0].mxu0
      %v6791 = vadd.f32 %v6598, %v6790
      %v6792 = vpop.f32.mrb[0].mxu0
      %v6793 = vpop.f32.mrb[0].mxu0
      %v6794 = vadd.f32 %v6601, %v6793
      %v6795 = vpop.f32.mrb[0].mxu0
      %6796 = vmatprep.mubr.bf16.mxu0 %v5864
      %6797 = vmatmul.mubr.bf16.gmra.mrb[0].mxu0 %v5863
      %v6798 = vpop.f32.mrb[0].mxu0
      %v6799 = vadd.f32 %v6606, %v6798
      %v6800 = vpop.f32.mrb[0].mxu0
      %v6801 = vpop.f32.mrb[0].mxu0
      %v6802 = vadd.f32 %v6609, %v6801
      %v6803 = vpop.f32.mrb[0].mxu0
      %6804 = vmatprep.mubr.bf16.mxu0 %v5882
      %6805 = vmatmul.mubr.bf16.gmra.mrb[0].mxu0 %v5881
      %v6806 = vpop.f32.mrb[0].mxu0
      %v6807 = vadd.f32 %v6614, %v6806
      %v6808 = vpop.f32.mrb[0].mxu0
      %v6809 = vpop.f32.mrb[0].mxu0
      %v6810 = vadd.f32 %v6617, %v6809
      %v6811 = vpop.f32.mrb[0].mxu0
      %6812 = vmatprep.mubr.bf16.mxu0 %v5900
      %6813 = vmatmul.mubr.bf16.gmra.mrb[0].mxu0 %v5899
      %v6814 = vpop.f32.mrb[0].mxu0
      %v6815 = vadd.f32 %v6622, %v6814
      %v6816 = vpop.f32.mrb[0].mxu0
      %v6817 = vpop.f32.mrb[0].mxu0
      %v6818 = vadd.f32 %v6625, %v6817
      %v6819 = vpop.f32.mrb[0].mxu0
      %6820 = vmatprep.mubr.bf16.mxu0 %v5918
      %6821 = vmatmul.mubr.bf16.gmra.mrb[0].mxu0 %v5917
      %v6822 = vpop.f32.mrb[0].mxu0
      %v6823 = vadd.f32 %v6630, %v6822
      %v6824 = vpop.f32.mrb[0].mxu0
      %v6825 = vpop.f32.mrb[0].mxu0
      %v6826 = vadd.f32 %v6633, %v6825
      %v6827 = vpop.f32.mrb[0].mxu0
      %6828 = vmatprep.mubr.bf16.mxu0 %v5936
      %6829 = vmatmul.mubr.bf16.gmra.mrb[0].mxu0 %v5935
      %v6830 = vpop.f32.mrb[0].mxu0
      %v6831 = vadd.f32 %v6638, %v6830
      %v6832 = vpop.f32.mrb[0].mxu0
      %v6833 = vpop.f32.mrb[0].mxu0
      %v6834 = vadd.f32 %v6641, %v6833
      %v6835 = vpop.f32.mrb[0].mxu0
      %6836 = vmatprep.mubr.bf16.mxu0 %v5954
      %6837 = vmatmul.mubr.bf16.gmra.mrb[0].mxu0 %v5953
      %v6838 = vpop.f32.mrb[0].mxu0
      %v6839 = vadd.f32 %v6646, %v6838
      %v6840 = vpop.f32.mrb[0].mxu0
      %v6841 = vpop.f32.mrb[0].mxu0
      %v6842 = vadd.f32 %v6649, %v6841
      %v6843 = vpop.f32.mrb[0].mxu0
      %6844 = vmatprep.mubr.bf16.mxu0 %v5972
      %6845 = vmatmul.mubr.bf16.gmra.mrb[0].mxu0 %v5971
      %v6846 = vpop.f32.mrb[0].mxu0
      %v6847 = vadd.f32 %v6654, %v6846
      %v6848 = vpop.f32.mrb[0].mxu0
      %v6849 = vpop.f32.mrb[0].mxu0
      %v6850 = vadd.f32 %v6657, %v6849
      %v6851 = vpop.f32.mrb[0].mxu0
      %6852 = vmatprep.mubr.bf16.mxu0 %v5990
      %6853 = vmatmul.mubr.bf16.gmra.mrb[0].mxu0 %v5989
      %v6854 = vpop.f32.mrb[0].mxu0
      %v6855 = vadd.f32 %v6662, %v6854
      %v6856 = vpop.f32.mrb[0].mxu0
      %v6857 = vpop.f32.mrb[0].mxu0
      %v6858 = vadd.f32 %v6665, %v6857
      %v6859 = vpop.f32.mrb[0].mxu0
      %6860 = vmatprep.mubr.bf16.mxu0 %v6008
      %6861 = vmatmul.mubr.bf16.gmra.mrb[0].mxu0 %v6007
      %v6862 = vpop.f32.mrb[0].mxu0
      %v6863 = vadd.f32 %v6670, %v6862
      %v6864 = vpop.f32.mrb[0].mxu0
      %v6865 = vpop.f32.mrb[0].mxu0
      %v6866 = vadd.f32 %v6673, %v6865
      %v6867 = vpop.f32.mrb[0].mxu0
      %6868 = vmatprep.mubr.bf16.mxu0 %v6026
      %6869 = vmatmul.mubr.bf16.gmra.mrb[0].mxu0 %v6025
      %v6870 = vpop.f32.mrb[0].mxu0
      %v6871 = vadd.f32 %v6678, %v6870
      %v6872 = vpop.f32.mrb[0].mxu0
      %v6873 = vpop.f32.mrb[0].mxu0
      %v6874 = vadd.f32 %v6681, %v6873
      %v6875 = vpop.f32.mrb[0].mxu0
      %6876 = vmatprep.mubr.bf16.mxu0 %v6044
      %6877 = vmatmul.mubr.bf16.gmra.mrb[0].mxu0 %v6043
      %v6878 = vpop.f32.mrb[0].mxu0
      %v6879 = vadd.f32 %v6686, %v6878
      %v6880 = vpop.f32.mrb[0].mxu0
      %v6881 = vpop.f32.mrb[0].mxu0
      %v6882 = vadd.f32 %v6689, %v6881
      %v6883 = vpop.f32.mrb[0].mxu0
      %6884 = vmatprep.mubr.bf16.mxu0 %v6062
      %6885 = vmatmul.mubr.bf16.gmra.mrb[0].mxu0 %v6061
      %v6886 = vpop.f32.mrb[0].mxu0
      %v6887 = vadd.f32 %v6694, %v6886
      %v6888 = vpop.f32.mrb[0].mxu0
      %v6889 = vpop.f32.mrb[0].mxu0
      %v6890 = vadd.f32 %v6697, %v6889
      %v6891 = vpop.f32.mrb[0].mxu0
      %6892 = vmatprep.mubr.bf16.mxu0 %v6080
      %6893 = vmatmul.mubr.bf16.gmra.mrb[0].mxu0 %v6079
      %v6894 = vpop.f32.mrb[0].mxu0
      %v6895 = vadd.f32 %v6702, %v6894
      %v6896 = vpop.f32.mrb[0].mxu0
      %v6897 = vpop.f32.mrb[0].mxu0
      %v6898 = vadd.f32 %v6705, %v6897
      %v6899 = vpop.f32.mrb[0].mxu0
      %6900 = vmatprep.mubr.bf16.mxu0 %v6098
      %6901 = vmatmul.mubr.bf16.gmra.mrb[0].mxu0 %v6097
      %v6902 = vpop.f32.mrb[0].mxu0
      %v6903 = vadd.f32 %v6710, %v6902
      %v6904 = vpop.f32.mrb[0].mxu0
      %v6905 = vpop.f32.mrb[0].mxu0
      %v6906 = vadd.f32 %v6713, %v6905
      %v6907 = vpop.f32.mrb[0].mxu0
      %6908 = vmatprep.mubr.bf16.mxu0 %v6116
      %6909 = vmatmul.mubr.bf16.gmra.mrb[0].mxu0 %v6115
      %v6910 = vpop.f32.mrb[0].mxu0
      %v6911 = vadd.f32 %v6718, %v6910
      %v6912 = vpop.f32.mrb[0].mxu0
      %v6913 = vpop.f32.mrb[0].mxu0
      %v6914 = vadd.f32 %v6721, %v6913
      %v6915 = vpop.f32.mrb[0].mxu0
      %6916 = vmatprep.mubr.bf16.mxu0 %v6134
      %6917 = vmatmul.mubr.bf16.gmra.mrb[0].mxu0 %v6133
      %v6918 = vpop.f32.mrb[0].mxu0
      %v6919 = vadd.f32 %v6726, %v6918
      %v6920 = vpop.f32.mrb[0].mxu0
      %v6921 = vpop.f32.mrb[0].mxu0
      %v6922 = vadd.f32 %v6729, %v6921
      %v6923 = vpop.f32.mrb[0].mxu0
      %6924 = vmatprep.mubr.bf16.mxu0 %v6152
      %6925 = vmatmul.mubr.bf16.gmra.mrb[0].mxu0 %v6151
      %v6926 = vpop.f32.mrb[0].mxu0
      %v6927 = vadd.f32 %v6734, %v6926
      %v6928 = vpop.f32.mrb[0].mxu0
      %v6929 = vpop.f32.mrb[0].mxu0
      %v6930 = vadd.f32 %v6737, %v6929
      %v6931 = vpop.f32.mrb[0].mxu0
      %6932 = vmatprep.mubr.bf16.mxu0 %v6170
      %6933 = vmatmul.mubr.bf16.gmra.mrb[0].mxu0 %v6169
      %v6934 = vpop.f32.mrb[0].mxu0
      %v6935 = vadd.f32 %v6742, %v6934
      %v6936 = vpop.f32.mrb[0].mxu0
      %v6937 = vpop.f32.mrb[0].mxu0
      %v6938 = vadd.f32 %v6745, %v6937
      %v6939 = vpop.f32.mrb[0].mxu0
      %6940 = vmatprep.mubr.bf16.mxu0 %v6188
      %6941 = vmatmul.mubr.bf16.gmra.mrb[0].mxu0 %v6187
      %v6942 = vpop.f32.mrb[0].mxu0
      %v6943 = vadd.f32 %v6750, %v6942
      %v6944 = vpop.f32.mrb[0].mxu0
      %v6945 = vpop.f32.mrb[0].mxu0
      %v6946 = vadd.f32 %v6753, %v6945
      %v6947 = vpop.f32.mrb[0].mxu0
      %6948 = vdwg.mxu0
      %6949 = vmatprep.subr.bf16.mxu0 0
      %6950 = vmatpush1.bf16.msra.mxu0 %v4291
      %6951 = vmatprep.subr.bf16.mxu0 0
      %6952 = vmatpush1.bf16.msra.mxu0 %v4292
      %6953 = vmatprep.subr.bf16.mxu0 0
      %6954 = vmatpush1.bf16.msra.mxu0 %v4293
      %6955 = vmatprep.subr.bf16.mxu0 0
      %6956 = vmatpush1.bf16.msra.mxu0 %v4294
      %6957 = vmatprep.subr.bf16.mxu0 0
      %6958 = vmatpush1.bf16.msra.mxu0 %v4295
      %6959 = vmatprep.subr.bf16.mxu0 0
      %6960 = vmatpush1.bf16.msra.mxu0 %v4296
      %6961 = vmatprep.subr.bf16.mxu0 0
      %6962 = vmatpush1.bf16.msra.mxu0 %v4297
      %6963 = vmatprep.subr.bf16.mxu0 0
      %6964 = vmatpush1.bf16.msra.mxu0 %v4298
      %6965 = vmatprep.subr.bf16.mxu0 0
      %6966 = vmatpush1.bf16.msra.mxu0 %v4299
      %6967 = vmatprep.subr.bf16.mxu0 0
      %6968 = vmatpush1.bf16.msra.mxu0 %v4300
      %6969 = vmatprep.subr.bf16.mxu0 0
      %6970 = vmatpush1.bf16.msra.mxu0 %v4301
      %6971 = vmatprep.subr.bf16.mxu0 0
      %6972 = vmatpush1.bf16.msra.mxu0 %v4302
      %6973 = vmatprep.subr.bf16.mxu0 0
      %6974 = vmatpush1.bf16.msra.mxu0 %v4303
      %6975 = vmatprep.subr.bf16.mxu0 0
      %6976 = vmatpush1.bf16.msra.mxu0 %v4304
      %6977 = vmatprep.subr.bf16.mxu0 0
      %6978 = vmatpush1.bf16.msra.mxu0 %v4305
      %6979 = vmatprep.subr.bf16.mxu0 0
      %6980 = vmatpush1.bf16.msra.mxu0 %v4306
      %6981 = vmatprep.mubr.bf16.mxu0 %v5848
      %6982 = vmatmul.mubr.bf16.gmra.mrb[0].mxu0 %v5847
      %v6983 = vpop.f32.mrb[0].mxu0
      %v6984 = vadd.f32 %v6791, %v6983
      %v6985 = vpop.f32.mrb[0].mxu0
      %v6986 = vpop.f32.mrb[0].mxu0
      %v6987 = vadd.f32 %v6794, %v6986
      %v6988 = vpop.f32.mrb[0].mxu0
      %6989 = vmatprep.mubr.bf16.mxu0 %v5866
      %6990 = vmatmul.mubr.bf16.gmra.mrb[0].mxu0 %v5865
      %v6991 = vpop.f32.mrb[0].mxu0
      %v6992 = vadd.f32 %v6799, %v6991
      %v6993 = vpop.f32.mrb[0].mxu0
      %v6994 = vpop.f32.mrb[0].mxu0
      %v6995 = vadd.f32 %v6802, %v6994
      %v6996 = vpop.f32.mrb[0].mxu0
      %6997 = vmatprep.mubr.bf16.mxu0 %v5884
      %6998 = vmatmul.mubr.bf16.gmra.mrb[0].mxu0 %v5883
      %v6999 = vpop.f32.mrb[0].mxu0
      %v7000 = vadd.f32 %v6807, %v6999
      %v7001 = vpop.f32.mrb[0].mxu0
      %v7002 = vpop.f32.mrb[0].mxu0
      %v7003 = vadd.f32 %v6810, %v7002
      %v7004 = vpop.f32.mrb[0].mxu0
      %7005 = vmatprep.mubr.bf16.mxu0 %v5902
      %7006 = vmatmul.mubr.bf16.gmra.mrb[0].mxu0 %v5901
      %v7007 = vpop.f32.mrb[0].mxu0
      %v7008 = vadd.f32 %v6815, %v7007
      %v7009 = vpop.f32.mrb[0].mxu0
      %v7010 = vpop.f32.mrb[0].mxu0
      %v7011 = vadd.f32 %v6818, %v7010
      %v7012 = vpop.f32.mrb[0].mxu0
      %7013 = vmatprep.mubr.bf16.mxu0 %v5920
      %7014 = vmatmul.mubr.bf16.gmra.mrb[0].mxu0 %v5919
      %v7015 = vpop.f32.mrb[0].mxu0
      %v7016 = vadd.f32 %v6823, %v7015
      %v7017 = vpop.f32.mrb[0].mxu0
      %v7018 = vpop.f32.mrb[0].mxu0
      %v7019 = vadd.f32 %v6826, %v7018
      %v7020 = vpop.f32.mrb[0].mxu0
      %7021 = vmatprep.mubr.bf16.mxu0 %v5938
      %7022 = vmatmul.mubr.bf16.gmra.mrb[0].mxu0 %v5937
      %v7023 = vpop.f32.mrb[0].mxu0
      %v7024 = vadd.f32 %v6831, %v7023
      %v7025 = vpop.f32.mrb[0].mxu0
      %v7026 = vpop.f32.mrb[0].mxu0
      %v7027 = vadd.f32 %v6834, %v7026
      %v7028 = vpop.f32.mrb[0].mxu0
      %7029 = vmatprep.mubr.bf16.mxu0 %v5956
      %7030 = vmatmul.mubr.bf16.gmra.mrb[0].mxu0 %v5955
      %v7031 = vpop.f32.mrb[0].mxu0
      %v7032 = vadd.f32 %v6839, %v7031
      %v7033 = vpop.f32.mrb[0].mxu0
      %v7034 = vpop.f32.mrb[0].mxu0
      %v7035 = vadd.f32 %v6842, %v7034
      %v7036 = vpop.f32.mrb[0].mxu0
      %7037 = vmatprep.mubr.bf16.mxu0 %v5974
      %7038 = vmatmul.mubr.bf16.gmra.mrb[0].mxu0 %v5973
      %v7039 = vpop.f32.mrb[0].mxu0
      %v7040 = vadd.f32 %v6847, %v7039
      %v7041 = vpop.f32.mrb[0].mxu0
      %v7042 = vpop.f32.mrb[0].mxu0
      %v7043 = vadd.f32 %v6850, %v7042
      %v7044 = vpop.f32.mrb[0].mxu0
      %7045 = vmatprep.mubr.bf16.mxu0 %v5992
      %7046 = vmatmul.mubr.bf16.gmra.mrb[0].mxu0 %v5991
      %v7047 = vpop.f32.mrb[0].mxu0
      %v7048 = vadd.f32 %v6855, %v7047
      %v7049 = vpop.f32.mrb[0].mxu0
      %v7050 = vpop.f32.mrb[0].mxu0
      %v7051 = vadd.f32 %v6858, %v7050
      %v7052 = vpop.f32.mrb[0].mxu0
      %7053 = vmatprep.mubr.bf16.mxu0 %v6010
      %7054 = vmatmul.mubr.bf16.gmra.mrb[0].mxu0 %v6009
      %v7055 = vpop.f32.mrb[0].mxu0
      %v7056 = vadd.f32 %v6863, %v7055
      %v7057 = vpop.f32.mrb[0].mxu0
      %v7058 = vpop.f32.mrb[0].mxu0
      %v7059 = vadd.f32 %v6866, %v7058
      %v7060 = vpop.f32.mrb[0].mxu0
      %7061 = vmatprep.mubr.bf16.mxu0 %v6028
      %7062 = vmatmul.mubr.bf16.gmra.mrb[0].mxu0 %v6027
      %v7063 = vpop.f32.mrb[0].mxu0
      %v7064 = vadd.f32 %v6871, %v7063
      %v7065 = vpop.f32.mrb[0].mxu0
      %v7066 = vpop.f32.mrb[0].mxu0
      %v7067 = vadd.f32 %v6874, %v7066
      %v7068 = vpop.f32.mrb[0].mxu0
      %7069 = vmatprep.mubr.bf16.mxu0 %v6046
      %7070 = vmatmul.mubr.bf16.gmra.mrb[0].mxu0 %v6045
      %v7071 = vpop.f32.mrb[0].mxu0
      %v7072 = vadd.f32 %v6879, %v7071
      %v7073 = vpop.f32.mrb[0].mxu0
      %v7074 = vpop.f32.mrb[0].mxu0
      %v7075 = vadd.f32 %v6882, %v7074
      %v7076 = vpop.f32.mrb[0].mxu0
      %7077 = vmatprep.mubr.bf16.mxu0 %v6064
      %7078 = vmatmul.mubr.bf16.gmra.mrb[0].mxu0 %v6063
      %v7079 = vpop.f32.mrb[0].mxu0
      %v7080 = vadd.f32 %v6887, %v7079
      %v7081 = vpop.f32.mrb[0].mxu0
      %v7082 = vpop.f32.mrb[0].mxu0
      %v7083 = vadd.f32 %v6890, %v7082
      %v7084 = vpop.f32.mrb[0].mxu0
      %7085 = vmatprep.mubr.bf16.mxu0 %v6082
      %7086 = vmatmul.mubr.bf16.gmra.mrb[0].mxu0 %v6081
      %v7087 = vpop.f32.mrb[0].mxu0
      %v7088 = vadd.f32 %v6895, %v7087
      %v7089 = vpop.f32.mrb[0].mxu0
      %v7090 = vpop.f32.mrb[0].mxu0
      %v7091 = vadd.f32 %v6898, %v7090
      %v7092 = vpop.f32.mrb[0].mxu0
      %7093 = vmatprep.mubr.bf16.mxu0 %v6100
      %7094 = vmatmul.mubr.bf16.gmra.mrb[0].mxu0 %v6099
      %v7095 = vpop.f32.mrb[0].mxu0
      %v7096 = vadd.f32 %v6903, %v7095
      %v7097 = vpop.f32.mrb[0].mxu0
      %v7098 = vpop.f32.mrb[0].mxu0
      %v7099 = vadd.f32 %v6906, %v7098
      %v7100 = vpop.f32.mrb[0].mxu0
      %7101 = vmatprep.mubr.bf16.mxu0 %v6118
      %7102 = vmatmul.mubr.bf16.gmra.mrb[0].mxu0 %v6117
      %v7103 = vpop.f32.mrb[0].mxu0
      %v7104 = vadd.f32 %v6911, %v7103
      %v7105 = vpop.f32.mrb[0].mxu0
      %v7106 = vpop.f32.mrb[0].mxu0
      %v7107 = vadd.f32 %v6914, %v7106
      %v7108 = vpop.f32.mrb[0].mxu0
      %7109 = vmatprep.mubr.bf16.mxu0 %v6136
      %7110 = vmatmul.mubr.bf16.gmra.mrb[0].mxu0 %v6135
      %v7111 = vpop.f32.mrb[0].mxu0
      %v7112 = vadd.f32 %v6919, %v7111
      %v7113 = vpop.f32.mrb[0].mxu0
      %v7114 = vpop.f32.mrb[0].mxu0
      %v7115 = vadd.f32 %v6922, %v7114
      %v7116 = vpop.f32.mrb[0].mxu0
      %7117 = vmatprep.mubr.bf16.mxu0 %v6154
      %7118 = vmatmul.mubr.bf16.gmra.mrb[0].mxu0 %v6153
      %v7119 = vpop.f32.mrb[0].mxu0
      %v7120 = vadd.f32 %v6927, %v7119
      %v7121 = vpop.f32.mrb[0].mxu0
      %v7122 = vpop.f32.mrb[0].mxu0
      %v7123 = vadd.f32 %v6930, %v7122
      %v7124 = vpop.f32.mrb[0].mxu0
      %7125 = vmatprep.mubr.bf16.mxu0 %v6172
      %7126 = vmatmul.mubr.bf16.gmra.mrb[0].mxu0 %v6171
      %v7127 = vpop.f32.mrb[0].mxu0
      %v7128 = vadd.f32 %v6935, %v7127
      %v7129 = vpop.f32.mrb[0].mxu0
      %v7130 = vpop.f32.mrb[0].mxu0
      %v7131 = vadd.f32 %v6938, %v7130
      %v7132 = vpop.f32.mrb[0].mxu0
      %7133 = vmatprep.mubr.bf16.mxu0 %v6190
      %7134 = vmatmul.mubr.bf16.gmra.mrb[0].mxu0 %v6189
      %v7135 = vpop.f32.mrb[0].mxu0
      %v7136 = vadd.f32 %v6943, %v7135
      %v7137 = vpop.f32.mrb[0].mxu0
      %v7138 = vpop.f32.mrb[0].mxu0
      %v7139 = vadd.f32 %v6946, %v7138
      %v7140 = vpop.f32.mrb[0].mxu0
      %7141 = vdwg.mxu0
      %7142 = vmatprep.subr.bf16.mxu0 0
      %7143 = vmatpush1.bf16.msra.mxu0 %v4307
      %7144 = vmatprep.subr.bf16.mxu0 0
      %7145 = vmatpush1.bf16.msra.mxu0 %v4308
      %7146 = vmatprep.subr.bf16.mxu0 0
      %7147 = vmatpush1.bf16.msra.mxu0 %v4309
      %7148 = vmatprep.subr.bf16.mxu0 0
      %7149 = vmatpush1.bf16.msra.mxu0 %v4310
      %7150 = vmatprep.subr.bf16.mxu0 0
      %7151 = vmatpush1.bf16.msra.mxu0 %v4311
      %7152 = vmatprep.subr.bf16.mxu0 0
      %7153 = vmatpush1.bf16.msra.mxu0 %v4312
      %7154 = vmatprep.subr.bf16.mxu0 0
      %7155 = vmatpush1.bf16.msra.mxu0 %v4313
      %7156 = vmatprep.subr.bf16.mxu0 0
      %7157 = vmatpush1.bf16.msra.mxu0 %v4314
      %7158 = vmatprep.subr.bf16.mxu0 0
      %7159 = vmatpush1.bf16.msra.mxu0 %v4315
      %7160 = vmatprep.subr.bf16.mxu0 0
      %7161 = vmatpush1.bf16.msra.mxu0 %v4316
      %7162 = vmatprep.subr.bf16.mxu0 0
      %7163 = vmatpush1.bf16.msra.mxu0 %v4317
      %7164 = vmatprep.subr.bf16.mxu0 0
      %7165 = vmatpush1.bf16.msra.mxu0 %v4318
      %7166 = vmatprep.subr.bf16.mxu0 0
      %7167 = vmatpush1.bf16.msra.mxu0 %v4319
      %7168 = vmatprep.subr.bf16.mxu0 0
      %7169 = vmatpush1.bf16.msra.mxu0 %v4320
      %7170 = vmatprep.subr.bf16.mxu0 0
      %7171 = vmatpush1.bf16.msra.mxu0 %v4321
      %7172 = vmatprep.subr.bf16.mxu0 0
      %7173 = vmatpush1.bf16.msra.mxu0 %v4322
      %7174 = vmatprep.mubr.bf16.mxu0 %v5850
      %7175 = vmatmul.mubr.bf16.gmra.mrb[0].mxu0 %v5849
      %v7176 = vpop.f32.mrb[0].mxu0
      %v7177 = vadd.f32 %v6984, %v7176
      %v7178 = vpop.f32.mrb[0].mxu0
      %v7179 = vpop.f32.mrb[0].mxu0
      %v7180 = vadd.f32 %v6987, %v7179
      %v7181 = vpop.f32.mrb[0].mxu0
      %7182 = vmatprep.mubr.bf16.mxu0 %v5868
      %7183 = vmatmul.mubr.bf16.gmra.mrb[0].mxu0 %v5867
      %v7184 = vpop.f32.mrb[0].mxu0
      %v7185 = vadd.f32 %v6992, %v7184
      %v7186 = vpop.f32.mrb[0].mxu0
      %v7187 = vpop.f32.mrb[0].mxu0
      %v7188 = vadd.f32 %v6995, %v7187
      %v7189 = vpop.f32.mrb[0].mxu0
      %7190 = vmatprep.mubr.bf16.mxu0 %v5886
      %7191 = vmatmul.mubr.bf16.gmra.mrb[0].mxu0 %v5885
      %v7192 = vpop.f32.mrb[0].mxu0
      %v7193 = vadd.f32 %v7000, %v7192
      %v7194 = vpop.f32.mrb[0].mxu0
      %v7195 = vpop.f32.mrb[0].mxu0
      %v7196 = vadd.f32 %v7003, %v7195
      %v7197 = vpop.f32.mrb[0].mxu0
      %7198 = vmatprep.mubr.bf16.mxu0 %v5904
      %7199 = vmatmul.mubr.bf16.gmra.mrb[0].mxu0 %v5903
      %v7200 = vpop.f32.mrb[0].mxu0
      %v7201 = vadd.f32 %v7008, %v7200
      %v7202 = vpop.f32.mrb[0].mxu0
      %v7203 = vpop.f32.mrb[0].mxu0
      %v7204 = vadd.f32 %v7011, %v7203
      %v7205 = vpop.f32.mrb[0].mxu0
      %7206 = vmatprep.mubr.bf16.mxu0 %v5922
      %7207 = vmatmul.mubr.bf16.gmra.mrb[0].mxu0 %v5921
      %v7208 = vpop.f32.mrb[0].mxu0
      %v7209 = vadd.f32 %v7016, %v7208
      %v7210 = vpop.f32.mrb[0].mxu0
      %v7211 = vpop.f32.mrb[0].mxu0
      %v7212 = vadd.f32 %v7019, %v7211
      %v7213 = vpop.f32.mrb[0].mxu0
      %7214 = vmatprep.mubr.bf16.mxu0 %v5940
      %7215 = vmatmul.mubr.bf16.gmra.mrb[0].mxu0 %v5939
      %v7216 = vpop.f32.mrb[0].mxu0
      %v7217 = vadd.f32 %v7024, %v7216
      %v7218 = vpop.f32.mrb[0].mxu0
      %v7219 = vpop.f32.mrb[0].mxu0
      %v7220 = vadd.f32 %v7027, %v7219
      %v7221 = vpop.f32.mrb[0].mxu0
      %7222 = vmatprep.mubr.bf16.mxu0 %v5958
      %7223 = vmatmul.mubr.bf16.gmra.mrb[0].mxu0 %v5957
      %v7224 = vpop.f32.mrb[0].mxu0
      %v7225 = vadd.f32 %v7032, %v7224
      %v7226 = vpop.f32.mrb[0].mxu0
      %v7227 = vpop.f32.mrb[0].mxu0
      %v7228 = vadd.f32 %v7035, %v7227
      %v7229 = vpop.f32.mrb[0].mxu0
      %7230 = vmatprep.mubr.bf16.mxu0 %v5976
      %7231 = vmatmul.mubr.bf16.gmra.mrb[0].mxu0 %v5975
      %v7232 = vpop.f32.mrb[0].mxu0
      %v7233 = vadd.f32 %v7040, %v7232
      %v7234 = vpop.f32.mrb[0].mxu0
      %v7235 = vpop.f32.mrb[0].mxu0
      %v7236 = vadd.f32 %v7043, %v7235
      %v7237 = vpop.f32.mrb[0].mxu0
      %7238 = vmatprep.mubr.bf16.mxu0 %v5994
      %7239 = vmatmul.mubr.bf16.gmra.mrb[0].mxu0 %v5993
      %v7240 = vpop.f32.mrb[0].mxu0
      %v7241 = vadd.f32 %v7048, %v7240
      %v7242 = vpop.f32.mrb[0].mxu0
      %v7243 = vpop.f32.mrb[0].mxu0
      %v7244 = vadd.f32 %v7051, %v7243
      %v7245 = vpop.f32.mrb[0].mxu0
      %7246 = vmatprep.mubr.bf16.mxu0 %v6012
      %7247 = vmatmul.mubr.bf16.gmra.mrb[0].mxu0 %v6011
      %v7248 = vpop.f32.mrb[0].mxu0
      %v7249 = vadd.f32 %v7056, %v7248
      %v7250 = vpop.f32.mrb[0].mxu0
      %v7251 = vpop.f32.mrb[0].mxu0
      %v7252 = vadd.f32 %v7059, %v7251
      %v7253 = vpop.f32.mrb[0].mxu0
      %7254 = vmatprep.mubr.bf16.mxu0 %v6030
      %7255 = vmatmul.mubr.bf16.gmra.mrb[0].mxu0 %v6029
      %v7256 = vpop.f32.mrb[0].mxu0
      %v7257 = vadd.f32 %v7064, %v7256
      %v7258 = vpop.f32.mrb[0].mxu0
      %v7259 = vpop.f32.mrb[0].mxu0
      %v7260 = vadd.f32 %v7067, %v7259
      %v7261 = vpop.f32.mrb[0].mxu0
      %7262 = vmatprep.mubr.bf16.mxu0 %v6048
      %7263 = vmatmul.mubr.bf16.gmra.mrb[0].mxu0 %v6047
      %v7264 = vpop.f32.mrb[0].mxu0
      %v7265 = vadd.f32 %v7072, %v7264
      %v7266 = vpop.f32.mrb[0].mxu0
      %v7267 = vpop.f32.mrb[0].mxu0
      %v7268 = vadd.f32 %v7075, %v7267
      %v7269 = vpop.f32.mrb[0].mxu0
      %7270 = vmatprep.mubr.bf16.mxu0 %v6066
      %7271 = vmatmul.mubr.bf16.gmra.mrb[0].mxu0 %v6065
      %v7272 = vpop.f32.mrb[0].mxu0
      %v7273 = vadd.f32 %v7080, %v7272
      %v7274 = vpop.f32.mrb[0].mxu0
      %v7275 = vpop.f32.mrb[0].mxu0
      %v7276 = vadd.f32 %v7083, %v7275
      %v7277 = vpop.f32.mrb[0].mxu0
      %7278 = vmatprep.mubr.bf16.mxu0 %v6084
      %7279 = vmatmul.mubr.bf16.gmra.mrb[0].mxu0 %v6083
      %v7280 = vpop.f32.mrb[0].mxu0
      %v7281 = vadd.f32 %v7088, %v7280
      %v7282 = vpop.f32.mrb[0].mxu0
      %v7283 = vpop.f32.mrb[0].mxu0
      %v7284 = vadd.f32 %v7091, %v7283
      %v7285 = vpop.f32.mrb[0].mxu0
      %7286 = vmatprep.mubr.bf16.mxu0 %v6102
      %7287 = vmatmul.mubr.bf16.gmra.mrb[0].mxu0 %v6101
      %v7288 = vpop.f32.mrb[0].mxu0
      %v7289 = vadd.f32 %v7096, %v7288
      %v7290 = vpop.f32.mrb[0].mxu0
      %v7291 = vpop.f32.mrb[0].mxu0
      %v7292 = vadd.f32 %v7099, %v7291
      %v7293 = vpop.f32.mrb[0].mxu0
      %7294 = vmatprep.mubr.bf16.mxu0 %v6120
      %7295 = vmatmul.mubr.bf16.gmra.mrb[0].mxu0 %v6119
      %v7296 = vpop.f32.mrb[0].mxu0
      %v7297 = vadd.f32 %v7104, %v7296
      %v7298 = vpop.f32.mrb[0].mxu0
      %v7299 = vpop.f32.mrb[0].mxu0
      %v7300 = vadd.f32 %v7107, %v7299
      %v7301 = vpop.f32.mrb[0].mxu0
      %7302 = vmatprep.mubr.bf16.mxu0 %v6138
      %7303 = vmatmul.mubr.bf16.gmra.mrb[0].mxu0 %v6137
      %v7304 = vpop.f32.mrb[0].mxu0
      %v7305 = vadd.f32 %v7112, %v7304
      %v7306 = vpop.f32.mrb[0].mxu0
      %v7307 = vpop.f32.mrb[0].mxu0
      %v7308 = vadd.f32 %v7115, %v7307
      %v7309 = vpop.f32.mrb[0].mxu0
      %7310 = vmatprep.mubr.bf16.mxu0 %v6156
      %7311 = vmatmul.mubr.bf16.gmra.mrb[0].mxu0 %v6155
      %v7312 = vpop.f32.mrb[0].mxu0
      %v7313 = vadd.f32 %v7120, %v7312
      %v7314 = vpop.f32.mrb[0].mxu0
      %v7315 = vpop.f32.mrb[0].mxu0
      %v7316 = vadd.f32 %v7123, %v7315
      %v7317 = vpop.f32.mrb[0].mxu0
      %7318 = vmatprep.mubr.bf16.mxu0 %v6174
      %7319 = vmatmul.mubr.bf16.gmra.mrb[0].mxu0 %v6173
      %v7320 = vpop.f32.mrb[0].mxu0
      %v7321 = vadd.f32 %v7128, %v7320
      %v7322 = vpop.f32.mrb[0].mxu0
      %v7323 = vpop.f32.mrb[0].mxu0
      %v7324 = vadd.f32 %v7131, %v7323
      %v7325 = vpop.f32.mrb[0].mxu0
      %7326 = vmatprep.mubr.bf16.mxu0 %v6192
      %7327 = vmatmul.mubr.bf16.gmra.mrb[0].mxu0 %v6191
      %v7328 = vpop.f32.mrb[0].mxu0
      %v7329 = vadd.f32 %v7136, %v7328
      %v7330 = vpop.f32.mrb[0].mxu0
      %v7331 = vpop.f32.mrb[0].mxu0
      %v7332 = vadd.f32 %v7139, %v7331
      %v7333 = vpop.f32.mrb[0].mxu0
      %7334 = vdwg.mxu0
      %7335 = vmatprep.subr.bf16.mxu0 0
      %7336 = vmatpush1.bf16.msra.mxu0 %v4323
      %7337 = vmatprep.subr.bf16.mxu0 0
      %7338 = vmatpush1.bf16.msra.mxu0 %v4324
      %7339 = vmatprep.subr.bf16.mxu0 0
      %7340 = vmatpush1.bf16.msra.mxu0 %v4325
      %7341 = vmatprep.subr.bf16.mxu0 0
      %7342 = vmatpush1.bf16.msra.mxu0 %v4326
      %7343 = vmatprep.subr.bf16.mxu0 0
      %7344 = vmatpush1.bf16.msra.mxu0 %v4327
      %7345 = vmatprep.subr.bf16.mxu0 0
      %7346 = vmatpush1.bf16.msra.mxu0 %v4328
      %7347 = vmatprep.subr.bf16.mxu0 0
      %7348 = vmatpush1.bf16.msra.mxu0 %v4329
      %7349 = vmatprep.subr.bf16.mxu0 0
      %7350 = vmatpush1.bf16.msra.mxu0 %v4330
      %7351 = vmatprep.subr.bf16.mxu0 0
      %7352 = vmatpush1.bf16.msra.mxu0 %v4331
      %7353 = vmatprep.subr.bf16.mxu0 0
      %7354 = vmatpush1.bf16.msra.mxu0 %v4332
      %7355 = vmatprep.subr.bf16.mxu0 0
      %7356 = vmatpush1.bf16.msra.mxu0 %v4333
      %7357 = vmatprep.subr.bf16.mxu0 0
      %7358 = vmatpush1.bf16.msra.mxu0 %v4334
      %7359 = vmatprep.subr.bf16.mxu0 0
      %7360 = vmatpush1.bf16.msra.mxu0 %v4335
      %7361 = vmatprep.subr.bf16.mxu0 0
      %7362 = vmatpush1.bf16.msra.mxu0 %v4336
      %7363 = vmatprep.subr.bf16.mxu0 0
      %7364 = vmatpush1.bf16.msra.mxu0 %v4337
      %7365 = vmatprep.subr.bf16.mxu0 0
      %7366 = vmatpush1.bf16.msra.mxu0 %v4338
      %7367 = vmatprep.mubr.bf16.mxu0 %v5852
      %7368 = vmatmul.mubr.bf16.gmra.mrb[0].mxu0 %v5851
      %v7369 = vpop.f32.mrb[0].mxu0
      %v7370 = vadd.f32 %v7177, %v7369
      %v7371 = vpop.f32.mrb[0].mxu0
      %v7372 = vpop.f32.mrb[0].mxu0
      %v7373 = vadd.f32 %v7180, %v7372
      %v7374 = vpop.f32.mrb[0].mxu0
      %7375 = vmatprep.mubr.bf16.mxu0 %v5870
      %7376 = vmatmul.mubr.bf16.gmra.mrb[0].mxu0 %v5869
      %v7377 = vpop.f32.mrb[0].mxu0
      %v7378 = vadd.f32 %v7185, %v7377
      %v7379 = vpop.f32.mrb[0].mxu0
      %v7380 = vpop.f32.mrb[0].mxu0
      %v7381 = vadd.f32 %v7188, %v7380
      %v7382 = vpop.f32.mrb[0].mxu0
      %7383 = vmatprep.mubr.bf16.mxu0 %v5888
      %7384 = vmatmul.mubr.bf16.gmra.mrb[0].mxu0 %v5887
      %v7385 = vpop.f32.mrb[0].mxu0
      %v7386 = vadd.f32 %v7193, %v7385
      %v7387 = vpop.f32.mrb[0].mxu0
      %v7388 = vpop.f32.mrb[0].mxu0
      %v7389 = vadd.f32 %v7196, %v7388
      %v7390 = vpop.f32.mrb[0].mxu0
      %7391 = vmatprep.mubr.bf16.mxu0 %v5906
      %7392 = vmatmul.mubr.bf16.gmra.mrb[0].mxu0 %v5905
      %v7393 = vpop.f32.mrb[0].mxu0
      %v7394 = vadd.f32 %v7201, %v7393
      %v7395 = vpop.f32.mrb[0].mxu0
      %v7396 = vpop.f32.mrb[0].mxu0
      %v7397 = vadd.f32 %v7204, %v7396
      %v7398 = vpop.f32.mrb[0].mxu0
      %7399 = vmatprep.mubr.bf16.mxu0 %v5924
      %7400 = vmatmul.mubr.bf16.gmra.mrb[0].mxu0 %v5923
      %v7401 = vpop.f32.mrb[0].mxu0
      %v7402 = vadd.f32 %v7209, %v7401
      %v7403 = vpop.f32.mrb[0].mxu0
      %v7404 = vpop.f32.mrb[0].mxu0
      %v7405 = vadd.f32 %v7212, %v7404
      %v7406 = vpop.f32.mrb[0].mxu0
      %7407 = vmatprep.mubr.bf16.mxu0 %v5942
      %7408 = vmatmul.mubr.bf16.gmra.mrb[0].mxu0 %v5941
      %v7409 = vpop.f32.mrb[0].mxu0
      %v7410 = vadd.f32 %v7217, %v7409
      %v7411 = vpop.f32.mrb[0].mxu0
      %v7412 = vpop.f32.mrb[0].mxu0
      %v7413 = vadd.f32 %v7220, %v7412
      %v7414 = vpop.f32.mrb[0].mxu0
      %7415 = vmatprep.mubr.bf16.mxu0 %v5960
      %7416 = vmatmul.mubr.bf16.gmra.mrb[0].mxu0 %v5959
      %v7417 = vpop.f32.mrb[0].mxu0
      %v7418 = vadd.f32 %v7225, %v7417
      %v7419 = vpop.f32.mrb[0].mxu0
      %v7420 = vpop.f32.mrb[0].mxu0
      %v7421 = vadd.f32 %v7228, %v7420
      %v7422 = vpop.f32.mrb[0].mxu0
      %7423 = vmatprep.mubr.bf16.mxu0 %v5978
      %7424 = vmatmul.mubr.bf16.gmra.mrb[0].mxu0 %v5977
      %v7425 = vpop.f32.mrb[0].mxu0
      %v7426 = vadd.f32 %v7233, %v7425
      %v7427 = vpop.f32.mrb[0].mxu0
      %v7428 = vpop.f32.mrb[0].mxu0
      %v7429 = vadd.f32 %v7236, %v7428
      %v7430 = vpop.f32.mrb[0].mxu0
      %7431 = vmatprep.mubr.bf16.mxu0 %v5996
      %7432 = vmatmul.mubr.bf16.gmra.mrb[0].mxu0 %v5995
      %v7433 = vpop.f32.mrb[0].mxu0
      %v7434 = vadd.f32 %v7241, %v7433
      %v7435 = vpop.f32.mrb[0].mxu0
      %v7436 = vpop.f32.mrb[0].mxu0
      %v7437 = vadd.f32 %v7244, %v7436
      %v7438 = vpop.f32.mrb[0].mxu0
      %7439 = vmatprep.mubr.bf16.mxu0 %v6014
      %7440 = vmatmul.mubr.bf16.gmra.mrb[0].mxu0 %v6013
      %v7441 = vpop.f32.mrb[0].mxu0
      %v7442 = vadd.f32 %v7249, %v7441
      %v7443 = vpop.f32.mrb[0].mxu0
      %v7444 = vpop.f32.mrb[0].mxu0
      %v7445 = vadd.f32 %v7252, %v7444
      %v7446 = vpop.f32.mrb[0].mxu0
      %7447 = vmatprep.mubr.bf16.mxu0 %v6032
      %7448 = vmatmul.mubr.bf16.gmra.mrb[0].mxu0 %v6031
      %v7449 = vpop.f32.mrb[0].mxu0
      %v7450 = vadd.f32 %v7257, %v7449
      %v7451 = vpop.f32.mrb[0].mxu0
      %v7452 = vpop.f32.mrb[0].mxu0
      %v7453 = vadd.f32 %v7260, %v7452
      %v7454 = vpop.f32.mrb[0].mxu0
      %7455 = vmatprep.mubr.bf16.mxu0 %v6050
      %7456 = vmatmul.mubr.bf16.gmra.mrb[0].mxu0 %v6049
      %v7457 = vpop.f32.mrb[0].mxu0
      %v7458 = vadd.f32 %v7265, %v7457
      %v7459 = vpop.f32.mrb[0].mxu0
      %v7460 = vpop.f32.mrb[0].mxu0
      %v7461 = vadd.f32 %v7268, %v7460
      %v7462 = vpop.f32.mrb[0].mxu0
      %7463 = vmatprep.mubr.bf16.mxu0 %v6068
      %7464 = vmatmul.mubr.bf16.gmra.mrb[0].mxu0 %v6067
      %v7465 = vpop.f32.mrb[0].mxu0
      %v7466 = vadd.f32 %v7273, %v7465
      %v7467 = vpop.f32.mrb[0].mxu0
      %v7468 = vpop.f32.mrb[0].mxu0
      %v7469 = vadd.f32 %v7276, %v7468
      %v7470 = vpop.f32.mrb[0].mxu0
      %7471 = vmatprep.mubr.bf16.mxu0 %v6086
      %7472 = vmatmul.mubr.bf16.gmra.mrb[0].mxu0 %v6085
      %v7473 = vpop.f32.mrb[0].mxu0
      %v7474 = vadd.f32 %v7281, %v7473
      %v7475 = vpop.f32.mrb[0].mxu0
      %v7476 = vpop.f32.mrb[0].mxu0
      %v7477 = vadd.f32 %v7284, %v7476
      %v7478 = vpop.f32.mrb[0].mxu0
      %7479 = vmatprep.mubr.bf16.mxu0 %v6104
      %7480 = vmatmul.mubr.bf16.gmra.mrb[0].mxu0 %v6103
      %v7481 = vpop.f32.mrb[0].mxu0
      %v7482 = vadd.f32 %v7289, %v7481
      %v7483 = vpop.f32.mrb[0].mxu0
      %v7484 = vpop.f32.mrb[0].mxu0
      %v7485 = vadd.f32 %v7292, %v7484
      %v7486 = vpop.f32.mrb[0].mxu0
      %7487 = vmatprep.mubr.bf16.mxu0 %v6122
      %7488 = vmatmul.mubr.bf16.gmra.mrb[0].mxu0 %v6121
      %v7489 = vpop.f32.mrb[0].mxu0
      %v7490 = vadd.f32 %v7297, %v7489
      %v7491 = vpop.f32.mrb[0].mxu0
      %v7492 = vpop.f32.mrb[0].mxu0
      %v7493 = vadd.f32 %v7300, %v7492
      %v7494 = vpop.f32.mrb[0].mxu0
      %7495 = vmatprep.mubr.bf16.mxu0 %v6140
      %7496 = vmatmul.mubr.bf16.gmra.mrb[0].mxu0 %v6139
      %v7497 = vpop.f32.mrb[0].mxu0
      %v7498 = vadd.f32 %v7305, %v7497
      %v7499 = vpop.f32.mrb[0].mxu0
      %v7500 = vpop.f32.mrb[0].mxu0
      %v7501 = vadd.f32 %v7308, %v7500
      %v7502 = vpop.f32.mrb[0].mxu0
      %7503 = vmatprep.mubr.bf16.mxu0 %v6158
      %7504 = vmatmul.mubr.bf16.gmra.mrb[0].mxu0 %v6157
      %v7505 = vpop.f32.mrb[0].mxu0
      %v7506 = vadd.f32 %v7313, %v7505
      %v7507 = vpop.f32.mrb[0].mxu0
      %v7508 = vpop.f32.mrb[0].mxu0
      %v7509 = vadd.f32 %v7316, %v7508
      %v7510 = vpop.f32.mrb[0].mxu0
      %7511 = vmatprep.mubr.bf16.mxu0 %v6176
      %7512 = vmatmul.mubr.bf16.gmra.mrb[0].mxu0 %v6175
      %v7513 = vpop.f32.mrb[0].mxu0
      %v7514 = vadd.f32 %v7321, %v7513
      %v7515 = vpop.f32.mrb[0].mxu0
      %v7516 = vpop.f32.mrb[0].mxu0
      %v7517 = vadd.f32 %v7324, %v7516
      %v7518 = vpop.f32.mrb[0].mxu0
      %7519 = vmatprep.mubr.bf16.mxu0 %v6194
      %7520 = vmatmul.mubr.bf16.gmra.mrb[0].mxu0 %v6193
      %v7521 = vpop.f32.mrb[0].mxu0
      %v7522 = vadd.f32 %v7329, %v7521
      %v7523 = vpop.f32.mrb[0].mxu0
      %v7524 = vpop.f32.mrb[0].mxu0
      %v7525 = vadd.f32 %v7332, %v7524
      %v7526 = vpop.f32.mrb[0].mxu0
      %7527 = vdwg.mxu0
      %7528 = vmatprep.subr.bf16.mxu0 0
      %7529 = vmatpush1.bf16.msra.mxu0 %v4339
      %7530 = vmatprep.subr.bf16.mxu0 0
      %7531 = vmatpush1.bf16.msra.mxu0 %v4340
      %7532 = vmatprep.subr.bf16.mxu0 0
      %7533 = vmatpush1.bf16.msra.mxu0 %v4341
      %7534 = vmatprep.subr.bf16.mxu0 0
      %7535 = vmatpush1.bf16.msra.mxu0 %v4342
      %7536 = vmatprep.subr.bf16.mxu0 0
      %7537 = vmatpush1.bf16.msra.mxu0 %v4343
      %7538 = vmatprep.subr.bf16.mxu0 0
      %7539 = vmatpush1.bf16.msra.mxu0 %v4344
      %7540 = vmatprep.subr.bf16.mxu0 0
      %7541 = vmatpush1.bf16.msra.mxu0 %v4345
      %7542 = vmatprep.subr.bf16.mxu0 0
      %7543 = vmatpush1.bf16.msra.mxu0 %v4346
      %7544 = vmatprep.subr.bf16.mxu0 0
      %7545 = vmatpush1.bf16.msra.mxu0 %v4347
      %7546 = vmatprep.subr.bf16.mxu0 0
      %7547 = vmatpush1.bf16.msra.mxu0 %v4348
      %7548 = vmatprep.subr.bf16.mxu0 0
      %7549 = vmatpush1.bf16.msra.mxu0 %v4349
      %7550 = vmatprep.subr.bf16.mxu0 0
      %7551 = vmatpush1.bf16.msra.mxu0 %v4350
      %7552 = vmatprep.subr.bf16.mxu0 0
      %7553 = vmatpush1.bf16.msra.mxu0 %v4351
      %7554 = vmatprep.subr.bf16.mxu0 0
      %7555 = vmatpush1.bf16.msra.mxu0 %v4352
      %7556 = vmatprep.subr.bf16.mxu0 0
      %7557 = vmatpush1.bf16.msra.mxu0 %v4353
      %7558 = vmatprep.subr.bf16.mxu0 0
      %7559 = vmatpush1.bf16.msra.mxu0 %v4354
      %7560 = vmatprep.mubr.bf16.mxu0 %v5854
      %7561 = vmatmul.mubr.bf16.gmra.mrb[0].mxu0 %v5853
      %v7562 = vpop.f32.mrb[0].mxu0
      %v7563 = vadd.f32 %v7370, %v7562
      %v7564 = vpop.f32.mrb[0].mxu0
      %v7565 = vpop.f32.mrb[0].mxu0
      %v7566 = vadd.f32 %v7373, %v7565
      %v7567 = vpop.f32.mrb[0].mxu0
      %7568 = vmatprep.mubr.bf16.mxu0 %v5872
      %7569 = vmatmul.mubr.bf16.gmra.mrb[0].mxu0 %v5871
      %v7570 = vpop.f32.mrb[0].mxu0
      %v7571 = vadd.f32 %v7378, %v7570
      %v7572 = vpop.f32.mrb[0].mxu0
      %v7573 = vpop.f32.mrb[0].mxu0
      %v7574 = vadd.f32 %v7381, %v7573
      %v7575 = vpop.f32.mrb[0].mxu0
      %7576 = vmatprep.mubr.bf16.mxu0 %v5890
      %7577 = vmatmul.mubr.bf16.gmra.mrb[0].mxu0 %v5889
      %v7578 = vpop.f32.mrb[0].mxu0
      %v7579 = vadd.f32 %v7386, %v7578
      %v7580 = vpop.f32.mrb[0].mxu0
      %v7581 = vpop.f32.mrb[0].mxu0
      %v7582 = vadd.f32 %v7389, %v7581
      %v7583 = vpop.f32.mrb[0].mxu0
      %7584 = vmatprep.mubr.bf16.mxu0 %v5908
      %7585 = vmatmul.mubr.bf16.gmra.mrb[0].mxu0 %v5907
      %v7586 = vpop.f32.mrb[0].mxu0
      %v7587 = vadd.f32 %v7394, %v7586
      %v7588 = vpop.f32.mrb[0].mxu0
      %v7589 = vpop.f32.mrb[0].mxu0
      %v7590 = vadd.f32 %v7397, %v7589
      %v7591 = vpop.f32.mrb[0].mxu0
      %7592 = vmatprep.mubr.bf16.mxu0 %v5926
      %7593 = vmatmul.mubr.bf16.gmra.mrb[0].mxu0 %v5925
      %v7594 = vpop.f32.mrb[0].mxu0
      %v7595 = vadd.f32 %v7402, %v7594
      %v7596 = vpop.f32.mrb[0].mxu0
      %v7597 = vpop.f32.mrb[0].mxu0
      %v7598 = vadd.f32 %v7405, %v7597
      %v7599 = vpop.f32.mrb[0].mxu0
      %7600 = vmatprep.mubr.bf16.mxu0 %v5944
      %7601 = vmatmul.mubr.bf16.gmra.mrb[0].mxu0 %v5943
      %v7602 = vpop.f32.mrb[0].mxu0
      %v7603 = vadd.f32 %v7410, %v7602
      %v7604 = vpop.f32.mrb[0].mxu0
      %v7605 = vpop.f32.mrb[0].mxu0
      %v7606 = vadd.f32 %v7413, %v7605
      %v7607 = vpop.f32.mrb[0].mxu0
      %7608 = vmatprep.mubr.bf16.mxu0 %v5962
      %7609 = vmatmul.mubr.bf16.gmra.mrb[0].mxu0 %v5961
      %v7610 = vpop.f32.mrb[0].mxu0
      %v7611 = vadd.f32 %v7418, %v7610
      %v7612 = vpop.f32.mrb[0].mxu0
      %v7613 = vpop.f32.mrb[0].mxu0
      %v7614 = vadd.f32 %v7421, %v7613
      %v7615 = vpop.f32.mrb[0].mxu0
      %7616 = vmatprep.mubr.bf16.mxu0 %v5980
      %7617 = vmatmul.mubr.bf16.gmra.mrb[0].mxu0 %v5979
      %v7618 = vpop.f32.mrb[0].mxu0
      %v7619 = vadd.f32 %v7426, %v7618
      %v7620 = vpop.f32.mrb[0].mxu0
      %v7621 = vpop.f32.mrb[0].mxu0
      %v7622 = vadd.f32 %v7429, %v7621
      %v7623 = vpop.f32.mrb[0].mxu0
      %7624 = vmatprep.mubr.bf16.mxu0 %v5998
      %7625 = vmatmul.mubr.bf16.gmra.mrb[0].mxu0 %v5997
      %v7626 = vpop.f32.mrb[0].mxu0
      %v7627 = vadd.f32 %v7434, %v7626
      %v7628 = vpop.f32.mrb[0].mxu0
      %v7629 = vpop.f32.mrb[0].mxu0
      %v7630 = vadd.f32 %v7437, %v7629
      %v7631 = vpop.f32.mrb[0].mxu0
      %7632 = vmatprep.mubr.bf16.mxu0 %v6016
      %7633 = vmatmul.mubr.bf16.gmra.mrb[0].mxu0 %v6015
      %v7634 = vpop.f32.mrb[0].mxu0
      %v7635 = vadd.f32 %v7442, %v7634
      %v7636 = vpop.f32.mrb[0].mxu0
      %v7637 = vpop.f32.mrb[0].mxu0
      %v7638 = vadd.f32 %v7445, %v7637
      %v7639 = vpop.f32.mrb[0].mxu0
      %7640 = vmatprep.mubr.bf16.mxu0 %v6034
      %7641 = vmatmul.mubr.bf16.gmra.mrb[0].mxu0 %v6033
      %v7642 = vpop.f32.mrb[0].mxu0
      %v7643 = vadd.f32 %v7450, %v7642
      %v7644 = vpop.f32.mrb[0].mxu0
      %v7645 = vpop.f32.mrb[0].mxu0
      %v7646 = vadd.f32 %v7453, %v7645
      %v7647 = vpop.f32.mrb[0].mxu0
      %7648 = vmatprep.mubr.bf16.mxu0 %v6052
      %7649 = vmatmul.mubr.bf16.gmra.mrb[0].mxu0 %v6051
      %v7650 = vpop.f32.mrb[0].mxu0
      %v7651 = vadd.f32 %v7458, %v7650
      %v7652 = vpop.f32.mrb[0].mxu0
      %v7653 = vpop.f32.mrb[0].mxu0
      %v7654 = vadd.f32 %v7461, %v7653
      %v7655 = vpop.f32.mrb[0].mxu0
      %7656 = vmatprep.mubr.bf16.mxu0 %v6070
      %7657 = vmatmul.mubr.bf16.gmra.mrb[0].mxu0 %v6069
      %v7658 = vpop.f32.mrb[0].mxu0
      %v7659 = vadd.f32 %v7466, %v7658
      %v7660 = vpop.f32.mrb[0].mxu0
      %v7661 = vpop.f32.mrb[0].mxu0
      %v7662 = vadd.f32 %v7469, %v7661
      %v7663 = vpop.f32.mrb[0].mxu0
      %7664 = vmatprep.mubr.bf16.mxu0 %v6088
      %7665 = vmatmul.mubr.bf16.gmra.mrb[0].mxu0 %v6087
      %v7666 = vpop.f32.mrb[0].mxu0
      %v7667 = vadd.f32 %v7474, %v7666
      %v7668 = vpop.f32.mrb[0].mxu0
      %v7669 = vpop.f32.mrb[0].mxu0
      %v7670 = vadd.f32 %v7477, %v7669
      %v7671 = vpop.f32.mrb[0].mxu0
      %7672 = vmatprep.mubr.bf16.mxu0 %v6106
      %7673 = vmatmul.mubr.bf16.gmra.mrb[0].mxu0 %v6105
      %v7674 = vpop.f32.mrb[0].mxu0
      %v7675 = vadd.f32 %v7482, %v7674
      %v7676 = vpop.f32.mrb[0].mxu0
      %v7677 = vpop.f32.mrb[0].mxu0
      %v7678 = vadd.f32 %v7485, %v7677
      %v7679 = vpop.f32.mrb[0].mxu0
      %7680 = vmatprep.mubr.bf16.mxu0 %v6124
      %7681 = vmatmul.mubr.bf16.gmra.mrb[0].mxu0 %v6123
      %v7682 = vpop.f32.mrb[0].mxu0
      %v7683 = vadd.f32 %v7490, %v7682
      %v7684 = vpop.f32.mrb[0].mxu0
      %v7685 = vpop.f32.mrb[0].mxu0
      %v7686 = vadd.f32 %v7493, %v7685
      %v7687 = vpop.f32.mrb[0].mxu0
      %7688 = vmatprep.mubr.bf16.mxu0 %v6142
      %7689 = vmatmul.mubr.bf16.gmra.mrb[0].mxu0 %v6141
      %v7690 = vpop.f32.mrb[0].mxu0
      %v7691 = vadd.f32 %v7498, %v7690
      %v7692 = vpop.f32.mrb[0].mxu0
      %v7693 = vpop.f32.mrb[0].mxu0
      %v7694 = vadd.f32 %v7501, %v7693
      %v7695 = vpop.f32.mrb[0].mxu0
      %7696 = vmatprep.mubr.bf16.mxu0 %v6160
      %7697 = vmatmul.mubr.bf16.gmra.mrb[0].mxu0 %v6159
      %v7698 = vpop.f32.mrb[0].mxu0
      %v7699 = vadd.f32 %v7506, %v7698
      %v7700 = vpop.f32.mrb[0].mxu0
      %v7701 = vpop.f32.mrb[0].mxu0
      %v7702 = vadd.f32 %v7509, %v7701
      %v7703 = vpop.f32.mrb[0].mxu0
      %7704 = vmatprep.mubr.bf16.mxu0 %v6178
      %7705 = vmatmul.mubr.bf16.gmra.mrb[0].mxu0 %v6177
      %v7706 = vpop.f32.mrb[0].mxu0
      %v7707 = vadd.f32 %v7514, %v7706
      %v7708 = vpop.f32.mrb[0].mxu0
      %v7709 = vpop.f32.mrb[0].mxu0
      %v7710 = vadd.f32 %v7517, %v7709
      %v7711 = vpop.f32.mrb[0].mxu0
      %7712 = vmatprep.mubr.bf16.mxu0 %v6196
      %7713 = vmatmul.mubr.bf16.gmra.mrb[0].mxu0 %v6195
      %v7714 = vpop.f32.mrb[0].mxu0
      %v7715 = vadd.f32 %v7522, %v7714
      %v7716 = vpop.f32.mrb[0].mxu0
      %v7717 = vpop.f32.mrb[0].mxu0
      %v7718 = vadd.f32 %v7525, %v7717
      %v7719 = vpop.f32.mrb[0].mxu0
      %7720 = vdwg.mxu0
      %7721 = vmatprep.subr.bf16.mxu0 0
      %7722 = vmatpush1.bf16.msra.mxu0 %v4355
      %7723 = vmatprep.subr.bf16.mxu0 0
      %7724 = vmatpush1.bf16.msra.mxu0 %v4356
      %7725 = vmatprep.subr.bf16.mxu0 0
      %7726 = vmatpush1.bf16.msra.mxu0 %v4357
      %7727 = vmatprep.subr.bf16.mxu0 0
      %7728 = vmatpush1.bf16.msra.mxu0 %v4358
      %7729 = vmatprep.subr.bf16.mxu0 0
      %7730 = vmatpush1.bf16.msra.mxu0 %v4359
      %7731 = vmatprep.subr.bf16.mxu0 0
      %7732 = vmatpush1.bf16.msra.mxu0 %v4360
      %7733 = vmatprep.subr.bf16.mxu0 0
      %7734 = vmatpush1.bf16.msra.mxu0 %v4361
      %7735 = vmatprep.subr.bf16.mxu0 0
      %7736 = vmatpush1.bf16.msra.mxu0 %v4362
      %7737 = vmatprep.subr.bf16.mxu0 0
      %7738 = vmatpush1.bf16.msra.mxu0 %v4363
      %7739 = vmatprep.subr.bf16.mxu0 0
      %7740 = vmatpush1.bf16.msra.mxu0 %v4364
      %7741 = vmatprep.subr.bf16.mxu0 0
      %7742 = vmatpush1.bf16.msra.mxu0 %v4365
      %7743 = vmatprep.subr.bf16.mxu0 0
      %7744 = vmatpush1.bf16.msra.mxu0 %v4366
      %7745 = vmatprep.subr.bf16.mxu0 0
      %7746 = vmatpush1.bf16.msra.mxu0 %v4367
      %7747 = vmatprep.subr.bf16.mxu0 0
      %7748 = vmatpush1.bf16.msra.mxu0 %v4368
      %7749 = vmatprep.subr.bf16.mxu0 0
      %7750 = vmatpush1.bf16.msra.mxu0 %v4369
      %7751 = vmatprep.subr.bf16.mxu0 0
      %7752 = vmatpush1.bf16.msra.mxu0 %v4370
      %7753 = vmatprep.mubr.bf16.mxu0 %v5856
      %7754 = vmatmul.mubr.bf16.gmra.mrb[0].mxu0 %v5855
      %v7755 = vpop.f32.mrb[0].mxu0
      %v7756 = vadd.f32 %v7563, %v7755
      %v7757 = vpop.f32.mrb[0].mxu0
      %v7758 = vpop.f32.mrb[0].mxu0
      %v7759 = vadd.f32 %v7566, %v7758
      %v7760 = vpop.f32.mrb[0].mxu0
      %7761 = vmatprep.mubr.bf16.mxu0 %v5874
      %7762 = vmatmul.mubr.bf16.gmra.mrb[0].mxu0 %v5873
      %v7763 = vpop.f32.mrb[0].mxu0
      %v7764 = vadd.f32 %v7571, %v7763
      %v7765 = vpop.f32.mrb[0].mxu0
      %v7766 = vpop.f32.mrb[0].mxu0
      %v7767 = vadd.f32 %v7574, %v7766
      %v7768 = vpop.f32.mrb[0].mxu0
      %7769 = vmatprep.mubr.bf16.mxu0 %v5892
      %7770 = vmatmul.mubr.bf16.gmra.mrb[0].mxu0 %v5891
      %v7771 = vpop.f32.mrb[0].mxu0
      %v7772 = vadd.f32 %v7579, %v7771
      %v7773 = vpop.f32.mrb[0].mxu0
      %v7774 = vpop.f32.mrb[0].mxu0
      %v7775 = vadd.f32 %v7582, %v7774
      %v7776 = vpop.f32.mrb[0].mxu0
      %7777 = vmatprep.mubr.bf16.mxu0 %v5910
      %7778 = vmatmul.mubr.bf16.gmra.mrb[0].mxu0 %v5909
      %v7779 = vpop.f32.mrb[0].mxu0
      %v7780 = vadd.f32 %v7587, %v7779
      %v7781 = vpop.f32.mrb[0].mxu0
      %v7782 = vpop.f32.mrb[0].mxu0
      %v7783 = vadd.f32 %v7590, %v7782
      %v7784 = vpop.f32.mrb[0].mxu0
      %7785 = vmatprep.mubr.bf16.mxu0 %v5928
      %7786 = vmatmul.mubr.bf16.gmra.mrb[0].mxu0 %v5927
      %v7787 = vpop.f32.mrb[0].mxu0
      %v7788 = vadd.f32 %v7595, %v7787
      %v7789 = vpop.f32.mrb[0].mxu0
      %v7790 = vpop.f32.mrb[0].mxu0
      %v7791 = vadd.f32 %v7598, %v7790
      %v7792 = vpop.f32.mrb[0].mxu0
      %7793 = vmatprep.mubr.bf16.mxu0 %v5946
      %7794 = vmatmul.mubr.bf16.gmra.mrb[0].mxu0 %v5945
      %v7795 = vpop.f32.mrb[0].mxu0
      %v7796 = vadd.f32 %v7603, %v7795
      %v7797 = vpop.f32.mrb[0].mxu0
      %v7798 = vpop.f32.mrb[0].mxu0
      %v7799 = vadd.f32 %v7606, %v7798
      %v7800 = vpop.f32.mrb[0].mxu0
      %7801 = vmatprep.mubr.bf16.mxu0 %v5964
      %7802 = vmatmul.mubr.bf16.gmra.mrb[0].mxu0 %v5963
      %v7803 = vpop.f32.mrb[0].mxu0
      %v7804 = vadd.f32 %v7611, %v7803
      %v7805 = vpop.f32.mrb[0].mxu0
      %v7806 = vpop.f32.mrb[0].mxu0
      %v7807 = vadd.f32 %v7614, %v7806
      %v7808 = vpop.f32.mrb[0].mxu0
      %7809 = vmatprep.mubr.bf16.mxu0 %v5982
      %7810 = vmatmul.mubr.bf16.gmra.mrb[0].mxu0 %v5981
      %v7811 = vpop.f32.mrb[0].mxu0
      %v7812 = vadd.f32 %v7619, %v7811
      %v7813 = vpop.f32.mrb[0].mxu0
      %v7814 = vpop.f32.mrb[0].mxu0
      %v7815 = vadd.f32 %v7622, %v7814
      %v7816 = vpop.f32.mrb[0].mxu0
      %7817 = vmatprep.mubr.bf16.mxu0 %v6000
      %7818 = vmatmul.mubr.bf16.gmra.mrb[0].mxu0 %v5999
      %v7819 = vpop.f32.mrb[0].mxu0
      %v7820 = vadd.f32 %v7627, %v7819
      %v7821 = vpop.f32.mrb[0].mxu0
      %v7822 = vpop.f32.mrb[0].mxu0
      %v7823 = vadd.f32 %v7630, %v7822
      %v7824 = vpop.f32.mrb[0].mxu0
      %7825 = vmatprep.mubr.bf16.mxu0 %v6018
      %7826 = vmatmul.mubr.bf16.gmra.mrb[0].mxu0 %v6017
      %v7827 = vpop.f32.mrb[0].mxu0
      %v7828 = vadd.f32 %v7635, %v7827
      %v7829 = vpop.f32.mrb[0].mxu0
      %v7830 = vpop.f32.mrb[0].mxu0
      %v7831 = vadd.f32 %v7638, %v7830
      %v7832 = vpop.f32.mrb[0].mxu0
      %7833 = vmatprep.mubr.bf16.mxu0 %v6036
      %7834 = vmatmul.mubr.bf16.gmra.mrb[0].mxu0 %v6035
      %v7835 = vpop.f32.mrb[0].mxu0
      %v7836 = vadd.f32 %v7643, %v7835
      %v7837 = vpop.f32.mrb[0].mxu0
      %v7838 = vpop.f32.mrb[0].mxu0
      %v7839 = vadd.f32 %v7646, %v7838
      %v7840 = vpop.f32.mrb[0].mxu0
      %7841 = vmatprep.mubr.bf16.mxu0 %v6054
      %7842 = vmatmul.mubr.bf16.gmra.mrb[0].mxu0 %v6053
      %v7843 = vpop.f32.mrb[0].mxu0
      %v7844 = vadd.f32 %v7651, %v7843
      %v7845 = vpop.f32.mrb[0].mxu0
      %v7846 = vpop.f32.mrb[0].mxu0
      %v7847 = vadd.f32 %v7654, %v7846
      %v7848 = vpop.f32.mrb[0].mxu0
      %7849 = vmatprep.mubr.bf16.mxu0 %v6072
      %7850 = vmatmul.mubr.bf16.gmra.mrb[0].mxu0 %v6071
      %v7851 = vpop.f32.mrb[0].mxu0
      %v7852 = vadd.f32 %v7659, %v7851
      %v7853 = vpop.f32.mrb[0].mxu0
      %v7854 = vpop.f32.mrb[0].mxu0
      %v7855 = vadd.f32 %v7662, %v7854
      %v7856 = vpop.f32.mrb[0].mxu0
      %7857 = vmatprep.mubr.bf16.mxu0 %v6090
      %7858 = vmatmul.mubr.bf16.gmra.mrb[0].mxu0 %v6089
      %v7859 = vpop.f32.mrb[0].mxu0
      %v7860 = vadd.f32 %v7667, %v7859
      %v7861 = vpop.f32.mrb[0].mxu0
      %v7862 = vpop.f32.mrb[0].mxu0
      %v7863 = vadd.f32 %v7670, %v7862
      %v7864 = vpop.f32.mrb[0].mxu0
      %7865 = vmatprep.mubr.bf16.mxu0 %v6108
      %7866 = vmatmul.mubr.bf16.gmra.mrb[0].mxu0 %v6107
      %v7867 = vpop.f32.mrb[0].mxu0
      %v7868 = vadd.f32 %v7675, %v7867
      %v7869 = vpop.f32.mrb[0].mxu0
      %v7870 = vpop.f32.mrb[0].mxu0
      %v7871 = vadd.f32 %v7678, %v7870
      %v7872 = vpop.f32.mrb[0].mxu0
      %7873 = vmatprep.mubr.bf16.mxu0 %v6126
      %7874 = vmatmul.mubr.bf16.gmra.mrb[0].mxu0 %v6125
      %v7875 = vpop.f32.mrb[0].mxu0
      %v7876 = vadd.f32 %v7683, %v7875
      %v7877 = vpop.f32.mrb[0].mxu0
      %v7878 = vpop.f32.mrb[0].mxu0
      %v7879 = vadd.f32 %v7686, %v7878
      %v7880 = vpop.f32.mrb[0].mxu0
      %7881 = vmatprep.mubr.bf16.mxu0 %v6144
      %7882 = vmatmul.mubr.bf16.gmra.mrb[0].mxu0 %v6143
      %v7883 = vpop.f32.mrb[0].mxu0
      %v7884 = vadd.f32 %v7691, %v7883
      %v7885 = vpop.f32.mrb[0].mxu0
      %v7886 = vpop.f32.mrb[0].mxu0
      %v7887 = vadd.f32 %v7694, %v7886
      %v7888 = vpop.f32.mrb[0].mxu0
      %7889 = vmatprep.mubr.bf16.mxu0 %v6162
      %7890 = vmatmul.mubr.bf16.gmra.mrb[0].mxu0 %v6161
      %v7891 = vpop.f32.mrb[0].mxu0
      %v7892 = vadd.f32 %v7699, %v7891
      %v7893 = vpop.f32.mrb[0].mxu0
      %v7894 = vpop.f32.mrb[0].mxu0
      %v7895 = vadd.f32 %v7702, %v7894
      %v7896 = vpop.f32.mrb[0].mxu0
      %7897 = vmatprep.mubr.bf16.mxu0 %v6180
      %7898 = vmatmul.mubr.bf16.gmra.mrb[0].mxu0 %v6179
      %v7899 = vpop.f32.mrb[0].mxu0
      %v7900 = vadd.f32 %v7707, %v7899
      %v7901 = vpop.f32.mrb[0].mxu0
      %v7902 = vpop.f32.mrb[0].mxu0
      %v7903 = vadd.f32 %v7710, %v7902
      %v7904 = vpop.f32.mrb[0].mxu0
      %7905 = vmatprep.mubr.bf16.mxu0 %v6198
      %7906 = vmatmul.mubr.bf16.gmra.mrb[0].mxu0 %v6197
      %v7907 = vpop.f32.mrb[0].mxu0
      %v7908 = vadd.f32 %v7715, %v7907
      %v7909 = vpop.f32.mrb[0].mxu0
      %v7910 = vpop.f32.mrb[0].mxu0
      %v7911 = vadd.f32 %v7718, %v7910
      %v7912 = vpop.f32.mrb[0].mxu0
      %7913 = vdwg.mxu0
      %7914 = vmatprep.subr.bf16.mxu0 0
      %7915 = vmatpush1.bf16.msra.mxu0 %v4371
      %7916 = vmatprep.subr.bf16.mxu0 0
      %7917 = vmatpush1.bf16.msra.mxu0 %v4372
      %7918 = vmatprep.subr.bf16.mxu0 0
      %7919 = vmatpush1.bf16.msra.mxu0 %v4373
      %7920 = vmatprep.subr.bf16.mxu0 0
      %7921 = vmatpush1.bf16.msra.mxu0 %v4374
      %7922 = vmatprep.subr.bf16.mxu0 0
      %7923 = vmatpush1.bf16.msra.mxu0 %v4375
      %7924 = vmatprep.subr.bf16.mxu0 0
      %7925 = vmatpush1.bf16.msra.mxu0 %v4376
      %7926 = vmatprep.subr.bf16.mxu0 0
      %7927 = vmatpush1.bf16.msra.mxu0 %v4377
      %7928 = vmatprep.subr.bf16.mxu0 0
      %7929 = vmatpush1.bf16.msra.mxu0 %v4378
      %7930 = vmatprep.subr.bf16.mxu0 0
      %7931 = vmatpush1.bf16.msra.mxu0 %v4379
      %7932 = vmatprep.subr.bf16.mxu0 0
      %7933 = vmatpush1.bf16.msra.mxu0 %v4380
      %7934 = vmatprep.subr.bf16.mxu0 0
      %7935 = vmatpush1.bf16.msra.mxu0 %v4381
      %7936 = vmatprep.subr.bf16.mxu0 0
      %7937 = vmatpush1.bf16.msra.mxu0 %v4382
      %7938 = vmatprep.subr.bf16.mxu0 0
      %7939 = vmatpush1.bf16.msra.mxu0 %v4383
      %7940 = vmatprep.subr.bf16.mxu0 0
      %7941 = vmatpush1.bf16.msra.mxu0 %v4384
      %7942 = vmatprep.subr.bf16.mxu0 0
      %7943 = vmatpush1.bf16.msra.mxu0 %v4385
      %7944 = vmatprep.subr.bf16.mxu0 0
      %7945 = vmatpush1.bf16.msra.mxu0 %v4386
      %7946 = vmatprep.mubr.bf16.mxu0 %v5858
      %7947 = vmatmul.mubr.bf16.gmra.mrb[0].mxu0 %v5857
      %v7948 = vpop.f32.mrb[0].mxu0
      %v7949 = vadd.f32 %v7756, %v7948
      %v7950 = vpop.f32.mrb[0].mxu0
      %v7951 = vpop.f32.mrb[0].mxu0
      %v7952 = vadd.f32 %v7759, %v7951
      %v7953 = vpop.f32.mrb[0].mxu0
      %7954 = vmatprep.mubr.bf16.mxu0 %v5876
      %7955 = vmatmul.mubr.bf16.gmra.mrb[0].mxu0 %v5875
      %v7956 = vpop.f32.mrb[0].mxu0
      %v7957 = vadd.f32 %v7764, %v7956
      %v7958 = vpop.f32.mrb[0].mxu0
      %v7959 = vpop.f32.mrb[0].mxu0
      %v7960 = vadd.f32 %v7767, %v7959
      %v7961 = vpop.f32.mrb[0].mxu0
      %7962 = vmatprep.mubr.bf16.mxu0 %v5894
      %7963 = vmatmul.mubr.bf16.gmra.mrb[0].mxu0 %v5893
      %v7964 = vpop.f32.mrb[0].mxu0
      %v7965 = vadd.f32 %v7772, %v7964
      %v7966 = vpop.f32.mrb[0].mxu0
      %v7967 = vpop.f32.mrb[0].mxu0
      %v7968 = vadd.f32 %v7775, %v7967
      %v7969 = vpop.f32.mrb[0].mxu0
      %7970 = vmatprep.mubr.bf16.mxu0 %v5912
      %7971 = vmatmul.mubr.bf16.gmra.mrb[0].mxu0 %v5911
      %v7972 = vpop.f32.mrb[0].mxu0
      %v7973 = vadd.f32 %v7780, %v7972
      %v7974 = vpop.f32.mrb[0].mxu0
      %v7975 = vpop.f32.mrb[0].mxu0
      %v7976 = vadd.f32 %v7783, %v7975
      %v7977 = vpop.f32.mrb[0].mxu0
      %7978 = vmatprep.mubr.bf16.mxu0 %v5930
      %7979 = vmatmul.mubr.bf16.gmra.mrb[0].mxu0 %v5929
      %v7980 = vpop.f32.mrb[0].mxu0
      %v7981 = vadd.f32 %v7788, %v7980
      %v7982 = vpop.f32.mrb[0].mxu0
      %v7983 = vpop.f32.mrb[0].mxu0
      %v7984 = vadd.f32 %v7791, %v7983
      %v7985 = vpop.f32.mrb[0].mxu0
      %7986 = vmatprep.mubr.bf16.mxu0 %v5948
      %7987 = vmatmul.mubr.bf16.gmra.mrb[0].mxu0 %v5947
      %v7988 = vpop.f32.mrb[0].mxu0
      %v7989 = vadd.f32 %v7796, %v7988
      %v7990 = vpop.f32.mrb[0].mxu0
      %v7991 = vpop.f32.mrb[0].mxu0
      %v7992 = vadd.f32 %v7799, %v7991
      %v7993 = vpop.f32.mrb[0].mxu0
      %7994 = vmatprep.mubr.bf16.mxu0 %v5966
      %7995 = vmatmul.mubr.bf16.gmra.mrb[0].mxu0 %v5965
      %v7996 = vpop.f32.mrb[0].mxu0
      %v7997 = vadd.f32 %v7804, %v7996
      %v7998 = vpop.f32.mrb[0].mxu0
      %v7999 = vpop.f32.mrb[0].mxu0
      %v8000 = vadd.f32 %v7807, %v7999
      %v8001 = vpop.f32.mrb[0].mxu0
      %8002 = vmatprep.mubr.bf16.mxu0 %v5984
      %8003 = vmatmul.mubr.bf16.gmra.mrb[0].mxu0 %v5983
      %v8004 = vpop.f32.mrb[0].mxu0
      %v8005 = vadd.f32 %v7812, %v8004
      %v8006 = vpop.f32.mrb[0].mxu0
      %v8007 = vpop.f32.mrb[0].mxu0
      %v8008 = vadd.f32 %v7815, %v8007
      %v8009 = vpop.f32.mrb[0].mxu0
      %8010 = vmatprep.mubr.bf16.mxu0 %v6002
      %8011 = vmatmul.mubr.bf16.gmra.mrb[0].mxu0 %v6001
      %v8012 = vpop.f32.mrb[0].mxu0
      %v8013 = vadd.f32 %v7820, %v8012
      %v8014 = vpop.f32.mrb[0].mxu0
      %v8015 = vpop.f32.mrb[0].mxu0
      %v8016 = vadd.f32 %v7823, %v8015
      %v8017 = vpop.f32.mrb[0].mxu0
      %8018 = vmatprep.mubr.bf16.mxu0 %v6020
      %8019 = vmatmul.mubr.bf16.gmra.mrb[0].mxu0 %v6019
      %v8020 = vpop.f32.mrb[0].mxu0
      %v8021 = vadd.f32 %v7828, %v8020
      %v8022 = vpop.f32.mrb[0].mxu0
      %v8023 = vpop.f32.mrb[0].mxu0
      %v8024 = vadd.f32 %v7831, %v8023
      %v8025 = vpop.f32.mrb[0].mxu0
      %8026 = vmatprep.mubr.bf16.mxu0 %v6038
      %8027 = vmatmul.mubr.bf16.gmra.mrb[0].mxu0 %v6037
      %v8028 = vpop.f32.mrb[0].mxu0
      %v8029 = vadd.f32 %v7836, %v8028
      %v8030 = vpop.f32.mrb[0].mxu0
      %v8031 = vpop.f32.mrb[0].mxu0
      %v8032 = vadd.f32 %v7839, %v8031
      %v8033 = vpop.f32.mrb[0].mxu0
      %8034 = vmatprep.mubr.bf16.mxu0 %v6056
      %8035 = vmatmul.mubr.bf16.gmra.mrb[0].mxu0 %v6055
      %v8036 = vpop.f32.mrb[0].mxu0
      %v8037 = vadd.f32 %v7844, %v8036
      %v8038 = vpop.f32.mrb[0].mxu0
      %v8039 = vpop.f32.mrb[0].mxu0
      %v8040 = vadd.f32 %v7847, %v8039
      %v8041 = vpop.f32.mrb[0].mxu0
      %8042 = vmatprep.mubr.bf16.mxu0 %v6074
      %8043 = vmatmul.mubr.bf16.gmra.mrb[0].mxu0 %v6073
      %v8044 = vpop.f32.mrb[0].mxu0
      %v8045 = vadd.f32 %v7852, %v8044
      %v8046 = vpop.f32.mrb[0].mxu0
      %v8047 = vpop.f32.mrb[0].mxu0
      %v8048 = vadd.f32 %v7855, %v8047
      %v8049 = vpop.f32.mrb[0].mxu0
      %8050 = vmatprep.mubr.bf16.mxu0 %v6092
      %8051 = vmatmul.mubr.bf16.gmra.mrb[0].mxu0 %v6091
      %v8052 = vpop.f32.mrb[0].mxu0
      %v8053 = vadd.f32 %v7860, %v8052
      %v8054 = vpop.f32.mrb[0].mxu0
      %v8055 = vpop.f32.mrb[0].mxu0
      %v8056 = vadd.f32 %v7863, %v8055
      %v8057 = vpop.f32.mrb[0].mxu0
      %8058 = vmatprep.mubr.bf16.mxu0 %v6110
      %8059 = vmatmul.mubr.bf16.gmra.mrb[0].mxu0 %v6109
      %v8060 = vpop.f32.mrb[0].mxu0
      %v8061 = vadd.f32 %v7868, %v8060
      %v8062 = vpop.f32.mrb[0].mxu0
      %v8063 = vpop.f32.mrb[0].mxu0
      %v8064 = vadd.f32 %v7871, %v8063
      %v8065 = vpop.f32.mrb[0].mxu0
      %8066 = vmatprep.mubr.bf16.mxu0 %v6128
      %8067 = vmatmul.mubr.bf16.gmra.mrb[0].mxu0 %v6127
      %v8068 = vpop.f32.mrb[0].mxu0
      %v8069 = vadd.f32 %v7876, %v8068
      %v8070 = vpop.f32.mrb[0].mxu0
      %v8071 = vpop.f32.mrb[0].mxu0
      %v8072 = vadd.f32 %v7879, %v8071
      %v8073 = vpop.f32.mrb[0].mxu0
      %8074 = vmatprep.mubr.bf16.mxu0 %v6146
      %8075 = vmatmul.mubr.bf16.gmra.mrb[0].mxu0 %v6145
      %v8076 = vpop.f32.mrb[0].mxu0
      %v8077 = vadd.f32 %v7884, %v8076
      %v8078 = vpop.f32.mrb[0].mxu0
      %v8079 = vpop.f32.mrb[0].mxu0
      %v8080 = vadd.f32 %v7887, %v8079
      %v8081 = vpop.f32.mrb[0].mxu0
      %8082 = vmatprep.mubr.bf16.mxu0 %v6164
      %8083 = vmatmul.mubr.bf16.gmra.mrb[0].mxu0 %v6163
      %v8084 = vpop.f32.mrb[0].mxu0
      %v8085 = vadd.f32 %v7892, %v8084
      %v8086 = vpop.f32.mrb[0].mxu0
      %v8087 = vpop.f32.mrb[0].mxu0
      %v8088 = vadd.f32 %v7895, %v8087
      %v8089 = vpop.f32.mrb[0].mxu0
      %8090 = vmatprep.mubr.bf16.mxu0 %v6182
      %8091 = vmatmul.mubr.bf16.gmra.mrb[0].mxu0 %v6181
      %v8092 = vpop.f32.mrb[0].mxu0
      %v8093 = vadd.f32 %v7900, %v8092
      %v8094 = vpop.f32.mrb[0].mxu0
      %v8095 = vpop.f32.mrb[0].mxu0
      %v8096 = vadd.f32 %v7903, %v8095
      %v8097 = vpop.f32.mrb[0].mxu0
      %8098 = vmatprep.mubr.bf16.mxu0 %v6200
      %8099 = vmatmul.mubr.bf16.gmra.mrb[0].mxu0 %v6199
      %v8100 = vpop.f32.mrb[0].mxu0
      %v8101 = vadd.f32 %v7908, %v8100
      %v8102 = vpop.f32.mrb[0].mxu0
      %v8103 = vpop.f32.mrb[0].mxu0
      %v8104 = vadd.f32 %v7911, %v8103
      %v8105 = vpop.f32.mrb[0].mxu0
      %8106 = vdwg.mxu0
      %8107 = vmatprep.subr.bf16.mxu0 0
      %8108 = vmatpush1.bf16.msra.mxu0 %v4387
      %8109 = vmatprep.subr.bf16.mxu0 0
      %8110 = vmatpush1.bf16.msra.mxu0 %v4388
      %8111 = vmatprep.subr.bf16.mxu0 0
      %8112 = vmatpush1.bf16.msra.mxu0 %v4389
      %8113 = vmatprep.subr.bf16.mxu0 0
      %8114 = vmatpush1.bf16.msra.mxu0 %v4390
      %8115 = vmatprep.subr.bf16.mxu0 0
      %8116 = vmatpush1.bf16.msra.mxu0 %v4391
      %8117 = vmatprep.subr.bf16.mxu0 0
      %8118 = vmatpush1.bf16.msra.mxu0 %v4392
      %8119 = vmatprep.subr.bf16.mxu0 0
      %8120 = vmatpush1.bf16.msra.mxu0 %v4393
      %8121 = vmatprep.subr.bf16.mxu0 0
      %8122 = vmatpush1.bf16.msra.mxu0 %v4394
      %8123 = vmatprep.subr.bf16.mxu0 0
      %8124 = vmatpush1.bf16.msra.mxu0 %v4395
      %8125 = vmatprep.subr.bf16.mxu0 0
      %8126 = vmatpush1.bf16.msra.mxu0 %v4396
      %8127 = vmatprep.subr.bf16.mxu0 0
      %8128 = vmatpush1.bf16.msra.mxu0 %v4397
      %8129 = vmatprep.subr.bf16.mxu0 0
      %8130 = vmatpush1.bf16.msra.mxu0 %v4398
      %8131 = vmatprep.subr.bf16.mxu0 0
      %8132 = vmatpush1.bf16.msra.mxu0 %v4399
      %8133 = vmatprep.subr.bf16.mxu0 0
      %8134 = vmatpush1.bf16.msra.mxu0 %v4400
      %8135 = vmatprep.subr.bf16.mxu0 0
      %8136 = vmatpush1.bf16.msra.mxu0 %v4401
      %8137 = vmatprep.subr.bf16.mxu0 0
      %8138 = vmatpush1.bf16.msra.mxu0 %v4402
      %8139 = vmatprep.mubr.bf16.mxu0 %v5860
      %8140 = vmatmul.mubr.bf16.gmra.mrb[0].mxu0 %v5859
      %v8141 = vpop.f32.mrb[0].mxu0
      %v8142 = vadd.f32 %v7949, %v8141
      %v8143 = vpop.f32.mrb[0].mxu0
      %v8144 = vpop.f32.mrb[0].mxu0
      %v8145 = vadd.f32 %v7952, %v8144
      %v8146 = vpop.f32.mrb[0].mxu0
      %8147 = vmatprep.mubr.bf16.mxu0 %v5878
      %8148 = vmatmul.mubr.bf16.gmra.mrb[0].mxu0 %v5877
      %v8149 = vpop.f32.mrb[0].mxu0
      %v8150 = vadd.f32 %v7957, %v8149
      %v8151 = vpop.f32.mrb[0].mxu0
      %v8152 = vpop.f32.mrb[0].mxu0
      %v8153 = vadd.f32 %v7960, %v8152
      %v8154 = vpop.f32.mrb[0].mxu0
      %8155 = vmatprep.mubr.bf16.mxu0 %v5896
      %8156 = vmatmul.mubr.bf16.gmra.mrb[0].mxu0 %v5895
      %v8157 = vpop.f32.mrb[0].mxu0
      %v8158 = vadd.f32 %v7965, %v8157
      %v8159 = vpop.f32.mrb[0].mxu0
      %v8160 = vpop.f32.mrb[0].mxu0
      %v8161 = vadd.f32 %v7968, %v8160
      %v8162 = vpop.f32.mrb[0].mxu0
      %8163 = vmatprep.mubr.bf16.mxu0 %v5914
      %8164 = vmatmul.mubr.bf16.gmra.mrb[0].mxu0 %v5913
      %v8165 = vpop.f32.mrb[0].mxu0
      %v8166 = vadd.f32 %v7973, %v8165
      %v8167 = vpop.f32.mrb[0].mxu0
      %v8168 = vpop.f32.mrb[0].mxu0
      %v8169 = vadd.f32 %v7976, %v8168
      %v8170 = vpop.f32.mrb[0].mxu0
      %8171 = vmatprep.mubr.bf16.mxu0 %v5932
      %8172 = vmatmul.mubr.bf16.gmra.mrb[0].mxu0 %v5931
      %v8173 = vpop.f32.mrb[0].mxu0
      %v8174 = vadd.f32 %v7981, %v8173
      %v8175 = vpop.f32.mrb[0].mxu0
      %v8176 = vpop.f32.mrb[0].mxu0
      %v8177 = vadd.f32 %v7984, %v8176
      %v8178 = vpop.f32.mrb[0].mxu0
      %8179 = vmatprep.mubr.bf16.mxu0 %v5950
      %8180 = vmatmul.mubr.bf16.gmra.mrb[0].mxu0 %v5949
      %v8181 = vpop.f32.mrb[0].mxu0
      %v8182 = vadd.f32 %v7989, %v8181
      %v8183 = vpop.f32.mrb[0].mxu0
      %v8184 = vpop.f32.mrb[0].mxu0
      %v8185 = vadd.f32 %v7992, %v8184
      %v8186 = vpop.f32.mrb[0].mxu0
      %8187 = vmatprep.mubr.bf16.mxu0 %v5968
      %8188 = vmatmul.mubr.bf16.gmra.mrb[0].mxu0 %v5967
      %v8189 = vpop.f32.mrb[0].mxu0
      %v8190 = vadd.f32 %v7997, %v8189
      %v8191 = vpop.f32.mrb[0].mxu0
      %v8192 = vpop.f32.mrb[0].mxu0
      %v8193 = vadd.f32 %v8000, %v8192
      %v8194 = vpop.f32.mrb[0].mxu0
      %8195 = vmatprep.mubr.bf16.mxu0 %v5986
      %8196 = vmatmul.mubr.bf16.gmra.mrb[0].mxu0 %v5985
      %v8197 = vpop.f32.mrb[0].mxu0
      %v8198 = vadd.f32 %v8005, %v8197
      %v8199 = vpop.f32.mrb[0].mxu0
      %v8200 = vpop.f32.mrb[0].mxu0
      %v8201 = vadd.f32 %v8008, %v8200
      %v8202 = vpop.f32.mrb[0].mxu0
      %8203 = vmatprep.mubr.bf16.mxu0 %v6004
      %8204 = vmatmul.mubr.bf16.gmra.mrb[0].mxu0 %v6003
      %v8205 = vpop.f32.mrb[0].mxu0
      %v8206 = vadd.f32 %v8013, %v8205
      %v8207 = vpop.f32.mrb[0].mxu0
      %v8208 = vpop.f32.mrb[0].mxu0
      %v8209 = vadd.f32 %v8016, %v8208
      %v8210 = vpop.f32.mrb[0].mxu0
      %8211 = vmatprep.mubr.bf16.mxu0 %v6022
      %8212 = vmatmul.mubr.bf16.gmra.mrb[0].mxu0 %v6021
      %v8213 = vpop.f32.mrb[0].mxu0
      %v8214 = vadd.f32 %v8021, %v8213
      %v8215 = vpop.f32.mrb[0].mxu0
      %v8216 = vpop.f32.mrb[0].mxu0
      %v8217 = vadd.f32 %v8024, %v8216
      %v8218 = vpop.f32.mrb[0].mxu0
      %8219 = vmatprep.mubr.bf16.mxu0 %v6040
      %8220 = vmatmul.mubr.bf16.gmra.mrb[0].mxu0 %v6039
      %v8221 = vpop.f32.mrb[0].mxu0
      %v8222 = vadd.f32 %v8029, %v8221
      %v8223 = vpop.f32.mrb[0].mxu0
      %v8224 = vpop.f32.mrb[0].mxu0
      %v8225 = vadd.f32 %v8032, %v8224
      %v8226 = vpop.f32.mrb[0].mxu0
      %8227 = vmatprep.mubr.bf16.mxu0 %v6058
      %8228 = vmatmul.mubr.bf16.gmra.mrb[0].mxu0 %v6057
      %v8229 = vpop.f32.mrb[0].mxu0
      %v8230 = vadd.f32 %v8037, %v8229
      %v8231 = vpop.f32.mrb[0].mxu0
      %v8232 = vpop.f32.mrb[0].mxu0
      %v8233 = vadd.f32 %v8040, %v8232
      %v8234 = vpop.f32.mrb[0].mxu0
      %8235 = vmatprep.mubr.bf16.mxu0 %v6076
      %8236 = vmatmul.mubr.bf16.gmra.mrb[0].mxu0 %v6075
      %v8237 = vpop.f32.mrb[0].mxu0
      %v8238 = vadd.f32 %v8045, %v8237
      %v8239 = vpop.f32.mrb[0].mxu0
      %v8240 = vpop.f32.mrb[0].mxu0
      %v8241 = vadd.f32 %v8048, %v8240
      %v8242 = vpop.f32.mrb[0].mxu0
      %8243 = vmatprep.mubr.bf16.mxu0 %v6094
      %8244 = vmatmul.mubr.bf16.gmra.mrb[0].mxu0 %v6093
      %v8245 = vpop.f32.mrb[0].mxu0
      %v8246 = vadd.f32 %v8053, %v8245
      %v8247 = vpop.f32.mrb[0].mxu0
      %v8248 = vpop.f32.mrb[0].mxu0
      %v8249 = vadd.f32 %v8056, %v8248
      %v8250 = vpop.f32.mrb[0].mxu0
      %8251 = vmatprep.mubr.bf16.mxu0 %v6112
      %8252 = vmatmul.mubr.bf16.gmra.mrb[0].mxu0 %v6111
      %v8253 = vpop.f32.mrb[0].mxu0
      %v8254 = vadd.f32 %v8061, %v8253
      %v8255 = vpop.f32.mrb[0].mxu0
      %v8256 = vpop.f32.mrb[0].mxu0
      %v8257 = vadd.f32 %v8064, %v8256
      %v8258 = vpop.f32.mrb[0].mxu0
      %8259 = vmatprep.mubr.bf16.mxu0 %v6130
      %8260 = vmatmul.mubr.bf16.gmra.mrb[0].mxu0 %v6129
      %v8261 = vpop.f32.mrb[0].mxu0
      %v8262 = vadd.f32 %v8069, %v8261
      %v8263 = vpop.f32.mrb[0].mxu0
      %v8264 = vpop.f32.mrb[0].mxu0
      %v8265 = vadd.f32 %v8072, %v8264
      %v8266 = vpop.f32.mrb[0].mxu0
      %8267 = vmatprep.mubr.bf16.mxu0 %v6148
      %8268 = vmatmul.mubr.bf16.gmra.mrb[0].mxu0 %v6147
      %v8269 = vpop.f32.mrb[0].mxu0
      %v8270 = vadd.f32 %v8077, %v8269
      %v8271 = vpop.f32.mrb[0].mxu0
      %v8272 = vpop.f32.mrb[0].mxu0
      %v8273 = vadd.f32 %v8080, %v8272
      %v8274 = vpop.f32.mrb[0].mxu0
      %8275 = vmatprep.mubr.bf16.mxu0 %v6166
      %8276 = vmatmul.mubr.bf16.gmra.mrb[0].mxu0 %v6165
      %v8277 = vpop.f32.mrb[0].mxu0
      %v8278 = vadd.f32 %v8085, %v8277
      %v8279 = vpop.f32.mrb[0].mxu0
      %v8280 = vpop.f32.mrb[0].mxu0
      %v8281 = vadd.f32 %v8088, %v8280
      %v8282 = vpop.f32.mrb[0].mxu0
      %8283 = vmatprep.mubr.bf16.mxu0 %v6184
      %8284 = vmatmul.mubr.bf16.gmra.mrb[0].mxu0 %v6183
      %v8285 = vpop.f32.mrb[0].mxu0
      %v8286 = vadd.f32 %v8093, %v8285
      %v8287 = vpop.f32.mrb[0].mxu0
      %v8288 = vpop.f32.mrb[0].mxu0
      %v8289 = vadd.f32 %v8096, %v8288
      %v8290 = vpop.f32.mrb[0].mxu0
      %8291 = vmatprep.mubr.bf16.mxu0 %v6202
      %8292 = vmatmul.mubr.bf16.gmra.mrb[0].mxu0 %v6201
      %v8293 = vpop.f32.mrb[0].mxu0
      %v8294 = vadd.f32 %v8101, %v8293
      %v8295 = vpop.f32.mrb[0].mxu0
      %v8296 = vpop.f32.mrb[0].mxu0
      %v8297 = vadd.f32 %v8104, %v8296
      %v8298 = vpop.f32.mrb[0].mxu0
      %8299 = vdwg.mxu0
      %vm8300 = vcmask 400384
      %v8301 = vsel %vm8300, %v8142, 0.0
      %8302 = vadd.xlane.f32.xlu0 %v8301
      %v8303 = vpop.xlane.xlu0 %8302
      %v8304 = vsel %vm8300, %v8145, 0.0
      %8305 = vadd.xlane.f32.xlu0 %v8304
      %v8306 = vpop.xlane.xlu0 %8305
      %v8307 = vsel %vm8300, %v8150, 0.0
      %8308 = vadd.xlane.f32.xlu0 %v8307
      %v8309 = vpop.xlane.xlu0 %8308
      %v8310 = vsel %vm8300, %v8153, 0.0
      %8311 = vadd.xlane.f32.xlu0 %v8310
      %v8312 = vpop.xlane.xlu0 %8311
      %v8313 = vsel %vm8300, %v8158, 0.0
      %8314 = vadd.xlane.f32.xlu0 %v8313
      %v8315 = vpop.xlane.xlu0 %8314
      %v8316 = vsel %vm8300, %v8161, 0.0
      %8317 = vadd.xlane.f32.xlu0 %v8316
      %v8318 = vpop.xlane.xlu0 %8317
      %v8319 = vsel %vm8300, %v8166, 0.0
      %8320 = vadd.xlane.f32.xlu0 %v8319
      %v8321 = vpop.xlane.xlu0 %8320
      %v8322 = vsel %vm8300, %v8169, 0.0
      %8323 = vadd.xlane.f32.xlu0 %v8322
      %v8324 = vpop.xlane.xlu0 %8323
      %v8325 = vsel %vm8300, %v8174, 0.0
      %8326 = vadd.xlane.f32.xlu0 %v8325
      %v8327 = vpop.xlane.xlu0 %8326
      %v8328 = vsel %vm8300, %v8177, 0.0
      %8329 = vadd.xlane.f32.xlu0 %v8328
      %v8330 = vpop.xlane.xlu0 %8329
      %v8331 = vsel %vm8300, %v8182, 0.0
      %8332 = vadd.xlane.f32.xlu0 %v8331
      %v8333 = vpop.xlane.xlu0 %8332
      %v8334 = vsel %vm8300, %v8185, 0.0
      %8335 = vadd.xlane.f32.xlu0 %v8334
      %v8336 = vpop.xlane.xlu0 %8335
      %v8337 = vsel %vm8300, %v8190, 0.0
      %8338 = vadd.xlane.f32.xlu0 %v8337
      %v8339 = vpop.xlane.xlu0 %8338
      %v8340 = vsel %vm8300, %v8193, 0.0
      %8341 = vadd.xlane.f32.xlu0 %v8340
      %v8342 = vpop.xlane.xlu0 %8341
      %v8343 = vsel %vm8300, %v8198, 0.0
      %8344 = vadd.xlane.f32.xlu0 %v8343
      %v8345 = vpop.xlane.xlu0 %8344
      %v8346 = vsel %vm8300, %v8201, 0.0
      %8347 = vadd.xlane.f32.xlu0 %v8346
      %v8348 = vpop.xlane.xlu0 %8347
      %v8349 = vsel %vm8300, %v8206, 0.0
      %8350 = vadd.xlane.f32.xlu0 %v8349
      %v8351 = vpop.xlane.xlu0 %8350
      %v8352 = vsel %vm8300, %v8209, 0.0
      %8353 = vadd.xlane.f32.xlu0 %v8352
      %v8354 = vpop.xlane.xlu0 %8353
      %v8355 = vsel %vm8300, %v8214, 0.0
      %8356 = vadd.xlane.f32.xlu0 %v8355
      %v8357 = vpop.xlane.xlu0 %8356
      %v8358 = vsel %vm8300, %v8217, 0.0
      %8359 = vadd.xlane.f32.xlu0 %v8358
      %v8360 = vpop.xlane.xlu0 %8359
      %v8361 = vsel %vm8300, %v8222, 0.0
      %8362 = vadd.xlane.f32.xlu0 %v8361
      %v8363 = vpop.xlane.xlu0 %8362
      %v8364 = vsel %vm8300, %v8225, 0.0
      %8365 = vadd.xlane.f32.xlu0 %v8364
      %v8366 = vpop.xlane.xlu0 %8365
      %v8367 = vsel %vm8300, %v8230, 0.0
      %8368 = vadd.xlane.f32.xlu0 %v8367
      %v8369 = vpop.xlane.xlu0 %8368
      %v8370 = vsel %vm8300, %v8233, 0.0
      %8371 = vadd.xlane.f32.xlu0 %v8370
      %v8372 = vpop.xlane.xlu0 %8371
      %v8373 = vsel %vm8300, %v8238, 0.0
      %8374 = vadd.xlane.f32.xlu0 %v8373
      %v8375 = vpop.xlane.xlu0 %8374
      %v8376 = vsel %vm8300, %v8241, 0.0
      %8377 = vadd.xlane.f32.xlu0 %v8376
      %v8378 = vpop.xlane.xlu0 %8377
      %v8379 = vsel %vm8300, %v8246, 0.0
      %8380 = vadd.xlane.f32.xlu0 %v8379
      %v8381 = vpop.xlane.xlu0 %8380
      %v8382 = vsel %vm8300, %v8249, 0.0
      %8383 = vadd.xlane.f32.xlu0 %v8382
      %v8384 = vpop.xlane.xlu0 %8383
      %v8385 = vsel %vm8300, %v8254, 0.0
      %8386 = vadd.xlane.f32.xlu0 %v8385
      %v8387 = vpop.xlane.xlu0 %8386
      %v8388 = vsel %vm8300, %v8257, 0.0
      %8389 = vadd.xlane.f32.xlu0 %v8388
      %v8390 = vpop.xlane.xlu0 %8389
      %v8391 = vsel %vm8300, %v8262, 0.0
      %8392 = vadd.xlane.f32.xlu0 %v8391
      %v8393 = vpop.xlane.xlu0 %8392
      %v8394 = vsel %vm8300, %v8265, 0.0
      %8395 = vadd.xlane.f32.xlu0 %v8394
      %v8396 = vpop.xlane.xlu0 %8395
      %v8397 = vsel %vm8300, %v8270, 0.0
      %8398 = vadd.xlane.f32.xlu0 %v8397
      %v8399 = vpop.xlane.xlu0 %8398
      %v8400 = vsel %vm8300, %v8273, 0.0
      %8401 = vadd.xlane.f32.xlu0 %v8400
      %v8402 = vpop.xlane.xlu0 %8401
      %v8403 = vsel %vm8300, %v8278, 0.0
      %8404 = vadd.xlane.f32.xlu0 %v8403
      %v8405 = vpop.xlane.xlu0 %8404
      %v8406 = vsel %vm8300, %v8281, 0.0
      %8407 = vadd.xlane.f32.xlu0 %v8406
      %v8408 = vpop.xlane.xlu0 %8407
      %v8409 = vsel %vm8300, %v8286, 0.0
      %8410 = vadd.xlane.f32.xlu0 %v8409
      %v8411 = vpop.xlane.xlu0 %8410
      %v8412 = vsel %vm8300, %v8289, 0.0
      %8413 = vadd.xlane.f32.xlu0 %v8412
      %v8414 = vpop.xlane.xlu0 %8413
      %v8415 = vsel %vm8300, %v8294, 0.0
      %8416 = vadd.xlane.f32.xlu0 %v8415
      %v8417 = vpop.xlane.xlu0 %8416
      %v8418 = vsel %vm8300, %v8297, 0.0
      %8419 = vadd.xlane.f32.xlu0 %v8418
      %v8420 = vpop.xlane.xlu0 %8419
      %v8421 = vmul.f32 %v8142, %v8142
      %v8422 = vmul.f32 %v8145, %v8145
      %v8423 = vmul.f32 %v8150, %v8150
      %v8424 = vmul.f32 %v8153, %v8153
      %v8425 = vmul.f32 %v8158, %v8158
      %v8426 = vmul.f32 %v8161, %v8161
      %v8427 = vmul.f32 %v8166, %v8166
      %v8428 = vmul.f32 %v8169, %v8169
      %v8429 = vmul.f32 %v8174, %v8174
      %v8430 = vmul.f32 %v8177, %v8177
      %v8431 = vmul.f32 %v8182, %v8182
      %v8432 = vmul.f32 %v8185, %v8185
      %v8433 = vmul.f32 %v8190, %v8190
      %v8434 = vmul.f32 %v8193, %v8193
      %v8435 = vmul.f32 %v8198, %v8198
      %v8436 = vmul.f32 %v8201, %v8201
      %v8437 = vmul.f32 %v8206, %v8206
      %v8438 = vmul.f32 %v8209, %v8209
      %v8439 = vmul.f32 %v8214, %v8214
      %v8440 = vmul.f32 %v8217, %v8217
      %v8441 = vmul.f32 %v8222, %v8222
      %v8442 = vmul.f32 %v8225, %v8225
      %v8443 = vmul.f32 %v8230, %v8230
      %v8444 = vmul.f32 %v8233, %v8233
      %v8445 = vmul.f32 %v8238, %v8238
      %v8446 = vmul.f32 %v8241, %v8241
      %v8447 = vmul.f32 %v8246, %v8246
      %v8448 = vmul.f32 %v8249, %v8249
      %v8449 = vmul.f32 %v8254, %v8254
      %v8450 = vmul.f32 %v8257, %v8257
      %v8451 = vmul.f32 %v8262, %v8262
      %v8452 = vmul.f32 %v8265, %v8265
      %v8453 = vmul.f32 %v8270, %v8270
      %v8454 = vmul.f32 %v8273, %v8273
      %v8455 = vmul.f32 %v8278, %v8278
      %v8456 = vmul.f32 %v8281, %v8281
      %v8457 = vmul.f32 %v8286, %v8286
      %v8458 = vmul.f32 %v8289, %v8289
      %v8459 = vmul.f32 %v8294, %v8294
      %v8460 = vmul.f32 %v8297, %v8297
      %v8461 = vsel %vm8300, %v8421, 0.0
      %8462 = vadd.xlane.f32.xlu0 %v8461
      %v8463 = vpop.xlane.xlu0 %8462
      %v8464 = vsel %vm8300, %v8422, 0.0
      %8465 = vadd.xlane.f32.xlu0 %v8464
      %v8466 = vpop.xlane.xlu0 %8465
      %v8467 = vsel %vm8300, %v8423, 0.0
      %8468 = vadd.xlane.f32.xlu0 %v8467
      %v8469 = vpop.xlane.xlu0 %8468
      %v8470 = vsel %vm8300, %v8424, 0.0
      %8471 = vadd.xlane.f32.xlu0 %v8470
      %v8472 = vpop.xlane.xlu0 %8471
      %v8473 = vsel %vm8300, %v8425, 0.0
      %8474 = vadd.xlane.f32.xlu0 %v8473
      %v8475 = vpop.xlane.xlu0 %8474
      %v8476 = vsel %vm8300, %v8426, 0.0
      %8477 = vadd.xlane.f32.xlu0 %v8476
      %v8478 = vpop.xlane.xlu0 %8477
      %v8479 = vsel %vm8300, %v8427, 0.0
      %8480 = vadd.xlane.f32.xlu0 %v8479
      %v8481 = vpop.xlane.xlu0 %8480
      %v8482 = vsel %vm8300, %v8428, 0.0
      %8483 = vadd.xlane.f32.xlu0 %v8482
      %v8484 = vpop.xlane.xlu0 %8483
      %v8485 = vsel %vm8300, %v8429, 0.0
      %8486 = vadd.xlane.f32.xlu0 %v8485
      %v8487 = vpop.xlane.xlu0 %8486
      %v8488 = vsel %vm8300, %v8430, 0.0
      %8489 = vadd.xlane.f32.xlu0 %v8488
      %v8490 = vpop.xlane.xlu0 %8489
      %v8491 = vsel %vm8300, %v8431, 0.0
      %8492 = vadd.xlane.f32.xlu0 %v8491
      %v8493 = vpop.xlane.xlu0 %8492
      %v8494 = vsel %vm8300, %v8432, 0.0
      %8495 = vadd.xlane.f32.xlu0 %v8494
      %v8496 = vpop.xlane.xlu0 %8495
      %v8497 = vsel %vm8300, %v8433, 0.0
      %8498 = vadd.xlane.f32.xlu0 %v8497
      %v8499 = vpop.xlane.xlu0 %8498
      %v8500 = vsel %vm8300, %v8434, 0.0
      %8501 = vadd.xlane.f32.xlu0 %v8500
      %v8502 = vpop.xlane.xlu0 %8501
      %v8503 = vsel %vm8300, %v8435, 0.0
      %8504 = vadd.xlane.f32.xlu0 %v8503
      %v8505 = vpop.xlane.xlu0 %8504
      %v8506 = vsel %vm8300, %v8436, 0.0
      %8507 = vadd.xlane.f32.xlu0 %v8506
      %v8508 = vpop.xlane.xlu0 %8507
      %v8509 = vsel %vm8300, %v8437, 0.0
      %8510 = vadd.xlane.f32.xlu0 %v8509
      %v8511 = vpop.xlane.xlu0 %8510
      %v8512 = vsel %vm8300, %v8438, 0.0
      %8513 = vadd.xlane.f32.xlu0 %v8512
      %v8514 = vpop.xlane.xlu0 %8513
      %v8515 = vsel %vm8300, %v8439, 0.0
      %8516 = vadd.xlane.f32.xlu0 %v8515
      %v8517 = vpop.xlane.xlu0 %8516
      %v8518 = vsel %vm8300, %v8440, 0.0
      %8519 = vadd.xlane.f32.xlu0 %v8518
      %v8520 = vpop.xlane.xlu0 %8519
      %v8521 = vsel %vm8300, %v8441, 0.0
      %8522 = vadd.xlane.f32.xlu0 %v8521
      %v8523 = vpop.xlane.xlu0 %8522
      %v8524 = vsel %vm8300, %v8442, 0.0
      %8525 = vadd.xlane.f32.xlu0 %v8524
      %v8526 = vpop.xlane.xlu0 %8525
      %v8527 = vsel %vm8300, %v8443, 0.0
      %8528 = vadd.xlane.f32.xlu0 %v8527
      %v8529 = vpop.xlane.xlu0 %8528
      %v8530 = vsel %vm8300, %v8444, 0.0
      %8531 = vadd.xlane.f32.xlu0 %v8530
      %v8532 = vpop.xlane.xlu0 %8531
      %v8533 = vsel %vm8300, %v8445, 0.0
      %8534 = vadd.xlane.f32.xlu0 %v8533
      %v8535 = vpop.xlane.xlu0 %8534
      %v8536 = vsel %vm8300, %v8446, 0.0
      %8537 = vadd.xlane.f32.xlu0 %v8536
      %v8538 = vpop.xlane.xlu0 %8537
      %v8539 = vsel %vm8300, %v8447, 0.0
      %8540 = vadd.xlane.f32.xlu0 %v8539
      %v8541 = vpop.xlane.xlu0 %8540
      %v8542 = vsel %vm8300, %v8448, 0.0
      %8543 = vadd.xlane.f32.xlu0 %v8542
      %v8544 = vpop.xlane.xlu0 %8543
      %v8545 = vsel %vm8300, %v8449, 0.0
      %8546 = vadd.xlane.f32.xlu0 %v8545
      %v8547 = vpop.xlane.xlu0 %8546
      %v8548 = vsel %vm8300, %v8450, 0.0
      %8549 = vadd.xlane.f32.xlu0 %v8548
      %v8550 = vpop.xlane.xlu0 %8549
      %v8551 = vsel %vm8300, %v8451, 0.0
      %8552 = vadd.xlane.f32.xlu0 %v8551
      %v8553 = vpop.xlane.xlu0 %8552
      %v8554 = vsel %vm8300, %v8452, 0.0
      %8555 = vadd.xlane.f32.xlu0 %v8554
      %v8556 = vpop.xlane.xlu0 %8555
      %v8557 = vsel %vm8300, %v8453, 0.0
      %8558 = vadd.xlane.f32.xlu0 %v8557
      %v8559 = vpop.xlane.xlu0 %8558
      %v8560 = vsel %vm8300, %v8454, 0.0
      %8561 = vadd.xlane.f32.xlu0 %v8560
      %v8562 = vpop.xlane.xlu0 %8561
      %v8563 = vsel %vm8300, %v8455, 0.0
      %8564 = vadd.xlane.f32.xlu0 %v8563
      %v8565 = vpop.xlane.xlu0 %8564
      %v8566 = vsel %vm8300, %v8456, 0.0
      %8567 = vadd.xlane.f32.xlu0 %v8566
      %v8568 = vpop.xlane.xlu0 %8567
      %v8569 = vsel %vm8300, %v8457, 0.0
      %8570 = vadd.xlane.f32.xlu0 %v8569
      %v8571 = vpop.xlane.xlu0 %8570
      %v8572 = vsel %vm8300, %v8458, 0.0
      %8573 = vadd.xlane.f32.xlu0 %v8572
      %v8574 = vpop.xlane.xlu0 %8573
      %v8575 = vsel %vm8300, %v8459, 0.0
      %8576 = vadd.xlane.f32.xlu0 %v8575
      %v8577 = vpop.xlane.xlu0 %8576
      %v8578 = vsel %vm8300, %v8460, 0.0
      %8579 = vadd.xlane.f32.xlu0 %v8578
      %v8580 = vpop.xlane.xlu0 %8579
      %v8581 = vmul.f32 %v8303, 0.020408163
      %v8582 = vmul.f32 %v8306, 0.020408163
      %v8583 = vmul.f32 %v8309, 0.020408163
      %v8584 = vmul.f32 %v8312, 0.020408163
      %v8585 = vmul.f32 %v8315, 0.020408163
      %v8586 = vmul.f32 %v8318, 0.020408163
      %v8587 = vmul.f32 %v8321, 0.020408163
      %v8588 = vmul.f32 %v8324, 0.020408163
      %v8589 = vmul.f32 %v8327, 0.020408163
      %v8590 = vmul.f32 %v8330, 0.020408163
      %v8591 = vmul.f32 %v8333, 0.020408163
      %v8592 = vmul.f32 %v8336, 0.020408163
      %v8593 = vmul.f32 %v8339, 0.020408163
      %v8594 = vmul.f32 %v8342, 0.020408163
      %v8595 = vmul.f32 %v8345, 0.020408163
      %v8596 = vmul.f32 %v8348, 0.020408163
      %v8597 = vmul.f32 %v8351, 0.020408163
      %v8598 = vmul.f32 %v8354, 0.020408163
      %v8599 = vmul.f32 %v8357, 0.020408163
      %v8600 = vmul.f32 %v8360, 0.020408163
      %v8601 = vmul.f32 %v8363, 0.020408163
      %v8602 = vmul.f32 %v8366, 0.020408163
      %v8603 = vmul.f32 %v8369, 0.020408163
      %v8604 = vmul.f32 %v8372, 0.020408163
      %v8605 = vmul.f32 %v8375, 0.020408163
      %v8606 = vmul.f32 %v8378, 0.020408163
      %v8607 = vmul.f32 %v8381, 0.020408163
      %v8608 = vmul.f32 %v8384, 0.020408163
      %v8609 = vmul.f32 %v8387, 0.020408163
      %v8610 = vmul.f32 %v8390, 0.020408163
      %v8611 = vmul.f32 %v8393, 0.020408163
      %v8612 = vmul.f32 %v8396, 0.020408163
      %v8613 = vmul.f32 %v8399, 0.020408163
      %v8614 = vmul.f32 %v8402, 0.020408163
      %v8615 = vmul.f32 %v8405, 0.020408163
      %v8616 = vmul.f32 %v8408, 0.020408163
      %v8617 = vmul.f32 %v8411, 0.020408163
      %v8618 = vmul.f32 %v8414, 0.020408163
      %v8619 = vmul.f32 %v8417, 0.020408163
      %v8620 = vmul.f32 %v8420, 0.020408163
      %v8621 = vmul.f32 %v8463, 0.020408163
      %v8622 = vmul.f32 %v8466, 0.020408163
      %v8623 = vmul.f32 %v8469, 0.020408163
      %v8624 = vmul.f32 %v8472, 0.020408163
      %v8625 = vmul.f32 %v8475, 0.020408163
      %v8626 = vmul.f32 %v8478, 0.020408163
      %v8627 = vmul.f32 %v8481, 0.020408163
      %v8628 = vmul.f32 %v8484, 0.020408163
      %v8629 = vmul.f32 %v8487, 0.020408163
      %v8630 = vmul.f32 %v8490, 0.020408163
      %v8631 = vmul.f32 %v8493, 0.020408163
      %v8632 = vmul.f32 %v8496, 0.020408163
      %v8633 = vmul.f32 %v8499, 0.020408163
      %v8634 = vmul.f32 %v8502, 0.020408163
      %v8635 = vmul.f32 %v8505, 0.020408163
      %v8636 = vmul.f32 %v8508, 0.020408163
      %v8637 = vmul.f32 %v8511, 0.020408163
      %v8638 = vmul.f32 %v8514, 0.020408163
      %v8639 = vmul.f32 %v8517, 0.020408163
      %v8640 = vmul.f32 %v8520, 0.020408163
      %v8641 = vmul.f32 %v8523, 0.020408163
      %v8642 = vmul.f32 %v8526, 0.020408163
      %v8643 = vmul.f32 %v8529, 0.020408163
      %v8644 = vmul.f32 %v8532, 0.020408163
      %v8645 = vmul.f32 %v8535, 0.020408163
      %v8646 = vmul.f32 %v8538, 0.020408163
      %v8647 = vmul.f32 %v8541, 0.020408163
      %v8648 = vmul.f32 %v8544, 0.020408163
      %v8649 = vmul.f32 %v8547, 0.020408163
      %v8650 = vmul.f32 %v8550, 0.020408163
      %v8651 = vmul.f32 %v8553, 0.020408163
      %v8652 = vmul.f32 %v8556, 0.020408163
      %v8653 = vmul.f32 %v8559, 0.020408163
      %v8654 = vmul.f32 %v8562, 0.020408163
      %v8655 = vmul.f32 %v8565, 0.020408163
      %v8656 = vmul.f32 %v8568, 0.020408163
      %v8657 = vmul.f32 %v8571, 0.020408163
      %v8658 = vmul.f32 %v8574, 0.020408163
      %v8659 = vmul.f32 %v8577, 0.020408163
      %v8660 = vmul.f32 %v8580, 0.020408163
      %v8661 = vmul.f32 %v8581, %v8581
      %v8662 = vmul.f32 %v8582, %v8582
      %v8663 = vmul.f32 %v8583, %v8583
      %v8664 = vmul.f32 %v8584, %v8584
      %v8665 = vmul.f32 %v8585, %v8585
      %v8666 = vmul.f32 %v8586, %v8586
      %v8667 = vmul.f32 %v8587, %v8587
      %v8668 = vmul.f32 %v8588, %v8588
      %v8669 = vmul.f32 %v8589, %v8589
      %v8670 = vmul.f32 %v8590, %v8590
      %v8671 = vmul.f32 %v8591, %v8591
      %v8672 = vmul.f32 %v8592, %v8592
      %v8673 = vmul.f32 %v8593, %v8593
      %v8674 = vmul.f32 %v8594, %v8594
      %v8675 = vmul.f32 %v8595, %v8595
      %v8676 = vmul.f32 %v8596, %v8596
      %v8677 = vmul.f32 %v8597, %v8597
      %v8678 = vmul.f32 %v8598, %v8598
      %v8679 = vmul.f32 %v8599, %v8599
      %v8680 = vmul.f32 %v8600, %v8600
      %v8681 = vmul.f32 %v8601, %v8601
      %v8682 = vmul.f32 %v8602, %v8602
      %v8683 = vmul.f32 %v8603, %v8603
      %v8684 = vmul.f32 %v8604, %v8604
      %v8685 = vmul.f32 %v8605, %v8605
      %v8686 = vmul.f32 %v8606, %v8606
      %v8687 = vmul.f32 %v8607, %v8607
      %v8688 = vmul.f32 %v8608, %v8608
      %v8689 = vmul.f32 %v8609, %v8609
      %v8690 = vmul.f32 %v8610, %v8610
      %v8691 = vmul.f32 %v8611, %v8611
      %v8692 = vmul.f32 %v8612, %v8612
      %v8693 = vmul.f32 %v8613, %v8613
      %v8694 = vmul.f32 %v8614, %v8614
      %v8695 = vmul.f32 %v8615, %v8615
      %v8696 = vmul.f32 %v8616, %v8616
      %v8697 = vmul.f32 %v8617, %v8617
      %v8698 = vmul.f32 %v8618, %v8618
      %v8699 = vmul.f32 %v8619, %v8619
      %v8700 = vmul.f32 %v8620, %v8620
      %v8701 = vsub.f32 %v8621, %v8661
      %v8702 = vsub.f32 %v8622, %v8662
      %v8703 = vsub.f32 %v8623, %v8663
      %v8704 = vsub.f32 %v8624, %v8664
      %v8705 = vsub.f32 %v8625, %v8665
      %v8706 = vsub.f32 %v8626, %v8666
      %v8707 = vsub.f32 %v8627, %v8667
      %v8708 = vsub.f32 %v8628, %v8668
      %v8709 = vsub.f32 %v8629, %v8669
      %v8710 = vsub.f32 %v8630, %v8670
      %v8711 = vsub.f32 %v8631, %v8671
      %v8712 = vsub.f32 %v8632, %v8672
      %v8713 = vsub.f32 %v8633, %v8673
      %v8714 = vsub.f32 %v8634, %v8674
      %v8715 = vsub.f32 %v8635, %v8675
      %v8716 = vsub.f32 %v8636, %v8676
      %v8717 = vsub.f32 %v8637, %v8677
      %v8718 = vsub.f32 %v8638, %v8678
      %v8719 = vsub.f32 %v8639, %v8679
      %v8720 = vsub.f32 %v8640, %v8680
      %v8721 = vsub.f32 %v8641, %v8681
      %v8722 = vsub.f32 %v8642, %v8682
      %v8723 = vsub.f32 %v8643, %v8683
      %v8724 = vsub.f32 %v8644, %v8684
      %v8725 = vsub.f32 %v8645, %v8685
      %v8726 = vsub.f32 %v8646, %v8686
      %v8727 = vsub.f32 %v8647, %v8687
      %v8728 = vsub.f32 %v8648, %v8688
      %v8729 = vsub.f32 %v8649, %v8689
      %v8730 = vsub.f32 %v8650, %v8690
      %v8731 = vsub.f32 %v8651, %v8691
      %v8732 = vsub.f32 %v8652, %v8692
      %v8733 = vsub.f32 %v8653, %v8693
      %v8734 = vsub.f32 %v8654, %v8694
      %v8735 = vsub.f32 %v8655, %v8695
      %v8736 = vsub.f32 %v8656, %v8696
      %v8737 = vsub.f32 %v8657, %v8697
      %v8738 = vsub.f32 %v8658, %v8698
      %v8739 = vsub.f32 %v8659, %v8699
      %v8740 = vsub.f32 %v8660, %v8700
      %v8741 = vmax.f32 %v8701, 0.0
      %v8742 = vmax.f32 %v8702, 0.0
      %v8743 = vmax.f32 %v8703, 0.0
      %v8744 = vmax.f32 %v8704, 0.0
      %v8745 = vmax.f32 %v8705, 0.0
      %v8746 = vmax.f32 %v8706, 0.0
      %v8747 = vmax.f32 %v8707, 0.0
      %v8748 = vmax.f32 %v8708, 0.0
      %v8749 = vmax.f32 %v8709, 0.0
      %v8750 = vmax.f32 %v8710, 0.0
      %v8751 = vmax.f32 %v8711, 0.0
      %v8752 = vmax.f32 %v8712, 0.0
      %v8753 = vmax.f32 %v8713, 0.0
      %v8754 = vmax.f32 %v8714, 0.0
      %v8755 = vmax.f32 %v8715, 0.0
      %v8756 = vmax.f32 %v8716, 0.0
      %v8757 = vmax.f32 %v8717, 0.0
      %v8758 = vmax.f32 %v8718, 0.0
      %v8759 = vmax.f32 %v8719, 0.0
      %v8760 = vmax.f32 %v8720, 0.0
      %v8761 = vmax.f32 %v8721, 0.0
      %v8762 = vmax.f32 %v8722, 0.0
      %v8763 = vmax.f32 %v8723, 0.0
      %v8764 = vmax.f32 %v8724, 0.0
      %v8765 = vmax.f32 %v8725, 0.0
      %v8766 = vmax.f32 %v8726, 0.0
      %v8767 = vmax.f32 %v8727, 0.0
      %v8768 = vmax.f32 %v8728, 0.0
      %v8769 = vmax.f32 %v8729, 0.0
      %v8770 = vmax.f32 %v8730, 0.0
      %v8771 = vmax.f32 %v8731, 0.0
      %v8772 = vmax.f32 %v8732, 0.0
      %v8773 = vmax.f32 %v8733, 0.0
      %v8774 = vmax.f32 %v8734, 0.0
      %v8775 = vmax.f32 %v8735, 0.0
      %v8776 = vmax.f32 %v8736, 0.0
      %v8777 = vmax.f32 %v8737, 0.0
      %v8778 = vmax.f32 %v8738, 0.0
      %v8779 = vmax.f32 %v8739, 0.0
      %v8780 = vmax.f32 %v8740, 0.0
      %v8781 = vld [vmem:[%s218] sm:$0xff]
      %v8782 = vld [vmem:[%s218 + $0x8] sm:$0xff]
      %v8783 = vld [vmem:[%s218 + $0x10] sm:$0xff]
      %v8784 = vld [vmem:[%s218 + $0x18] sm:$0xff]
      %v8785 = vld [vmem:[%s218 + $0x20] sm:$0xff]
      %v8786 = vld [vmem:[%s218 + $0x28] sm:$0xff]
      %v8787 = vld [vmem:[%s218 + $0x30] sm:$0xff]
      %v8788 = vld [vmem:[%s218 + $0x38] sm:$0xff]
      %v8789 = vld [vmem:[%s218 + $0x40] sm:$0xff]
      %v8790 = vld [vmem:[%s218 + $0x48] sm:$0xff]
      %v8791 = vld [vmem:[%s218 + $0x50] sm:$0xff]
      %v8792 = vld [vmem:[%s218 + $0x58] sm:$0xff]
      %v8793 = vld [vmem:[%s218 + $0x60] sm:$0xff]
      %v8794 = vld [vmem:[%s218 + $0x68] sm:$0xff]
      %v8795 = vld [vmem:[%s218 + $0x70] sm:$0xff]
      %v8796 = vld [vmem:[%s218 + $0x78] sm:$0xff]
      %v8797 = vld [vmem:[%s218 + $0x80] sm:$0xff]
      %v8798 = vld [vmem:[%s218 + $0x88] sm:$0xff]
      %v8799 = vld [vmem:[%s218 + $0x90] sm:$0xff]
      %v8800 = vld [vmem:[%s218 + $0x98] sm:$0xff]
      %v8801 = vld [vmem:[%s218 + $0xa0] sm:$0xff]
      %v8802 = vld [vmem:[%s218 + $0xa8] sm:$0xff]
      %v8803 = vld [vmem:[%s218 + $0xb0] sm:$0xff]
      %v8804 = vld [vmem:[%s218 + $0xb8] sm:$0xff]
      %v8805 = vld [vmem:[%s218 + $0xc0] sm:$0xff]
      %v8806 = vld [vmem:[%s218 + $0xc8] sm:$0xff]
      %v8807 = vld [vmem:[%s218 + $0xd0] sm:$0xff]
      %v8808 = vld [vmem:[%s218 + $0xd8] sm:$0xff]
      %v8809 = vld [vmem:[%s218 + $0xe0] sm:$0xff]
      %v8810 = vld [vmem:[%s218 + $0xe8] sm:$0xff]
      %v8811 = vld [vmem:[%s218 + $0xf0] sm:$0xff]
      %v8812 = vld [vmem:[%s218 + $0xf8] sm:$0xff]
      %v8813 = vld [vmem:[%s218 + $0x100] sm:$0xff]
      %v8814 = vld [vmem:[%s218 + $0x108] sm:$0xff]
      %v8815 = vld [vmem:[%s218 + $0x110] sm:$0xff]
      %v8816 = vld [vmem:[%s218 + $0x118] sm:$0xff]
      %v8817 = vld [vmem:[%s218 + $0x120] sm:$0xff]
      %v8818 = vld [vmem:[%s218 + $0x128] sm:$0xff]
      %v8819 = vld [vmem:[%s218 + $0x130] sm:$0xff]
      %v8820 = vld [vmem:[%s218 + $0x138] sm:$0xff]
      %v8821 = vadd.f32 %v8741, 0.001
      %v8822 = vadd.f32 %v8742, 0.001
      %v8823 = vadd.f32 %v8743, 0.001
      %v8824 = vadd.f32 %v8744, 0.001
      %v8825 = vadd.f32 %v8745, 0.001
      %v8826 = vadd.f32 %v8746, 0.001
      %v8827 = vadd.f32 %v8747, 0.001
      %v8828 = vadd.f32 %v8748, 0.001
      %v8829 = vadd.f32 %v8749, 0.001
      %v8830 = vadd.f32 %v8750, 0.001
      %v8831 = vadd.f32 %v8751, 0.001
      %v8832 = vadd.f32 %v8752, 0.001
      %v8833 = vadd.f32 %v8753, 0.001
      %v8834 = vadd.f32 %v8754, 0.001
      %v8835 = vadd.f32 %v8755, 0.001
      %v8836 = vadd.f32 %v8756, 0.001
      %v8837 = vadd.f32 %v8757, 0.001
      %v8838 = vadd.f32 %v8758, 0.001
      %v8839 = vadd.f32 %v8759, 0.001
      %v8840 = vadd.f32 %v8760, 0.001
      %v8841 = vadd.f32 %v8761, 0.001
      %v8842 = vadd.f32 %v8762, 0.001
      %v8843 = vadd.f32 %v8763, 0.001
      %v8844 = vadd.f32 %v8764, 0.001
      %v8845 = vadd.f32 %v8765, 0.001
      %v8846 = vadd.f32 %v8766, 0.001
      %v8847 = vadd.f32 %v8767, 0.001
      %v8848 = vadd.f32 %v8768, 0.001
      %v8849 = vadd.f32 %v8769, 0.001
      %v8850 = vadd.f32 %v8770, 0.001
      %v8851 = vadd.f32 %v8771, 0.001
      %v8852 = vadd.f32 %v8772, 0.001
      %v8853 = vadd.f32 %v8773, 0.001
      %v8854 = vadd.f32 %v8774, 0.001
      %v8855 = vadd.f32 %v8775, 0.001
      %v8856 = vadd.f32 %v8776, 0.001
      %v8857 = vadd.f32 %v8777, 0.001
      %v8858 = vadd.f32 %v8778, 0.001
      %v8859 = vadd.f32 %v8779, 0.001
      %v8860 = vadd.f32 %v8780, 0.001
      %v8861 = vrsqrt.pop %v8821
      %v8862 = vrsqrt.pop %v8822
      %v8863 = vrsqrt.pop %v8823
      %v8864 = vrsqrt.pop %v8824
      %v8865 = vrsqrt.pop %v8825
      %v8866 = vrsqrt.pop %v8826
      %v8867 = vrsqrt.pop %v8827
      %v8868 = vrsqrt.pop %v8828
      %v8869 = vrsqrt.pop %v8829
      %v8870 = vrsqrt.pop %v8830
      %v8871 = vrsqrt.pop %v8831
      %v8872 = vrsqrt.pop %v8832
      %v8873 = vrsqrt.pop %v8833
      %v8874 = vrsqrt.pop %v8834
      %v8875 = vrsqrt.pop %v8835
      %v8876 = vrsqrt.pop %v8836
      %v8877 = vrsqrt.pop %v8837
      %v8878 = vrsqrt.pop %v8838
      %v8879 = vrsqrt.pop %v8839
      %v8880 = vrsqrt.pop %v8840
      %v8881 = vrsqrt.pop %v8841
      %v8882 = vrsqrt.pop %v8842
      %v8883 = vrsqrt.pop %v8843
      %v8884 = vrsqrt.pop %v8844
      %v8885 = vrsqrt.pop %v8845
      %v8886 = vrsqrt.pop %v8846
      %v8887 = vrsqrt.pop %v8847
      %v8888 = vrsqrt.pop %v8848
      %v8889 = vrsqrt.pop %v8849
      %v8890 = vrsqrt.pop %v8850
      %v8891 = vrsqrt.pop %v8851
      %v8892 = vrsqrt.pop %v8852
      %v8893 = vrsqrt.pop %v8853
      %v8894 = vrsqrt.pop %v8854
      %v8895 = vrsqrt.pop %v8855
      %v8896 = vrsqrt.pop %v8856
      %v8897 = vrsqrt.pop %v8857
      %v8898 = vrsqrt.pop %v8858
      %v8899 = vrsqrt.pop %v8859
      %v8900 = vrsqrt.pop %v8860
      %v8901 = vmul.f32 %v8861, %v8781
      %v8902 = vmul.f32 %v8862, %v8782
      %v8903 = vmul.f32 %v8863, %v8783
      %v8904 = vmul.f32 %v8864, %v8784
      %v8905 = vmul.f32 %v8865, %v8785
      %v8906 = vmul.f32 %v8866, %v8786
      %v8907 = vmul.f32 %v8867, %v8787
      %v8908 = vmul.f32 %v8868, %v8788
      %v8909 = vmul.f32 %v8869, %v8789
      %v8910 = vmul.f32 %v8870, %v8790
      %v8911 = vmul.f32 %v8871, %v8791
      %v8912 = vmul.f32 %v8872, %v8792
      %v8913 = vmul.f32 %v8873, %v8793
      %v8914 = vmul.f32 %v8874, %v8794
      %v8915 = vmul.f32 %v8875, %v8795
      %v8916 = vmul.f32 %v8876, %v8796
      %v8917 = vmul.f32 %v8877, %v8797
      %v8918 = vmul.f32 %v8878, %v8798
      %v8919 = vmul.f32 %v8879, %v8799
      %v8920 = vmul.f32 %v8880, %v8800
      %v8921 = vmul.f32 %v8881, %v8801
      %v8922 = vmul.f32 %v8882, %v8802
      %v8923 = vmul.f32 %v8883, %v8803
      %v8924 = vmul.f32 %v8884, %v8804
      %v8925 = vmul.f32 %v8885, %v8805
      %v8926 = vmul.f32 %v8886, %v8806
      %v8927 = vmul.f32 %v8887, %v8807
      %v8928 = vmul.f32 %v8888, %v8808
      %v8929 = vmul.f32 %v8889, %v8809
      %v8930 = vmul.f32 %v8890, %v8810
      %v8931 = vmul.f32 %v8891, %v8811
      %v8932 = vmul.f32 %v8892, %v8812
      %v8933 = vmul.f32 %v8893, %v8813
      %v8934 = vmul.f32 %v8894, %v8814
      %v8935 = vmul.f32 %v8895, %v8815
      %v8936 = vmul.f32 %v8896, %v8816
      %v8937 = vmul.f32 %v8897, %v8817
      %v8938 = vmul.f32 %v8898, %v8818
      %v8939 = vmul.f32 %v8899, %v8819
      %v8940 = vmul.f32 %v8900, %v8820
      %v8941 = vsub.f32 %v8142, %v8581
      %v8942 = vsub.f32 %v8145, %v8582
      %v8943 = vsub.f32 %v8150, %v8583
      %v8944 = vsub.f32 %v8153, %v8584
      %v8945 = vsub.f32 %v8158, %v8585
      %v8946 = vsub.f32 %v8161, %v8586
      %v8947 = vsub.f32 %v8166, %v8587
      %v8948 = vsub.f32 %v8169, %v8588
      %v8949 = vsub.f32 %v8174, %v8589
      %v8950 = vsub.f32 %v8177, %v8590
      %v8951 = vsub.f32 %v8182, %v8591
      %v8952 = vsub.f32 %v8185, %v8592
      %v8953 = vsub.f32 %v8190, %v8593
      %v8954 = vsub.f32 %v8193, %v8594
      %v8955 = vsub.f32 %v8198, %v8595
      %v8956 = vsub.f32 %v8201, %v8596
      %v8957 = vsub.f32 %v8206, %v8597
      %v8958 = vsub.f32 %v8209, %v8598
      %v8959 = vsub.f32 %v8214, %v8599
      %v8960 = vsub.f32 %v8217, %v8600
      %v8961 = vsub.f32 %v8222, %v8601
      %v8962 = vsub.f32 %v8225, %v8602
      %v8963 = vsub.f32 %v8230, %v8603
      %v8964 = vsub.f32 %v8233, %v8604
      %v8965 = vsub.f32 %v8238, %v8605
      %v8966 = vsub.f32 %v8241, %v8606
      %v8967 = vsub.f32 %v8246, %v8607
      %v8968 = vsub.f32 %v8249, %v8608
      %v8969 = vsub.f32 %v8254, %v8609
      %v8970 = vsub.f32 %v8257, %v8610
      %v8971 = vsub.f32 %v8262, %v8611
      %v8972 = vsub.f32 %v8265, %v8612
      %v8973 = vsub.f32 %v8270, %v8613
      %v8974 = vsub.f32 %v8273, %v8614
      %v8975 = vsub.f32 %v8278, %v8615
      %v8976 = vsub.f32 %v8281, %v8616
      %v8977 = vsub.f32 %v8286, %v8617
      %v8978 = vsub.f32 %v8289, %v8618
      %v8979 = vsub.f32 %v8294, %v8619
      %v8980 = vsub.f32 %v8297, %v8620
      %8982 = vset.pattern.permute.xlu0 0
      %8983 = vperm.xlu0 %8982, %v8901
      %v8984 = vpop.permute.xlu0 %8983
      %8987 = vset.pattern.permute.xlu0 0
      %8988 = vperm.xlu0 %8987, %v8902
      %v8989 = vpop.permute.xlu0 %8988
      %8992 = vset.pattern.permute.xlu0 0
      %8993 = vperm.xlu0 %8992, %v8903
      %v8994 = vpop.permute.xlu0 %8993
      %8997 = vset.pattern.permute.xlu0 0
      %8998 = vperm.xlu0 %8997, %v8904
      %v8999 = vpop.permute.xlu0 %8998
      %9002 = vset.pattern.permute.xlu0 0
      %9003 = vperm.xlu0 %9002, %v8905
      %v9004 = vpop.permute.xlu0 %9003
      %9007 = vset.pattern.permute.xlu0 0
      %9008 = vperm.xlu0 %9007, %v8906
      %v9009 = vpop.permute.xlu0 %9008
      %9012 = vset.pattern.permute.xlu0 0
      %9013 = vperm.xlu0 %9012, %v8907
      %v9014 = vpop.permute.xlu0 %9013
      %9017 = vset.pattern.permute.xlu0 0
      %9018 = vperm.xlu0 %9017, %v8908
      %v9019 = vpop.permute.xlu0 %9018
      %9022 = vset.pattern.permute.xlu0 0
      %9023 = vperm.xlu0 %9022, %v8909
      %v9024 = vpop.permute.xlu0 %9023
      %9027 = vset.pattern.permute.xlu0 0
      %9028 = vperm.xlu0 %9027, %v8910
      %v9029 = vpop.permute.xlu0 %9028
      %9032 = vset.pattern.permute.xlu0 0
      %9033 = vperm.xlu0 %9032, %v8911
      %v9034 = vpop.permute.xlu0 %9033
      %9037 = vset.pattern.permute.xlu0 0
      %9038 = vperm.xlu0 %9037, %v8912
      %v9039 = vpop.permute.xlu0 %9038
      %9042 = vset.pattern.permute.xlu0 0
      %9043 = vperm.xlu0 %9042, %v8913
      %v9044 = vpop.permute.xlu0 %9043
      %9047 = vset.pattern.permute.xlu0 0
      %9048 = vperm.xlu0 %9047, %v8914
      %v9049 = vpop.permute.xlu0 %9048
      %9052 = vset.pattern.permute.xlu0 0
      %9053 = vperm.xlu0 %9052, %v8915
      %v9054 = vpop.permute.xlu0 %9053
      %9057 = vset.pattern.permute.xlu0 0
      %9058 = vperm.xlu0 %9057, %v8916
      %v9059 = vpop.permute.xlu0 %9058
      %9062 = vset.pattern.permute.xlu0 0
      %9063 = vperm.xlu0 %9062, %v8917
      %v9064 = vpop.permute.xlu0 %9063
      %9067 = vset.pattern.permute.xlu0 0
      %9068 = vperm.xlu0 %9067, %v8918
      %v9069 = vpop.permute.xlu0 %9068
      %9072 = vset.pattern.permute.xlu0 0
      %9073 = vperm.xlu0 %9072, %v8919
      %v9074 = vpop.permute.xlu0 %9073
      %9077 = vset.pattern.permute.xlu0 0
      %9078 = vperm.xlu0 %9077, %v8920
      %v9079 = vpop.permute.xlu0 %9078
      %9082 = vset.pattern.permute.xlu0 0
      %9083 = vperm.xlu0 %9082, %v8921
      %v9084 = vpop.permute.xlu0 %9083
      %9087 = vset.pattern.permute.xlu0 0
      %9088 = vperm.xlu0 %9087, %v8922
      %v9089 = vpop.permute.xlu0 %9088
      %9092 = vset.pattern.permute.xlu0 0
      %9093 = vperm.xlu0 %9092, %v8923
      %v9094 = vpop.permute.xlu0 %9093
      %9097 = vset.pattern.permute.xlu0 0
      %9098 = vperm.xlu0 %9097, %v8924
      %v9099 = vpop.permute.xlu0 %9098
      %9102 = vset.pattern.permute.xlu0 0
      %9103 = vperm.xlu0 %9102, %v8925
      %v9104 = vpop.permute.xlu0 %9103
      %9107 = vset.pattern.permute.xlu0 0
      %9108 = vperm.xlu0 %9107, %v8926
      %v9109 = vpop.permute.xlu0 %9108
      %9112 = vset.pattern.permute.xlu0 0
      %9113 = vperm.xlu0 %9112, %v8927
      %v9114 = vpop.permute.xlu0 %9113
      %9117 = vset.pattern.permute.xlu0 0
      %9118 = vperm.xlu0 %9117, %v8928
      %v9119 = vpop.permute.xlu0 %9118
      %9122 = vset.pattern.permute.xlu0 0
      %9123 = vperm.xlu0 %9122, %v8929
      %v9124 = vpop.permute.xlu0 %9123
      %9127 = vset.pattern.permute.xlu0 0
      %9128 = vperm.xlu0 %9127, %v8930
      %v9129 = vpop.permute.xlu0 %9128
      %9132 = vset.pattern.permute.xlu0 0
      %9133 = vperm.xlu0 %9132, %v8931
      %v9134 = vpop.permute.xlu0 %9133
      %9137 = vset.pattern.permute.xlu0 0
      %9138 = vperm.xlu0 %9137, %v8932
      %v9139 = vpop.permute.xlu0 %9138
      %9142 = vset.pattern.permute.xlu0 0
      %9143 = vperm.xlu0 %9142, %v8933
      %v9144 = vpop.permute.xlu0 %9143
      %9147 = vset.pattern.permute.xlu0 0
      %9148 = vperm.xlu0 %9147, %v8934
      %v9149 = vpop.permute.xlu0 %9148
      %9152 = vset.pattern.permute.xlu0 0
      %9153 = vperm.xlu0 %9152, %v8935
      %v9154 = vpop.permute.xlu0 %9153
      %9157 = vset.pattern.permute.xlu0 0
      %9158 = vperm.xlu0 %9157, %v8936
      %v9159 = vpop.permute.xlu0 %9158
      %9162 = vset.pattern.permute.xlu0 0
      %9163 = vperm.xlu0 %9162, %v8937
      %v9164 = vpop.permute.xlu0 %9163
      %9167 = vset.pattern.permute.xlu0 0
      %9168 = vperm.xlu0 %9167, %v8938
      %v9169 = vpop.permute.xlu0 %9168
      %9172 = vset.pattern.permute.xlu0 0
      %9173 = vperm.xlu0 %9172, %v8939
      %v9174 = vpop.permute.xlu0 %9173
      %9177 = vset.pattern.permute.xlu0 0
      %9178 = vperm.xlu0 %9177, %v8940
      %v9179 = vpop.permute.xlu0 %9178
      %v9181 = vmul.f32 %v8941, %v8984
      %v9182 = vmul.f32 %v8942, %v8989
      %v9183 = vmul.f32 %v8943, %v8994
      %v9184 = vmul.f32 %v8944, %v8999
      %v9185 = vmul.f32 %v8945, %v9004
      %v9186 = vmul.f32 %v8946, %v9009
      %v9187 = vmul.f32 %v8947, %v9014
      %v9188 = vmul.f32 %v8948, %v9019
      %v9189 = vmul.f32 %v8949, %v9024
      %v9190 = vmul.f32 %v8950, %v9029
      %v9191 = vmul.f32 %v8951, %v9034
      %v9192 = vmul.f32 %v8952, %v9039
      %v9193 = vmul.f32 %v8953, %v9044
      %v9194 = vmul.f32 %v8954, %v9049
      %v9195 = vmul.f32 %v8955, %v9054
      %v9196 = vmul.f32 %v8956, %v9059
      %v9197 = vmul.f32 %v8957, %v9064
      %v9198 = vmul.f32 %v8958, %v9069
      %v9199 = vmul.f32 %v8959, %v9074
      %v9200 = vmul.f32 %v8960, %v9079
      %v9201 = vmul.f32 %v8961, %v9084
      %v9202 = vmul.f32 %v8962, %v9089
      %v9203 = vmul.f32 %v8963, %v9094
      %v9204 = vmul.f32 %v8964, %v9099
      %v9205 = vmul.f32 %v8965, %v9104
      %v9206 = vmul.f32 %v8966, %v9109
      %v9207 = vmul.f32 %v8967, %v9114
      %v9208 = vmul.f32 %v8968, %v9119
      %v9209 = vmul.f32 %v8969, %v9124
      %v9210 = vmul.f32 %v8970, %v9129
      %v9211 = vmul.f32 %v8971, %v9134
      %v9212 = vmul.f32 %v8972, %v9139
      %v9213 = vmul.f32 %v8973, %v9144
      %v9214 = vmul.f32 %v8974, %v9149
      %v9215 = vmul.f32 %v8975, %v9154
      %v9216 = vmul.f32 %v8976, %v9159
      %v9217 = vmul.f32 %v8977, %v9164
      %v9218 = vmul.f32 %v8978, %v9169
      %v9219 = vmul.f32 %v8979, %v9174
      %v9220 = vmul.f32 %v8980, %v9179
      %9222 = vset.pattern.permute.xlu0 1
      %9223 = vperm.xlu0 %9222, %v8781
      %v9224 = vpop.permute.xlu0 %9223
      %9227 = vset.pattern.permute.xlu0 1
      %9228 = vperm.xlu0 %9227, %v8782
      %v9229 = vpop.permute.xlu0 %9228
      %9232 = vset.pattern.permute.xlu0 1
      %9233 = vperm.xlu0 %9232, %v8783
      %v9234 = vpop.permute.xlu0 %9233
      %9237 = vset.pattern.permute.xlu0 1
      %9238 = vperm.xlu0 %9237, %v8784
      %v9239 = vpop.permute.xlu0 %9238
      %9242 = vset.pattern.permute.xlu0 1
      %9243 = vperm.xlu0 %9242, %v8785
      %v9244 = vpop.permute.xlu0 %9243
      %9247 = vset.pattern.permute.xlu0 1
      %9248 = vperm.xlu0 %9247, %v8786
      %v9249 = vpop.permute.xlu0 %9248
      %9252 = vset.pattern.permute.xlu0 1
      %9253 = vperm.xlu0 %9252, %v8787
      %v9254 = vpop.permute.xlu0 %9253
      %9257 = vset.pattern.permute.xlu0 1
      %9258 = vperm.xlu0 %9257, %v8788
      %v9259 = vpop.permute.xlu0 %9258
      %9262 = vset.pattern.permute.xlu0 1
      %9263 = vperm.xlu0 %9262, %v8789
      %v9264 = vpop.permute.xlu0 %9263
      %9267 = vset.pattern.permute.xlu0 1
      %9268 = vperm.xlu0 %9267, %v8790
      %v9269 = vpop.permute.xlu0 %9268
      %9272 = vset.pattern.permute.xlu0 1
      %9273 = vperm.xlu0 %9272, %v8791
      %v9274 = vpop.permute.xlu0 %9273
      %9277 = vset.pattern.permute.xlu0 1
      %9278 = vperm.xlu0 %9277, %v8792
      %v9279 = vpop.permute.xlu0 %9278
      %9282 = vset.pattern.permute.xlu0 1
      %9283 = vperm.xlu0 %9282, %v8793
      %v9284 = vpop.permute.xlu0 %9283
      %9287 = vset.pattern.permute.xlu0 1
      %9288 = vperm.xlu0 %9287, %v8794
      %v9289 = vpop.permute.xlu0 %9288
      %9292 = vset.pattern.permute.xlu0 1
      %9293 = vperm.xlu0 %9292, %v8795
      %v9294 = vpop.permute.xlu0 %9293
      %9297 = vset.pattern.permute.xlu0 1
      %9298 = vperm.xlu0 %9297, %v8796
      %v9299 = vpop.permute.xlu0 %9298
      %9302 = vset.pattern.permute.xlu0 1
      %9303 = vperm.xlu0 %9302, %v8797
      %v9304 = vpop.permute.xlu0 %9303
      %9307 = vset.pattern.permute.xlu0 1
      %9308 = vperm.xlu0 %9307, %v8798
      %v9309 = vpop.permute.xlu0 %9308
      %9312 = vset.pattern.permute.xlu0 1
      %9313 = vperm.xlu0 %9312, %v8799
      %v9314 = vpop.permute.xlu0 %9313
      %9317 = vset.pattern.permute.xlu0 1
      %9318 = vperm.xlu0 %9317, %v8800
      %v9319 = vpop.permute.xlu0 %9318
      %9322 = vset.pattern.permute.xlu0 1
      %9323 = vperm.xlu0 %9322, %v8801
      %v9324 = vpop.permute.xlu0 %9323
      %9327 = vset.pattern.permute.xlu0 1
      %9328 = vperm.xlu0 %9327, %v8802
      %v9329 = vpop.permute.xlu0 %9328
      %9332 = vset.pattern.permute.xlu0 1
      %9333 = vperm.xlu0 %9332, %v8803
      %v9334 = vpop.permute.xlu0 %9333
      %9337 = vset.pattern.permute.xlu0 1
      %9338 = vperm.xlu0 %9337, %v8804
      %v9339 = vpop.permute.xlu0 %9338
      %9342 = vset.pattern.permute.xlu0 1
      %9343 = vperm.xlu0 %9342, %v8805
      %v9344 = vpop.permute.xlu0 %9343
      %9347 = vset.pattern.permute.xlu0 1
      %9348 = vperm.xlu0 %9347, %v8806
      %v9349 = vpop.permute.xlu0 %9348
      %9352 = vset.pattern.permute.xlu0 1
      %9353 = vperm.xlu0 %9352, %v8807
      %v9354 = vpop.permute.xlu0 %9353
      %9357 = vset.pattern.permute.xlu0 1
      %9358 = vperm.xlu0 %9357, %v8808
      %v9359 = vpop.permute.xlu0 %9358
      %9362 = vset.pattern.permute.xlu0 1
      %9363 = vperm.xlu0 %9362, %v8809
      %v9364 = vpop.permute.xlu0 %9363
      %9367 = vset.pattern.permute.xlu0 1
      %9368 = vperm.xlu0 %9367, %v8810
      %v9369 = vpop.permute.xlu0 %9368
      %9372 = vset.pattern.permute.xlu0 1
      %9373 = vperm.xlu0 %9372, %v8811
      %v9374 = vpop.permute.xlu0 %9373
      %9377 = vset.pattern.permute.xlu0 1
      %9378 = vperm.xlu0 %9377, %v8812
      %v9379 = vpop.permute.xlu0 %9378
      %9382 = vset.pattern.permute.xlu0 1
      %9383 = vperm.xlu0 %9382, %v8813
      %v9384 = vpop.permute.xlu0 %9383
      %9387 = vset.pattern.permute.xlu0 1
      %9388 = vperm.xlu0 %9387, %v8814
      %v9389 = vpop.permute.xlu0 %9388
      %9392 = vset.pattern.permute.xlu0 1
      %9393 = vperm.xlu0 %9392, %v8815
      %v9394 = vpop.permute.xlu0 %9393
      %9397 = vset.pattern.permute.xlu0 1
      %9398 = vperm.xlu0 %9397, %v8816
      %v9399 = vpop.permute.xlu0 %9398
      %9402 = vset.pattern.permute.xlu0 1
      %9403 = vperm.xlu0 %9402, %v8817
      %v9404 = vpop.permute.xlu0 %9403
      %9407 = vset.pattern.permute.xlu0 1
      %9408 = vperm.xlu0 %9407, %v8818
      %v9409 = vpop.permute.xlu0 %9408
      %9412 = vset.pattern.permute.xlu0 1
      %9413 = vperm.xlu0 %9412, %v8819
      %v9414 = vpop.permute.xlu0 %9413
      %9417 = vset.pattern.permute.xlu0 1
      %9418 = vperm.xlu0 %9417, %v8820
      %v9419 = vpop.permute.xlu0 %9418
      %v9421 = vadd.f32 %v9181, %v9224
      %v9422 = vadd.f32 %v9182, %v9229
      %v9423 = vadd.f32 %v9183, %v9234
      %v9424 = vadd.f32 %v9184, %v9239
      %v9425 = vadd.f32 %v9185, %v9244
      %v9426 = vadd.f32 %v9186, %v9249
      %v9427 = vadd.f32 %v9187, %v9254
      %v9428 = vadd.f32 %v9188, %v9259
      %v9429 = vadd.f32 %v9189, %v9264
      %v9430 = vadd.f32 %v9190, %v9269
      %v9431 = vadd.f32 %v9191, %v9274
      %v9432 = vadd.f32 %v9192, %v9279
      %v9433 = vadd.f32 %v9193, %v9284
      %v9434 = vadd.f32 %v9194, %v9289
      %v9435 = vadd.f32 %v9195, %v9294
      %v9436 = vadd.f32 %v9196, %v9299
      %v9437 = vadd.f32 %v9197, %v9304
      %v9438 = vadd.f32 %v9198, %v9309
      %v9439 = vadd.f32 %v9199, %v9314
      %v9440 = vadd.f32 %v9200, %v9319
      %v9441 = vadd.f32 %v9201, %v9324
      %v9442 = vadd.f32 %v9202, %v9329
      %v9443 = vadd.f32 %v9203, %v9334
      %v9444 = vadd.f32 %v9204, %v9339
      %v9445 = vadd.f32 %v9205, %v9344
      %v9446 = vadd.f32 %v9206, %v9349
      %v9447 = vadd.f32 %v9207, %v9354
      %v9448 = vadd.f32 %v9208, %v9359
      %v9449 = vadd.f32 %v9209, %v9364
      %v9450 = vadd.f32 %v9210, %v9369
      %v9451 = vadd.f32 %v9211, %v9374
      %v9452 = vadd.f32 %v9212, %v9379
      %v9453 = vadd.f32 %v9213, %v9384
      %v9454 = vadd.f32 %v9214, %v9389
      %v9455 = vadd.f32 %v9215, %v9394
      %v9456 = vadd.f32 %v9216, %v9399
      %v9457 = vadd.f32 %v9217, %v9404
      %v9458 = vadd.f32 %v9218, %v9409
      %v9459 = vadd.f32 %v9219, %v9414
      %v9460 = vadd.f32 %v9220, %v9419
      %9461 = vst.msk [vmem:[%s224] sm:$0xff] %vm8300, %v9421
      %9462 = vst.msk [vmem:[%s224 + $0x8] sm:$0xff] %vm8300, %v9422
      %9463 = vst.msk [vmem:[%s224 + $0x10] sm:$0xff] %vm8300, %v9423
      %9464 = vst.msk [vmem:[%s224 + $0x18] sm:$0xff] %vm8300, %v9424
      %9465 = vst.msk [vmem:[%s224 + $0x20] sm:$0xff] %vm8300, %v9425
      %9466 = vst.msk [vmem:[%s224 + $0x28] sm:$0xff] %vm8300, %v9426
      %9467 = vst.msk [vmem:[%s224 + $0x30] sm:$0xff] %vm8300, %v9427
      %9468 = vst.msk [vmem:[%s224 + $0x38] sm:$0xff] %vm8300, %v9428
      %9469 = vst.msk [vmem:[%s224 + $0x40] sm:$0xff] %vm8300, %v9429
      %9470 = vst.msk [vmem:[%s224 + $0x48] sm:$0xff] %vm8300, %v9430
      %9471 = vst.msk [vmem:[%s224 + $0x50] sm:$0xff] %vm8300, %v9431
      %9472 = vst.msk [vmem:[%s224 + $0x58] sm:$0xff] %vm8300, %v9432
      %9473 = vst.msk [vmem:[%s224 + $0x60] sm:$0xff] %vm8300, %v9433
      %9474 = vst.msk [vmem:[%s224 + $0x68] sm:$0xff] %vm8300, %v9434
      %9475 = vst.msk [vmem:[%s224 + $0x70] sm:$0xff] %vm8300, %v9435
      %9476 = vst.msk [vmem:[%s224 + $0x78] sm:$0xff] %vm8300, %v9436
      %9477 = vst.msk [vmem:[%s224 + $0x80] sm:$0xff] %vm8300, %v9437
      %9478 = vst.msk [vmem:[%s224 + $0x88] sm:$0xff] %vm8300, %v9438
      %9479 = vst.msk [vmem:[%s224 + $0x90] sm:$0xff] %vm8300, %v9439
      %9480 = vst.msk [vmem:[%s224 + $0x98] sm:$0xff] %vm8300, %v9440
      %9481 = vst.msk [vmem:[%s224 + $0xa0] sm:$0xff] %vm8300, %v9441
      %9482 = vst.msk [vmem:[%s224 + $0xa8] sm:$0xff] %vm8300, %v9442
      %9483 = vst.msk [vmem:[%s224 + $0xb0] sm:$0xff] %vm8300, %v9443
      %9484 = vst.msk [vmem:[%s224 + $0xb8] sm:$0xff] %vm8300, %v9444
      %9485 = vst.msk [vmem:[%s224 + $0xc0] sm:$0xff] %vm8300, %v9445
      %9486 = vst.msk [vmem:[%s224 + $0xc8] sm:$0xff] %vm8300, %v9446
      %9487 = vst.msk [vmem:[%s224 + $0xd0] sm:$0xff] %vm8300, %v9447
      %9488 = vst.msk [vmem:[%s224 + $0xd8] sm:$0xff] %vm8300, %v9448
      %9489 = vst.msk [vmem:[%s224 + $0xe0] sm:$0xff] %vm8300, %v9449
      %9490 = vst.msk [vmem:[%s224 + $0xe8] sm:$0xff] %vm8300, %v9450
      %9491 = vst.msk [vmem:[%s224 + $0xf0] sm:$0xff] %vm8300, %v9451
      %9492 = vst.msk [vmem:[%s224 + $0xf8] sm:$0xff] %vm8300, %v9452
      %9493 = vst.msk [vmem:[%s224 + $0x100] sm:$0xff] %vm8300, %v9453
      %9494 = vst.msk [vmem:[%s224 + $0x108] sm:$0xff] %vm8300, %v9454
      %9495 = vst.msk [vmem:[%s224 + $0x110] sm:$0xff] %vm8300, %v9455
      %9496 = vst.msk [vmem:[%s224 + $0x118] sm:$0xff] %vm8300, %v9456
      %9497 = vst.msk [vmem:[%s224 + $0x120] sm:$0xff] %vm8300, %v9457
      %9498 = vst.msk [vmem:[%s224 + $0x128] sm:$0xff] %vm8300, %v9458
      %9499 = vst.msk [vmem:[%s224 + $0x130] sm:$0xff] %vm8300, %v9459
      %9500 = vst.msk [vmem:[%s224 + $0x138] sm:$0xff] %vm8300, %v9460
      %s9501 = smul.u32 40, %s15
      %p9502 = scmp.lt.s32.totalorder %s9501, 79
      %s9503 = scalar_select %p9502, %s9501, 79
      %s9504 = smul.addr %s9503, 8
      %s9505 = scalar_lea.vmem %s4, %s9504
      // Predicated region
      $region37: #{tpu_custom_call.1} parent=35 // pred_check
        %p9506 = pneg %p127
      $region38: #{tpu_custom_call.1} parent=35 // pred_check_branch
        %9508 = sbr.rel (%p9506) target = $region40
      $region39: #{tpu_custom_call.1} parent=35 // pred_region
        %s9509 = smul.u32 40, %s15
      $region40: #{tpu_custom_call.1} parent=35 // pred_fallthru
        _
    $region36: #{tpu_custom_call.1} parent=5 // pred_fallthru
      _
    %p9510 = scmp.le.s32.totalorder 2, %s10
    // Predicated region
    $region41: #{tpu_custom_call.1} parent=5 // pred_check
      %p9511 = pneg %p9510
    $region42: #{tpu_custom_call.1} parent=5 // pred_check_branch
      %9513 = sbr.rel (%p9511) target = $region44
    $region43: #{tpu_custom_call.1} parent=5 // pred_region
      %s9514 = ssub.s32 %s10, 2
      // Predicated region
      $region45: #{tpu_custom_call.1} parent=43 // pred_check
        %p9515 = pneg %p133
      $region46: #{tpu_custom_call.1} parent=43 // pred_check_branch
        %9517 = sbr.rel (%p9515) target = $region48
      $region47: #{tpu_custom_call.1} parent=43 // pred_region
        %s9518 = smul.u32 40, %s16
        %p9519 = scmp.lt.s32.totalorder %s9518, 79
        %s9520 = scalar_select %p9519, %s9518, 79
        %s9521 = smul.addr %s9520, 8
        %s9522 = scalar_lea.vmem %s4, %s9521
      $region48: #{tpu_custom_call.1} parent=43 // pred_fallthru
        _
    $region44: #{tpu_custom_call.1} parent=5 // pred_fallthru
      _
  $region6: #{tpu_custom_call.1} parent=0 // loop_footer
    %s14 = sadd.s32 1, %s10
  $region7: #{tpu_custom_call.1} parent=0 // loop_footer_branch
    %9 = sbr.rel target = $region3
  $region8: #{tpu_custom_call.1} parent=0 // loop_exit
    _

</llo_original>
